<compile_context>
chip_gen: v6e
topology: v6e:2x2x1
jax: 0.10.0
libtpu: 0.0.40
codegen_flags: <defaults>
</compile_context>

<pallas_src>
import functools

import jax
import jax.numpy as jnp
import numpy as np
from jax.experimental import pallas as pl
from jax.experimental.pallas import tpu as pltpu


# ---------------------------------------------------------------------------
# Trace-time weight prep: banded ("Toeplitz") conv weights.
# ---------------------------------------------------------------------------
def _conv_toeplitz(w_hwio, w_in):
    """Banded weight for a 3x3 'same' conv fused with a 2x2 max-pool.

    For pooled output row hh, the kernel builds an LHS row as the lane-concat
    of the 4 input rows [2hh-1, 2hh, 2hh+1, 2hh+2] (each flattened (w, ci),
    zeros outside the image).  LHS @ T gives the four pre-pool conv outputs
    (row parity s, column parity t) as lane chunks of width Wh*Cout:
        N index = (2s+t)*Wh*Cout + wh*Cout + co
        K index = r*(w_in*Cin) + w'*Cin + ci        (r = row offset 0..3)
    """
    cin, cout = int(w_hwio.shape[2]), int(w_hwio.shape[3])
    wh_out = w_in // 2
    r = np.arange(4)[:, None, None]
    s = np.arange(2)[None, :, None]
    kh = np.arange(3)[None, None, :]
    a = (kh == r - s).astype(np.float32)                      # (4, 2, 3)
    wp = np.arange(w_in)[:, None, None, None]
    t = np.arange(2)[None, :, None, None]
    wo = np.arange(wh_out)[None, None, :, None]
    kw = np.arange(3)[None, None, None, :]
    b = (wp == 2 * wo + t - 1 + kw).astype(np.float32)        # (w_in, 2, Wh, 3)
    tmat = jnp.einsum("rsh,xtwk,hkcd->rxcstwd",
                      jnp.asarray(a), jnp.asarray(b), w_hwio.astype(jnp.float32))
    return tmat.reshape(4 * w_in * cin, 4 * wh_out * cout).astype(jnp.bfloat16)


# ---------------------------------------------------------------------------
# Fused LeNet kernel (per batch block).
# ---------------------------------------------------------------------------
def _lenet_kernel(xg_ref, t1_ref, b1_ref, t2_ref, b2_ref, t3_ref, b3_ref,
                  w1_ref, fb1_ref, w2_ref, fb2_ref, o_ref, *, bblk):
    bf = jnp.bfloat16

    def conv_block(slab, t_ref, b_ref, rows):
        # slab: (bblk, rows, K) bf16.  One MXU matmul, then the 2x2 max-pool
        # is a max over four 128-aligned lane chunks; bias + ReLU afterwards
        # (valid: per-channel bias is identical across the chunks and
        # ReLU/max are monotone).
        k = slab.shape[-1]
        y = jnp.dot(slab.reshape(bblk * rows, k), t_ref[...],
                    preferred_element_type=jnp.float32)        # (M, 1024)
        m = jnp.maximum(jnp.maximum(y[:, 0:256], y[:, 256:512]),
                        jnp.maximum(y[:, 512:768], y[:, 768:1024]))
        m = jnp.maximum(m + b_ref[...], 0.0)
        return m.astype(bf).reshape(bblk, rows, 256)

    zero96 = jnp.zeros((bblk, 1, 96), bf)
    zero256 = jnp.zeros((bblk, 1, 256), bf)

    # ---- conv1 + ReLU + pool : (32,32,3) -> (16,16,16) ------------------
    xg = xg_ref[...]                                  # (bblk, 4, 8, 96)
    q0, q1, q2, q3 = xg[:, 0], xg[:, 1], xg[:, 2], xg[:, 3]   # rows 4g+i
    q3d = jnp.concatenate([zero96, q3[:, :-1, :]], axis=1)    # rows 4g-1
    q0u = jnp.concatenate([q0[:, 1:, :], zero96], axis=1)     # rows 4g+4
    slab_e = jnp.concatenate([q3d, q0, q1, q2], axis=-1)      # pooled rows 2g
    slab_o = jnp.concatenate([q1, q2, q3, q0u], axis=-1)      # pooled rows 2g+1
    y1 = conv_block(jnp.concatenate([slab_e, slab_o], axis=1), t1_ref, b1_ref, 16)
    # y1 rows (per image): [0:8] = pooled rows 0,2,...,14 ; [8:16] = 1,3,...,15

    # ---- conv2 + ReLU + pool : (16,16,16) -> (8,8,32) -------------------
    e2, o2 = y1[:, 0:8, :], y1[:, 8:16, :]
    o2d = jnp.concatenate([zero256, o2[:, :-1, :]], axis=1)   # rows 2hh-1
    e2u = jnp.concatenate([e2[:, 1:, :], zero256], axis=1)    # rows 2hh+2
    s2 = jnp.concatenate([o2d, e2, o2, e2u], axis=-1)         # (bblk, 8, 1024)
    y2 = conv_block(s2, t2_ref, b2_ref, 8)                    # rows hh = 0..7

    # ---- conv3 + ReLU + pool + NHWC flatten : -> feat (bblk, 1024) ------
    zrow = jnp.zeros((bblk, 256), bf)
    rows8 = [y2[:, r, :] for r in range(8)]
    feats = []
    for g in range(4):                                        # pooled row g
        parts = [rows8[r] if 0 <= r < 8 else zrow
                 for r in (2 * g - 1, 2 * g, 2 * g + 1, 2 * g + 2)]
        xr = jnp.concatenate(parts, axis=-1)                  # (bblk, 1024)
        y = jnp.dot(xr, t3_ref[...], preferred_element_type=jnp.float32)
        m = jnp.maximum(jnp.maximum(y[:, 0:256], y[:, 256:512]),
                        jnp.maximum(y[:, 512:768], y[:, 768:1024]))
        feats.append(jnp.maximum(m + b3_ref[...], 0.0).astype(bf))
    feat = jnp.concatenate(feats, axis=-1)                    # (bblk, 1024)

    # ---- fc1 + ReLU + (dropout: eval-mode identity) + fc2 ---------------
    h = jnp.dot(feat, w1_ref[...], preferred_element_type=jnp.float32)
    h = jnp.maximum(h + fb1_ref[...], 0.0)
    # TODO(synk): training-mode Dropout(0.5) (random masking + 1/(1-p) scale)
    # is not implemented; eval/inference-mode identity is used.
    o_ref[...] = (jnp.dot(h.astype(bf), w2_ref[...],
                          preferred_element_type=jnp.float32) + fb2_ref[...])


# ---------------------------------------------------------------------------
# Wrapper.
# ---------------------------------------------------------------------------
def _vmem_capacity_bytes():
    try:
        return int(getattr(pltpu.get_tpu_info(), "vmem_capacity_bytes", 64 << 20))
    except Exception:
        return 64 << 20


def _pick_bblk(batch, vmem_bytes):
    """Batch block: largest block fitting the VMEM budget.

    The (B, 128) logits block puts bblk on the sublane axis, so bblk must be a
    multiple of 8 unless it covers the whole batch.  Keep >= 2 parallel grid
    steps when the batch allows so both v7x TensorCores (megacore) get work.
    """
    per_img = 192 << 10          # in-kernel activations + matmul temporaries
    resident = 14 << 20          # Toeplitz conv + MLP weights (double-buffered)
    cap = max(1, (max(per_img, int(0.5 * vmem_bytes) - resident)) // per_img)
    cands = [d for d in range(1, batch + 1)
             if batch % d == 0 and (d == batch or d % 8 == 0)]
    ok = [d for d in cands if d <= cap]
    bblk = max(ok) if ok else min(cands)
    if bblk == batch and batch > 1:
        multi = [d for d in ok if batch // d >= 2]
        if multi:
            bblk = max(multi)
    return bblk


@jax.jit
def lenet_pallas(x_nchw, p):
    B = x_nchw.shape[0]
    vmem = _vmem_capacity_bytes()
    bblk = _pick_bblk(B, vmem)
    vmem_limit = min(int(0.75 * vmem), 100 << 20)

    # Input: NCHW -> NHWC bf16, rows grouped mod 4 so every conv row-slab in
    # the kernel is built from contiguous slices (no strided access).
    x = jnp.transpose(x_nchw, (0, 2, 3, 1)).astype(jnp.bfloat16)      # (B,32,32,3)
    xg = x.reshape(B, 8, 4, 96).transpose(0, 2, 1, 3)                 # (B,4,8,96)

    # Banded conv weights (bf16) + bias tiles matching the (wh, co) lane order.
    t1 = _conv_toeplitz(p["cw1"], 32)             # (384, 1024)
    t2 = _conv_toeplitz(p["cw2"], 16)             # (1024, 1024)
    t3 = _conv_toeplitz(p["cw3"], 8)              # (1024, 1024)
    b1 = jnp.tile(p["cb1"].astype(jnp.float32), 16).reshape(1, 256)
    b2 = jnp.tile(p["cb2"].astype(jnp.float32), 8).reshape(1, 256)
    b3 = jnp.tile(p["cb3"].astype(jnp.float32), 4).reshape(1, 256)

    # fc1: rows permuted from PyTorch NCHW-flatten to the kernel's NHWC
    # feature order, hidden padded 500 -> 512.  fc2 padded to (512, 128) so the
    # logits store is lane-dense; sliced back to 10 classes below.
    fin, fmid = p["fw1"].shape
    w1 = p["fw1"].reshape(64, 4, 4, fmid).transpose(1, 2, 0, 3).reshape(fin, fmid)
    w1 = jnp.pad(w1, ((0, 0), (0, 512 - fmid))).astype(jnp.bfloat16)
    fb1 = jnp.pad(p["fb1"], (0, 512 - fmid)).astype(jnp.float32).reshape(1, 512)
    nout = p["fw2"].shape[1]
    w2 = jnp.pad(p["fw2"], ((0, 512 - fmid), (0, 128 - nout))).astype(jnp.bfloat16)
    fb2 = jnp.pad(p["fb2"], (0, 128 - nout)).astype(jnp.float32).reshape(1, 128)

    def wspec(shape):
        return pl.BlockSpec(shape, lambda n: (0, 0))

    out = pl.pallas_call(
        functools.partial(_lenet_kernel, bblk=bblk),
        out_shape=jax.ShapeDtypeStruct((B, 128), jnp.float32),
        grid=(B // bblk,),
        in_specs=[
            pl.BlockSpec((bblk, 4, 8, 96), lambda n: (n, 0, 0, 0)),
            wspec((384, 1024)), wspec((1, 256)),
            wspec((1024, 1024)), wspec((1, 256)),
            wspec((1024, 1024)), wspec((1, 256)),
            wspec((1024, 512)), wspec((1, 512)),
            wspec((512, 128)), wspec((1, 128)),
        ],
        out_specs=pl.BlockSpec((bblk, 128), lambda n: (n, 0)),
        compiler_params=pltpu.CompilerParams(
            dimension_semantics=("parallel",),
            vmem_limit_bytes=vmem_limit),
    )(xg, t1, b1, t2, b2, t3, b3, w1, fb1, w2, fb2)
    return out[:, :nout]


# ---------------------------------------------------------------------------
# Pure-JAX reference (same bf16-matmul / f32-accumulate pipeline).
# ---------------------------------------------------------------------------
def lenet_reference(x_nchw, p):
    bf = jnp.bfloat16

    def conv(x, w, b):
        y = jax.lax.conv_general_dilated(
            x.astype(bf), w.astype(bf), window_strides=(1, 1), padding="SAME",
            dimension_numbers=("NCHW", "HWIO", "NCHW"),
            preferred_element_type=jnp.float32)
        return jax.nn.relu(y + b.reshape(1, -1, 1, 1))

    def pool(x):
        return jax.lax.reduce_window(x, -jnp.inf, jax.lax.max,
                                     (1, 1, 2, 2), (1, 1, 2, 2), "VALID")

    x = pool(conv(x_nchw, p["cw1"], p["cb1"])).astype(bf)
    x = pool(conv(x, p["cw2"], p["cb2"])).astype(bf)
    x = pool(conv(x, p["cw3"], p["cb3"])).astype(bf)
    B = x.shape[0]
    feat = x.reshape(B, 4 * 4 * 64)                           # NCHW flatten
    h = jnp.dot(feat, p["fw1"].astype(bf),
                preferred_element_type=jnp.float32) + p["fb1"]
    h = jax.nn.relu(h)
    return (jnp.dot(h.astype(bf), p["fw2"].astype(bf),
                    preferred_element_type=jnp.float32) + p["fb2"])


# ---------------------------------------------------------------------------
if __name__ == "__main__":
    key = jax.random.PRNGKey(0)
    ks = jax.random.split(key, 11)
    params = {
        "cw1": jax.random.normal(ks[0], (3, 3, 3, 16), jnp.float32) * 0.1,
        "cb1": jax.random.normal(ks[1], (16,), jnp.float32) * 0.1,
        "cw2": jax.random.normal(ks[2], (3, 3, 16, 32), jnp.float32) * 0.1,
        "cb2": jax.random.normal(ks[3], (32,), jnp.float32) * 0.1,
        "cw3": jax.random.normal(ks[4], (3, 3, 32, 64), jnp.float32) * 0.1,
        "cb3": jax.random.normal(ks[5], (64,), jnp.float32) * 0.1,
        "fw1": jax.random.normal(ks[6], (4 * 4 * 64, 500), jnp.float32) * 0.05,
        "fb1": jax.random.normal(ks[7], (500,), jnp.float32) * 0.05,
        "fw2": jax.random.normal(ks[8], (500, 10), jnp.float32) * 0.05,
        "fb2": jax.random.normal(ks[9], (10,), jnp.float32) * 0.05,
    }
    # PyTorch-style NCHW input; CIFAR-10 geometry (3x32x32) is implied by the
    # module's 4*4*64 flatten, so batch is the "small" knob.
    x = jax.random.normal(ks[10], (2, 3, 32, 32), jnp.float32)

    out = jax.block_until_ready(lenet_pallas(x, params))
    ref = jax.block_until_ready(lenet_reference(x, params))
    np.testing.assert_allclose(np.asarray(out, dtype=np.float32),
                               np.asarray(ref, dtype=np.float32),
                               rtol=2e-2, atol=2e-2)
    print("KERNEL_OK")
</pallas_src>

<mosaic_0001>
module attributes {stable_mosaic.version = 11 : i64} {
  func.func @_lenet_kernel(%arg0: i32, %arg1: memref<2x4x8x96xbf16, #tpu.memory_space<vmem>>, %arg2: memref<384x1024xbf16, #tpu.memory_space<vmem>>, %arg3: memref<1x256xf32, #tpu.memory_space<vmem>>, %arg4: memref<1024x1024xbf16, #tpu.memory_space<vmem>>, %arg5: memref<1x256xf32, #tpu.memory_space<vmem>>, %arg6: memref<1024x1024xbf16, #tpu.memory_space<vmem>>, %arg7: memref<1x256xf32, #tpu.memory_space<vmem>>, %arg8: memref<1024x512xbf16, #tpu.memory_space<vmem>>, %arg9: memref<1x512xf32, #tpu.memory_space<vmem>>, %arg10: memref<512x128xbf16, #tpu.memory_space<vmem>>, %arg11: memref<1x128xf32, #tpu.memory_space<vmem>>, %arg12: memref<2x128xf32, #tpu.memory_space<vmem>>) attributes {dimension_semantics = [#tpu.dimension_semantics<parallel>], iteration_bounds = array<i64: 1>, scalar_prefetch = 0 : i64, scratch_operands = 0 : i64, tpu.core_type = #tpu.core_type<tc>, window_params = [{transform_indices = @transform_0, window_bounds = array<i64: 2, 4, 8, 96>}, {pipeline_mode = #tpu.pipeline_mode<synchronous>, transform_indices = @transform_1, window_bounds = array<i64: 384, 1024>}, {pipeline_mode = #tpu.pipeline_mode<synchronous>, transform_indices = @transform_2, window_bounds = array<i64: 1, 256>}, {pipeline_mode = #tpu.pipeline_mode<synchronous>, transform_indices = @transform_3, window_bounds = array<i64: 1024, 1024>}, {pipeline_mode = #tpu.pipeline_mode<synchronous>, transform_indices = @transform_4, window_bounds = array<i64: 1, 256>}, {pipeline_mode = #tpu.pipeline_mode<synchronous>, transform_indices = @transform_5, window_bounds = array<i64: 1024, 1024>}, {pipeline_mode = #tpu.pipeline_mode<synchronous>, transform_indices = @transform_6, window_bounds = array<i64: 1, 256>}, {pipeline_mode = #tpu.pipeline_mode<synchronous>, transform_indices = @transform_7, window_bounds = array<i64: 1024, 512>}, {pipeline_mode = #tpu.pipeline_mode<synchronous>, transform_indices = @transform_8, window_bounds = array<i64: 1, 512>}, {pipeline_mode = #tpu.pipeline_mode<synchronous>, transform_indices = @transform_9, window_bounds = array<i64: 512, 128>}, {pipeline_mode = #tpu.pipeline_mode<synchronous>, transform_indices = @transform_10, window_bounds = array<i64: 1, 128>}, {transform_indices = @transform_11, window_bounds = array<i64: 2, 128>}]} {
    %cst = arith.constant 0.000000e+00 : bf16
    %0 = vector.broadcast %cst : bf16 to vector<2x1x96xbf16>
    %cst_0 = arith.constant 0.000000e+00 : bf16
    %1 = vector.broadcast %cst_0 : bf16 to vector<2x1x256xbf16>
    %c0 = arith.constant 0 : index
    %c0_1 = arith.constant 0 : index
    %c0_2 = arith.constant 0 : index
    %c0_3 = arith.constant 0 : index
    %2 = vector.load %arg1[%c0, %c0_1, %c0_2, %c0_3] : memref<2x4x8x96xbf16, #tpu.memory_space<vmem>>, vector<2x4x8x96xbf16>
    %3 = vector.extract_strided_slice %2 {offsets = [0, 0, 0, 0], sizes = [2, 1, 8, 96], strides = [1, 1, 1, 1]} : vector<2x4x8x96xbf16> to vector<2x1x8x96xbf16>
    %4 = vector.shape_cast %3 : vector<2x1x8x96xbf16> to vector<2x8x96xbf16>
    %5 = vector.extract_strided_slice %2 {offsets = [0, 1, 0, 0], sizes = [2, 1, 8, 96], strides = [1, 1, 1, 1]} : vector<2x4x8x96xbf16> to vector<2x1x8x96xbf16>
    %6 = vector.shape_cast %5 : vector<2x1x8x96xbf16> to vector<2x8x96xbf16>
    %7 = vector.extract_strided_slice %2 {offsets = [0, 2, 0, 0], sizes = [2, 1, 8, 96], strides = [1, 1, 1, 1]} : vector<2x4x8x96xbf16> to vector<2x1x8x96xbf16>
    %8 = vector.shape_cast %7 : vector<2x1x8x96xbf16> to vector<2x8x96xbf16>
    %9 = vector.extract_strided_slice %2 {offsets = [0, 3, 0, 0], sizes = [2, 1, 8, 96], strides = [1, 1, 1, 1]} : vector<2x4x8x96xbf16> to vector<2x1x8x96xbf16>
    %10 = vector.shape_cast %9 : vector<2x1x8x96xbf16> to vector<2x8x96xbf16>
    %11 = vector.extract_strided_slice %10 {offsets = [0, 0, 0], sizes = [2, 7, 96], strides = [1, 1, 1]} : vector<2x8x96xbf16> to vector<2x7x96xbf16>
    %12 = tpu.concatenate %0, %11 in 1 : vector<2x1x96xbf16>, vector<2x7x96xbf16> -> vector<2x8x96xbf16>
    %13 = vector.extract_strided_slice %4 {offsets = [0, 1, 0], sizes = [2, 7, 96], strides = [1, 1, 1]} : vector<2x8x96xbf16> to vector<2x7x96xbf16>
    %14 = tpu.concatenate %13, %0 in 1 : vector<2x7x96xbf16>, vector<2x1x96xbf16> -> vector<2x8x96xbf16>
    %15 = tpu.concatenate %12, %4, %6, %8 in 2 : vector<2x8x96xbf16>, vector<2x8x96xbf16>, vector<2x8x96xbf16>, vector<2x8x96xbf16> -> vector<2x8x384xbf16>
    %16 = tpu.concatenate %6, %8, %10, %14 in 2 : vector<2x8x96xbf16>, vector<2x8x96xbf16>, vector<2x8x96xbf16>, vector<2x8x96xbf16> -> vector<2x8x384xbf16>
    %17 = tpu.concatenate %15, %16 in 1 : vector<2x8x384xbf16>, vector<2x8x384xbf16> -> vector<2x16x384xbf16>
    %18 = vector.shape_cast %17 : vector<2x16x384xbf16> to vector<32x384xbf16>
    %c0_4 = arith.constant 0 : index
    %c0_5 = arith.constant 0 : index
    %19 = vector.load %arg2[%c0_4, %c0_5] : memref<384x1024xbf16, #tpu.memory_space<vmem>>, vector<384x1024xbf16>
    %cst_6 = arith.constant dense<0.000000e+00> : vector<32x1024xf32>
    %20 = tpu.matmul %18, %19, %cst_6 {dimension_numbers = #tpu.dot_dimension_numbers<[1], [0], [0], [1], [0, 0, 1, 1], [], []>} : vector<32x384xbf16>, vector<384x1024xbf16>, vector<32x1024xf32> -> vector<32x1024xf32>
    %21 = vector.extract_strided_slice %20 {offsets = [0, 0], sizes = [32, 256], strides = [1, 1]} : vector<32x1024xf32> to vector<32x256xf32>
    %22 = vector.extract_strided_slice %20 {offsets = [0, 256], sizes = [32, 256], strides = [1, 1]} : vector<32x1024xf32> to vector<32x256xf32>
    %23 = arith.maximumf %21, %22 : vector<32x256xf32>
    %24 = vector.extract_strided_slice %20 {offsets = [0, 512], sizes = [32, 256], strides = [1, 1]} : vector<32x1024xf32> to vector<32x256xf32>
    %25 = vector.extract_strided_slice %20 {offsets = [0, 768], sizes = [32, 256], strides = [1, 1]} : vector<32x1024xf32> to vector<32x256xf32>
    %26 = arith.maximumf %24, %25 : vector<32x256xf32>
    %27 = arith.maximumf %23, %26 : vector<32x256xf32>
    %c0_7 = arith.constant 0 : index
    %c0_8 = arith.constant 0 : index
    %28 = vector.load %arg3[%c0_7, %c0_8] : memref<1x256xf32, #tpu.memory_space<vmem>>, vector<1x256xf32>
    %29 = vector.broadcast %28 : vector<1x256xf32> to vector<32x256xf32>
    %30 = arith.addf %27, %29 : vector<32x256xf32>
    %cst_9 = arith.constant 0.000000e+00 : f32
    %31 = vector.broadcast %cst_9 : f32 to vector<32x256xf32>
    %32 = arith.maximumf %30, %31 : vector<32x256xf32>
    %33 = arith.truncf %32 : vector<32x256xf32> to vector<32x256xbf16>
    %34 = vector.shape_cast %33 : vector<32x256xbf16> to vector<2x16x256xbf16>
    %35 = vector.extract_strided_slice %34 {offsets = [0, 0, 0], sizes = [2, 8, 256], strides = [1, 1, 1]} : vector<2x16x256xbf16> to vector<2x8x256xbf16>
    %36 = vector.extract_strided_slice %34 {offsets = [0, 8, 0], sizes = [2, 8, 256], strides = [1, 1, 1]} : vector<2x16x256xbf16> to vector<2x8x256xbf16>
    %37 = vector.extract_strided_slice %36 {offsets = [0, 0, 0], sizes = [2, 7, 256], strides = [1, 1, 1]} : vector<2x8x256xbf16> to vector<2x7x256xbf16>
    %38 = tpu.concatenate %1, %37 in 1 : vector<2x1x256xbf16>, vector<2x7x256xbf16> -> vector<2x8x256xbf16>
    %39 = vector.extract_strided_slice %35 {offsets = [0, 1, 0], sizes = [2, 7, 256], strides = [1, 1, 1]} : vector<2x8x256xbf16> to vector<2x7x256xbf16>
    %40 = tpu.concatenate %39, %1 in 1 : vector<2x7x256xbf16>, vector<2x1x256xbf16> -> vector<2x8x256xbf16>
    %41 = tpu.concatenate %38, %35, %36, %40 in 2 : vector<2x8x256xbf16>, vector<2x8x256xbf16>, vector<2x8x256xbf16>, vector<2x8x256xbf16> -> vector<2x8x1024xbf16>
    %42 = vector.shape_cast %41 : vector<2x8x1024xbf16> to vector<16x1024xbf16>
    %c0_10 = arith.constant 0 : index
    %c0_11 = arith.constant 0 : index
    %43 = vector.load %arg4[%c0_10, %c0_11] : memref<1024x1024xbf16, #tpu.memory_space<vmem>>, vector<1024x1024xbf16>
    %cst_12 = arith.constant dense<0.000000e+00> : vector<16x1024xf32>
    %44 = tpu.matmul %42, %43, %cst_12 {dimension_numbers = #tpu.dot_dimension_numbers<[1], [0], [0], [1], [0, 0, 1, 1], [], []>} : vector<16x1024xbf16>, vector<1024x1024xbf16>, vector<16x1024xf32> -> vector<16x1024xf32>
    %45 = vector.extract_strided_slice %44 {offsets = [0, 0], sizes = [16, 256], strides = [1, 1]} : vector<16x1024xf32> to vector<16x256xf32>
    %46 = vector.extract_strided_slice %44 {offsets = [0, 256], sizes = [16, 256], strides = [1, 1]} : vector<16x1024xf32> to vector<16x256xf32>
    %47 = arith.maximumf %45, %46 : vector<16x256xf32>
    %48 = vector.extract_strided_slice %44 {offsets = [0, 512], sizes = [16, 256], strides = [1, 1]} : vector<16x1024xf32> to vector<16x256xf32>
    %49 = vector.extract_strided_slice %44 {offsets = [0, 768], sizes = [16, 256], strides = [1, 1]} : vector<16x1024xf32> to vector<16x256xf32>
    %50 = arith.maximumf %48, %49 : vector<16x256xf32>
    %51 = arith.maximumf %47, %50 : vector<16x256xf32>
    %c0_13 = arith.constant 0 : index
    %c0_14 = arith.constant 0 : index
    %52 = vector.load %arg5[%c0_13, %c0_14] : memref<1x256xf32, #tpu.memory_space<vmem>>, vector<1x256xf32>
    %53 = vector.broadcast %52 : vector<1x256xf32> to vector<16x256xf32>
    %54 = arith.addf %51, %53 : vector<16x256xf32>
    %cst_15 = arith.constant 0.000000e+00 : f32
    %55 = vector.broadcast %cst_15 : f32 to vector<16x256xf32>
    %56 = arith.maximumf %54, %55 : vector<16x256xf32>
    %57 = arith.truncf %56 : vector<16x256xf32> to vector<16x256xbf16>
    %58 = vector.shape_cast %57 : vector<16x256xbf16> to vector<2x8x256xbf16>
    %cst_16 = arith.constant 0.000000e+00 : bf16
    %59 = vector.broadcast %cst_16 : bf16 to vector<2x256xbf16>
    %60 = vector.extract_strided_slice %58 {offsets = [0, 0, 0], sizes = [2, 1, 256], strides = [1, 1, 1]} : vector<2x8x256xbf16> to vector<2x1x256xbf16>
    %61 = vector.shape_cast %60 : vector<2x1x256xbf16> to vector<2x256xbf16>
    %62 = vector.extract_strided_slice %58 {offsets = [0, 1, 0], sizes = [2, 1, 256], strides = [1, 1, 1]} : vector<2x8x256xbf16> to vector<2x1x256xbf16>
    %63 = vector.shape_cast %62 : vector<2x1x256xbf16> to vector<2x256xbf16>
    %64 = vector.extract_strided_slice %58 {offsets = [0, 2, 0], sizes = [2, 1, 256], strides = [1, 1, 1]} : vector<2x8x256xbf16> to vector<2x1x256xbf16>
    %65 = vector.shape_cast %64 : vector<2x1x256xbf16> to vector<2x256xbf16>
    %66 = vector.extract_strided_slice %58 {offsets = [0, 3, 0], sizes = [2, 1, 256], strides = [1, 1, 1]} : vector<2x8x256xbf16> to vector<2x1x256xbf16>
    %67 = vector.shape_cast %66 : vector<2x1x256xbf16> to vector<2x256xbf16>
    %68 = vector.extract_strided_slice %58 {offsets = [0, 4, 0], sizes = [2, 1, 256], strides = [1, 1, 1]} : vector<2x8x256xbf16> to vector<2x1x256xbf16>
    %69 = vector.shape_cast %68 : vector<2x1x256xbf16> to vector<2x256xbf16>
    %70 = vector.extract_strided_slice %58 {offsets = [0, 5, 0], sizes = [2, 1, 256], strides = [1, 1, 1]} : vector<2x8x256xbf16> to vector<2x1x256xbf16>
    %71 = vector.shape_cast %70 : vector<2x1x256xbf16> to vector<2x256xbf16>
    %72 = vector.extract_strided_slice %58 {offsets = [0, 6, 0], sizes = [2, 1, 256], strides = [1, 1, 1]} : vector<2x8x256xbf16> to vector<2x1x256xbf16>
    %73 = vector.shape_cast %72 : vector<2x1x256xbf16> to vector<2x256xbf16>
    %74 = vector.extract_strided_slice %58 {offsets = [0, 7, 0], sizes = [2, 1, 256], strides = [1, 1, 1]} : vector<2x8x256xbf16> to vector<2x1x256xbf16>
    %75 = vector.shape_cast %74 : vector<2x1x256xbf16> to vector<2x256xbf16>
    %76 = tpu.concatenate %59, %61, %63, %65 in 1 : vector<2x256xbf16>, vector<2x256xbf16>, vector<2x256xbf16>, vector<2x256xbf16> -> vector<2x1024xbf16>
    %c0_17 = arith.constant 0 : index
    %c0_18 = arith.constant 0 : index
    %77 = vector.load %arg6[%c0_17, %c0_18] : memref<1024x1024xbf16, #tpu.memory_space<vmem>>, vector<1024x1024xbf16>
    %cst_19 = arith.constant dense<0.000000e+00> : vector<2x1024xf32>
    %78 = tpu.matmul %76, %77, %cst_19 {dimension_numbers = #tpu.dot_dimension_numbers<[1], [0], [0], [1], [0, 0, 1, 1], [], []>} : vector<2x1024xbf16>, vector<1024x1024xbf16>, vector<2x1024xf32> -> vector<2x1024xf32>
    %79 = vector.extract_strided_slice %78 {offsets = [0, 0], sizes = [2, 256], strides = [1, 1]} : vector<2x1024xf32> to vector<2x256xf32>
    %80 = vector.extract_strided_slice %78 {offsets = [0, 256], sizes = [2, 256], strides = [1, 1]} : vector<2x1024xf32> to vector<2x256xf32>
    %81 = arith.maximumf %79, %80 : vector<2x256xf32>
    %82 = vector.extract_strided_slice %78 {offsets = [0, 512], sizes = [2, 256], strides = [1, 1]} : vector<2x1024xf32> to vector<2x256xf32>
    %83 = vector.extract_strided_slice %78 {offsets = [0, 768], sizes = [2, 256], strides = [1, 1]} : vector<2x1024xf32> to vector<2x256xf32>
    %84 = arith.maximumf %82, %83 : vector<2x256xf32>
    %85 = arith.maximumf %81, %84 : vector<2x256xf32>
    %c0_20 = arith.constant 0 : index
    %c0_21 = arith.constant 0 : index
    %86 = vector.load %arg7[%c0_20, %c0_21] : memref<1x256xf32, #tpu.memory_space<vmem>>, vector<1x256xf32>
    %87 = vector.broadcast %86 : vector<1x256xf32> to vector<2x256xf32>
    %88 = arith.addf %85, %87 : vector<2x256xf32>
    %cst_22 = arith.constant 0.000000e+00 : f32
    %89 = vector.broadcast %cst_22 : f32 to vector<2x256xf32>
    %90 = arith.maximumf %88, %89 : vector<2x256xf32>
    %91 = arith.truncf %90 : vector<2x256xf32> to vector<2x256xbf16>
    %92 = tpu.concatenate %63, %65, %67, %69 in 1 : vector<2x256xbf16>, vector<2x256xbf16>, vector<2x256xbf16>, vector<2x256xbf16> -> vector<2x1024xbf16>
    %c0_23 = arith.constant 0 : index
    %c0_24 = arith.constant 0 : index
    %93 = vector.load %arg6[%c0_23, %c0_24] : memref<1024x1024xbf16, #tpu.memory_space<vmem>>, vector<1024x1024xbf16>
    %cst_25 = arith.constant dense<0.000000e+00> : vector<2x1024xf32>
    %94 = tpu.matmul %92, %93, %cst_25 {dimension_numbers = #tpu.dot_dimension_numbers<[1], [0], [0], [1], [0, 0, 1, 1], [], []>} : vector<2x1024xbf16>, vector<1024x1024xbf16>, vector<2x1024xf32> -> vector<2x1024xf32>
    %95 = vector.extract_strided_slice %94 {offsets = [0, 0], sizes = [2, 256], strides = [1, 1]} : vector<2x1024xf32> to vector<2x256xf32>
    %96 = vector.extract_strided_slice %94 {offsets = [0, 256], sizes = [2, 256], strides = [1, 1]} : vector<2x1024xf32> to vector<2x256xf32>
    %97 = arith.maximumf %95, %96 : vector<2x256xf32>
    %98 = vector.extract_strided_slice %94 {offsets = [0, 512], sizes = [2, 256], strides = [1, 1]} : vector<2x1024xf32> to vector<2x256xf32>
    %99 = vector.extract_strided_slice %94 {offsets = [0, 768], sizes = [2, 256], strides = [1, 1]} : vector<2x1024xf32> to vector<2x256xf32>
    %100 = arith.maximumf %98, %99 : vector<2x256xf32>
    %101 = arith.maximumf %97, %100 : vector<2x256xf32>
    %c0_26 = arith.constant 0 : index
    %c0_27 = arith.constant 0 : index
    %102 = vector.load %arg7[%c0_26, %c0_27] : memref<1x256xf32, #tpu.memory_space<vmem>>, vector<1x256xf32>
    %103 = vector.broadcast %102 : vector<1x256xf32> to vector<2x256xf32>
    %104 = arith.addf %101, %103 : vector<2x256xf32>
    %cst_28 = arith.constant 0.000000e+00 : f32
    %105 = vector.broadcast %cst_28 : f32 to vector<2x256xf32>
    %106 = arith.maximumf %104, %105 : vector<2x256xf32>
    %107 = arith.truncf %106 : vector<2x256xf32> to vector<2x256xbf16>
    %108 = tpu.concatenate %67, %69, %71, %73 in 1 : vector<2x256xbf16>, vector<2x256xbf16>, vector<2x256xbf16>, vector<2x256xbf16> -> vector<2x1024xbf16>
    %c0_29 = arith.constant 0 : index
    %c0_30 = arith.constant 0 : index
    %109 = vector.load %arg6[%c0_29, %c0_30] : memref<1024x1024xbf16, #tpu.memory_space<vmem>>, vector<1024x1024xbf16>
    %cst_31 = arith.constant dense<0.000000e+00> : vector<2x1024xf32>
    %110 = tpu.matmul %108, %109, %cst_31 {dimension_numbers = #tpu.dot_dimension_numbers<[1], [0], [0], [1], [0, 0, 1, 1], [], []>} : vector<2x1024xbf16>, vector<1024x1024xbf16>, vector<2x1024xf32> -> vector<2x1024xf32>
    %111 = vector.extract_strided_slice %110 {offsets = [0, 0], sizes = [2, 256], strides = [1, 1]} : vector<2x1024xf32> to vector<2x256xf32>
    %112 = vector.extract_strided_slice %110 {offsets = [0, 256], sizes = [2, 256], strides = [1, 1]} : vector<2x1024xf32> to vector<2x256xf32>
    %113 = arith.maximumf %111, %112 : vector<2x256xf32>
    %114 = vector.extract_strided_slice %110 {offsets = [0, 512], sizes = [2, 256], strides = [1, 1]} : vector<2x1024xf32> to vector<2x256xf32>
    %115 = vector.extract_strided_slice %110 {offsets = [0, 768], sizes = [2, 256], strides = [1, 1]} : vector<2x1024xf32> to vector<2x256xf32>
    %116 = arith.maximumf %114, %115 : vector<2x256xf32>
    %117 = arith.maximumf %113, %116 : vector<2x256xf32>
    %c0_32 = arith.constant 0 : index
    %c0_33 = arith.constant 0 : index
    %118 = vector.load %arg7[%c0_32, %c0_33] : memref<1x256xf32, #tpu.memory_space<vmem>>, vector<1x256xf32>
    %119 = vector.broadcast %118 : vector<1x256xf32> to vector<2x256xf32>
    %120 = arith.addf %117, %119 : vector<2x256xf32>
    %cst_34 = arith.constant 0.000000e+00 : f32
    %121 = vector.broadcast %cst_34 : f32 to vector<2x256xf32>
    %122 = arith.maximumf %120, %121 : vector<2x256xf32>
    %123 = arith.truncf %122 : vector<2x256xf32> to vector<2x256xbf16>
    %124 = tpu.concatenate %71, %73, %75, %59 in 1 : vector<2x256xbf16>, vector<2x256xbf16>, vector<2x256xbf16>, vector<2x256xbf16> -> vector<2x1024xbf16>
    %c0_35 = arith.constant 0 : index
    %c0_36 = arith.constant 0 : index
    %125 = vector.load %arg6[%c0_35, %c0_36] : memref<1024x1024xbf16, #tpu.memory_space<vmem>>, vector<1024x1024xbf16>
    %cst_37 = arith.constant dense<0.000000e+00> : vector<2x1024xf32>
    %126 = tpu.matmul %124, %125, %cst_37 {dimension_numbers = #tpu.dot_dimension_numbers<[1], [0], [0], [1], [0, 0, 1, 1], [], []>} : vector<2x1024xbf16>, vector<1024x1024xbf16>, vector<2x1024xf32> -> vector<2x1024xf32>
    %127 = vector.extract_strided_slice %126 {offsets = [0, 0], sizes = [2, 256], strides = [1, 1]} : vector<2x1024xf32> to vector<2x256xf32>
    %128 = vector.extract_strided_slice %126 {offsets = [0, 256], sizes = [2, 256], strides = [1, 1]} : vector<2x1024xf32> to vector<2x256xf32>
    %129 = arith.maximumf %127, %128 : vector<2x256xf32>
    %130 = vector.extract_strided_slice %126 {offsets = [0, 512], sizes = [2, 256], strides = [1, 1]} : vector<2x1024xf32> to vector<2x256xf32>
    %131 = vector.extract_strided_slice %126 {offsets = [0, 768], sizes = [2, 256], strides = [1, 1]} : vector<2x1024xf32> to vector<2x256xf32>
    %132 = arith.maximumf %130, %131 : vector<2x256xf32>
    %133 = arith.maximumf %129, %132 : vector<2x256xf32>
    %c0_38 = arith.constant 0 : index
    %c0_39 = arith.constant 0 : index
    %134 = vector.load %arg7[%c0_38, %c0_39] : memref<1x256xf32, #tpu.memory_space<vmem>>, vector<1x256xf32>
    %135 = vector.broadcast %134 : vector<1x256xf32> to vector<2x256xf32>
    %136 = arith.addf %133, %135 : vector<2x256xf32>
    %cst_40 = arith.constant 0.000000e+00 : f32
    %137 = vector.broadcast %cst_40 : f32 to vector<2x256xf32>
    %138 = arith.maximumf %136, %137 : vector<2x256xf32>
    %139 = arith.truncf %138 : vector<2x256xf32> to vector<2x256xbf16>
    %140 = tpu.concatenate %91, %107, %123, %139 in 1 : vector<2x256xbf16>, vector<2x256xbf16>, vector<2x256xbf16>, vector<2x256xbf16> -> vector<2x1024xbf16>
    %c0_41 = arith.constant 0 : index
    %c0_42 = arith.constant 0 : index
    %141 = vector.load %arg8[%c0_41, %c0_42] : memref<1024x512xbf16, #tpu.memory_space<vmem>>, vector<1024x512xbf16>
    %cst_43 = arith.constant dense<0.000000e+00> : vector<2x512xf32>
    %142 = tpu.matmul %140, %141, %cst_43 {dimension_numbers = #tpu.dot_dimension_numbers<[1], [0], [0], [1], [0, 0, 1, 1], [], []>} : vector<2x1024xbf16>, vector<1024x512xbf16>, vector<2x512xf32> -> vector<2x512xf32>
    %c0_44 = arith.constant 0 : index
    %c0_45 = arith.constant 0 : index
    %143 = vector.load %arg9[%c0_44, %c0_45] : memref<1x512xf32, #tpu.memory_space<vmem>>, vector<1x512xf32>
    %144 = vector.broadcast %143 : vector<1x512xf32> to vector<2x512xf32>
    %145 = arith.addf %142, %144 : vector<2x512xf32>
    %cst_46 = arith.constant 0.000000e+00 : f32
    %146 = vector.broadcast %cst_46 : f32 to vector<2x512xf32>
    %147 = arith.maximumf %145, %146 : vector<2x512xf32>
    %148 = arith.truncf %147 : vector<2x512xf32> to vector<2x512xbf16>
    %c0_47 = arith.constant 0 : index
    %c0_48 = arith.constant 0 : index
    %149 = vector.load %arg10[%c0_47, %c0_48] : memref<512x128xbf16, #tpu.memory_space<vmem>>, vector<512x128xbf16>
    %cst_49 = arith.constant dense<0.000000e+00> : vector<2x128xf32>
    %150 = tpu.matmul %148, %149, %cst_49 {dimension_numbers = #tpu.dot_dimension_numbers<[1], [0], [0], [1], [0, 0, 1, 1], [], []>} : vector<2x512xbf16>, vector<512x128xbf16>, vector<2x128xf32> -> vector<2x128xf32>
    %c0_50 = arith.constant 0 : index
    %c0_51 = arith.constant 0 : index
    %151 = vector.load %arg11[%c0_50, %c0_51] : memref<1x128xf32, #tpu.memory_space<vmem>>, vector<1x128xf32>
    %152 = vector.broadcast %151 : vector<1x128xf32> to vector<2x128xf32>
    %153 = arith.addf %150, %152 : vector<2x128xf32>
    %c0_52 = arith.constant 0 : index
    %c0_53 = arith.constant 0 : index
    %154 = vector.load %arg12[%c0_52, %c0_53] : memref<2x128xf32, #tpu.memory_space<vmem>>, vector<2x128xf32>
    tpu.vector_store %arg12[%c0_52, %c0_53], %153 {strides = array<i32>} : memref<2x128xf32, #tpu.memory_space<vmem>>, vector<2x128xf32>,
    return
  }
  func.func @transform_0(%arg0: i32) -> (i32, i32, i32, i32) {
    %c0_i32 = arith.constant 0 : i32
    %c0_i32_0 = arith.constant 0 : i32
    %c0_i32_1 = arith.constant 0 : i32
    %c0_i32_2 = arith.constant 0 : i32
    return %arg0, %c0_i32, %c0_i32_0, %c0_i32_1 : i32, i32, i32, i32
  }
  func.func @transform_1(%arg0: i32) -> (i32, i32) {
    %c0_i32 = arith.constant 0 : i32
    %c0_i32_0 = arith.constant 0 : i32
    %c0_i32_1 = arith.constant 0 : i32
    return %c0_i32, %c0_i32_0 : i32, i32
  }
  func.func @transform_2(%arg0: i32) -> (i32, i32) {
    %c0_i32 = arith.constant 0 : i32
    %c0_i32_0 = arith.constant 0 : i32
    %c0_i32_1 = arith.constant 0 : i32
    return %c0_i32, %c0_i32_0 : i32, i32
  }
  func.func @transform_3(%arg0: i32) -> (i32, i32) {
    %c0_i32 = arith.constant 0 : i32
    %c0_i32_0 = arith.constant 0 : i32
    %c0_i32_1 = arith.constant 0 : i32
    return %c0_i32, %c0_i32_0 : i32, i32
  }
  func.func @transform_4(%arg0: i32) -> (i32, i32) {
    %c0_i32 = arith.constant 0 : i32
    %c0_i32_0 = arith.constant 0 : i32
    %c0_i32_1 = arith.constant 0 : i32
    return %c0_i32, %c0_i32_0 : i32, i32
  }
  func.func @transform_5(%arg0: i32) -> (i32, i32) {
    %c0_i32 = arith.constant 0 : i32
    %c0_i32_0 = arith.constant 0 : i32
    %c0_i32_1 = arith.constant 0 : i32
    return %c0_i32, %c0_i32_0 : i32, i32
  }
  func.func @transform_6(%arg0: i32) -> (i32, i32) {
    %c0_i32 = arith.constant 0 : i32
    %c0_i32_0 = arith.constant 0 : i32
    %c0_i32_1 = arith.constant 0 : i32
    return %c0_i32, %c0_i32_0 : i32, i32
  }
  func.func @transform_7(%arg0: i32) -> (i32, i32) {
    %c0_i32 = arith.constant 0 : i32
    %c0_i32_0 = arith.constant 0 : i32
    %c0_i32_1 = arith.constant 0 : i32
    return %c0_i32, %c0_i32_0 : i32, i32
  }
  func.func @transform_8(%arg0: i32) -> (i32, i32) {
    %c0_i32 = arith.constant 0 : i32
    %c0_i32_0 = arith.constant 0 : i32
    %c0_i32_1 = arith.constant 0 : i32
    return %c0_i32, %c0_i32_0 : i32, i32
  }
  func.func @transform_9(%arg0: i32) -> (i32, i32) {
    %c0_i32 = arith.constant 0 : i32
    %c0_i32_0 = arith.constant 0 : i32
    %c0_i32_1 = arith.constant 0 : i32
    return %c0_i32, %c0_i32_0 : i32, i32
  }
  func.func @transform_10(%arg0: i32) -> (i32, i32) {
    %c0_i32 = arith.constant 0 : i32
    %c0_i32_0 = arith.constant 0 : i32
    %c0_i32_1 = arith.constant 0 : i32
    return %c0_i32, %c0_i32_0 : i32, i32
  }
  func.func @transform_11(%arg0: i32) -> (i32, i32) {
    %c0_i32 = arith.constant 0 : i32
    %c0_i32_0 = arith.constant 0 : i32
    return %arg0, %c0_i32 : i32, i32
  }
}

</mosaic_0001>

<llo_original>
// kernel: tile.18
$region0: #{tile.18}
  #allocation0 [shape = 's32[1]{0}', space=sflag, size = 0x4, scoped, tag = 'scoped memory for tile.18']
  %s0 = inlined_call_operand.vmem [shape: f32[16], index: 0, kind: input, shape index: {}]
  %s1 = inlined_call_operand.vmem [shape: f32[16,16], index: 1, kind: output, shape index: {}]
  // Predicated region
  $region2: #{tile.18} parent=0 // pred_check
    _
  $region3: #{tile.18} parent=0 // pred_check_branch
    %3 = sbr.rel (0) target = $region5
  $region4: #{tile.18} parent=0 // pred_region
    _
  $region5: #{tile.18} parent=0 // pred_fallthru
    _
  %v4 = vld [vmem:[%s0] ss:$0 sm:$0xff]
  %5 = vst [vmem:[%s1] sm:$0xff] %v4
  %s6 = scalar_lea.vmem %s1, 8
  %7 = vst [vmem:[%s6] sm:$0xff] %v4

// kernel: tile.19
$region0: #{tile.19}
  %s0 = inlined_call_operand.vmem [shape: f32[16,16], index: 0, kind: input, shape index: {}]
  %s1 = inlined_call_operand.vmem [shape: f32[1,256], index: 1, kind: output, shape index: {}]
  $region1: #{tile.19} parent=0
    #allocation0 [shape = 'u8[8192]{0}', space=vmem, size = 0x2000, scoped, tag = 'scoped mem for output reshape']
    %s2 = smov 3
    %v3 = vld [vmem:[%s0] ss:$8 sm:%s2]
    %vm4 = vcmask 130048
    %5 = vst.msk [vmem:[#allocation0] ss:$8 sm:$0x3] %vm4, %v3
    %s6 = scalar_lea.vmem %s0, 7
    %s7 = smov 3
    %v8 = vld [vmem:[%s6] ss:$8 sm:%s7]
    %9 = vrot.lane.b32.xlu0 %v8, 112
    %v10 = vpop.permute.xlu0 %9
    %vm11 = vcmask 1048448
    %12 = vst.msk [vmem:[#allocation0] ss:$8 sm:$0x3] %vm11, %v10
    %s13 = scalar_lea.vmem %s0, 6
    %s14 = smov 3
    %v15 = vld [vmem:[%s13] ss:$8 sm:%s14]
    %16 = vrot.lane.b32.xlu0 %v15, 96
    %v17 = vpop.permute.xlu0 %16
    %vm18 = vcmask 917248
    %19 = vst.msk [vmem:[#allocation0] ss:$8 sm:$0x3] %vm18, %v17
    %s20 = scalar_lea.vmem %s0, 5
    %s21 = smov 3
    %v22 = vld [vmem:[%s20] ss:$8 sm:%s21]
    %23 = vrot.lane.b32.xlu0 %v22, 80
    %v24 = vpop.permute.xlu0 %23
    %vm25 = vcmask 786048
    %26 = vst.msk [vmem:[#allocation0] ss:$8 sm:$0x3] %vm25, %v24
    %s27 = scalar_lea.vmem %s0, 4
    %s28 = smov 3
    %v29 = vld [vmem:[%s27] ss:$8 sm:%s28]
    %30 = vrot.lane.b32.xlu0 %v29, 64
    %v31 = vpop.permute.xlu0 %30
    %vm32 = vcmask 654848
    %33 = vst.msk [vmem:[#allocation0] ss:$8 sm:$0x3] %vm32, %v31
    %s34 = scalar_lea.vmem %s0, 3
    %s35 = smov 3
    %v36 = vld [vmem:[%s34] ss:$8 sm:%s35]
    %37 = vrot.lane.b32.xlu0 %v36, 48
    %v38 = vpop.permute.xlu0 %37
    %vm39 = vcmask 523648
    %40 = vst.msk [vmem:[#allocation0] ss:$8 sm:$0x3] %vm39, %v38
    %s41 = scalar_lea.vmem %s0, 2
    %s42 = smov 3
    %v43 = vld [vmem:[%s41] ss:$8 sm:%s42]
    %44 = vrot.lane.b32.xlu0 %v43, 32
    %v45 = vpop.permute.xlu0 %44
    %vm46 = vcmask 392448
    %47 = vst.msk [vmem:[#allocation0] ss:$8 sm:$0x3] %vm46, %v45
    %s48 = scalar_lea.vmem %s0, 1
    %s49 = smov 3
    %v50 = vld [vmem:[%s48] ss:$8 sm:%s49]
    %51 = vrot.lane.b32.xlu0 %v50, 16
    %v52 = vpop.permute.xlu0 %51
    %vm53 = vcmask 261248
    %54 = vst.msk [vmem:[#allocation0] ss:$8 sm:$0x3] %vm53, %v52
    %s56 = sshll.u32 1, 1
    %s57 = ssub.s32 %s56, 1
    %v59 = vld [vmem:[#allocation0] sm:%s57]
    %s60 = sshll.u32 1, 1
    %s61 = ssub.s32 %s60, 1
    %62 = vst [vmem:[%s1] sm:%s61] %v59
    %s63 = scalar_lea.vmem [#allocation0], 8
    %v64 = vld [vmem:[%s63] sm:%s57]
    %s65 = sshll.u32 1, 1
    %s66 = ssub.s32 %s65, 1
    %s67 = scalar_lea.vmem %s1, 1
    %68 = vst [vmem:[%s67] sm:%s66] %v64

// kernel: tile.23
$region0: #{tile.23}
  #allocation0 [shape = 's32[1]{0}', space=sflag, size = 0x4, scoped, tag = 'scoped memory for tile.23']
  %s0 = inlined_call_operand.vmem [shape: f32[32], index: 0, kind: input, shape index: {}]
  %s1 = inlined_call_operand.vmem [shape: f32[8,32], index: 1, kind: output, shape index: {}]
  // Predicated region
  $region2: #{tile.23} parent=0 // pred_check
    _
  $region3: #{tile.23} parent=0 // pred_check_branch
    %3 = sbr.rel (0) target = $region5
  $region4: #{tile.23} parent=0 // pred_region
    _
  $region5: #{tile.23} parent=0 // pred_fallthru
    _
  %v4 = vld [vmem:[%s0] ss:$0 sm:$0xff]
  %5 = vst [vmem:[%s1] sm:$0xff] %v4

// kernel: tile.24
$region0: #{tile.24}
  %s0 = inlined_call_operand.vmem [shape: f32[8,32], index: 0, kind: input, shape index: {}]
  %s1 = inlined_call_operand.vmem [shape: f32[1,256], index: 1, kind: output, shape index: {}]
  $region1: #{tile.24} parent=0
    #allocation0 [shape = 'u8[8192]{0}', space=vmem, size = 0x2000, scoped, tag = 'scoped mem for output reshape']
    %s2 = smov 3
    %v3 = vld [vmem:[%s0] ss:$4 sm:%s2]
    %vm4 = vcmask 261120
    %5 = vst.msk [vmem:[#allocation0] ss:$8 sm:$0x3] %vm4, %v3
    %s6 = scalar_lea.vmem %s0, 3
    %s7 = smov 3
    %v8 = vld [vmem:[%s6] ss:$4 sm:%s7]
    %9 = vrot.lane.b32.xlu0 %v8, 96
    %v10 = vpop.permute.xlu0 %9
    %vm11 = vcmask 1048320
    %12 = vst.msk [vmem:[#allocation0] ss:$8 sm:$0x3] %vm11, %v10
    %s13 = scalar_lea.vmem %s0, 2
    %s14 = smov 3
    %v15 = vld [vmem:[%s13] ss:$4 sm:%s14]
    %16 = vrot.lane.b32.xlu0 %v15, 64
    %v17 = vpop.permute.xlu0 %16
    %vm18 = vcmask 785920
    %19 = vst.msk [vmem:[#allocation0] ss:$8 sm:$0x3] %vm18, %v17
    %s20 = scalar_lea.vmem %s0, 1
    %s21 = smov 3
    %v22 = vld [vmem:[%s20] ss:$4 sm:%s21]
    %23 = vrot.lane.b32.xlu0 %v22, 32
    %v24 = vpop.permute.xlu0 %23
    %vm25 = vcmask 523520
    %26 = vst.msk [vmem:[#allocation0] ss:$8 sm:$0x3] %vm25, %v24
    %s28 = sshll.u32 1, 1
    %s29 = ssub.s32 %s28, 1
    %v31 = vld [vmem:[#allocation0] sm:%s29]
    %s32 = sshll.u32 1, 1
    %s33 = ssub.s32 %s32, 1
    %34 = vst [vmem:[%s1] sm:%s33] %v31
    %s35 = scalar_lea.vmem [#allocation0], 8
    %v36 = vld [vmem:[%s35] sm:%s29]
    %s37 = sshll.u32 1, 1
    %s38 = ssub.s32 %s37, 1
    %s39 = scalar_lea.vmem %s1, 1
    %40 = vst [vmem:[%s39] sm:%s38] %v36

// kernel: tile.28
$region0: #{tile.28}
  #allocation0 [shape = 's32[1]{0}', space=sflag, size = 0x4, scoped, tag = 'scoped memory for tile.28']
  %s0 = inlined_call_operand.vmem [shape: f32[64], index: 0, kind: input, shape index: {}]
  %s1 = inlined_call_operand.vmem [shape: f32[4,64], index: 1, kind: output, shape index: {}]
  // Predicated region
  $region2: #{tile.28} parent=0 // pred_check
    _
  $region3: #{tile.28} parent=0 // pred_check_branch
    %3 = sbr.rel (0) target = $region5
  $region4: #{tile.28} parent=0 // pred_region
    _
  $region5: #{tile.28} parent=0 // pred_fallthru
    _
  %v4 = vld [vmem:[%s0] ss:$0 sm:$0xff]
  %5 = vst [vmem:[%s1] sm:$0xf] %v4

// kernel: tile.29
$region0: #{tile.29}
  %s0 = inlined_call_operand.vmem [shape: f32[4,64], index: 0, kind: input, shape index: {}]
  %s1 = inlined_call_operand.vmem [shape: f32[1,256], index: 1, kind: output, shape index: {}]
  $region1: #{tile.29} parent=0
    #allocation0 [shape = 'u8[8192]{0}', space=vmem, size = 0x2000, scoped, tag = 'scoped mem for output reshape']
    #allocation1 [shape = 'u8[4096]{0}', space=vmem, size = 0x1000, scoped, tag = 'scoped mem for input reshape']
    %s3 = sshll.u32 1, 4
    %s4 = ssub.s32 %s3, 1
    %v5 = vld [vmem:[%s0] sm:%s4]
    %6 = vst [vmem:[#allocation1] sm:%s4] %v5
    %s7 = smov 3
    %v8 = vld [vmem:[#allocation1] ss:$2 sm:%s7]
    %vm9 = vcmask 523264
    %10 = vst.msk [vmem:[#allocation0] ss:$8 sm:$0x3] %vm9, %v8
    %s11 = scalar_lea.vmem [#allocation1], 1
    %s12 = smov 3
    %v13 = vld [vmem:[%s11] ss:$2 sm:%s12]
    %14 = vrot.lane.b32.xlu0 %v13, 64
    %v15 = vpop.permute.xlu0 %14
    %vm16 = vcmask 1048064
    %17 = vst.msk [vmem:[#allocation0] ss:$8 sm:$0x3] %vm16, %v15
    %s19 = sshll.u32 1, 1
    %s20 = ssub.s32 %s19, 1
    %v22 = vld [vmem:[#allocation0] sm:%s20]
    %s23 = sshll.u32 1, 1
    %s24 = ssub.s32 %s23, 1
    %25 = vst [vmem:[%s1] sm:%s24] %v22
    %s26 = scalar_lea.vmem [#allocation0], 8
    %v27 = vld [vmem:[%s26] sm:%s20]
    %s28 = sshll.u32 1, 1
    %s29 = ssub.s32 %s28, 1
    %s30 = scalar_lea.vmem %s1, 1
    %31 = vst [vmem:[%s30] sm:%s29] %v27

// kernel: lenet_pallas.1
$region0: #{lenet_pallas.1}
  #allocation0 [shape = 'u32[]', space=smem, size = 0x4, offset = 0x4, fixed_abs, tag = 'smem constant byte address 0x4 - core index']
  #allocation1 [shape = 'u32[144,128]{1,0:T(1,128)}', space=vmem, size = 0x12000, scoped, tag = 'internal scratch']
  %s0 = inlined_call_operand.vmem [shape: bf16[2,4,8,96], index: 0, kind: input, shape index: {}]
  %s1 = inlined_call_operand.vmem [shape: bf16[384,1024], index: 1, kind: input, shape index: {}]
  %s2 = inlined_call_operand.vmem [shape: f32[1,256], index: 2, kind: input, shape index: {}]
  %s3 = inlined_call_operand.vmem [shape: bf16[1024,1024], index: 3, kind: input, shape index: {}]
  %s4 = inlined_call_operand.vmem [shape: f32[1,256], index: 4, kind: input, shape index: {}]
  %s5 = inlined_call_operand.vmem [shape: bf16[1024,1024], index: 5, kind: input, shape index: {}]
  %s6 = inlined_call_operand.vmem [shape: f32[1,256], index: 6, kind: input, shape index: {}]
  %s7 = inlined_call_operand.vmem [shape: bf16[1024,512], index: 7, kind: input, shape index: {}]
  %s8 = inlined_call_operand.vmem [shape: f32[1,512], index: 8, kind: input, shape index: {}]
  %s9 = inlined_call_operand.vmem [shape: bf16[512,128], index: 9, kind: input, shape index: {}]
  %s10 = inlined_call_operand.vmem [shape: f32[1,128], index: 10, kind: input, shape index: {}]
  %s11 = inlined_call_operand.hbm [shape: f32[2,128], index: 11, kind: output, shape index: {}]
  %s12 = sld [smem:[#allocation0]]
  $region54: #{lenet_pallas.1} parent=0
    _
  %s14 = ssub.s32 1, %s12
  %s15 = scalar_select 0, %s14, %s12
  $region1: #{lenet_pallas.1} parent=0
    #allocation2 [shape = 'u8[1024]{0}', space=vmem, size = 0x400, scoped, tag = 'output window, operand 0, single buffered']
    #allocation3 [shape = 's32[1]{0}', space=sflag, size = 0x4, scoped, tag = 'scoped memory for lenet_pallas.1']
    %16 = vsyncpa [#allocation3], 0
    // Predicated region
    $region2: #{lenet_pallas.1} parent=1 // pred_check
      _
    $region3: #{lenet_pallas.1} parent=1 // pred_check_branch
      %18 = sbr.rel (0) target = $region5
    $region4: #{lenet_pallas.1} parent=1 // pred_region
      _
    $region5: #{lenet_pallas.1} parent=1 // pred_fallthru
      _
    // Predicated region
    $region6: #{lenet_pallas.1} parent=1 // pred_check
      _
    $region7: #{lenet_pallas.1} parent=1 // pred_check_branch
      %20 = sbr.rel (0) target = $region9
    $region8: #{lenet_pallas.1} parent=1 // pred_region
      _
    $region9: #{lenet_pallas.1} parent=1 // pred_fallthru
      _
    // Predicated region
    $region10: #{lenet_pallas.1} parent=1 // pred_check
      _
    $region11: #{lenet_pallas.1} parent=1 // pred_check_branch
      %22 = sbr.rel (0) target = $region13
    $region12: #{lenet_pallas.1} parent=1 // pred_region
      _
    $region13: #{lenet_pallas.1} parent=1 // pred_fallthru
      _
    // Predicated region
    $region14: #{lenet_pallas.1} parent=1 // pred_check
      _
    $region15: #{lenet_pallas.1} parent=1 // pred_check_branch
      %24 = sbr.rel (0) target = $region17
    $region16: #{lenet_pallas.1} parent=1 // pred_region
      _
    $region17: #{lenet_pallas.1} parent=1 // pred_fallthru
      _
    // Predicated region
    $region18: #{lenet_pallas.1} parent=1 // pred_check
      _
    $region19: #{lenet_pallas.1} parent=1 // pred_check_branch
      %26 = sbr.rel (0) target = $region21
    $region20: #{lenet_pallas.1} parent=1 // pred_region
      _
    $region21: #{lenet_pallas.1} parent=1 // pred_fallthru
      _
    // Predicated region
    $region22: #{lenet_pallas.1} parent=1 // pred_check
      _
    $region23: #{lenet_pallas.1} parent=1 // pred_check_branch
      %28 = sbr.rel (0) target = $region25
    $region24: #{lenet_pallas.1} parent=1 // pred_region
      _
    $region25: #{lenet_pallas.1} parent=1 // pred_fallthru
      _
    // Predicated region
    $region26: #{lenet_pallas.1} parent=1 // pred_check
      _
    $region27: #{lenet_pallas.1} parent=1 // pred_check_branch
      %30 = sbr.rel (0) target = $region29
    $region28: #{lenet_pallas.1} parent=1 // pred_region
      _
    $region29: #{lenet_pallas.1} parent=1 // pred_fallthru
      _
    // Predicated region
    $region30: #{lenet_pallas.1} parent=1 // pred_check
      _
    $region31: #{lenet_pallas.1} parent=1 // pred_check_branch
      %32 = sbr.rel (0) target = $region33
    $region32: #{lenet_pallas.1} parent=1 // pred_region
      _
    $region33: #{lenet_pallas.1} parent=1 // pred_fallthru
      _
    // Predicated region
    $region34: #{lenet_pallas.1} parent=1 // pred_check
      _
    $region35: #{lenet_pallas.1} parent=1 // pred_check_branch
      %34 = sbr.rel (0) target = $region37
    $region36: #{lenet_pallas.1} parent=1 // pred_region
      _
    $region37: #{lenet_pallas.1} parent=1 // pred_fallthru
      _
    // Predicated region
    $region38: #{lenet_pallas.1} parent=1 // pred_check
      _
    $region39: #{lenet_pallas.1} parent=1 // pred_check_branch
      %36 = sbr.rel (0) target = $region41
    $region40: #{lenet_pallas.1} parent=1 // pred_region
      _
    $region41: #{lenet_pallas.1} parent=1 // pred_fallthru
      _
    // Predicated region
    $region42: #{lenet_pallas.1} parent=1 // pred_check
      _
    $region43: #{lenet_pallas.1} parent=1 // pred_check_branch
      %38 = sbr.rel (0) target = $region45
    $region44: #{lenet_pallas.1} parent=1 // pred_region
      _
    $region45: #{lenet_pallas.1} parent=1 // pred_fallthru
      _
    %v40 = vld [vmem:[%s0] sm:$0xf]
    %v41 = vld [vmem:[%s0 + $0x4] sm:$0xf]
    %v42 = vld [vmem:[%s0 + $0x8] sm:$0xf]
    %v43 = vld [vmem:[%s0 + $0xc] sm:$0xf]
    %v44 = vld [vmem:[%s0 + $0x10] sm:$0xf]
    %v45 = vld [vmem:[%s0 + $0x14] sm:$0xf]
    %v46 = vld [vmem:[%s0 + $0x18] sm:$0xf]
    %v47 = vld [vmem:[%s0 + $0x1c] sm:$0xf]
    %v50 = vunpack.c.l.b16 %v43
    %v51 = vunpack.c.l.b16 %v47
    %v52 = vpack.c.b16 %v50, %v50
    %v53 = vpack.c.b16 %v51, %v51
    %v55 = vshrl.u32 %v52, 16
    %v57 = vrot.slane %v55, 7
    %v58 = vshll.u32 %v52, 16
    %v60 = vor.u32 %v57, %v58
    %v62 = vshrl.u32 %v53, 16
    %v64 = vrot.slane %v62, 7
    %v65 = vshll.u32 %v53, 16
    %v67 = vor.u32 %v64, %v65
    %vm70 = vcmask 1040384
    %vm71 = vsmask.f32 256
    %vm72 = vmand %vm70, %vm71
    %v73 = vsel %vm72, 0, %v60
    %v74 = vsel %vm72, 0, %v67
    %v77 = vunpack.c.l.b16 %v40
    %v78 = vunpack.c.l.b16 %v44
    %v79 = vpack.c.b16 %v77, %v77
    %v80 = vpack.c.b16 %v78, %v78
    %v82 = vshrl.u32 %v79, 16
    %v84 = vshll.u32 %v79, 16
    %v86 = vrot.slane %v84, 1
    %v87 = vor.u32 %v82, %v86
    %v89 = vshrl.u32 %v80, 16
    %v91 = vshll.u32 %v80, 16
    %v93 = vrot.slane %v91, 1
    %v94 = vor.u32 %v89, %v93
    %vm97 = vcmask 1043456
    %vm98 = vsmask.f32 3328
    %vm99 = vmand %vm97, %vm98
    %v100 = vsel %vm99, %v87, 0
    %v101 = vsel %vm99, %v94, 0
    %102 = vrot.lane.b32.xlu0 %v79, 96
    %v103 = vpop.permute.xlu0 %102
    %104 = vrot.lane.b32.xlu0 %v80, 96
    %v105 = vpop.permute.xlu0 %104
    %v108 = vunpack.c.l.b16 %v41
    %v109 = vunpack.c.l.b16 %v45
    %v110 = vpack.c.b16 %v108, %v108
    %v111 = vpack.c.b16 %v109, %v109
    %112 = vrot.lane.b32.xlu0 %v110, 64
    %v113 = vpop.permute.xlu0 %112
    %114 = vrot.lane.b32.xlu0 %v111, 64
    %v115 = vpop.permute.xlu0 %114
    %v118 = vunpack.c.l.b16 %v42
    %v119 = vunpack.c.l.b16 %v46
    %v120 = vpack.c.b16 %v118, %v118
    %v121 = vpack.c.b16 %v119, %v119
    %122 = vrot.lane.b32.xlu0 %v120, 32
    %v123 = vpop.permute.xlu0 %122
    %124 = vrot.lane.b32.xlu0 %v121, 32
    %v125 = vpop.permute.xlu0 %124
    %vm126 = vcmask 785408
    %v129 = vsel %vm126, %v73, %v103
    %v132 = vsel %vm126, %v74, %v105
    %vm133 = vcmask 523264
    %v135 = vsel %vm133, %v103, %v113
    %v137 = vsel %vm133, %v105, %v115
    %vm138 = vcmask 261120
    %v140 = vsel %vm138, %v113, %v123
    %v142 = vsel %vm138, %v115, %v125
    %143 = vrot.lane.b32.xlu0 %v120, 96
    %v144 = vpop.permute.xlu0 %143
    %145 = vrot.lane.b32.xlu0 %v121, 96
    %v146 = vpop.permute.xlu0 %145
    %147 = vrot.lane.b32.xlu0 %v52, 64
    %v148 = vpop.permute.xlu0 %147
    %149 = vrot.lane.b32.xlu0 %v53, 64
    %v150 = vpop.permute.xlu0 %149
    %153 = vrot.lane.b32.xlu0 %v100, 32
    %v154 = vpop.permute.xlu0 %153
    %155 = vrot.lane.b32.xlu0 %v101, 32
    %v156 = vpop.permute.xlu0 %155
    %v159 = vsel %vm126, %v41, %v144
    %v162 = vsel %vm126, %v45, %v146
    %v164 = vsel %vm133, %v144, %v148
    %v166 = vsel %vm133, %v146, %v150
    %v168 = vsel %vm138, %v148, %v154
    %v170 = vsel %vm138, %v150, %v156
    %v177 = vrot.slane %v159, 4
    %v178 = vrot.slane %v164, 4
    %v179 = vrot.slane %v168, 4
    %v180 = vrot.slane %v162, 4
    %v181 = vrot.slane %v166, 4
    %v182 = vrot.slane %v170, 4
    %vm183 = vcmask 1043456
    %v185 = vsel %vm183, %v129, %v177
    %v188 = vsel %vm183, %v135, %v178
    %v191 = vsel %vm183, %v140, %v179
    %v194 = vsel %vm183, %v132, %v180
    %v197 = vsel %vm183, %v137, %v181
    %v200 = vsel %vm183, %v142, %v182
    %v202 = vld [vmem:[%s1] sm:$0xff]
    %v203 = vld [vmem:[%s1 + $0x8] sm:$0xff]
    %v204 = vld [vmem:[%s1 + $0x10] sm:$0xff]
    %v205 = vld [vmem:[%s1 + $0x18] sm:$0xff]
    %v206 = vld [vmem:[%s1 + $0x20] sm:$0xff]
    %v207 = vld [vmem:[%s1 + $0x28] sm:$0xff]
    %v208 = vld [vmem:[%s1 + $0x30] sm:$0xff]
    %v209 = vld [vmem:[%s1 + $0x38] sm:$0xff]
    %v210 = vld [vmem:[%s1 + $0x40] sm:$0xff]
    %v211 = vld [vmem:[%s1 + $0x48] sm:$0xff]
    %v212 = vld [vmem:[%s1 + $0x50] sm:$0xff]
    %v213 = vld [vmem:[%s1 + $0x58] sm:$0xff]
    %v214 = vld [vmem:[%s1 + $0x60] sm:$0xff]
    %v215 = vld [vmem:[%s1 + $0x68] sm:$0xff]
    %v216 = vld [vmem:[%s1 + $0x70] sm:$0xff]
    %v217 = vld [vmem:[%s1 + $0x78] sm:$0xff]
    %v218 = vld [vmem:[%s1 + $0x80] sm:$0xff]
    %v219 = vld [vmem:[%s1 + $0x88] sm:$0xff]
    %v220 = vld [vmem:[%s1 + $0x90] sm:$0xff]
    %v221 = vld [vmem:[%s1 + $0x98] sm:$0xff]
    %v222 = vld [vmem:[%s1 + $0xa0] sm:$0xff]
    %v223 = vld [vmem:[%s1 + $0xa8] sm:$0xff]
    %v224 = vld [vmem:[%s1 + $0xb0] sm:$0xff]
    %v225 = vld [vmem:[%s1 + $0xb8] sm:$0xff]
    %v226 = vld [vmem:[%s1 + $0xc0] sm:$0xff]
    %v227 = vld [vmem:[%s1 + $0xc8] sm:$0xff]
    %v228 = vld [vmem:[%s1 + $0xd0] sm:$0xff]
    %v229 = vld [vmem:[%s1 + $0xd8] sm:$0xff]
    %v230 = vld [vmem:[%s1 + $0xe0] sm:$0xff]
    %v231 = vld [vmem:[%s1 + $0xe8] sm:$0xff]
    %v232 = vld [vmem:[%s1 + $0xf0] sm:$0xff]
    %v233 = vld [vmem:[%s1 + $0xf8] sm:$0xff]
    %v234 = vld [vmem:[%s1 + $0x100] sm:$0xff]
    %v235 = vld [vmem:[%s1 + $0x108] sm:$0xff]
    %v236 = vld [vmem:[%s1 + $0x110] sm:$0xff]
    %v237 = vld [vmem:[%s1 + $0x118] sm:$0xff]
    %v238 = vld [vmem:[%s1 + $0x120] sm:$0xff]
    %v239 = vld [vmem:[%s1 + $0x128] sm:$0xff]
    %v240 = vld [vmem:[%s1 + $0x130] sm:$0xff]
    %v241 = vld [vmem:[%s1 + $0x138] sm:$0xff]
    %v242 = vld [vmem:[%s1 + $0x140] sm:$0xff]
    %v243 = vld [vmem:[%s1 + $0x148] sm:$0xff]
    %v244 = vld [vmem:[%s1 + $0x150] sm:$0xff]
    %v245 = vld [vmem:[%s1 + $0x158] sm:$0xff]
    %v246 = vld [vmem:[%s1 + $0x160] sm:$0xff]
    %v247 = vld [vmem:[%s1 + $0x168] sm:$0xff]
    %v248 = vld [vmem:[%s1 + $0x170] sm:$0xff]
    %v249 = vld [vmem:[%s1 + $0x178] sm:$0xff]
    %v250 = vld [vmem:[%s1 + $0x180] sm:$0xff]
    %v251 = vld [vmem:[%s1 + $0x188] sm:$0xff]
    %v252 = vld [vmem:[%s1 + $0x190] sm:$0xff]
    %v253 = vld [vmem:[%s1 + $0x198] sm:$0xff]
    %v254 = vld [vmem:[%s1 + $0x1a0] sm:$0xff]
    %v255 = vld [vmem:[%s1 + $0x1a8] sm:$0xff]
    %v256 = vld [vmem:[%s1 + $0x1b0] sm:$0xff]
    %v257 = vld [vmem:[%s1 + $0x1b8] sm:$0xff]
    %v258 = vld [vmem:[%s1 + $0x1c0] sm:$0xff]
    %v259 = vld [vmem:[%s1 + $0x1c8] sm:$0xff]
    %v260 = vld [vmem:[%s1 + $0x1d0] sm:$0xff]
    %v261 = vld [vmem:[%s1 + $0x1d8] sm:$0xff]
    %v262 = vld [vmem:[%s1 + $0x1e0] sm:$0xff]
    %v263 = vld [vmem:[%s1 + $0x1e8] sm:$0xff]
    %v264 = vld [vmem:[%s1 + $0x1f0] sm:$0xff]
    %v265 = vld [vmem:[%s1 + $0x1f8] sm:$0xff]
    %v266 = vld [vmem:[%s1 + $0x200] sm:$0xff]
    %v267 = vld [vmem:[%s1 + $0x208] sm:$0xff]
    %v268 = vld [vmem:[%s1 + $0x210] sm:$0xff]
    %v269 = vld [vmem:[%s1 + $0x218] sm:$0xff]
    %v270 = vld [vmem:[%s1 + $0x220] sm:$0xff]
    %v271 = vld [vmem:[%s1 + $0x228] sm:$0xff]
    %v272 = vld [vmem:[%s1 + $0x230] sm:$0xff]
    %v273 = vld [vmem:[%s1 + $0x238] sm:$0xff]
    %v274 = vld [vmem:[%s1 + $0x240] sm:$0xff]
    %v275 = vld [vmem:[%s1 + $0x248] sm:$0xff]
    %v276 = vld [vmem:[%s1 + $0x250] sm:$0xff]
    %v277 = vld [vmem:[%s1 + $0x258] sm:$0xff]
    %v278 = vld [vmem:[%s1 + $0x260] sm:$0xff]
    %v279 = vld [vmem:[%s1 + $0x268] sm:$0xff]
    %v280 = vld [vmem:[%s1 + $0x270] sm:$0xff]
    %v281 = vld [vmem:[%s1 + $0x278] sm:$0xff]
    %v282 = vld [vmem:[%s1 + $0x280] sm:$0xff]
    %v283 = vld [vmem:[%s1 + $0x288] sm:$0xff]
    %v284 = vld [vmem:[%s1 + $0x290] sm:$0xff]
    %v285 = vld [vmem:[%s1 + $0x298] sm:$0xff]
    %v286 = vld [vmem:[%s1 + $0x2a0] sm:$0xff]
    %v287 = vld [vmem:[%s1 + $0x2a8] sm:$0xff]
    %v288 = vld [vmem:[%s1 + $0x2b0] sm:$0xff]
    %v289 = vld [vmem:[%s1 + $0x2b8] sm:$0xff]
    %v290 = vld [vmem:[%s1 + $0x2c0] sm:$0xff]
    %v291 = vld [vmem:[%s1 + $0x2c8] sm:$0xff]
    %v292 = vld [vmem:[%s1 + $0x2d0] sm:$0xff]
    %v293 = vld [vmem:[%s1 + $0x2d8] sm:$0xff]
    %v294 = vld [vmem:[%s1 + $0x2e0] sm:$0xff]
    %v295 = vld [vmem:[%s1 + $0x2e8] sm:$0xff]
    %v296 = vld [vmem:[%s1 + $0x2f0] sm:$0xff]
    %v297 = vld [vmem:[%s1 + $0x2f8] sm:$0xff]
    %v298 = vld [vmem:[%s1 + $0x300] sm:$0xff]
    %v299 = vld [vmem:[%s1 + $0x308] sm:$0xff]
    %v300 = vld [vmem:[%s1 + $0x310] sm:$0xff]
    %v301 = vld [vmem:[%s1 + $0x318] sm:$0xff]
    %v302 = vld [vmem:[%s1 + $0x320] sm:$0xff]
    %v303 = vld [vmem:[%s1 + $0x328] sm:$0xff]
    %v304 = vld [vmem:[%s1 + $0x330] sm:$0xff]
    %v305 = vld [vmem:[%s1 + $0x338] sm:$0xff]
    %v306 = vld [vmem:[%s1 + $0x340] sm:$0xff]
    %v307 = vld [vmem:[%s1 + $0x348] sm:$0xff]
    %v308 = vld [vmem:[%s1 + $0x350] sm:$0xff]
    %v309 = vld [vmem:[%s1 + $0x358] sm:$0xff]
    %v310 = vld [vmem:[%s1 + $0x360] sm:$0xff]
    %v311 = vld [vmem:[%s1 + $0x368] sm:$0xff]
    %v312 = vld [vmem:[%s1 + $0x370] sm:$0xff]
    %v313 = vld [vmem:[%s1 + $0x378] sm:$0xff]
    %v314 = vld [vmem:[%s1 + $0x380] sm:$0xff]
    %v315 = vld [vmem:[%s1 + $0x388] sm:$0xff]
    %v316 = vld [vmem:[%s1 + $0x390] sm:$0xff]
    %v317 = vld [vmem:[%s1 + $0x398] sm:$0xff]
    %v318 = vld [vmem:[%s1 + $0x3a0] sm:$0xff]
    %v319 = vld [vmem:[%s1 + $0x3a8] sm:$0xff]
    %v320 = vld [vmem:[%s1 + $0x3b0] sm:$0xff]
    %v321 = vld [vmem:[%s1 + $0x3b8] sm:$0xff]
    %v322 = vld [vmem:[%s1 + $0x3c0] sm:$0xff]
    %v323 = vld [vmem:[%s1 + $0x3c8] sm:$0xff]
    %v324 = vld [vmem:[%s1 + $0x3d0] sm:$0xff]
    %v325 = vld [vmem:[%s1 + $0x3d8] sm:$0xff]
    %v326 = vld [vmem:[%s1 + $0x3e0] sm:$0xff]
    %v327 = vld [vmem:[%s1 + $0x3e8] sm:$0xff]
    %v328 = vld [vmem:[%s1 + $0x3f0] sm:$0xff]
    %v329 = vld [vmem:[%s1 + $0x3f8] sm:$0xff]
    %v330 = vld [vmem:[%s1 + $0x400] sm:$0xff]
    %v331 = vld [vmem:[%s1 + $0x408] sm:$0xff]
    %v332 = vld [vmem:[%s1 + $0x410] sm:$0xff]
    %v333 = vld [vmem:[%s1 + $0x418] sm:$0xff]
    %v334 = vld [vmem:[%s1 + $0x420] sm:$0xff]
    %v335 = vld [vmem:[%s1 + $0x428] sm:$0xff]
    %v336 = vld [vmem:[%s1 + $0x430] sm:$0xff]
    %v337 = vld [vmem:[%s1 + $0x438] sm:$0xff]
    %v338 = vld [vmem:[%s1 + $0x440] sm:$0xff]
    %v339 = vld [vmem:[%s1 + $0x448] sm:$0xff]
    %v340 = vld [vmem:[%s1 + $0x450] sm:$0xff]
    %v341 = vld [vmem:[%s1 + $0x458] sm:$0xff]
    %v342 = vld [vmem:[%s1 + $0x460] sm:$0xff]
    %v343 = vld [vmem:[%s1 + $0x468] sm:$0xff]
    %v344 = vld [vmem:[%s1 + $0x470] sm:$0xff]
    %v345 = vld [vmem:[%s1 + $0x478] sm:$0xff]
    %v346 = vld [vmem:[%s1 + $0x480] sm:$0xff]
    %v347 = vld [vmem:[%s1 + $0x488] sm:$0xff]
    %v348 = vld [vmem:[%s1 + $0x490] sm:$0xff]
    %v349 = vld [vmem:[%s1 + $0x498] sm:$0xff]
    %v350 = vld [vmem:[%s1 + $0x4a0] sm:$0xff]
    %v351 = vld [vmem:[%s1 + $0x4a8] sm:$0xff]
    %v352 = vld [vmem:[%s1 + $0x4b0] sm:$0xff]
    %v353 = vld [vmem:[%s1 + $0x4b8] sm:$0xff]
    %v354 = vld [vmem:[%s1 + $0x4c0] sm:$0xff]
    %v355 = vld [vmem:[%s1 + $0x4c8] sm:$0xff]
    %v356 = vld [vmem:[%s1 + $0x4d0] sm:$0xff]
    %v357 = vld [vmem:[%s1 + $0x4d8] sm:$0xff]
    %v358 = vld [vmem:[%s1 + $0x4e0] sm:$0xff]
    %v359 = vld [vmem:[%s1 + $0x4e8] sm:$0xff]
    %v360 = vld [vmem:[%s1 + $0x4f0] sm:$0xff]
    %v361 = vld [vmem:[%s1 + $0x4f8] sm:$0xff]
    %v362 = vld [vmem:[%s1 + $0x500] sm:$0xff]
    %v363 = vld [vmem:[%s1 + $0x508] sm:$0xff]
    %v364 = vld [vmem:[%s1 + $0x510] sm:$0xff]
    %v365 = vld [vmem:[%s1 + $0x518] sm:$0xff]
    %v366 = vld [vmem:[%s1 + $0x520] sm:$0xff]
    %v367 = vld [vmem:[%s1 + $0x528] sm:$0xff]
    %v368 = vld [vmem:[%s1 + $0x530] sm:$0xff]
    %v369 = vld [vmem:[%s1 + $0x538] sm:$0xff]
    %v370 = vld [vmem:[%s1 + $0x540] sm:$0xff]
    %v371 = vld [vmem:[%s1 + $0x548] sm:$0xff]
    %v372 = vld [vmem:[%s1 + $0x550] sm:$0xff]
    %v373 = vld [vmem:[%s1 + $0x558] sm:$0xff]
    %v374 = vld [vmem:[%s1 + $0x560] sm:$0xff]
    %v375 = vld [vmem:[%s1 + $0x568] sm:$0xff]
    %v376 = vld [vmem:[%s1 + $0x570] sm:$0xff]
    %v377 = vld [vmem:[%s1 + $0x578] sm:$0xff]
    %v378 = vld [vmem:[%s1 + $0x580] sm:$0xff]
    %v379 = vld [vmem:[%s1 + $0x588] sm:$0xff]
    %v380 = vld [vmem:[%s1 + $0x590] sm:$0xff]
    %v381 = vld [vmem:[%s1 + $0x598] sm:$0xff]
    %v382 = vld [vmem:[%s1 + $0x5a0] sm:$0xff]
    %v383 = vld [vmem:[%s1 + $0x5a8] sm:$0xff]
    %v384 = vld [vmem:[%s1 + $0x5b0] sm:$0xff]
    %v385 = vld [vmem:[%s1 + $0x5b8] sm:$0xff]
    %v386 = vld [vmem:[%s1 + $0x5c0] sm:$0xff]
    %v387 = vld [vmem:[%s1 + $0x5c8] sm:$0xff]
    %v388 = vld [vmem:[%s1 + $0x5d0] sm:$0xff]
    %v389 = vld [vmem:[%s1 + $0x5d8] sm:$0xff]
    %v390 = vld [vmem:[%s1 + $0x5e0] sm:$0xff]
    %v391 = vld [vmem:[%s1 + $0x5e8] sm:$0xff]
    %v392 = vld [vmem:[%s1 + $0x5f0] sm:$0xff]
    %v393 = vld [vmem:[%s1 + $0x5f8] sm:$0xff]
    %v586 = vunpack.c.l.b16 %v202
    %v587 = vunpack.c.h.b16 %v202
    %v588 = vunpack.c.l.b16 %v203
    %v589 = vunpack.c.h.b16 %v203
    %v590 = vunpack.c.l.b16 %v204
    %v591 = vunpack.c.h.b16 %v204
    %v592 = vunpack.c.l.b16 %v205
    %v593 = vunpack.c.h.b16 %v205
    %v594 = vunpack.c.l.b16 %v206
    %v595 = vunpack.c.h.b16 %v206
    %v596 = vunpack.c.l.b16 %v207
    %v597 = vunpack.c.h.b16 %v207
    %v598 = vunpack.c.l.b16 %v208
    %v599 = vunpack.c.h.b16 %v208
    %v600 = vunpack.c.l.b16 %v209
    %v601 = vunpack.c.h.b16 %v209
    %v602 = vunpack.c.l.b16 %v210
    %v603 = vunpack.c.h.b16 %v210
    %v604 = vunpack.c.l.b16 %v211
    %v605 = vunpack.c.h.b16 %v211
    %v606 = vunpack.c.l.b16 %v212
    %v607 = vunpack.c.h.b16 %v212
    %v608 = vunpack.c.l.b16 %v213
    %v609 = vunpack.c.h.b16 %v213
    %v610 = vunpack.c.l.b16 %v214
    %v611 = vunpack.c.h.b16 %v214
    %v612 = vunpack.c.l.b16 %v215
    %v613 = vunpack.c.h.b16 %v215
    %v614 = vunpack.c.l.b16 %v216
    %v615 = vunpack.c.h.b16 %v216
    %v616 = vunpack.c.l.b16 %v217
    %v617 = vunpack.c.h.b16 %v217
    %v618 = vunpack.c.l.b16 %v218
    %v619 = vunpack.c.h.b16 %v218
    %v620 = vunpack.c.l.b16 %v219
    %v621 = vunpack.c.h.b16 %v219
    %v622 = vunpack.c.l.b16 %v220
    %v623 = vunpack.c.h.b16 %v220
    %v624 = vunpack.c.l.b16 %v221
    %v625 = vunpack.c.h.b16 %v221
    %v626 = vunpack.c.l.b16 %v222
    %v627 = vunpack.c.h.b16 %v222
    %v628 = vunpack.c.l.b16 %v223
    %v629 = vunpack.c.h.b16 %v223
    %v630 = vunpack.c.l.b16 %v224
    %v631 = vunpack.c.h.b16 %v224
    %v632 = vunpack.c.l.b16 %v225
    %v633 = vunpack.c.h.b16 %v225
    %v634 = vunpack.c.l.b16 %v226
    %v635 = vunpack.c.h.b16 %v226
    %v636 = vunpack.c.l.b16 %v227
    %v637 = vunpack.c.h.b16 %v227
    %v638 = vunpack.c.l.b16 %v228
    %v639 = vunpack.c.h.b16 %v228
    %v640 = vunpack.c.l.b16 %v229
    %v641 = vunpack.c.h.b16 %v229
    %v642 = vunpack.c.l.b16 %v230
    %v643 = vunpack.c.h.b16 %v230
    %v644 = vunpack.c.l.b16 %v231
    %v645 = vunpack.c.h.b16 %v231
    %v646 = vunpack.c.l.b16 %v232
    %v647 = vunpack.c.h.b16 %v232
    %v648 = vunpack.c.l.b16 %v233
    %v649 = vunpack.c.h.b16 %v233
    %v650 = vunpack.c.l.b16 %v234
    %v651 = vunpack.c.h.b16 %v234
    %v652 = vunpack.c.l.b16 %v235
    %v653 = vunpack.c.h.b16 %v235
    %v654 = vunpack.c.l.b16 %v236
    %v655 = vunpack.c.h.b16 %v236
    %v656 = vunpack.c.l.b16 %v237
    %v657 = vunpack.c.h.b16 %v237
    %v658 = vunpack.c.l.b16 %v238
    %v659 = vunpack.c.h.b16 %v238
    %v660 = vunpack.c.l.b16 %v239
    %v661 = vunpack.c.h.b16 %v239
    %v662 = vunpack.c.l.b16 %v240
    %v663 = vunpack.c.h.b16 %v240
    %v664 = vunpack.c.l.b16 %v241
    %v665 = vunpack.c.h.b16 %v241
    %v666 = vunpack.c.l.b16 %v242
    %v667 = vunpack.c.h.b16 %v242
    %v668 = vunpack.c.l.b16 %v243
    %v669 = vunpack.c.h.b16 %v243
    %v670 = vunpack.c.l.b16 %v244
    %v671 = vunpack.c.h.b16 %v244
    %v672 = vunpack.c.l.b16 %v245
    %v673 = vunpack.c.h.b16 %v245
    %v674 = vunpack.c.l.b16 %v246
    %v675 = vunpack.c.h.b16 %v246
    %v676 = vunpack.c.l.b16 %v247
    %v677 = vunpack.c.h.b16 %v247
    %v678 = vunpack.c.l.b16 %v248
    %v679 = vunpack.c.h.b16 %v248
    %v680 = vunpack.c.l.b16 %v249
    %v681 = vunpack.c.h.b16 %v249
    %v682 = vunpack.c.l.b16 %v250
    %v683 = vunpack.c.h.b16 %v250
    %v684 = vunpack.c.l.b16 %v251
    %v685 = vunpack.c.h.b16 %v251
    %v686 = vunpack.c.l.b16 %v252
    %v687 = vunpack.c.h.b16 %v252
    %v688 = vunpack.c.l.b16 %v253
    %v689 = vunpack.c.h.b16 %v253
    %v690 = vunpack.c.l.b16 %v254
    %v691 = vunpack.c.h.b16 %v254
    %v692 = vunpack.c.l.b16 %v255
    %v693 = vunpack.c.h.b16 %v255
    %v694 = vunpack.c.l.b16 %v256
    %v695 = vunpack.c.h.b16 %v256
    %v696 = vunpack.c.l.b16 %v257
    %v697 = vunpack.c.h.b16 %v257
    %v698 = vunpack.c.l.b16 %v258
    %v699 = vunpack.c.h.b16 %v258
    %v700 = vunpack.c.l.b16 %v259
    %v701 = vunpack.c.h.b16 %v259
    %v702 = vunpack.c.l.b16 %v260
    %v703 = vunpack.c.h.b16 %v260
    %v704 = vunpack.c.l.b16 %v261
    %v705 = vunpack.c.h.b16 %v261
    %v706 = vunpack.c.l.b16 %v262
    %v707 = vunpack.c.h.b16 %v262
    %v708 = vunpack.c.l.b16 %v263
    %v709 = vunpack.c.h.b16 %v263
    %v710 = vunpack.c.l.b16 %v264
    %v711 = vunpack.c.h.b16 %v264
    %v712 = vunpack.c.l.b16 %v265
    %v713 = vunpack.c.h.b16 %v265
    %v714 = vunpack.c.l.b16 %v266
    %v715 = vunpack.c.h.b16 %v266
    %v716 = vunpack.c.l.b16 %v267
    %v717 = vunpack.c.h.b16 %v267
    %v718 = vunpack.c.l.b16 %v268
    %v719 = vunpack.c.h.b16 %v268
    %v720 = vunpack.c.l.b16 %v269
    %v721 = vunpack.c.h.b16 %v269
    %v722 = vunpack.c.l.b16 %v270
    %v723 = vunpack.c.h.b16 %v270
    %v724 = vunpack.c.l.b16 %v271
    %v725 = vunpack.c.h.b16 %v271
    %v726 = vunpack.c.l.b16 %v272
    %v727 = vunpack.c.h.b16 %v272
    %v728 = vunpack.c.l.b16 %v273
    %v729 = vunpack.c.h.b16 %v273
    %v730 = vunpack.c.l.b16 %v274
    %v731 = vunpack.c.h.b16 %v274
    %v732 = vunpack.c.l.b16 %v275
    %v733 = vunpack.c.h.b16 %v275
    %v734 = vunpack.c.l.b16 %v276
    %v735 = vunpack.c.h.b16 %v276
    %v736 = vunpack.c.l.b16 %v277
    %v737 = vunpack.c.h.b16 %v277
    %v738 = vunpack.c.l.b16 %v278
    %v739 = vunpack.c.h.b16 %v278
    %v740 = vunpack.c.l.b16 %v279
    %v741 = vunpack.c.h.b16 %v279
    %v742 = vunpack.c.l.b16 %v280
    %v743 = vunpack.c.h.b16 %v280
    %v744 = vunpack.c.l.b16 %v281
    %v745 = vunpack.c.h.b16 %v281
    %v746 = vunpack.c.l.b16 %v282
    %v747 = vunpack.c.h.b16 %v282
    %v748 = vunpack.c.l.b16 %v283
    %v749 = vunpack.c.h.b16 %v283
    %v750 = vunpack.c.l.b16 %v284
    %v751 = vunpack.c.h.b16 %v284
    %v752 = vunpack.c.l.b16 %v285
    %v753 = vunpack.c.h.b16 %v285
    %v754 = vunpack.c.l.b16 %v286
    %v755 = vunpack.c.h.b16 %v286
    %v756 = vunpack.c.l.b16 %v287
    %v757 = vunpack.c.h.b16 %v287
    %v758 = vunpack.c.l.b16 %v288
    %v759 = vunpack.c.h.b16 %v288
    %v760 = vunpack.c.l.b16 %v289
    %v761 = vunpack.c.h.b16 %v289
    %v762 = vunpack.c.l.b16 %v290
    %v763 = vunpack.c.h.b16 %v290
    %v764 = vunpack.c.l.b16 %v291
    %v765 = vunpack.c.h.b16 %v291
    %v766 = vunpack.c.l.b16 %v292
    %v767 = vunpack.c.h.b16 %v292
    %v768 = vunpack.c.l.b16 %v293
    %v769 = vunpack.c.h.b16 %v293
    %v770 = vunpack.c.l.b16 %v294
    %v771 = vunpack.c.h.b16 %v294
    %v772 = vunpack.c.l.b16 %v295
    %v773 = vunpack.c.h.b16 %v295
    %v774 = vunpack.c.l.b16 %v296
    %v775 = vunpack.c.h.b16 %v296
    %v776 = vunpack.c.l.b16 %v297
    %v777 = vunpack.c.h.b16 %v297
    %v778 = vunpack.c.l.b16 %v298
    %v779 = vunpack.c.h.b16 %v298
    %v780 = vunpack.c.l.b16 %v299
    %v781 = vunpack.c.h.b16 %v299
    %v782 = vunpack.c.l.b16 %v300
    %v783 = vunpack.c.h.b16 %v300
    %v784 = vunpack.c.l.b16 %v301
    %v785 = vunpack.c.h.b16 %v301
    %v786 = vunpack.c.l.b16 %v302
    %v787 = vunpack.c.h.b16 %v302
    %v788 = vunpack.c.l.b16 %v303
    %v789 = vunpack.c.h.b16 %v303
    %v790 = vunpack.c.l.b16 %v304
    %v791 = vunpack.c.h.b16 %v304
    %v792 = vunpack.c.l.b16 %v305
    %v793 = vunpack.c.h.b16 %v305
    %v794 = vunpack.c.l.b16 %v306
    %v795 = vunpack.c.h.b16 %v306
    %v796 = vunpack.c.l.b16 %v307
    %v797 = vunpack.c.h.b16 %v307
    %v798 = vunpack.c.l.b16 %v308
    %v799 = vunpack.c.h.b16 %v308
    %v800 = vunpack.c.l.b16 %v309
    %v801 = vunpack.c.h.b16 %v309
    %v802 = vunpack.c.l.b16 %v310
    %v803 = vunpack.c.h.b16 %v310
    %v804 = vunpack.c.l.b16 %v311
    %v805 = vunpack.c.h.b16 %v311
    %v806 = vunpack.c.l.b16 %v312
    %v807 = vunpack.c.h.b16 %v312
    %v808 = vunpack.c.l.b16 %v313
    %v809 = vunpack.c.h.b16 %v313
    %v810 = vunpack.c.l.b16 %v314
    %v811 = vunpack.c.h.b16 %v314
    %v812 = vunpack.c.l.b16 %v315
    %v813 = vunpack.c.h.b16 %v315
    %v814 = vunpack.c.l.b16 %v316
    %v815 = vunpack.c.h.b16 %v316
    %v816 = vunpack.c.l.b16 %v317
    %v817 = vunpack.c.h.b16 %v317
    %v818 = vunpack.c.l.b16 %v318
    %v819 = vunpack.c.h.b16 %v318
    %v820 = vunpack.c.l.b16 %v319
    %v821 = vunpack.c.h.b16 %v319
    %v822 = vunpack.c.l.b16 %v320
    %v823 = vunpack.c.h.b16 %v320
    %v824 = vunpack.c.l.b16 %v321
    %v825 = vunpack.c.h.b16 %v321
    %v826 = vunpack.c.l.b16 %v322
    %v827 = vunpack.c.h.b16 %v322
    %v828 = vunpack.c.l.b16 %v323
    %v829 = vunpack.c.h.b16 %v323
    %v830 = vunpack.c.l.b16 %v324
    %v831 = vunpack.c.h.b16 %v324
    %v832 = vunpack.c.l.b16 %v325
    %v833 = vunpack.c.h.b16 %v325
    %v834 = vunpack.c.l.b16 %v326
    %v835 = vunpack.c.h.b16 %v326
    %v836 = vunpack.c.l.b16 %v327
    %v837 = vunpack.c.h.b16 %v327
    %v838 = vunpack.c.l.b16 %v328
    %v839 = vunpack.c.h.b16 %v328
    %v840 = vunpack.c.l.b16 %v329
    %v841 = vunpack.c.h.b16 %v329
    %v842 = vunpack.c.l.b16 %v330
    %v843 = vunpack.c.h.b16 %v330
    %v844 = vunpack.c.l.b16 %v331
    %v845 = vunpack.c.h.b16 %v331
    %v846 = vunpack.c.l.b16 %v332
    %v847 = vunpack.c.h.b16 %v332
    %v848 = vunpack.c.l.b16 %v333
    %v849 = vunpack.c.h.b16 %v333
    %v850 = vunpack.c.l.b16 %v334
    %v851 = vunpack.c.h.b16 %v334
    %v852 = vunpack.c.l.b16 %v335
    %v853 = vunpack.c.h.b16 %v335
    %v854 = vunpack.c.l.b16 %v336
    %v855 = vunpack.c.h.b16 %v336
    %v856 = vunpack.c.l.b16 %v337
    %v857 = vunpack.c.h.b16 %v337
    %v858 = vunpack.c.l.b16 %v338
    %v859 = vunpack.c.h.b16 %v338
    %v860 = vunpack.c.l.b16 %v339
    %v861 = vunpack.c.h.b16 %v339
    %v862 = vunpack.c.l.b16 %v340
    %v863 = vunpack.c.h.b16 %v340
    %v864 = vunpack.c.l.b16 %v341
    %v865 = vunpack.c.h.b16 %v341
    %v866 = vunpack.c.l.b16 %v342
    %v867 = vunpack.c.h.b16 %v342
    %v868 = vunpack.c.l.b16 %v343
    %v869 = vunpack.c.h.b16 %v343
    %v870 = vunpack.c.l.b16 %v344
    %v871 = vunpack.c.h.b16 %v344
    %v872 = vunpack.c.l.b16 %v345
    %v873 = vunpack.c.h.b16 %v345
    %v874 = vunpack.c.l.b16 %v346
    %v875 = vunpack.c.h.b16 %v346
    %v876 = vunpack.c.l.b16 %v347
    %v877 = vunpack.c.h.b16 %v347
    %v878 = vunpack.c.l.b16 %v348
    %v879 = vunpack.c.h.b16 %v348
    %v880 = vunpack.c.l.b16 %v349
    %v881 = vunpack.c.h.b16 %v349
    %v882 = vunpack.c.l.b16 %v350
    %v883 = vunpack.c.h.b16 %v350
    %v884 = vunpack.c.l.b16 %v351
    %v885 = vunpack.c.h.b16 %v351
    %v886 = vunpack.c.l.b16 %v352
    %v887 = vunpack.c.h.b16 %v352
    %v888 = vunpack.c.l.b16 %v353
    %v889 = vunpack.c.h.b16 %v353
    %v890 = vunpack.c.l.b16 %v354
    %v891 = vunpack.c.h.b16 %v354
    %v892 = vunpack.c.l.b16 %v355
    %v893 = vunpack.c.h.b16 %v355
    %v894 = vunpack.c.l.b16 %v356
    %v895 = vunpack.c.h.b16 %v356
    %v896 = vunpack.c.l.b16 %v357
    %v897 = vunpack.c.h.b16 %v357
    %v898 = vunpack.c.l.b16 %v358
    %v899 = vunpack.c.h.b16 %v358
    %v900 = vunpack.c.l.b16 %v359
    %v901 = vunpack.c.h.b16 %v359
    %v902 = vunpack.c.l.b16 %v360
    %v903 = vunpack.c.h.b16 %v360
    %v904 = vunpack.c.l.b16 %v361
    %v905 = vunpack.c.h.b16 %v361
    %v906 = vunpack.c.l.b16 %v362
    %v907 = vunpack.c.h.b16 %v362
    %v908 = vunpack.c.l.b16 %v363
    %v909 = vunpack.c.h.b16 %v363
    %v910 = vunpack.c.l.b16 %v364
    %v911 = vunpack.c.h.b16 %v364
    %v912 = vunpack.c.l.b16 %v365
    %v913 = vunpack.c.h.b16 %v365
    %v914 = vunpack.c.l.b16 %v366
    %v915 = vunpack.c.h.b16 %v366
    %v916 = vunpack.c.l.b16 %v367
    %v917 = vunpack.c.h.b16 %v367
    %v918 = vunpack.c.l.b16 %v368
    %v919 = vunpack.c.h.b16 %v368
    %v920 = vunpack.c.l.b16 %v369
    %v921 = vunpack.c.h.b16 %v369
    %v922 = vunpack.c.l.b16 %v370
    %v923 = vunpack.c.h.b16 %v370
    %v924 = vunpack.c.l.b16 %v371
    %v925 = vunpack.c.h.b16 %v371
    %v926 = vunpack.c.l.b16 %v372
    %v927 = vunpack.c.h.b16 %v372
    %v928 = vunpack.c.l.b16 %v373
    %v929 = vunpack.c.h.b16 %v373
    %v930 = vunpack.c.l.b16 %v374
    %v931 = vunpack.c.h.b16 %v374
    %v932 = vunpack.c.l.b16 %v375
    %v933 = vunpack.c.h.b16 %v375
    %v934 = vunpack.c.l.b16 %v376
    %v935 = vunpack.c.h.b16 %v376
    %v936 = vunpack.c.l.b16 %v377
    %v937 = vunpack.c.h.b16 %v377
    %v938 = vunpack.c.l.b16 %v378
    %v939 = vunpack.c.h.b16 %v378
    %v940 = vunpack.c.l.b16 %v379
    %v941 = vunpack.c.h.b16 %v379
    %v942 = vunpack.c.l.b16 %v380
    %v943 = vunpack.c.h.b16 %v380
    %v944 = vunpack.c.l.b16 %v381
    %v945 = vunpack.c.h.b16 %v381
    %v946 = vunpack.c.l.b16 %v382
    %v947 = vunpack.c.h.b16 %v382
    %v948 = vunpack.c.l.b16 %v383
    %v949 = vunpack.c.h.b16 %v383
    %v950 = vunpack.c.l.b16 %v384
    %v951 = vunpack.c.h.b16 %v384
    %v952 = vunpack.c.l.b16 %v385
    %v953 = vunpack.c.h.b16 %v385
    %v954 = vunpack.c.l.b16 %v386
    %v955 = vunpack.c.h.b16 %v386
    %v956 = vunpack.c.l.b16 %v387
    %v957 = vunpack.c.h.b16 %v387
    %v958 = vunpack.c.l.b16 %v388
    %v959 = vunpack.c.h.b16 %v388
    %v960 = vunpack.c.l.b16 %v389
    %v961 = vunpack.c.h.b16 %v389
    %v962 = vunpack.c.l.b16 %v390
    %v963 = vunpack.c.h.b16 %v390
    %v964 = vunpack.c.l.b16 %v391
    %v965 = vunpack.c.h.b16 %v391
    %v966 = vunpack.c.l.b16 %v392
    %v967 = vunpack.c.h.b16 %v392
    %v968 = vunpack.c.l.b16 %v393
    %v969 = vunpack.c.h.b16 %v393
    %v970 = vpack.c.b16 %v594, %v586
    %v971 = vpack.c.b16 %v595, %v587
    %v972 = vpack.c.b16 %v596, %v588
    %v973 = vpack.c.b16 %v597, %v589
    %v974 = vpack.c.b16 %v598, %v590
    %v975 = vpack.c.b16 %v599, %v591
    %v976 = vpack.c.b16 %v600, %v592
    %v977 = vpack.c.b16 %v601, %v593
    %v978 = vpack.c.b16 %v610, %v602
    %v979 = vpack.c.b16 %v611, %v603
    %v980 = vpack.c.b16 %v612, %v604
    %v981 = vpack.c.b16 %v613, %v605
    %v982 = vpack.c.b16 %v614, %v606
    %v983 = vpack.c.b16 %v615, %v607
    %v984 = vpack.c.b16 %v616, %v608
    %v985 = vpack.c.b16 %v617, %v609
    %v986 = vpack.c.b16 %v626, %v618
    %v987 = vpack.c.b16 %v627, %v619
    %v988 = vpack.c.b16 %v628, %v620
    %v989 = vpack.c.b16 %v629, %v621
    %v990 = vpack.c.b16 %v630, %v622
    %v991 = vpack.c.b16 %v631, %v623
    %v992 = vpack.c.b16 %v632, %v624
    %v993 = vpack.c.b16 %v633, %v625
    %v994 = vpack.c.b16 %v642, %v634
    %v995 = vpack.c.b16 %v643, %v635
    %v996 = vpack.c.b16 %v644, %v636
    %v997 = vpack.c.b16 %v645, %v637
    %v998 = vpack.c.b16 %v646, %v638
    %v999 = vpack.c.b16 %v647, %v639
    %v1000 = vpack.c.b16 %v648, %v640
    %v1001 = vpack.c.b16 %v649, %v641
    %v1002 = vpack.c.b16 %v658, %v650
    %v1003 = vpack.c.b16 %v659, %v651
    %v1004 = vpack.c.b16 %v660, %v652
    %v1005 = vpack.c.b16 %v661, %v653
    %v1006 = vpack.c.b16 %v662, %v654
    %v1007 = vpack.c.b16 %v663, %v655
    %v1008 = vpack.c.b16 %v664, %v656
    %v1009 = vpack.c.b16 %v665, %v657
    %v1010 = vpack.c.b16 %v674, %v666
    %v1011 = vpack.c.b16 %v675, %v667
    %v1012 = vpack.c.b16 %v676, %v668
    %v1013 = vpack.c.b16 %v677, %v669
    %v1014 = vpack.c.b16 %v678, %v670
    %v1015 = vpack.c.b16 %v679, %v671
    %v1016 = vpack.c.b16 %v680, %v672
    %v1017 = vpack.c.b16 %v681, %v673
    %v1018 = vpack.c.b16 %v690, %v682
    %v1019 = vpack.c.b16 %v691, %v683
    %v1020 = vpack.c.b16 %v692, %v684
    %v1021 = vpack.c.b16 %v693, %v685
    %v1022 = vpack.c.b16 %v694, %v686
    %v1023 = vpack.c.b16 %v695, %v687
    %v1024 = vpack.c.b16 %v696, %v688
    %v1025 = vpack.c.b16 %v697, %v689
    %v1026 = vpack.c.b16 %v706, %v698
    %v1027 = vpack.c.b16 %v707, %v699
    %v1028 = vpack.c.b16 %v708, %v700
    %v1029 = vpack.c.b16 %v709, %v701
    %v1030 = vpack.c.b16 %v710, %v702
    %v1031 = vpack.c.b16 %v711, %v703
    %v1032 = vpack.c.b16 %v712, %v704
    %v1033 = vpack.c.b16 %v713, %v705
    %v1034 = vpack.c.b16 %v722, %v714
    %v1035 = vpack.c.b16 %v723, %v715
    %v1036 = vpack.c.b16 %v724, %v716
    %v1037 = vpack.c.b16 %v725, %v717
    %v1038 = vpack.c.b16 %v726, %v718
    %v1039 = vpack.c.b16 %v727, %v719
    %v1040 = vpack.c.b16 %v728, %v720
    %v1041 = vpack.c.b16 %v729, %v721
    %v1042 = vpack.c.b16 %v738, %v730
    %v1043 = vpack.c.b16 %v739, %v731
    %v1044 = vpack.c.b16 %v740, %v732
    %v1045 = vpack.c.b16 %v741, %v733
    %v1046 = vpack.c.b16 %v742, %v734
    %v1047 = vpack.c.b16 %v743, %v735
    %v1048 = vpack.c.b16 %v744, %v736
    %v1049 = vpack.c.b16 %v745, %v737
    %v1050 = vpack.c.b16 %v754, %v746
    %v1051 = vpack.c.b16 %v755, %v747
    %v1052 = vpack.c.b16 %v756, %v748
    %v1053 = vpack.c.b16 %v757, %v749
    %v1054 = vpack.c.b16 %v758, %v750
    %v1055 = vpack.c.b16 %v759, %v751
    %v1056 = vpack.c.b16 %v760, %v752
    %v1057 = vpack.c.b16 %v761, %v753
    %v1058 = vpack.c.b16 %v770, %v762
    %v1059 = vpack.c.b16 %v771, %v763
    %v1060 = vpack.c.b16 %v772, %v764
    %v1061 = vpack.c.b16 %v773, %v765
    %v1062 = vpack.c.b16 %v774, %v766
    %v1063 = vpack.c.b16 %v775, %v767
    %v1064 = vpack.c.b16 %v776, %v768
    %v1065 = vpack.c.b16 %v777, %v769
    %v1066 = vpack.c.b16 %v786, %v778
    %v1067 = vpack.c.b16 %v787, %v779
    %v1068 = vpack.c.b16 %v788, %v780
    %v1069 = vpack.c.b16 %v789, %v781
    %v1070 = vpack.c.b16 %v790, %v782
    %v1071 = vpack.c.b16 %v791, %v783
    %v1072 = vpack.c.b16 %v792, %v784
    %v1073 = vpack.c.b16 %v793, %v785
    %v1074 = vpack.c.b16 %v802, %v794
    %v1075 = vpack.c.b16 %v803, %v795
    %v1076 = vpack.c.b16 %v804, %v796
    %v1077 = vpack.c.b16 %v805, %v797
    %v1078 = vpack.c.b16 %v806, %v798
    %v1079 = vpack.c.b16 %v807, %v799
    %v1080 = vpack.c.b16 %v808, %v800
    %v1081 = vpack.c.b16 %v809, %v801
    %v1082 = vpack.c.b16 %v818, %v810
    %v1083 = vpack.c.b16 %v819, %v811
    %v1084 = vpack.c.b16 %v820, %v812
    %v1085 = vpack.c.b16 %v821, %v813
    %v1086 = vpack.c.b16 %v822, %v814
    %v1087 = vpack.c.b16 %v823, %v815
    %v1088 = vpack.c.b16 %v824, %v816
    %v1089 = vpack.c.b16 %v825, %v817
    %v1090 = vpack.c.b16 %v834, %v826
    %v1091 = vpack.c.b16 %v835, %v827
    %v1092 = vpack.c.b16 %v836, %v828
    %v1093 = vpack.c.b16 %v837, %v829
    %v1094 = vpack.c.b16 %v838, %v830
    %v1095 = vpack.c.b16 %v839, %v831
    %v1096 = vpack.c.b16 %v840, %v832
    %v1097 = vpack.c.b16 %v841, %v833
    %v1098 = vpack.c.b16 %v850, %v842
    %v1099 = vpack.c.b16 %v851, %v843
    %v1100 = vpack.c.b16 %v852, %v844
    %v1101 = vpack.c.b16 %v853, %v845
    %v1102 = vpack.c.b16 %v854, %v846
    %v1103 = vpack.c.b16 %v855, %v847
    %v1104 = vpack.c.b16 %v856, %v848
    %v1105 = vpack.c.b16 %v857, %v849
    %v1106 = vpack.c.b16 %v866, %v858
    %v1107 = vpack.c.b16 %v867, %v859
    %v1108 = vpack.c.b16 %v868, %v860
    %v1109 = vpack.c.b16 %v869, %v861
    %v1110 = vpack.c.b16 %v870, %v862
    %v1111 = vpack.c.b16 %v871, %v863
    %v1112 = vpack.c.b16 %v872, %v864
    %v1113 = vpack.c.b16 %v873, %v865
    %v1114 = vpack.c.b16 %v882, %v874
    %v1115 = vpack.c.b16 %v883, %v875
    %v1116 = vpack.c.b16 %v884, %v876
    %v1117 = vpack.c.b16 %v885, %v877
    %v1118 = vpack.c.b16 %v886, %v878
    %v1119 = vpack.c.b16 %v887, %v879
    %v1120 = vpack.c.b16 %v888, %v880
    %v1121 = vpack.c.b16 %v889, %v881
    %v1122 = vpack.c.b16 %v898, %v890
    %v1123 = vpack.c.b16 %v899, %v891
    %v1124 = vpack.c.b16 %v900, %v892
    %v1125 = vpack.c.b16 %v901, %v893
    %v1126 = vpack.c.b16 %v902, %v894
    %v1127 = vpack.c.b16 %v903, %v895
    %v1128 = vpack.c.b16 %v904, %v896
    %v1129 = vpack.c.b16 %v905, %v897
    %v1130 = vpack.c.b16 %v914, %v906
    %v1131 = vpack.c.b16 %v915, %v907
    %v1132 = vpack.c.b16 %v916, %v908
    %v1133 = vpack.c.b16 %v917, %v909
    %v1134 = vpack.c.b16 %v918, %v910
    %v1135 = vpack.c.b16 %v919, %v911
    %v1136 = vpack.c.b16 %v920, %v912
    %v1137 = vpack.c.b16 %v921, %v913
    %v1138 = vpack.c.b16 %v930, %v922
    %v1139 = vpack.c.b16 %v931, %v923
    %v1140 = vpack.c.b16 %v932, %v924
    %v1141 = vpack.c.b16 %v933, %v925
    %v1142 = vpack.c.b16 %v934, %v926
    %v1143 = vpack.c.b16 %v935, %v927
    %v1144 = vpack.c.b16 %v936, %v928
    %v1145 = vpack.c.b16 %v937, %v929
    %v1146 = vpack.c.b16 %v946, %v938
    %v1147 = vpack.c.b16 %v947, %v939
    %v1148 = vpack.c.b16 %v948, %v940
    %v1149 = vpack.c.b16 %v949, %v941
    %v1150 = vpack.c.b16 %v950, %v942
    %v1151 = vpack.c.b16 %v951, %v943
    %v1152 = vpack.c.b16 %v952, %v944
    %v1153 = vpack.c.b16 %v953, %v945
    %v1154 = vpack.c.b16 %v962, %v954
    %v1155 = vpack.c.b16 %v963, %v955
    %v1156 = vpack.c.b16 %v964, %v956
    %v1157 = vpack.c.b16 %v965, %v957
    %v1158 = vpack.c.b16 %v966, %v958
    %v1159 = vpack.c.b16 %v967, %v959
    %v1160 = vpack.c.b16 %v968, %v960
    %v1161 = vpack.c.b16 %v969, %v961
    %1354 = vmatprep.subr.bf16.mxu0 %v1027
    %1355 = vmatpush1.bf16.msra.mxu0 %v1026
    %1356 = vmatprep.subr.bf16.mxu0 %v1019
    %1357 = vmatpush1.bf16.msra.mxu0 %v1018
    %1358 = vmatprep.subr.bf16.mxu0 %v1011
    %1359 = vmatpush1.bf16.msra.mxu0 %v1010
    %1360 = vmatprep.subr.bf16.mxu0 %v1003
    %1361 = vmatpush1.bf16.msra.mxu0 %v1002
    %1362 = vmatprep.subr.bf16.mxu0 %v995
    %1363 = vmatpush1.bf16.msra.mxu0 %v994
    %1364 = vmatprep.subr.bf16.mxu0 %v987
    %1365 = vmatpush1.bf16.msra.mxu0 %v986
    %1366 = vmatprep.subr.bf16.mxu0 %v979
    %1367 = vmatpush1.bf16.msra.mxu0 %v978
    %1368 = vmatprep.subr.bf16.mxu0 %v971
    %1369 = vmatpush1.bf16.msra.mxu0 %v970
    %1370 = vmatprep.subr.bf16.mxu0 %v1091
    %1371 = vmatpush2.bf16.msra.mxu0 %v1090
    %1372 = vmatprep.subr.bf16.mxu0 %v1083
    %1373 = vmatpush2.bf16.msra.mxu0 %v1082
    %1374 = vmatprep.subr.bf16.mxu0 %v1075
    %1375 = vmatpush2.bf16.msra.mxu0 %v1074
    %1376 = vmatprep.subr.bf16.mxu0 %v1067
    %1377 = vmatpush2.bf16.msra.mxu0 %v1066
    %1378 = vmatprep.subr.bf16.mxu0 %v1059
    %1379 = vmatpush2.bf16.msra.mxu0 %v1058
    %1380 = vmatprep.subr.bf16.mxu0 %v1051
    %1381 = vmatpush2.bf16.msra.mxu0 %v1050
    %1382 = vmatprep.subr.bf16.mxu0 %v1043
    %1383 = vmatpush2.bf16.msra.mxu0 %v1042
    %1384 = vmatprep.subr.bf16.mxu0 %v1035
    %1385 = vmatpush2.bf16.msra.mxu0 %v1034
    %1386 = vmatprep.mubr.bf16.mxu0 %v188
    %1387 = vmatmul.mubr.bf16.gmra.mxu0 %v185
    %v1388 = vpop.f32.mrf.mxu0
    %v1389 = vadd.f32 0.0, %v1388
    %v1390 = vpop.f32.mrf.mxu0
    %v1391 = vadd.f32 0.0, %v1390
    %v1392 = vpop.f32.mrf.mxu0
    %v1393 = vadd.f32 0.0, %v1392
    %v1394 = vpop.f32.mrf.mxu0
    %v1395 = vadd.f32 0.0, %v1394
    %1396 = vmatprep.mubr.bf16.mxu0 %v197
    %1397 = vmatmul.mubr.bf16.gmra.mxu0 %v194
    %v1398 = vpop.f32.mrf.mxu0
    %v1399 = vadd.f32 0.0, %v1398
    %v1400 = vpop.f32.mrf.mxu0
    %v1401 = vadd.f32 0.0, %v1400
    %v1402 = vpop.f32.mrf.mxu0
    %v1403 = vadd.f32 0.0, %v1402
    %v1404 = vpop.f32.mrf.mxu0
    %v1405 = vadd.f32 0.0, %v1404
    %1406 = vdwg.mxu0
    %1407 = vmatprep.subr.bf16.mxu0 %v1155
    %1408 = vmatpush1.bf16.msra.mxu0 %v1154
    %1409 = vmatprep.subr.bf16.mxu0 %v1147
    %1410 = vmatpush1.bf16.msra.mxu0 %v1146
    %1411 = vmatprep.subr.bf16.mxu0 %v1139
    %1412 = vmatpush1.bf16.msra.mxu0 %v1138
    %1413 = vmatprep.subr.bf16.mxu0 %v1131
    %1414 = vmatpush1.bf16.msra.mxu0 %v1130
    %1415 = vmatprep.subr.bf16.mxu0 %v1123
    %1416 = vmatpush1.bf16.msra.mxu0 %v1122
    %1417 = vmatprep.subr.bf16.mxu0 %v1115
    %1418 = vmatpush1.bf16.msra.mxu0 %v1114
    %1419 = vmatprep.subr.bf16.mxu0 %v1107
    %1420 = vmatpush1.bf16.msra.mxu0 %v1106
    %1421 = vmatprep.subr.bf16.mxu0 %v1099
    %1422 = vmatpush1.bf16.msra.mxu0 %v1098
    %1423 = vmatprep.subr.bf16.mxu0 0
    %1424 = vmatpush2.bf16.msra.mxu0 0
    %1425 = vmatprep.subr.bf16.mxu0 0
    %1426 = vmatpush2.bf16.msra.mxu0 0
    %1427 = vmatprep.subr.bf16.mxu0 0
    %1428 = vmatpush2.bf16.msra.mxu0 0
    %1429 = vmatprep.subr.bf16.mxu0 0
    %1430 = vmatpush2.bf16.msra.mxu0 0
    %1431 = vmatprep.subr.bf16.mxu0 0
    %1432 = vmatpush2.bf16.msra.mxu0 0
    %1433 = vmatprep.subr.bf16.mxu0 0
    %1434 = vmatpush2.bf16.msra.mxu0 0
    %1435 = vmatprep.subr.bf16.mxu0 0
    %1436 = vmatpush2.bf16.msra.mxu0 0
    %1437 = vmatprep.subr.bf16.mxu0 0
    %1438 = vmatpush2.bf16.msra.mxu0 0
    %1439 = vmatprep.mubr.bf16.mxu0 0
    %1440 = vmatmul.mubr.bf16.gmra.mxu0 %v191
    %v1441 = vpop.f32.mrf.mxu0
    %v1442 = vadd.f32 %v1389, %v1441
    %v1443 = vpop.f32.mrf.mxu0
    %v1444 = vadd.f32 %v1391, %v1443
    %v1445 = vpop.f32.mrf.mxu0
    %v1446 = vadd.f32 %v1393, %v1445
    %v1447 = vpop.f32.mrf.mxu0
    %v1448 = vadd.f32 %v1395, %v1447
    %1449 = vmatprep.mubr.bf16.mxu0 0
    %1450 = vmatmul.mubr.bf16.gmra.mxu0 %v200
    %v1451 = vpop.f32.mrf.mxu0
    %v1452 = vadd.f32 %v1399, %v1451
    %v1453 = vpop.f32.mrf.mxu0
    %v1454 = vadd.f32 %v1401, %v1453
    %v1455 = vpop.f32.mrf.mxu0
    %v1456 = vadd.f32 %v1403, %v1455
    %v1457 = vpop.f32.mrf.mxu0
    %v1458 = vadd.f32 %v1405, %v1457
    %1459 = vdwg.mxu0
    %1460 = vmatprep.subr.bf16.mxu0 %v1029
    %1461 = vmatpush1.bf16.msra.mxu0 %v1028
    %1462 = vmatprep.subr.bf16.mxu0 %v1021
    %1463 = vmatpush1.bf16.msra.mxu0 %v1020
    %1464 = vmatprep.subr.bf16.mxu0 %v1013
    %1465 = vmatpush1.bf16.msra.mxu0 %v1012
    %1466 = vmatprep.subr.bf16.mxu0 %v1005
    %1467 = vmatpush1.bf16.msra.mxu0 %v1004
    %1468 = vmatprep.subr.bf16.mxu0 %v997
    %1469 = vmatpush1.bf16.msra.mxu0 %v996
    %1470 = vmatprep.subr.bf16.mxu0 %v989
    %1471 = vmatpush1.bf16.msra.mxu0 %v988
    %1472 = vmatprep.subr.bf16.mxu0 %v981
    %1473 = vmatpush1.bf16.msra.mxu0 %v980
    %1474 = vmatprep.subr.bf16.mxu0 %v973
    %1475 = vmatpush1.bf16.msra.mxu0 %v972
    %1476 = vmatprep.subr.bf16.mxu0 %v1093
    %1477 = vmatpush2.bf16.msra.mxu0 %v1092
    %1478 = vmatprep.subr.bf16.mxu0 %v1085
    %1479 = vmatpush2.bf16.msra.mxu0 %v1084
    %1480 = vmatprep.subr.bf16.mxu0 %v1077
    %1481 = vmatpush2.bf16.msra.mxu0 %v1076
    %1482 = vmatprep.subr.bf16.mxu0 %v1069
    %1483 = vmatpush2.bf16.msra.mxu0 %v1068
    %1484 = vmatprep.subr.bf16.mxu0 %v1061
    %1485 = vmatpush2.bf16.msra.mxu0 %v1060
    %1486 = vmatprep.subr.bf16.mxu0 %v1053
    %1487 = vmatpush2.bf16.msra.mxu0 %v1052
    %1488 = vmatprep.subr.bf16.mxu0 %v1045
    %1489 = vmatpush2.bf16.msra.mxu0 %v1044
    %1490 = vmatprep.subr.bf16.mxu0 %v1037
    %1491 = vmatpush2.bf16.msra.mxu0 %v1036
    %1492 = vmatprep.mubr.bf16.mxu0 %v188
    %1493 = vmatmul.mubr.bf16.gmra.mxu0 %v185
    %v1494 = vpop.f32.mrf.mxu0
    %v1495 = vadd.f32 0.0, %v1494
    %v1496 = vpop.f32.mrf.mxu0
    %v1497 = vadd.f32 0.0, %v1496
    %v1498 = vpop.f32.mrf.mxu0
    %v1499 = vadd.f32 0.0, %v1498
    %v1500 = vpop.f32.mrf.mxu0
    %v1501 = vadd.f32 0.0, %v1500
    %1502 = vmatprep.mubr.bf16.mxu0 %v197
    %1503 = vmatmul.mubr.bf16.gmra.mxu0 %v194
    %v1504 = vpop.f32.mrf.mxu0
    %v1505 = vadd.f32 0.0, %v1504
    %v1506 = vpop.f32.mrf.mxu0
    %v1507 = vadd.f32 0.0, %v1506
    %v1508 = vpop.f32.mrf.mxu0
    %v1509 = vadd.f32 0.0, %v1508
    %v1510 = vpop.f32.mrf.mxu0
    %v1511 = vadd.f32 0.0, %v1510
    %1512 = vdwg.mxu0
    %1513 = vmatprep.subr.bf16.mxu0 %v1157
    %1514 = vmatpush1.bf16.msra.mxu0 %v1156
    %1515 = vmatprep.subr.bf16.mxu0 %v1149
    %1516 = vmatpush1.bf16.msra.mxu0 %v1148
    %1517 = vmatprep.subr.bf16.mxu0 %v1141
    %1518 = vmatpush1.bf16.msra.mxu0 %v1140
    %1519 = vmatprep.subr.bf16.mxu0 %v1133
    %1520 = vmatpush1.bf16.msra.mxu0 %v1132
    %1521 = vmatprep.subr.bf16.mxu0 %v1125
    %1522 = vmatpush1.bf16.msra.mxu0 %v1124
    %1523 = vmatprep.subr.bf16.mxu0 %v1117
    %1524 = vmatpush1.bf16.msra.mxu0 %v1116
    %1525 = vmatprep.subr.bf16.mxu0 %v1109
    %1526 = vmatpush1.bf16.msra.mxu0 %v1108
    %1527 = vmatprep.subr.bf16.mxu0 %v1101
    %1528 = vmatpush1.bf16.msra.mxu0 %v1100
    %1529 = vmatprep.subr.bf16.mxu0 0
    %1530 = vmatpush2.bf16.msra.mxu0 0
    %1531 = vmatprep.subr.bf16.mxu0 0
    %1532 = vmatpush2.bf16.msra.mxu0 0
    %1533 = vmatprep.subr.bf16.mxu0 0
    %1534 = vmatpush2.bf16.msra.mxu0 0
    %1535 = vmatprep.subr.bf16.mxu0 0
    %1536 = vmatpush2.bf16.msra.mxu0 0
    %1537 = vmatprep.subr.bf16.mxu0 0
    %1538 = vmatpush2.bf16.msra.mxu0 0
    %1539 = vmatprep.subr.bf16.mxu0 0
    %1540 = vmatpush2.bf16.msra.mxu0 0
    %1541 = vmatprep.subr.bf16.mxu0 0
    %1542 = vmatpush2.bf16.msra.mxu0 0
    %1543 = vmatprep.subr.bf16.mxu0 0
    %1544 = vmatpush2.bf16.msra.mxu0 0
    %1545 = vmatprep.mubr.bf16.mxu0 0
    %1546 = vmatmul.mubr.bf16.gmra.mxu0 %v191
    %v1547 = vpop.f32.mrf.mxu0
    %v1548 = vadd.f32 %v1495, %v1547
    %v1549 = vpop.f32.mrf.mxu0
    %v1550 = vadd.f32 %v1497, %v1549
    %v1551 = vpop.f32.mrf.mxu0
    %v1552 = vadd.f32 %v1499, %v1551
    %v1553 = vpop.f32.mrf.mxu0
    %v1554 = vadd.f32 %v1501, %v1553
    %1555 = vmatprep.mubr.bf16.mxu0 0
    %1556 = vmatmul.mubr.bf16.gmra.mxu0 %v200
    %v1557 = vpop.f32.mrf.mxu0
    %v1558 = vadd.f32 %v1505, %v1557
    %v1559 = vpop.f32.mrf.mxu0
    %v1560 = vadd.f32 %v1507, %v1559
    %v1561 = vpop.f32.mrf.mxu0
    %v1562 = vadd.f32 %v1509, %v1561
    %v1563 = vpop.f32.mrf.mxu0
    %v1564 = vadd.f32 %v1511, %v1563
    %1565 = vdwg.mxu0
    %1566 = vmatprep.subr.bf16.mxu0 %v1031
    %1567 = vmatpush1.bf16.msra.mxu0 %v1030
    %1568 = vmatprep.subr.bf16.mxu0 %v1023
    %1569 = vmatpush1.bf16.msra.mxu0 %v1022
    %1570 = vmatprep.subr.bf16.mxu0 %v1015
    %1571 = vmatpush1.bf16.msra.mxu0 %v1014
    %1572 = vmatprep.subr.bf16.mxu0 %v1007
    %1573 = vmatpush1.bf16.msra.mxu0 %v1006
    %1574 = vmatprep.subr.bf16.mxu0 %v999
    %1575 = vmatpush1.bf16.msra.mxu0 %v998
    %1576 = vmatprep.subr.bf16.mxu0 %v991
    %1577 = vmatpush1.bf16.msra.mxu0 %v990
    %1578 = vmatprep.subr.bf16.mxu0 %v983
    %1579 = vmatpush1.bf16.msra.mxu0 %v982
    %1580 = vmatprep.subr.bf16.mxu0 %v975
    %1581 = vmatpush1.bf16.msra.mxu0 %v974
    %1582 = vmatprep.subr.bf16.mxu0 %v1095
    %1583 = vmatpush2.bf16.msra.mxu0 %v1094
    %1584 = vmatprep.subr.bf16.mxu0 %v1087
    %1585 = vmatpush2.bf16.msra.mxu0 %v1086
    %1586 = vmatprep.subr.bf16.mxu0 %v1079
    %1587 = vmatpush2.bf16.msra.mxu0 %v1078
    %1588 = vmatprep.subr.bf16.mxu0 %v1071
    %1589 = vmatpush2.bf16.msra.mxu0 %v1070
    %1590 = vmatprep.subr.bf16.mxu0 %v1063
    %1591 = vmatpush2.bf16.msra.mxu0 %v1062
    %1592 = vmatprep.subr.bf16.mxu0 %v1055
    %1593 = vmatpush2.bf16.msra.mxu0 %v1054
    %1594 = vmatprep.subr.bf16.mxu0 %v1047
    %1595 = vmatpush2.bf16.msra.mxu0 %v1046
    %1596 = vmatprep.subr.bf16.mxu0 %v1039
    %1597 = vmatpush2.bf16.msra.mxu0 %v1038
    %1598 = vmatprep.mubr.bf16.mxu0 %v188
    %1599 = vmatmul.mubr.bf16.gmra.mxu0 %v185
    %v1600 = vpop.f32.mrf.mxu0
    %v1601 = vadd.f32 0.0, %v1600
    %v1602 = vpop.f32.mrf.mxu0
    %v1603 = vadd.f32 0.0, %v1602
    %v1604 = vpop.f32.mrf.mxu0
    %v1605 = vadd.f32 0.0, %v1604
    %v1606 = vpop.f32.mrf.mxu0
    %v1607 = vadd.f32 0.0, %v1606
    %1608 = vmatprep.mubr.bf16.mxu0 %v197
    %1609 = vmatmul.mubr.bf16.gmra.mxu0 %v194
    %v1610 = vpop.f32.mrf.mxu0
    %v1611 = vadd.f32 0.0, %v1610
    %v1612 = vpop.f32.mrf.mxu0
    %v1613 = vadd.f32 0.0, %v1612
    %v1614 = vpop.f32.mrf.mxu0
    %v1615 = vadd.f32 0.0, %v1614
    %v1616 = vpop.f32.mrf.mxu0
    %v1617 = vadd.f32 0.0, %v1616
    %1618 = vdwg.mxu0
    %1619 = vmatprep.subr.bf16.mxu0 %v1159
    %1620 = vmatpush1.bf16.msra.mxu0 %v1158
    %1621 = vmatprep.subr.bf16.mxu0 %v1151
    %1622 = vmatpush1.bf16.msra.mxu0 %v1150
    %1623 = vmatprep.subr.bf16.mxu0 %v1143
    %1624 = vmatpush1.bf16.msra.mxu0 %v1142
    %1625 = vmatprep.subr.bf16.mxu0 %v1135
    %1626 = vmatpush1.bf16.msra.mxu0 %v1134
    %1627 = vmatprep.subr.bf16.mxu0 %v1127
    %1628 = vmatpush1.bf16.msra.mxu0 %v1126
    %1629 = vmatprep.subr.bf16.mxu0 %v1119
    %1630 = vmatpush1.bf16.msra.mxu0 %v1118
    %1631 = vmatprep.subr.bf16.mxu0 %v1111
    %1632 = vmatpush1.bf16.msra.mxu0 %v1110
    %1633 = vmatprep.subr.bf16.mxu0 %v1103
    %1634 = vmatpush1.bf16.msra.mxu0 %v1102
    %1635 = vmatprep.subr.bf16.mxu0 0
    %1636 = vmatpush2.bf16.msra.mxu0 0
    %1637 = vmatprep.subr.bf16.mxu0 0
    %1638 = vmatpush2.bf16.msra.mxu0 0
    %1639 = vmatprep.subr.bf16.mxu0 0
    %1640 = vmatpush2.bf16.msra.mxu0 0
    %1641 = vmatprep.subr.bf16.mxu0 0
    %1642 = vmatpush2.bf16.msra.mxu0 0
    %1643 = vmatprep.subr.bf16.mxu0 0
    %1644 = vmatpush2.bf16.msra.mxu0 0
    %1645 = vmatprep.subr.bf16.mxu0 0
    %1646 = vmatpush2.bf16.msra.mxu0 0
    %1647 = vmatprep.subr.bf16.mxu0 0
    %1648 = vmatpush2.bf16.msra.mxu0 0
    %1649 = vmatprep.subr.bf16.mxu0 0
    %1650 = vmatpush2.bf16.msra.mxu0 0
    %1651 = vmatprep.mubr.bf16.mxu0 0
    %1652 = vmatmul.mubr.bf16.gmra.mxu0 %v191
    %v1653 = vpop.f32.mrf.mxu0
    %v1654 = vadd.f32 %v1601, %v1653
    %v1655 = vpop.f32.mrf.mxu0
    %v1656 = vadd.f32 %v1603, %v1655
    %v1657 = vpop.f32.mrf.mxu0
    %v1658 = vadd.f32 %v1605, %v1657
    %v1659 = vpop.f32.mrf.mxu0
    %v1660 = vadd.f32 %v1607, %v1659
    %1661 = vmatprep.mubr.bf16.mxu0 0
    %1662 = vmatmul.mubr.bf16.gmra.mxu0 %v200
    %v1663 = vpop.f32.mrf.mxu0
    %v1664 = vadd.f32 %v1611, %v1663
    %v1665 = vpop.f32.mrf.mxu0
    %v1666 = vadd.f32 %v1613, %v1665
    %v1667 = vpop.f32.mrf.mxu0
    %v1668 = vadd.f32 %v1615, %v1667
    %v1669 = vpop.f32.mrf.mxu0
    %v1670 = vadd.f32 %v1617, %v1669
    %1671 = vdwg.mxu0
    %1672 = vmatprep.subr.bf16.mxu0 %v1033
    %1673 = vmatpush1.bf16.msra.mxu0 %v1032
    %1674 = vmatprep.subr.bf16.mxu0 %v1025
    %1675 = vmatpush1.bf16.msra.mxu0 %v1024
    %1676 = vmatprep.subr.bf16.mxu0 %v1017
    %1677 = vmatpush1.bf16.msra.mxu0 %v1016
    %1678 = vmatprep.subr.bf16.mxu0 %v1009
    %1679 = vmatpush1.bf16.msra.mxu0 %v1008
    %1680 = vmatprep.subr.bf16.mxu0 %v1001
    %1681 = vmatpush1.bf16.msra.mxu0 %v1000
    %1682 = vmatprep.subr.bf16.mxu0 %v993
    %1683 = vmatpush1.bf16.msra.mxu0 %v992
    %1684 = vmatprep.subr.bf16.mxu0 %v985
    %1685 = vmatpush1.bf16.msra.mxu0 %v984
    %1686 = vmatprep.subr.bf16.mxu0 %v977
    %1687 = vmatpush1.bf16.msra.mxu0 %v976
    %1688 = vmatprep.subr.bf16.mxu0 %v1097
    %1689 = vmatpush2.bf16.msra.mxu0 %v1096
    %1690 = vmatprep.subr.bf16.mxu0 %v1089
    %1691 = vmatpush2.bf16.msra.mxu0 %v1088
    %1692 = vmatprep.subr.bf16.mxu0 %v1081
    %1693 = vmatpush2.bf16.msra.mxu0 %v1080
    %1694 = vmatprep.subr.bf16.mxu0 %v1073
    %1695 = vmatpush2.bf16.msra.mxu0 %v1072
    %1696 = vmatprep.subr.bf16.mxu0 %v1065
    %1697 = vmatpush2.bf16.msra.mxu0 %v1064
    %1698 = vmatprep.subr.bf16.mxu0 %v1057
    %1699 = vmatpush2.bf16.msra.mxu0 %v1056
    %1700 = vmatprep.subr.bf16.mxu0 %v1049
    %1701 = vmatpush2.bf16.msra.mxu0 %v1048
    %1702 = vmatprep.subr.bf16.mxu0 %v1041
    %1703 = vmatpush2.bf16.msra.mxu0 %v1040
    %1704 = vmatprep.mubr.bf16.mxu0 %v188
    %1705 = vmatmul.mubr.bf16.gmra.mxu0 %v185
    %v1706 = vpop.f32.mrf.mxu0
    %v1707 = vadd.f32 0.0, %v1706
    %v1708 = vpop.f32.mrf.mxu0
    %v1709 = vadd.f32 0.0, %v1708
    %v1710 = vpop.f32.mrf.mxu0
    %v1711 = vadd.f32 0.0, %v1710
    %v1712 = vpop.f32.mrf.mxu0
    %v1713 = vadd.f32 0.0, %v1712
    %1714 = vmatprep.mubr.bf16.mxu0 %v197
    %1715 = vmatmul.mubr.bf16.gmra.mxu0 %v194
    %v1716 = vpop.f32.mrf.mxu0
    %v1717 = vadd.f32 0.0, %v1716
    %v1718 = vpop.f32.mrf.mxu0
    %v1719 = vadd.f32 0.0, %v1718
    %v1720 = vpop.f32.mrf.mxu0
    %v1721 = vadd.f32 0.0, %v1720
    %v1722 = vpop.f32.mrf.mxu0
    %v1723 = vadd.f32 0.0, %v1722
    %1724 = vdwg.mxu0
    %1725 = vmatprep.subr.bf16.mxu0 %v1161
    %1726 = vmatpush1.bf16.msra.mxu0 %v1160
    %1727 = vmatprep.subr.bf16.mxu0 %v1153
    %1728 = vmatpush1.bf16.msra.mxu0 %v1152
    %1729 = vmatprep.subr.bf16.mxu0 %v1145
    %1730 = vmatpush1.bf16.msra.mxu0 %v1144
    %1731 = vmatprep.subr.bf16.mxu0 %v1137
    %1732 = vmatpush1.bf16.msra.mxu0 %v1136
    %1733 = vmatprep.subr.bf16.mxu0 %v1129
    %1734 = vmatpush1.bf16.msra.mxu0 %v1128
    %1735 = vmatprep.subr.bf16.mxu0 %v1121
    %1736 = vmatpush1.bf16.msra.mxu0 %v1120
    %1737 = vmatprep.subr.bf16.mxu0 %v1113
    %1738 = vmatpush1.bf16.msra.mxu0 %v1112
    %1739 = vmatprep.subr.bf16.mxu0 %v1105
    %1740 = vmatpush1.bf16.msra.mxu0 %v1104
    %1741 = vmatprep.subr.bf16.mxu0 0
    %1742 = vmatpush2.bf16.msra.mxu0 0
    %1743 = vmatprep.subr.bf16.mxu0 0
    %1744 = vmatpush2.bf16.msra.mxu0 0
    %1745 = vmatprep.subr.bf16.mxu0 0
    %1746 = vmatpush2.bf16.msra.mxu0 0
    %1747 = vmatprep.subr.bf16.mxu0 0
    %1748 = vmatpush2.bf16.msra.mxu0 0
    %1749 = vmatprep.subr.bf16.mxu0 0
    %1750 = vmatpush2.bf16.msra.mxu0 0
    %1751 = vmatprep.subr.bf16.mxu0 0
    %1752 = vmatpush2.bf16.msra.mxu0 0
    %1753 = vmatprep.subr.bf16.mxu0 0
    %1754 = vmatpush2.bf16.msra.mxu0 0
    %1755 = vmatprep.subr.bf16.mxu0 0
    %1756 = vmatpush2.bf16.msra.mxu0 0
    %1757 = vmatprep.mubr.bf16.mxu0 0
    %1758 = vmatmul.mubr.bf16.gmra.mxu0 %v191
    %v1759 = vpop.f32.mrf.mxu0
    %v1760 = vadd.f32 %v1707, %v1759
    %v1761 = vpop.f32.mrf.mxu0
    %v1762 = vadd.f32 %v1709, %v1761
    %v1763 = vpop.f32.mrf.mxu0
    %v1764 = vadd.f32 %v1711, %v1763
    %v1765 = vpop.f32.mrf.mxu0
    %v1766 = vadd.f32 %v1713, %v1765
    %1767 = vmatprep.mubr.bf16.mxu0 0
    %1768 = vmatmul.mubr.bf16.gmra.mxu0 %v200
    %v1769 = vpop.f32.mrf.mxu0
    %v1770 = vadd.f32 %v1717, %v1769
    %v1771 = vpop.f32.mrf.mxu0
    %v1772 = vadd.f32 %v1719, %v1771
    %v1773 = vpop.f32.mrf.mxu0
    %v1774 = vadd.f32 %v1721, %v1773
    %v1775 = vpop.f32.mrf.mxu0
    %v1776 = vadd.f32 %v1723, %v1775
    %1777 = vdwg.mxu0
    %v1778 = vmax.f32 %v1442, %v1548
    %v1779 = vmax.f32 %v1444, %v1550
    %v1780 = vmax.f32 %v1446, %v1552
    %v1781 = vmax.f32 %v1448, %v1554
    %v1782 = vmax.f32 %v1452, %v1558
    %v1783 = vmax.f32 %v1454, %v1560
    %v1784 = vmax.f32 %v1456, %v1562
    %v1785 = vmax.f32 %v1458, %v1564
    %v1786 = vmax.f32 %v1654, %v1760
    %v1787 = vmax.f32 %v1656, %v1762
    %v1788 = vmax.f32 %v1658, %v1764
    %v1789 = vmax.f32 %v1660, %v1766
    %v1790 = vmax.f32 %v1664, %v1770
    %v1791 = vmax.f32 %v1666, %v1772
    %v1792 = vmax.f32 %v1668, %v1774
    %v1793 = vmax.f32 %v1670, %v1776
    %v1794 = vmax.f32 %v1778, %v1786
    %v1795 = vmax.f32 %v1779, %v1787
    %v1796 = vmax.f32 %v1780, %v1788
    %v1797 = vmax.f32 %v1781, %v1789
    %v1798 = vmax.f32 %v1782, %v1790
    %v1799 = vmax.f32 %v1783, %v1791
    %v1800 = vmax.f32 %v1784, %v1792
    %v1801 = vmax.f32 %v1785, %v1793
    %v1802 = vld [vmem:[%s2] sm:$0x3]
    %v1804 = vlaneseq
    %v1805 = vshrl.u32 %v1804, 7
    %v1806 = vsub.s32 0, %v1805
    %v1807 = vrot.slane %v1802, %v1806
    %v1808 = vlaneseq
    %v1809 = vshrl.u32 %v1808, 7
    %v1810 = vsub.s32 1, %v1809
    %v1811 = vrot.slane %v1802, %v1810
    %v1814 = vadd.f32 %v1794, %v1807
    %v1815 = vadd.f32 %v1795, %v1811
    %v1816 = vadd.f32 %v1796, %v1807
    %v1817 = vadd.f32 %v1797, %v1811
    %v1818 = vadd.f32 %v1798, %v1807
    %v1819 = vadd.f32 %v1799, %v1811
    %v1820 = vadd.f32 %v1800, %v1807
    %v1821 = vadd.f32 %v1801, %v1811
    %v1822 = vmax.f32 %v1814, 0.0
    %v1823 = vmax.f32 %v1815, 0.0
    %v1824 = vmax.f32 %v1816, 0.0
    %v1825 = vmax.f32 %v1817, 0.0
    %v1826 = vmax.f32 %v1818, 0.0
    %v1827 = vmax.f32 %v1819, 0.0
    %v1828 = vmax.f32 %v1820, 0.0
    %v1829 = vmax.f32 %v1821, 0.0
    %v1830 = vpack.c.bf16 %v1824, %v1822
    %v1831 = vpack.c.bf16 %v1825, %v1823
    %v1832 = vpack.c.bf16 %v1828, %v1826
    %v1833 = vpack.c.bf16 %v1829, %v1827
    %v1835 = vshrl.u32 %v1830, 16
    %v1837 = vrot.slane %v1835, 3
    %v1838 = vshll.u32 %v1830, 16
    %v1840 = vrot.slane %v1838, 4
    %v1841 = vor.u32 %v1837, %v1840
    %v1843 = vshrl.u32 %v1831, 16
    %v1845 = vrot.slane %v1843, 3
    %v1846 = vshll.u32 %v1831, 16
    %v1848 = vrot.slane %v1846, 4
    %v1849 = vor.u32 %v1845, %v1848
    %v1851 = vshrl.u32 %v1832, 16
    %v1853 = vrot.slane %v1851, 3
    %v1854 = vshll.u32 %v1832, 16
    %v1856 = vrot.slane %v1854, 4
    %v1857 = vor.u32 %v1853, %v1856
    %v1859 = vshrl.u32 %v1833, 16
    %v1861 = vrot.slane %v1859, 3
    %v1862 = vshll.u32 %v1833, 16
    %v1864 = vrot.slane %v1862, 4
    %v1865 = vor.u32 %v1861, %v1864
    %v1870 = vsel %vm72, 0, %v1841
    %v1871 = vsel %vm72, 0, %v1849
    %v1872 = vsel %vm72, 0, %v1857
    %v1873 = vsel %vm72, 0, %v1865
    %v1874 = vrot.slane %v1838, 1
    %v1875 = vor.u32 %v1835, %v1874
    %v1876 = vrot.slane %v1846, 1
    %v1877 = vor.u32 %v1843, %v1876
    %v1878 = vrot.slane %v1854, 1
    %v1879 = vor.u32 %v1851, %v1878
    %v1880 = vrot.slane %v1862, 1
    %v1881 = vor.u32 %v1859, %v1880
    %v1886 = vsel %vm99, %v1875, 0
    %v1887 = vsel %vm99, %v1877, 0
    %v1888 = vsel %vm99, %v1879, 0
    %v1889 = vsel %vm99, %v1881, 0
    %v1894 = vrot.slane %v1830, 4
    %v1895 = vrot.slane %v1831, 4
    %v1896 = vrot.slane %v1832, 4
    %v1897 = vrot.slane %v1833, 4
    %v1906 = vunpack.c.l.b16 %v1870
    %v1907 = vunpack.c.l.b16 %v1871
    %v1908 = vunpack.c.l.b16 %v1830
    %v1909 = vunpack.c.l.b16 %v1831
    %v1910 = vunpack.c.l.b16 %v1894
    %v1911 = vunpack.c.l.b16 %v1895
    %v1912 = vunpack.c.l.b16 %v1886
    %v1913 = vunpack.c.l.b16 %v1887
    %v1914 = vunpack.c.l.b16 %v1872
    %v1915 = vunpack.c.l.b16 %v1873
    %v1916 = vunpack.c.l.b16 %v1832
    %v1917 = vunpack.c.l.b16 %v1833
    %v1918 = vunpack.c.l.b16 %v1896
    %v1919 = vunpack.c.l.b16 %v1897
    %v1920 = vunpack.c.l.b16 %v1888
    %v1921 = vunpack.c.l.b16 %v1889
    %v1922 = vld [vmem:[%s3] sm:$0xff]
    %v1923 = vld [vmem:[%s3 + $0x8] sm:$0xff]
    %v1924 = vld [vmem:[%s3 + $0x10] sm:$0xff]
    %v1925 = vld [vmem:[%s3 + $0x18] sm:$0xff]
    %v1926 = vld [vmem:[%s3 + $0x20] sm:$0xff]
    %v1927 = vld [vmem:[%s3 + $0x28] sm:$0xff]
    %v1928 = vld [vmem:[%s3 + $0x30] sm:$0xff]
    %v1929 = vld [vmem:[%s3 + $0x38] sm:$0xff]
    %v1930 = vld [vmem:[%s3 + $0x40] sm:$0xff]
    %v1931 = vld [vmem:[%s3 + $0x48] sm:$0xff]
    %v1932 = vld [vmem:[%s3 + $0x50] sm:$0xff]
    %v1933 = vld [vmem:[%s3 + $0x58] sm:$0xff]
    %v1934 = vld [vmem:[%s3 + $0x60] sm:$0xff]
    %v1935 = vld [vmem:[%s3 + $0x68] sm:$0xff]
    %v1936 = vld [vmem:[%s3 + $0x70] sm:$0xff]
    %v1937 = vld [vmem:[%s3 + $0x78] sm:$0xff]
    %v1938 = vld [vmem:[%s3 + $0x80] sm:$0xff]
    %v1939 = vld [vmem:[%s3 + $0x88] sm:$0xff]
    %v1940 = vld [vmem:[%s3 + $0x90] sm:$0xff]
    %v1941 = vld [vmem:[%s3 + $0x98] sm:$0xff]
    %v1942 = vld [vmem:[%s3 + $0xa0] sm:$0xff]
    %v1943 = vld [vmem:[%s3 + $0xa8] sm:$0xff]
    %v1944 = vld [vmem:[%s3 + $0xb0] sm:$0xff]
    %v1945 = vld [vmem:[%s3 + $0xb8] sm:$0xff]
    %v1946 = vld [vmem:[%s3 + $0xc0] sm:$0xff]
    %v1947 = vld [vmem:[%s3 + $0xc8] sm:$0xff]
    %v1948 = vld [vmem:[%s3 + $0xd0] sm:$0xff]
    %v1949 = vld [vmem:[%s3 + $0xd8] sm:$0xff]
    %v1950 = vld [vmem:[%s3 + $0xe0] sm:$0xff]
    %v1951 = vld [vmem:[%s3 + $0xe8] sm:$0xff]
    %v1952 = vld [vmem:[%s3 + $0xf0] sm:$0xff]
    %v1953 = vld [vmem:[%s3 + $0xf8] sm:$0xff]
    %v1954 = vld [vmem:[%s3 + $0x100] sm:$0xff]
    %v1955 = vld [vmem:[%s3 + $0x108] sm:$0xff]
    %v1956 = vld [vmem:[%s3 + $0x110] sm:$0xff]
    %v1957 = vld [vmem:[%s3 + $0x118] sm:$0xff]
    %v1958 = vld [vmem:[%s3 + $0x120] sm:$0xff]
    %v1959 = vld [vmem:[%s3 + $0x128] sm:$0xff]
    %v1960 = vld [vmem:[%s3 + $0x130] sm:$0xff]
    %v1961 = vld [vmem:[%s3 + $0x138] sm:$0xff]
    %v1962 = vld [vmem:[%s3 + $0x140] sm:$0xff]
    %v1963 = vld [vmem:[%s3 + $0x148] sm:$0xff]
    %v1964 = vld [vmem:[%s3 + $0x150] sm:$0xff]
    %v1965 = vld [vmem:[%s3 + $0x158] sm:$0xff]
    %v1966 = vld [vmem:[%s3 + $0x160] sm:$0xff]
    %v1967 = vld [vmem:[%s3 + $0x168] sm:$0xff]
    %v1968 = vld [vmem:[%s3 + $0x170] sm:$0xff]
    %v1969 = vld [vmem:[%s3 + $0x178] sm:$0xff]
    %v1970 = vld [vmem:[%s3 + $0x180] sm:$0xff]
    %v1971 = vld [vmem:[%s3 + $0x188] sm:$0xff]
    %v1972 = vld [vmem:[%s3 + $0x190] sm:$0xff]
    %v1973 = vld [vmem:[%s3 + $0x198] sm:$0xff]
    %v1974 = vld [vmem:[%s3 + $0x1a0] sm:$0xff]
    %v1975 = vld [vmem:[%s3 + $0x1a8] sm:$0xff]
    %v1976 = vld [vmem:[%s3 + $0x1b0] sm:$0xff]
    %v1977 = vld [vmem:[%s3 + $0x1b8] sm:$0xff]
    %v1978 = vld [vmem:[%s3 + $0x1c0] sm:$0xff]
    %v1979 = vld [vmem:[%s3 + $0x1c8] sm:$0xff]
    %v1980 = vld [vmem:[%s3 + $0x1d0] sm:$0xff]
    %v1981 = vld [vmem:[%s3 + $0x1d8] sm:$0xff]
    %v1982 = vld [vmem:[%s3 + $0x1e0] sm:$0xff]
    %v1983 = vld [vmem:[%s3 + $0x1e8] sm:$0xff]
    %v1984 = vld [vmem:[%s3 + $0x1f0] sm:$0xff]
    %v1985 = vld [vmem:[%s3 + $0x1f8] sm:$0xff]
    %v1986 = vld [vmem:[%s3 + $0x200] sm:$0xff]
    %v1987 = vld [vmem:[%s3 + $0x208] sm:$0xff]
    %v1988 = vld [vmem:[%s3 + $0x210] sm:$0xff]
    %v1989 = vld [vmem:[%s3 + $0x218] sm:$0xff]
    %v1990 = vld [vmem:[%s3 + $0x220] sm:$0xff]
    %v1991 = vld [vmem:[%s3 + $0x228] sm:$0xff]
    %v1992 = vld [vmem:[%s3 + $0x230] sm:$0xff]
    %v1993 = vld [vmem:[%s3 + $0x238] sm:$0xff]
    %v1994 = vld [vmem:[%s3 + $0x240] sm:$0xff]
    %v1995 = vld [vmem:[%s3 + $0x248] sm:$0xff]
    %v1996 = vld [vmem:[%s3 + $0x250] sm:$0xff]
    %v1997 = vld [vmem:[%s3 + $0x258] sm:$0xff]
    %v1998 = vld [vmem:[%s3 + $0x260] sm:$0xff]
    %v1999 = vld [vmem:[%s3 + $0x268] sm:$0xff]
    %v2000 = vld [vmem:[%s3 + $0x270] sm:$0xff]
    %v2001 = vld [vmem:[%s3 + $0x278] sm:$0xff]
    %v2002 = vld [vmem:[%s3 + $0x280] sm:$0xff]
    %v2003 = vld [vmem:[%s3 + $0x288] sm:$0xff]
    %v2004 = vld [vmem:[%s3 + $0x290] sm:$0xff]
    %v2005 = vld [vmem:[%s3 + $0x298] sm:$0xff]
    %v2006 = vld [vmem:[%s3 + $0x2a0] sm:$0xff]
    %v2007 = vld [vmem:[%s3 + $0x2a8] sm:$0xff]
    %v2008 = vld [vmem:[%s3 + $0x2b0] sm:$0xff]
    %v2009 = vld [vmem:[%s3 + $0x2b8] sm:$0xff]
    %v2010 = vld [vmem:[%s3 + $0x2c0] sm:$0xff]
    %v2011 = vld [vmem:[%s3 + $0x2c8] sm:$0xff]
    %v2012 = vld [vmem:[%s3 + $0x2d0] sm:$0xff]
    %v2013 = vld [vmem:[%s3 + $0x2d8] sm:$0xff]
    %v2014 = vld [vmem:[%s3 + $0x2e0] sm:$0xff]
    %v2015 = vld [vmem:[%s3 + $0x2e8] sm:$0xff]
    %v2016 = vld [vmem:[%s3 + $0x2f0] sm:$0xff]
    %v2017 = vld [vmem:[%s3 + $0x2f8] sm:$0xff]
    %v2018 = vld [vmem:[%s3 + $0x300] sm:$0xff]
    %v2019 = vld [vmem:[%s3 + $0x308] sm:$0xff]
    %v2020 = vld [vmem:[%s3 + $0x310] sm:$0xff]
    %v2021 = vld [vmem:[%s3 + $0x318] sm:$0xff]
    %v2022 = vld [vmem:[%s3 + $0x320] sm:$0xff]
    %v2023 = vld [vmem:[%s3 + $0x328] sm:$0xff]
    %v2024 = vld [vmem:[%s3 + $0x330] sm:$0xff]
    %v2025 = vld [vmem:[%s3 + $0x338] sm:$0xff]
    %v2026 = vld [vmem:[%s3 + $0x340] sm:$0xff]
    %v2027 = vld [vmem:[%s3 + $0x348] sm:$0xff]
    %v2028 = vld [vmem:[%s3 + $0x350] sm:$0xff]
    %v2029 = vld [vmem:[%s3 + $0x358] sm:$0xff]
    %v2030 = vld [vmem:[%s3 + $0x360] sm:$0xff]
    %v2031 = vld [vmem:[%s3 + $0x368] sm:$0xff]
    %v2032 = vld [vmem:[%s3 + $0x370] sm:$0xff]
    %v2033 = vld [vmem:[%s3 + $0x378] sm:$0xff]
    %v2034 = vld [vmem:[%s3 + $0x380] sm:$0xff]
    %v2035 = vld [vmem:[%s3 + $0x388] sm:$0xff]
    %v2036 = vld [vmem:[%s3 + $0x390] sm:$0xff]
    %v2037 = vld [vmem:[%s3 + $0x398] sm:$0xff]
    %v2038 = vld [vmem:[%s3 + $0x3a0] sm:$0xff]
    %v2039 = vld [vmem:[%s3 + $0x3a8] sm:$0xff]
    %v2040 = vld [vmem:[%s3 + $0x3b0] sm:$0xff]
    %v2041 = vld [vmem:[%s3 + $0x3b8] sm:$0xff]
    %v2042 = vld [vmem:[%s3 + $0x3c0] sm:$0xff]
    %v2043 = vld [vmem:[%s3 + $0x3c8] sm:$0xff]
    %v2044 = vld [vmem:[%s3 + $0x3d0] sm:$0xff]
    %v2045 = vld [vmem:[%s3 + $0x3d8] sm:$0xff]
    %v2046 = vld [vmem:[%s3 + $0x3e0] sm:$0xff]
    %v2047 = vld [vmem:[%s3 + $0x3e8] sm:$0xff]
    %v2048 = vld [vmem:[%s3 + $0x3f0] sm:$0xff]
    %v2049 = vld [vmem:[%s3 + $0x3f8] sm:$0xff]
    %v2050 = vld [vmem:[%s3 + $0x400] sm:$0xff]
    %v2051 = vld [vmem:[%s3 + $0x408] sm:$0xff]
    %v2052 = vld [vmem:[%s3 + $0x410] sm:$0xff]
    %v2053 = vld [vmem:[%s3 + $0x418] sm:$0xff]
    %v2054 = vld [vmem:[%s3 + $0x420] sm:$0xff]
    %v2055 = vld [vmem:[%s3 + $0x428] sm:$0xff]
    %v2056 = vld [vmem:[%s3 + $0x430] sm:$0xff]
    %v2057 = vld [vmem:[%s3 + $0x438] sm:$0xff]
    %v2058 = vld [vmem:[%s3 + $0x440] sm:$0xff]
    %v2059 = vld [vmem:[%s3 + $0x448] sm:$0xff]
    %v2060 = vld [vmem:[%s3 + $0x450] sm:$0xff]
    %v2061 = vld [vmem:[%s3 + $0x458] sm:$0xff]
    %v2062 = vld [vmem:[%s3 + $0x460] sm:$0xff]
    %v2063 = vld [vmem:[%s3 + $0x468] sm:$0xff]
    %v2064 = vld [vmem:[%s3 + $0x470] sm:$0xff]
    %v2065 = vld [vmem:[%s3 + $0x478] sm:$0xff]
    %v2066 = vld [vmem:[%s3 + $0x480] sm:$0xff]
    %v2067 = vld [vmem:[%s3 + $0x488] sm:$0xff]
    %v2068 = vld [vmem:[%s3 + $0x490] sm:$0xff]
    %v2069 = vld [vmem:[%s3 + $0x498] sm:$0xff]
    %v2070 = vld [vmem:[%s3 + $0x4a0] sm:$0xff]
    %v2071 = vld [vmem:[%s3 + $0x4a8] sm:$0xff]
    %v2072 = vld [vmem:[%s3 + $0x4b0] sm:$0xff]
    %v2073 = vld [vmem:[%s3 + $0x4b8] sm:$0xff]
    %v2074 = vld [vmem:[%s3 + $0x4c0] sm:$0xff]
    %v2075 = vld [vmem:[%s3 + $0x4c8] sm:$0xff]
    %v2076 = vld [vmem:[%s3 + $0x4d0] sm:$0xff]
    %v2077 = vld [vmem:[%s3 + $0x4d8] sm:$0xff]
    %v2078 = vld [vmem:[%s3 + $0x4e0] sm:$0xff]
    %v2079 = vld [vmem:[%s3 + $0x4e8] sm:$0xff]
    %v2080 = vld [vmem:[%s3 + $0x4f0] sm:$0xff]
    %v2081 = vld [vmem:[%s3 + $0x4f8] sm:$0xff]
    %v2082 = vld [vmem:[%s3 + $0x500] sm:$0xff]
    %v2083 = vld [vmem:[%s3 + $0x508] sm:$0xff]
    %v2084 = vld [vmem:[%s3 + $0x510] sm:$0xff]
    %v2085 = vld [vmem:[%s3 + $0x518] sm:$0xff]
    %v2086 = vld [vmem:[%s3 + $0x520] sm:$0xff]
    %v2087 = vld [vmem:[%s3 + $0x528] sm:$0xff]
    %v2088 = vld [vmem:[%s3 + $0x530] sm:$0xff]
    %v2089 = vld [vmem:[%s3 + $0x538] sm:$0xff]
    %v2090 = vld [vmem:[%s3 + $0x540] sm:$0xff]
    %v2091 = vld [vmem:[%s3 + $0x548] sm:$0xff]
    %v2092 = vld [vmem:[%s3 + $0x550] sm:$0xff]
    %v2093 = vld [vmem:[%s3 + $0x558] sm:$0xff]
    %v2094 = vld [vmem:[%s3 + $0x560] sm:$0xff]
    %v2095 = vld [vmem:[%s3 + $0x568] sm:$0xff]
    %v2096 = vld [vmem:[%s3 + $0x570] sm:$0xff]
    %v2097 = vld [vmem:[%s3 + $0x578] sm:$0xff]
    %v2098 = vld [vmem:[%s3 + $0x580] sm:$0xff]
    %v2099 = vld [vmem:[%s3 + $0x588] sm:$0xff]
    %v2100 = vld [vmem:[%s3 + $0x590] sm:$0xff]
    %v2101 = vld [vmem:[%s3 + $0x598] sm:$0xff]
    %v2102 = vld [vmem:[%s3 + $0x5a0] sm:$0xff]
    %v2103 = vld [vmem:[%s3 + $0x5a8] sm:$0xff]
    %v2104 = vld [vmem:[%s3 + $0x5b0] sm:$0xff]
    %v2105 = vld [vmem:[%s3 + $0x5b8] sm:$0xff]
    %v2106 = vld [vmem:[%s3 + $0x5c0] sm:$0xff]
    %v2107 = vld [vmem:[%s3 + $0x5c8] sm:$0xff]
    %v2108 = vld [vmem:[%s3 + $0x5d0] sm:$0xff]
    %v2109 = vld [vmem:[%s3 + $0x5d8] sm:$0xff]
    %v2110 = vld [vmem:[%s3 + $0x5e0] sm:$0xff]
    %v2111 = vld [vmem:[%s3 + $0x5e8] sm:$0xff]
    %v2112 = vld [vmem:[%s3 + $0x5f0] sm:$0xff]
    %v2113 = vld [vmem:[%s3 + $0x5f8] sm:$0xff]
    %v2114 = vld [vmem:[%s3 + $0x600] sm:$0xff]
    %v2115 = vld [vmem:[%s3 + $0x608] sm:$0xff]
    %v2116 = vld [vmem:[%s3 + $0x610] sm:$0xff]
    %v2117 = vld [vmem:[%s3 + $0x618] sm:$0xff]
    %v2118 = vld [vmem:[%s3 + $0x620] sm:$0xff]
    %v2119 = vld [vmem:[%s3 + $0x628] sm:$0xff]
    %v2120 = vld [vmem:[%s3 + $0x630] sm:$0xff]
    %v2121 = vld [vmem:[%s3 + $0x638] sm:$0xff]
    %v2122 = vld [vmem:[%s3 + $0x640] sm:$0xff]
    %v2123 = vld [vmem:[%s3 + $0x648] sm:$0xff]
    %v2124 = vld [vmem:[%s3 + $0x650] sm:$0xff]
    %v2125 = vld [vmem:[%s3 + $0x658] sm:$0xff]
    %v2126 = vld [vmem:[%s3 + $0x660] sm:$0xff]
    %v2127 = vld [vmem:[%s3 + $0x668] sm:$0xff]
    %v2128 = vld [vmem:[%s3 + $0x670] sm:$0xff]
    %v2129 = vld [vmem:[%s3 + $0x678] sm:$0xff]
    %v2130 = vld [vmem:[%s3 + $0x680] sm:$0xff]
    %v2131 = vld [vmem:[%s3 + $0x688] sm:$0xff]
    %v2132 = vld [vmem:[%s3 + $0x690] sm:$0xff]
    %v2133 = vld [vmem:[%s3 + $0x698] sm:$0xff]
    %v2134 = vld [vmem:[%s3 + $0x6a0] sm:$0xff]
    %v2135 = vld [vmem:[%s3 + $0x6a8] sm:$0xff]
    %v2136 = vld [vmem:[%s3 + $0x6b0] sm:$0xff]
    %v2137 = vld [vmem:[%s3 + $0x6b8] sm:$0xff]
    %v2138 = vld [vmem:[%s3 + $0x6c0] sm:$0xff]
    %v2139 = vld [vmem:[%s3 + $0x6c8] sm:$0xff]
    %v2140 = vld [vmem:[%s3 + $0x6d0] sm:$0xff]
    %v2141 = vld [vmem:[%s3 + $0x6d8] sm:$0xff]
    %v2142 = vld [vmem:[%s3 + $0x6e0] sm:$0xff]
    %v2143 = vld [vmem:[%s3 + $0x6e8] sm:$0xff]
    %v2144 = vld [vmem:[%s3 + $0x6f0] sm:$0xff]
    %v2145 = vld [vmem:[%s3 + $0x6f8] sm:$0xff]
    %v2146 = vld [vmem:[%s3 + $0x700] sm:$0xff]
    %v2147 = vld [vmem:[%s3 + $0x708] sm:$0xff]
    %v2148 = vld [vmem:[%s3 + $0x710] sm:$0xff]
    %v2149 = vld [vmem:[%s3 + $0x718] sm:$0xff]
    %v2150 = vld [vmem:[%s3 + $0x720] sm:$0xff]
    %v2151 = vld [vmem:[%s3 + $0x728] sm:$0xff]
    %v2152 = vld [vmem:[%s3 + $0x730] sm:$0xff]
    %v2153 = vld [vmem:[%s3 + $0x738] sm:$0xff]
    %v2154 = vld [vmem:[%s3 + $0x740] sm:$0xff]
    %v2155 = vld [vmem:[%s3 + $0x748] sm:$0xff]
    %v2156 = vld [vmem:[%s3 + $0x750] sm:$0xff]
    %v2157 = vld [vmem:[%s3 + $0x758] sm:$0xff]
    %v2158 = vld [vmem:[%s3 + $0x760] sm:$0xff]
    %v2159 = vld [vmem:[%s3 + $0x768] sm:$0xff]
    %v2160 = vld [vmem:[%s3 + $0x770] sm:$0xff]
    %v2161 = vld [vmem:[%s3 + $0x778] sm:$0xff]
    %v2162 = vld [vmem:[%s3 + $0x780] sm:$0xff]
    %v2163 = vld [vmem:[%s3 + $0x788] sm:$0xff]
    %v2164 = vld [vmem:[%s3 + $0x790] sm:$0xff]
    %v2165 = vld [vmem:[%s3 + $0x798] sm:$0xff]
    %v2166 = vld [vmem:[%s3 + $0x7a0] sm:$0xff]
    %v2167 = vld [vmem:[%s3 + $0x7a8] sm:$0xff]
    %v2168 = vld [vmem:[%s3 + $0x7b0] sm:$0xff]
    %v2169 = vld [vmem:[%s3 + $0x7b8] sm:$0xff]
    %v2170 = vld [vmem:[%s3 + $0x7c0] sm:$0xff]
    %v2171 = vld [vmem:[%s3 + $0x7c8] sm:$0xff]
    %v2172 = vld [vmem:[%s3 + $0x7d0] sm:$0xff]
    %v2173 = vld [vmem:[%s3 + $0x7d8] sm:$0xff]
    %v2174 = vld [vmem:[%s3 + $0x7e0] sm:$0xff]
    %v2175 = vld [vmem:[%s3 + $0x7e8] sm:$0xff]
    %v2176 = vld [vmem:[%s3 + $0x7f0] sm:$0xff]
    %v2177 = vld [vmem:[%s3 + $0x7f8] sm:$0xff]
    %v2178 = vld [vmem:[%s3 + $0x800] sm:$0xff]
    %v2179 = vld [vmem:[%s3 + $0x808] sm:$0xff]
    %v2180 = vld [vmem:[%s3 + $0x810] sm:$0xff]
    %v2181 = vld [vmem:[%s3 + $0x818] sm:$0xff]
    %v2182 = vld [vmem:[%s3 + $0x820] sm:$0xff]
    %v2183 = vld [vmem:[%s3 + $0x828] sm:$0xff]
    %v2184 = vld [vmem:[%s3 + $0x830] sm:$0xff]
    %v2185 = vld [vmem:[%s3 + $0x838] sm:$0xff]
    %v2186 = vld [vmem:[%s3 + $0x840] sm:$0xff]
    %v2187 = vld [vmem:[%s3 + $0x848] sm:$0xff]
    %v2188 = vld [vmem:[%s3 + $0x850] sm:$0xff]
    %v2189 = vld [vmem:[%s3 + $0x858] sm:$0xff]
    %v2190 = vld [vmem:[%s3 + $0x860] sm:$0xff]
    %v2191 = vld [vmem:[%s3 + $0x868] sm:$0xff]
    %v2192 = vld [vmem:[%s3 + $0x870] sm:$0xff]
    %v2193 = vld [vmem:[%s3 + $0x878] sm:$0xff]
    %v2194 = vld [vmem:[%s3 + $0x880] sm:$0xff]
    %v2195 = vld [vmem:[%s3 + $0x888] sm:$0xff]
    %v2196 = vld [vmem:[%s3 + $0x890] sm:$0xff]
    %v2197 = vld [vmem:[%s3 + $0x898] sm:$0xff]
    %v2198 = vld [vmem:[%s3 + $0x8a0] sm:$0xff]
    %v2199 = vld [vmem:[%s3 + $0x8a8] sm:$0xff]
    %v2200 = vld [vmem:[%s3 + $0x8b0] sm:$0xff]
    %v2201 = vld [vmem:[%s3 + $0x8b8] sm:$0xff]
    %v2202 = vld [vmem:[%s3 + $0x8c0] sm:$0xff]
    %v2203 = vld [vmem:[%s3 + $0x8c8] sm:$0xff]
    %v2204 = vld [vmem:[%s3 + $0x8d0] sm:$0xff]
    %v2205 = vld [vmem:[%s3 + $0x8d8] sm:$0xff]
    %v2206 = vld [vmem:[%s3 + $0x8e0] sm:$0xff]
    %v2207 = vld [vmem:[%s3 + $0x8e8] sm:$0xff]
    %v2208 = vld [vmem:[%s3 + $0x8f0] sm:$0xff]
    %v2209 = vld [vmem:[%s3 + $0x8f8] sm:$0xff]
    %v2210 = vld [vmem:[%s3 + $0x900] sm:$0xff]
    %v2211 = vld [vmem:[%s3 + $0x908] sm:$0xff]
    %v2212 = vld [vmem:[%s3 + $0x910] sm:$0xff]
    %v2213 = vld [vmem:[%s3 + $0x918] sm:$0xff]
    %v2214 = vld [vmem:[%s3 + $0x920] sm:$0xff]
    %v2215 = vld [vmem:[%s3 + $0x928] sm:$0xff]
    %v2216 = vld [vmem:[%s3 + $0x930] sm:$0xff]
    %v2217 = vld [vmem:[%s3 + $0x938] sm:$0xff]
    %v2218 = vld [vmem:[%s3 + $0x940] sm:$0xff]
    %v2219 = vld [vmem:[%s3 + $0x948] sm:$0xff]
    %v2220 = vld [vmem:[%s3 + $0x950] sm:$0xff]
    %v2221 = vld [vmem:[%s3 + $0x958] sm:$0xff]
    %v2222 = vld [vmem:[%s3 + $0x960] sm:$0xff]
    %v2223 = vld [vmem:[%s3 + $0x968] sm:$0xff]
    %v2224 = vld [vmem:[%s3 + $0x970] sm:$0xff]
    %v2225 = vld [vmem:[%s3 + $0x978] sm:$0xff]
    %v2226 = vld [vmem:[%s3 + $0x980] sm:$0xff]
    %v2227 = vld [vmem:[%s3 + $0x988] sm:$0xff]
    %v2228 = vld [vmem:[%s3 + $0x990] sm:$0xff]
    %v2229 = vld [vmem:[%s3 + $0x998] sm:$0xff]
    %v2230 = vld [vmem:[%s3 + $0x9a0] sm:$0xff]
    %v2231 = vld [vmem:[%s3 + $0x9a8] sm:$0xff]
    %v2232 = vld [vmem:[%s3 + $0x9b0] sm:$0xff]
    %v2233 = vld [vmem:[%s3 + $0x9b8] sm:$0xff]
    %v2234 = vld [vmem:[%s3 + $0x9c0] sm:$0xff]
    %v2235 = vld [vmem:[%s3 + $0x9c8] sm:$0xff]
    %v2236 = vld [vmem:[%s3 + $0x9d0] sm:$0xff]
    %v2237 = vld [vmem:[%s3 + $0x9d8] sm:$0xff]
    %v2238 = vld [vmem:[%s3 + $0x9e0] sm:$0xff]
    %v2239 = vld [vmem:[%s3 + $0x9e8] sm:$0xff]
    %v2240 = vld [vmem:[%s3 + $0x9f0] sm:$0xff]
    %v2241 = vld [vmem:[%s3 + $0x9f8] sm:$0xff]
    %v2242 = vld [vmem:[%s3 + $0xa00] sm:$0xff]
    %v2243 = vld [vmem:[%s3 + $0xa08] sm:$0xff]
    %v2244 = vld [vmem:[%s3 + $0xa10] sm:$0xff]
    %v2245 = vld [vmem:[%s3 + $0xa18] sm:$0xff]
    %v2246 = vld [vmem:[%s3 + $0xa20] sm:$0xff]
    %v2247 = vld [vmem:[%s3 + $0xa28] sm:$0xff]
    %v2248 = vld [vmem:[%s3 + $0xa30] sm:$0xff]
    %v2249 = vld [vmem:[%s3 + $0xa38] sm:$0xff]
    %v2250 = vld [vmem:[%s3 + $0xa40] sm:$0xff]
    %v2251 = vld [vmem:[%s3 + $0xa48] sm:$0xff]
    %v2252 = vld [vmem:[%s3 + $0xa50] sm:$0xff]
    %v2253 = vld [vmem:[%s3 + $0xa58] sm:$0xff]
    %v2254 = vld [vmem:[%s3 + $0xa60] sm:$0xff]
    %v2255 = vld [vmem:[%s3 + $0xa68] sm:$0xff]
    %v2256 = vld [vmem:[%s3 + $0xa70] sm:$0xff]
    %v2257 = vld [vmem:[%s3 + $0xa78] sm:$0xff]
    %v2258 = vld [vmem:[%s3 + $0xa80] sm:$0xff]
    %v2259 = vld [vmem:[%s3 + $0xa88] sm:$0xff]
    %v2260 = vld [vmem:[%s3 + $0xa90] sm:$0xff]
    %v2261 = vld [vmem:[%s3 + $0xa98] sm:$0xff]
    %v2262 = vld [vmem:[%s3 + $0xaa0] sm:$0xff]
    %v2263 = vld [vmem:[%s3 + $0xaa8] sm:$0xff]
    %v2264 = vld [vmem:[%s3 + $0xab0] sm:$0xff]
    %v2265 = vld [vmem:[%s3 + $0xab8] sm:$0xff]
    %v2266 = vld [vmem:[%s3 + $0xac0] sm:$0xff]
    %v2267 = vld [vmem:[%s3 + $0xac8] sm:$0xff]
    %v2268 = vld [vmem:[%s3 + $0xad0] sm:$0xff]
    %v2269 = vld [vmem:[%s3 + $0xad8] sm:$0xff]
    %v2270 = vld [vmem:[%s3 + $0xae0] sm:$0xff]
    %v2271 = vld [vmem:[%s3 + $0xae8] sm:$0xff]
    %v2272 = vld [vmem:[%s3 + $0xaf0] sm:$0xff]
    %v2273 = vld [vmem:[%s3 + $0xaf8] sm:$0xff]
    %v2274 = vld [vmem:[%s3 + $0xb00] sm:$0xff]
    %v2275 = vld [vmem:[%s3 + $0xb08] sm:$0xff]
    %v2276 = vld [vmem:[%s3 + $0xb10] sm:$0xff]
    %v2277 = vld [vmem:[%s3 + $0xb18] sm:$0xff]
    %v2278 = vld [vmem:[%s3 + $0xb20] sm:$0xff]
    %v2279 = vld [vmem:[%s3 + $0xb28] sm:$0xff]
    %v2280 = vld [vmem:[%s3 + $0xb30] sm:$0xff]
    %v2281 = vld [vmem:[%s3 + $0xb38] sm:$0xff]
    %v2282 = vld [vmem:[%s3 + $0xb40] sm:$0xff]
    %v2283 = vld [vmem:[%s3 + $0xb48] sm:$0xff]
    %v2284 = vld [vmem:[%s3 + $0xb50] sm:$0xff]
    %v2285 = vld [vmem:[%s3 + $0xb58] sm:$0xff]
    %v2286 = vld [vmem:[%s3 + $0xb60] sm:$0xff]
    %v2287 = vld [vmem:[%s3 + $0xb68] sm:$0xff]
    %v2288 = vld [vmem:[%s3 + $0xb70] sm:$0xff]
    %v2289 = vld [vmem:[%s3 + $0xb78] sm:$0xff]
    %v2290 = vld [vmem:[%s3 + $0xb80] sm:$0xff]
    %v2291 = vld [vmem:[%s3 + $0xb88] sm:$0xff]
    %v2292 = vld [vmem:[%s3 + $0xb90] sm:$0xff]
    %v2293 = vld [vmem:[%s3 + $0xb98] sm:$0xff]
    %v2294 = vld [vmem:[%s3 + $0xba0] sm:$0xff]
    %v2295 = vld [vmem:[%s3 + $0xba8] sm:$0xff]
    %v2296 = vld [vmem:[%s3 + $0xbb0] sm:$0xff]
    %v2297 = vld [vmem:[%s3 + $0xbb8] sm:$0xff]
    %v2298 = vld [vmem:[%s3 + $0xbc0] sm:$0xff]
    %v2299 = vld [vmem:[%s3 + $0xbc8] sm:$0xff]
    %v2300 = vld [vmem:[%s3 + $0xbd0] sm:$0xff]
    %v2301 = vld [vmem:[%s3 + $0xbd8] sm:$0xff]
    %v2302 = vld [vmem:[%s3 + $0xbe0] sm:$0xff]
    %v2303 = vld [vmem:[%s3 + $0xbe8] sm:$0xff]
    %v2304 = vld [vmem:[%s3 + $0xbf0] sm:$0xff]
    %v2305 = vld [vmem:[%s3 + $0xbf8] sm:$0xff]
    %v2306 = vld [vmem:[%s3 + $0xc00] sm:$0xff]
    %v2307 = vld [vmem:[%s3 + $0xc08] sm:$0xff]
    %v2308 = vld [vmem:[%s3 + $0xc10] sm:$0xff]
    %v2309 = vld [vmem:[%s3 + $0xc18] sm:$0xff]
    %v2310 = vld [vmem:[%s3 + $0xc20] sm:$0xff]
    %v2311 = vld [vmem:[%s3 + $0xc28] sm:$0xff]
    %v2312 = vld [vmem:[%s3 + $0xc30] sm:$0xff]
    %v2313 = vld [vmem:[%s3 + $0xc38] sm:$0xff]
    %v2314 = vld [vmem:[%s3 + $0xc40] sm:$0xff]
    %v2315 = vld [vmem:[%s3 + $0xc48] sm:$0xff]
    %v2316 = vld [vmem:[%s3 + $0xc50] sm:$0xff]
    %v2317 = vld [vmem:[%s3 + $0xc58] sm:$0xff]
    %v2318 = vld [vmem:[%s3 + $0xc60] sm:$0xff]
    %v2319 = vld [vmem:[%s3 + $0xc68] sm:$0xff]
    %v2320 = vld [vmem:[%s3 + $0xc70] sm:$0xff]
    %v2321 = vld [vmem:[%s3 + $0xc78] sm:$0xff]
    %v2322 = vld [vmem:[%s3 + $0xc80] sm:$0xff]
    %v2323 = vld [vmem:[%s3 + $0xc88] sm:$0xff]
    %v2324 = vld [vmem:[%s3 + $0xc90] sm:$0xff]
    %v2325 = vld [vmem:[%s3 + $0xc98] sm:$0xff]
    %v2326 = vld [vmem:[%s3 + $0xca0] sm:$0xff]
    %v2327 = vld [vmem:[%s3 + $0xca8] sm:$0xff]
    %v2328 = vld [vmem:[%s3 + $0xcb0] sm:$0xff]
    %v2329 = vld [vmem:[%s3 + $0xcb8] sm:$0xff]
    %v2330 = vld [vmem:[%s3 + $0xcc0] sm:$0xff]
    %v2331 = vld [vmem:[%s3 + $0xcc8] sm:$0xff]
    %v2332 = vld [vmem:[%s3 + $0xcd0] sm:$0xff]
    %v2333 = vld [vmem:[%s3 + $0xcd8] sm:$0xff]
    %v2334 = vld [vmem:[%s3 + $0xce0] sm:$0xff]
    %v2335 = vld [vmem:[%s3 + $0xce8] sm:$0xff]
    %v2336 = vld [vmem:[%s3 + $0xcf0] sm:$0xff]
    %v2337 = vld [vmem:[%s3 + $0xcf8] sm:$0xff]
    %v2338 = vld [vmem:[%s3 + $0xd00] sm:$0xff]
    %v2339 = vld [vmem:[%s3 + $0xd08] sm:$0xff]
    %v2340 = vld [vmem:[%s3 + $0xd10] sm:$0xff]
    %v2341 = vld [vmem:[%s3 + $0xd18] sm:$0xff]
    %v2342 = vld [vmem:[%s3 + $0xd20] sm:$0xff]
    %v2343 = vld [vmem:[%s3 + $0xd28] sm:$0xff]
    %v2344 = vld [vmem:[%s3 + $0xd30] sm:$0xff]
    %v2345 = vld [vmem:[%s3 + $0xd38] sm:$0xff]
    %v2346 = vld [vmem:[%s3 + $0xd40] sm:$0xff]
    %v2347 = vld [vmem:[%s3 + $0xd48] sm:$0xff]
    %v2348 = vld [vmem:[%s3 + $0xd50] sm:$0xff]
    %v2349 = vld [vmem:[%s3 + $0xd58] sm:$0xff]
    %v2350 = vld [vmem:[%s3 + $0xd60] sm:$0xff]
    %v2351 = vld [vmem:[%s3 + $0xd68] sm:$0xff]
    %v2352 = vld [vmem:[%s3 + $0xd70] sm:$0xff]
    %v2353 = vld [vmem:[%s3 + $0xd78] sm:$0xff]
    %v2354 = vld [vmem:[%s3 + $0xd80] sm:$0xff]
    %v2355 = vld [vmem:[%s3 + $0xd88] sm:$0xff]
    %v2356 = vld [vmem:[%s3 + $0xd90] sm:$0xff]
    %v2357 = vld [vmem:[%s3 + $0xd98] sm:$0xff]
    %v2358 = vld [vmem:[%s3 + $0xda0] sm:$0xff]
    %v2359 = vld [vmem:[%s3 + $0xda8] sm:$0xff]
    %v2360 = vld [vmem:[%s3 + $0xdb0] sm:$0xff]
    %v2361 = vld [vmem:[%s3 + $0xdb8] sm:$0xff]
    %v2362 = vld [vmem:[%s3 + $0xdc0] sm:$0xff]
    %v2363 = vld [vmem:[%s3 + $0xdc8] sm:$0xff]
    %v2364 = vld [vmem:[%s3 + $0xdd0] sm:$0xff]
    %v2365 = vld [vmem:[%s3 + $0xdd8] sm:$0xff]
    %v2366 = vld [vmem:[%s3 + $0xde0] sm:$0xff]
    %v2367 = vld [vmem:[%s3 + $0xde8] sm:$0xff]
    %v2368 = vld [vmem:[%s3 + $0xdf0] sm:$0xff]
    %v2369 = vld [vmem:[%s3 + $0xdf8] sm:$0xff]
    %v2370 = vld [vmem:[%s3 + $0xe00] sm:$0xff]
    %v2371 = vld [vmem:[%s3 + $0xe08] sm:$0xff]
    %v2372 = vld [vmem:[%s3 + $0xe10] sm:$0xff]
    %v2373 = vld [vmem:[%s3 + $0xe18] sm:$0xff]
    %v2374 = vld [vmem:[%s3 + $0xe20] sm:$0xff]
    %v2375 = vld [vmem:[%s3 + $0xe28] sm:$0xff]
    %v2376 = vld [vmem:[%s3 + $0xe30] sm:$0xff]
    %v2377 = vld [vmem:[%s3 + $0xe38] sm:$0xff]
    %v2378 = vld [vmem:[%s3 + $0xe40] sm:$0xff]
    %v2379 = vld [vmem:[%s3 + $0xe48] sm:$0xff]
    %v2380 = vld [vmem:[%s3 + $0xe50] sm:$0xff]
    %v2381 = vld [vmem:[%s3 + $0xe58] sm:$0xff]
    %v2382 = vld [vmem:[%s3 + $0xe60] sm:$0xff]
    %v2383 = vld [vmem:[%s3 + $0xe68] sm:$0xff]
    %v2384 = vld [vmem:[%s3 + $0xe70] sm:$0xff]
    %v2385 = vld [vmem:[%s3 + $0xe78] sm:$0xff]
    %v2386 = vld [vmem:[%s3 + $0xe80] sm:$0xff]
    %v2387 = vld [vmem:[%s3 + $0xe88] sm:$0xff]
    %v2388 = vld [vmem:[%s3 + $0xe90] sm:$0xff]
    %v2389 = vld [vmem:[%s3 + $0xe98] sm:$0xff]
    %v2390 = vld [vmem:[%s3 + $0xea0] sm:$0xff]
    %v2391 = vld [vmem:[%s3 + $0xea8] sm:$0xff]
    %v2392 = vld [vmem:[%s3 + $0xeb0] sm:$0xff]
    %v2393 = vld [vmem:[%s3 + $0xeb8] sm:$0xff]
    %v2394 = vld [vmem:[%s3 + $0xec0] sm:$0xff]
    %v2395 = vld [vmem:[%s3 + $0xec8] sm:$0xff]
    %v2396 = vld [vmem:[%s3 + $0xed0] sm:$0xff]
    %v2397 = vld [vmem:[%s3 + $0xed8] sm:$0xff]
    %v2398 = vld [vmem:[%s3 + $0xee0] sm:$0xff]
    %v2399 = vld [vmem:[%s3 + $0xee8] sm:$0xff]
    %v2400 = vld [vmem:[%s3 + $0xef0] sm:$0xff]
    %v2401 = vld [vmem:[%s3 + $0xef8] sm:$0xff]
    %v2402 = vld [vmem:[%s3 + $0xf00] sm:$0xff]
    %v2403 = vld [vmem:[%s3 + $0xf08] sm:$0xff]
    %v2404 = vld [vmem:[%s3 + $0xf10] sm:$0xff]
    %v2405 = vld [vmem:[%s3 + $0xf18] sm:$0xff]
    %v2406 = vld [vmem:[%s3 + $0xf20] sm:$0xff]
    %v2407 = vld [vmem:[%s3 + $0xf28] sm:$0xff]
    %v2408 = vld [vmem:[%s3 + $0xf30] sm:$0xff]
    %v2409 = vld [vmem:[%s3 + $0xf38] sm:$0xff]
    %v2410 = vld [vmem:[%s3 + $0xf40] sm:$0xff]
    %v2411 = vld [vmem:[%s3 + $0xf48] sm:$0xff]
    %v2412 = vld [vmem:[%s3 + $0xf50] sm:$0xff]
    %v2413 = vld [vmem:[%s3 + $0xf58] sm:$0xff]
    %v2414 = vld [vmem:[%s3 + $0xf60] sm:$0xff]
    %v2415 = vld [vmem:[%s3 + $0xf68] sm:$0xff]
    %v2416 = vld [vmem:[%s3 + $0xf70] sm:$0xff]
    %v2417 = vld [vmem:[%s3 + $0xf78] sm:$0xff]
    %v2418 = vld [vmem:[%s3 + $0xf80] sm:$0xff]
    %v2419 = vld [vmem:[%s3 + $0xf88] sm:$0xff]
    %v2420 = vld [vmem:[%s3 + $0xf90] sm:$0xff]
    %v2421 = vld [vmem:[%s3 + $0xf98] sm:$0xff]
    %v2422 = vld [vmem:[%s3 + $0xfa0] sm:$0xff]
    %v2423 = vld [vmem:[%s3 + $0xfa8] sm:$0xff]
    %v2424 = vld [vmem:[%s3 + $0xfb0] sm:$0xff]
    %v2425 = vld [vmem:[%s3 + $0xfb8] sm:$0xff]
    %v2426 = vld [vmem:[%s3 + $0xfc0] sm:$0xff]
    %v2427 = vld [vmem:[%s3 + $0xfc8] sm:$0xff]
    %v2428 = vld [vmem:[%s3 + $0xfd0] sm:$0xff]
    %v2429 = vld [vmem:[%s3 + $0xfd8] sm:$0xff]
    %v2430 = vld [vmem:[%s3 + $0xfe0] sm:$0xff]
    %v2431 = vld [vmem:[%s3 + $0xfe8] sm:$0xff]
    %v2432 = vld [vmem:[%s3 + $0xff0] sm:$0xff]
    %v2433 = vld [vmem:[%s3 + $0xff8] sm:$0xff]
    %v2434 = vpack.c.b16 %v1914, %v1906
    %v2435 = vpack.c.b16 %v1915, %v1907
    %v2436 = vpack.c.b16 %v1916, %v1908
    %v2437 = vpack.c.b16 %v1917, %v1909
    %v2438 = vpack.c.b16 %v1918, %v1910
    %v2439 = vpack.c.b16 %v1919, %v1911
    %v2440 = vpack.c.b16 %v1920, %v1912
    %v2441 = vpack.c.b16 %v1921, %v1913
    %v2962 = vunpack.c.l.b16 %v1922
    %v2963 = vunpack.c.h.b16 %v1922
    %v2964 = vunpack.c.l.b16 %v1923
    %v2965 = vunpack.c.h.b16 %v1923
    %v2966 = vunpack.c.l.b16 %v1924
    %v2967 = vunpack.c.h.b16 %v1924
    %v2968 = vunpack.c.l.b16 %v1925
    %v2969 = vunpack.c.h.b16 %v1925
    %v2970 = vunpack.c.l.b16 %v1926
    %v2971 = vunpack.c.h.b16 %v1926
    %v2972 = vunpack.c.l.b16 %v1927
    %v2973 = vunpack.c.h.b16 %v1927
    %v2974 = vunpack.c.l.b16 %v1928
    %v2975 = vunpack.c.h.b16 %v1928
    %v2976 = vunpack.c.l.b16 %v1929
    %v2977 = vunpack.c.h.b16 %v1929
    %v2978 = vunpack.c.l.b16 %v1930
    %v2979 = vunpack.c.h.b16 %v1930
    %v2980 = vunpack.c.l.b16 %v1931
    %v2981 = vunpack.c.h.b16 %v1931
    %v2982 = vunpack.c.l.b16 %v1932
    %v2983 = vunpack.c.h.b16 %v1932
    %v2984 = vunpack.c.l.b16 %v1933
    %v2985 = vunpack.c.h.b16 %v1933
    %v2986 = vunpack.c.l.b16 %v1934
    %v2987 = vunpack.c.h.b16 %v1934
    %v2988 = vunpack.c.l.b16 %v1935
    %v2989 = vunpack.c.h.b16 %v1935
    %v2990 = vunpack.c.l.b16 %v1936
    %v2991 = vunpack.c.h.b16 %v1936
    %v2992 = vunpack.c.l.b16 %v1937
    %v2993 = vunpack.c.h.b16 %v1937
    %v2994 = vunpack.c.l.b16 %v1938
    %v2995 = vunpack.c.h.b16 %v1938
    %v2996 = vunpack.c.l.b16 %v1939
    %v2997 = vunpack.c.h.b16 %v1939
    %v2998 = vunpack.c.l.b16 %v1940
    %v2999 = vunpack.c.h.b16 %v1940
    %v3000 = vunpack.c.l.b16 %v1941
    %v3001 = vunpack.c.h.b16 %v1941
    %v3002 = vunpack.c.l.b16 %v1942
    %v3003 = vunpack.c.h.b16 %v1942
    %v3004 = vunpack.c.l.b16 %v1943
    %v3005 = vunpack.c.h.b16 %v1943
    %v3006 = vunpack.c.l.b16 %v1944
    %v3007 = vunpack.c.h.b16 %v1944
    %v3008 = vunpack.c.l.b16 %v1945
    %v3009 = vunpack.c.h.b16 %v1945
    %v3010 = vunpack.c.l.b16 %v1946
    %v3011 = vunpack.c.h.b16 %v1946
    %v3012 = vunpack.c.l.b16 %v1947
    %v3013 = vunpack.c.h.b16 %v1947
    %v3014 = vunpack.c.l.b16 %v1948
    %v3015 = vunpack.c.h.b16 %v1948
    %v3016 = vunpack.c.l.b16 %v1949
    %v3017 = vunpack.c.h.b16 %v1949
    %v3018 = vunpack.c.l.b16 %v1950
    %v3019 = vunpack.c.h.b16 %v1950
    %v3020 = vunpack.c.l.b16 %v1951
    %v3021 = vunpack.c.h.b16 %v1951
    %v3022 = vunpack.c.l.b16 %v1952
    %v3023 = vunpack.c.h.b16 %v1952
    %v3024 = vunpack.c.l.b16 %v1953
    %v3025 = vunpack.c.h.b16 %v1953
    %v3026 = vunpack.c.l.b16 %v1954
    %v3027 = vunpack.c.h.b16 %v1954
    %v3028 = vunpack.c.l.b16 %v1955
    %v3029 = vunpack.c.h.b16 %v1955
    %v3030 = vunpack.c.l.b16 %v1956
    %v3031 = vunpack.c.h.b16 %v1956
    %v3032 = vunpack.c.l.b16 %v1957
    %v3033 = vunpack.c.h.b16 %v1957
    %v3034 = vunpack.c.l.b16 %v1958
    %v3035 = vunpack.c.h.b16 %v1958
    %v3036 = vunpack.c.l.b16 %v1959
    %v3037 = vunpack.c.h.b16 %v1959
    %v3038 = vunpack.c.l.b16 %v1960
    %v3039 = vunpack.c.h.b16 %v1960
    %v3040 = vunpack.c.l.b16 %v1961
    %v3041 = vunpack.c.h.b16 %v1961
    %v3042 = vunpack.c.l.b16 %v1962
    %v3043 = vunpack.c.h.b16 %v1962
    %v3044 = vunpack.c.l.b16 %v1963
    %v3045 = vunpack.c.h.b16 %v1963
    %v3046 = vunpack.c.l.b16 %v1964
    %v3047 = vunpack.c.h.b16 %v1964
    %v3048 = vunpack.c.l.b16 %v1965
    %v3049 = vunpack.c.h.b16 %v1965
    %v3050 = vunpack.c.l.b16 %v1966
    %v3051 = vunpack.c.h.b16 %v1966
    %v3052 = vunpack.c.l.b16 %v1967
    %v3053 = vunpack.c.h.b16 %v1967
    %v3054 = vunpack.c.l.b16 %v1968
    %v3055 = vunpack.c.h.b16 %v1968
    %v3056 = vunpack.c.l.b16 %v1969
    %v3057 = vunpack.c.h.b16 %v1969
    %v3058 = vunpack.c.l.b16 %v1970
    %v3059 = vunpack.c.h.b16 %v1970
    %v3060 = vunpack.c.l.b16 %v1971
    %v3061 = vunpack.c.h.b16 %v1971
    %v3062 = vunpack.c.l.b16 %v1972
    %v3063 = vunpack.c.h.b16 %v1972
    %v3064 = vunpack.c.l.b16 %v1973
    %v3065 = vunpack.c.h.b16 %v1973
    %v3066 = vunpack.c.l.b16 %v1974
    %v3067 = vunpack.c.h.b16 %v1974
    %v3068 = vunpack.c.l.b16 %v1975
    %v3069 = vunpack.c.h.b16 %v1975
    %v3070 = vunpack.c.l.b16 %v1976
    %v3071 = vunpack.c.h.b16 %v1976
    %v3072 = vunpack.c.l.b16 %v1977
    %v3073 = vunpack.c.h.b16 %v1977
    %v3074 = vunpack.c.l.b16 %v1978
    %v3075 = vunpack.c.h.b16 %v1978
    %v3076 = vunpack.c.l.b16 %v1979
    %v3077 = vunpack.c.h.b16 %v1979
    %v3078 = vunpack.c.l.b16 %v1980
    %v3079 = vunpack.c.h.b16 %v1980
    %v3080 = vunpack.c.l.b16 %v1981
    %v3081 = vunpack.c.h.b16 %v1981
    %v3082 = vunpack.c.l.b16 %v1982
    %v3083 = vunpack.c.h.b16 %v1982
    %v3084 = vunpack.c.l.b16 %v1983
    %v3085 = vunpack.c.h.b16 %v1983
    %v3086 = vunpack.c.l.b16 %v1984
    %v3087 = vunpack.c.h.b16 %v1984
    %v3088 = vunpack.c.l.b16 %v1985
    %v3089 = vunpack.c.h.b16 %v1985
    %v3090 = vunpack.c.l.b16 %v1986
    %v3091 = vunpack.c.h.b16 %v1986
    %v3092 = vunpack.c.l.b16 %v1987
    %v3093 = vunpack.c.h.b16 %v1987
    %v3094 = vunpack.c.l.b16 %v1988
    %v3095 = vunpack.c.h.b16 %v1988
    %v3096 = vunpack.c.l.b16 %v1989
    %v3097 = vunpack.c.h.b16 %v1989
    %v3098 = vunpack.c.l.b16 %v1990
    %v3099 = vunpack.c.h.b16 %v1990
    %v3100 = vunpack.c.l.b16 %v1991
    %v3101 = vunpack.c.h.b16 %v1991
    %v3102 = vunpack.c.l.b16 %v1992
    %v3103 = vunpack.c.h.b16 %v1992
    %v3104 = vunpack.c.l.b16 %v1993
    %v3105 = vunpack.c.h.b16 %v1993
    %v3106 = vunpack.c.l.b16 %v1994
    %v3107 = vunpack.c.h.b16 %v1994
    %v3108 = vunpack.c.l.b16 %v1995
    %v3109 = vunpack.c.h.b16 %v1995
    %v3110 = vunpack.c.l.b16 %v1996
    %v3111 = vunpack.c.h.b16 %v1996
    %v3112 = vunpack.c.l.b16 %v1997
    %v3113 = vunpack.c.h.b16 %v1997
    %v3114 = vunpack.c.l.b16 %v1998
    %v3115 = vunpack.c.h.b16 %v1998
    %v3116 = vunpack.c.l.b16 %v1999
    %v3117 = vunpack.c.h.b16 %v1999
    %v3118 = vunpack.c.l.b16 %v2000
    %v3119 = vunpack.c.h.b16 %v2000
    %v3120 = vunpack.c.l.b16 %v2001
    %v3121 = vunpack.c.h.b16 %v2001
    %v3122 = vunpack.c.l.b16 %v2002
    %v3123 = vunpack.c.h.b16 %v2002
    %v3124 = vunpack.c.l.b16 %v2003
    %v3125 = vunpack.c.h.b16 %v2003
    %v3126 = vunpack.c.l.b16 %v2004
    %v3127 = vunpack.c.h.b16 %v2004
    %v3128 = vunpack.c.l.b16 %v2005
    %v3129 = vunpack.c.h.b16 %v2005
    %v3130 = vunpack.c.l.b16 %v2006
    %v3131 = vunpack.c.h.b16 %v2006
    %v3132 = vunpack.c.l.b16 %v2007
    %v3133 = vunpack.c.h.b16 %v2007
    %v3134 = vunpack.c.l.b16 %v2008
    %v3135 = vunpack.c.h.b16 %v2008
    %v3136 = vunpack.c.l.b16 %v2009
    %v3137 = vunpack.c.h.b16 %v2009
    %v3138 = vunpack.c.l.b16 %v2010
    %v3139 = vunpack.c.h.b16 %v2010
    %v3140 = vunpack.c.l.b16 %v2011
    %v3141 = vunpack.c.h.b16 %v2011
    %v3142 = vunpack.c.l.b16 %v2012
    %v3143 = vunpack.c.h.b16 %v2012
    %v3144 = vunpack.c.l.b16 %v2013
    %v3145 = vunpack.c.h.b16 %v2013
    %v3146 = vunpack.c.l.b16 %v2014
    %v3147 = vunpack.c.h.b16 %v2014
    %v3148 = vunpack.c.l.b16 %v2015
    %v3149 = vunpack.c.h.b16 %v2015
    %v3150 = vunpack.c.l.b16 %v2016
    %v3151 = vunpack.c.h.b16 %v2016
    %v3152 = vunpack.c.l.b16 %v2017
    %v3153 = vunpack.c.h.b16 %v2017
    %v3154 = vunpack.c.l.b16 %v2018
    %v3155 = vunpack.c.h.b16 %v2018
    %v3156 = vunpack.c.l.b16 %v2019
    %v3157 = vunpack.c.h.b16 %v2019
    %v3158 = vunpack.c.l.b16 %v2020
    %v3159 = vunpack.c.h.b16 %v2020
    %v3160 = vunpack.c.l.b16 %v2021
    %v3161 = vunpack.c.h.b16 %v2021
    %v3162 = vunpack.c.l.b16 %v2022
    %v3163 = vunpack.c.h.b16 %v2022
    %v3164 = vunpack.c.l.b16 %v2023
    %v3165 = vunpack.c.h.b16 %v2023
    %v3166 = vunpack.c.l.b16 %v2024
    %v3167 = vunpack.c.h.b16 %v2024
    %v3168 = vunpack.c.l.b16 %v2025
    %v3169 = vunpack.c.h.b16 %v2025
    %v3170 = vunpack.c.l.b16 %v2026
    %v3171 = vunpack.c.h.b16 %v2026
    %v3172 = vunpack.c.l.b16 %v2027
    %v3173 = vunpack.c.h.b16 %v2027
    %v3174 = vunpack.c.l.b16 %v2028
    %v3175 = vunpack.c.h.b16 %v2028
    %v3176 = vunpack.c.l.b16 %v2029
    %v3177 = vunpack.c.h.b16 %v2029
    %v3178 = vunpack.c.l.b16 %v2030
    %v3179 = vunpack.c.h.b16 %v2030
    %v3180 = vunpack.c.l.b16 %v2031
    %v3181 = vunpack.c.h.b16 %v2031
    %v3182 = vunpack.c.l.b16 %v2032
    %v3183 = vunpack.c.h.b16 %v2032
    %v3184 = vunpack.c.l.b16 %v2033
    %v3185 = vunpack.c.h.b16 %v2033
    %v3186 = vunpack.c.l.b16 %v2034
    %v3187 = vunpack.c.h.b16 %v2034
    %v3188 = vunpack.c.l.b16 %v2035
    %v3189 = vunpack.c.h.b16 %v2035
    %v3190 = vunpack.c.l.b16 %v2036
    %v3191 = vunpack.c.h.b16 %v2036
    %v3192 = vunpack.c.l.b16 %v2037
    %v3193 = vunpack.c.h.b16 %v2037
    %v3194 = vunpack.c.l.b16 %v2038
    %v3195 = vunpack.c.h.b16 %v2038
    %v3196 = vunpack.c.l.b16 %v2039
    %v3197 = vunpack.c.h.b16 %v2039
    %v3198 = vunpack.c.l.b16 %v2040
    %v3199 = vunpack.c.h.b16 %v2040
    %v3200 = vunpack.c.l.b16 %v2041
    %v3201 = vunpack.c.h.b16 %v2041
    %v3202 = vunpack.c.l.b16 %v2042
    %v3203 = vunpack.c.h.b16 %v2042
    %v3204 = vunpack.c.l.b16 %v2043
    %v3205 = vunpack.c.h.b16 %v2043
    %v3206 = vunpack.c.l.b16 %v2044
    %v3207 = vunpack.c.h.b16 %v2044
    %v3208 = vunpack.c.l.b16 %v2045
    %v3209 = vunpack.c.h.b16 %v2045
    %v3210 = vunpack.c.l.b16 %v2046
    %v3211 = vunpack.c.h.b16 %v2046
    %v3212 = vunpack.c.l.b16 %v2047
    %v3213 = vunpack.c.h.b16 %v2047
    %v3214 = vunpack.c.l.b16 %v2048
    %v3215 = vunpack.c.h.b16 %v2048
    %v3216 = vunpack.c.l.b16 %v2049
    %v3217 = vunpack.c.h.b16 %v2049
    %v3218 = vunpack.c.l.b16 %v2050
    %v3219 = vunpack.c.h.b16 %v2050
    %v3220 = vunpack.c.l.b16 %v2051
    %v3221 = vunpack.c.h.b16 %v2051
    %v3222 = vunpack.c.l.b16 %v2052
    %v3223 = vunpack.c.h.b16 %v2052
    %v3224 = vunpack.c.l.b16 %v2053
    %v3225 = vunpack.c.h.b16 %v2053
    %v3226 = vunpack.c.l.b16 %v2054
    %v3227 = vunpack.c.h.b16 %v2054
    %v3228 = vunpack.c.l.b16 %v2055
    %v3229 = vunpack.c.h.b16 %v2055
    %v3230 = vunpack.c.l.b16 %v2056
    %v3231 = vunpack.c.h.b16 %v2056
    %v3232 = vunpack.c.l.b16 %v2057
    %v3233 = vunpack.c.h.b16 %v2057
    %v3234 = vunpack.c.l.b16 %v2058
    %v3235 = vunpack.c.h.b16 %v2058
    %v3236 = vunpack.c.l.b16 %v2059
    %v3237 = vunpack.c.h.b16 %v2059
    %v3238 = vunpack.c.l.b16 %v2060
    %v3239 = vunpack.c.h.b16 %v2060
    %v3240 = vunpack.c.l.b16 %v2061
    %v3241 = vunpack.c.h.b16 %v2061
    %v3242 = vunpack.c.l.b16 %v2062
    %v3243 = vunpack.c.h.b16 %v2062
    %v3244 = vunpack.c.l.b16 %v2063
    %v3245 = vunpack.c.h.b16 %v2063
    %v3246 = vunpack.c.l.b16 %v2064
    %v3247 = vunpack.c.h.b16 %v2064
    %v3248 = vunpack.c.l.b16 %v2065
    %v3249 = vunpack.c.h.b16 %v2065
    %v3250 = vunpack.c.l.b16 %v2066
    %v3251 = vunpack.c.h.b16 %v2066
    %v3252 = vunpack.c.l.b16 %v2067
    %v3253 = vunpack.c.h.b16 %v2067
    %v3254 = vunpack.c.l.b16 %v2068
    %v3255 = vunpack.c.h.b16 %v2068
    %v3256 = vunpack.c.l.b16 %v2069
    %v3257 = vunpack.c.h.b16 %v2069
    %v3258 = vunpack.c.l.b16 %v2070
    %v3259 = vunpack.c.h.b16 %v2070
    %v3260 = vunpack.c.l.b16 %v2071
    %v3261 = vunpack.c.h.b16 %v2071
    %v3262 = vunpack.c.l.b16 %v2072
    %v3263 = vunpack.c.h.b16 %v2072
    %v3264 = vunpack.c.l.b16 %v2073
    %v3265 = vunpack.c.h.b16 %v2073
    %v3266 = vunpack.c.l.b16 %v2074
    %v3267 = vunpack.c.h.b16 %v2074
    %v3268 = vunpack.c.l.b16 %v2075
    %v3269 = vunpack.c.h.b16 %v2075
    %v3270 = vunpack.c.l.b16 %v2076
    %v3271 = vunpack.c.h.b16 %v2076
    %v3272 = vunpack.c.l.b16 %v2077
    %v3273 = vunpack.c.h.b16 %v2077
    %v3274 = vunpack.c.l.b16 %v2078
    %v3275 = vunpack.c.h.b16 %v2078
    %v3276 = vunpack.c.l.b16 %v2079
    %v3277 = vunpack.c.h.b16 %v2079
    %v3278 = vunpack.c.l.b16 %v2080
    %v3279 = vunpack.c.h.b16 %v2080
    %v3280 = vunpack.c.l.b16 %v2081
    %v3281 = vunpack.c.h.b16 %v2081
    %v3282 = vunpack.c.l.b16 %v2082
    %v3283 = vunpack.c.h.b16 %v2082
    %v3284 = vunpack.c.l.b16 %v2083
    %v3285 = vunpack.c.h.b16 %v2083
    %v3286 = vunpack.c.l.b16 %v2084
    %v3287 = vunpack.c.h.b16 %v2084
    %v3288 = vunpack.c.l.b16 %v2085
    %v3289 = vunpack.c.h.b16 %v2085
    %v3290 = vunpack.c.l.b16 %v2086
    %v3291 = vunpack.c.h.b16 %v2086
    %v3292 = vunpack.c.l.b16 %v2087
    %v3293 = vunpack.c.h.b16 %v2087
    %v3294 = vunpack.c.l.b16 %v2088
    %v3295 = vunpack.c.h.b16 %v2088
    %v3296 = vunpack.c.l.b16 %v2089
    %v3297 = vunpack.c.h.b16 %v2089
    %v3298 = vunpack.c.l.b16 %v2090
    %v3299 = vunpack.c.h.b16 %v2090
    %v3300 = vunpack.c.l.b16 %v2091
    %v3301 = vunpack.c.h.b16 %v2091
    %v3302 = vunpack.c.l.b16 %v2092
    %v3303 = vunpack.c.h.b16 %v2092
    %v3304 = vunpack.c.l.b16 %v2093
    %v3305 = vunpack.c.h.b16 %v2093
    %v3306 = vunpack.c.l.b16 %v2094
    %v3307 = vunpack.c.h.b16 %v2094
    %v3308 = vunpack.c.l.b16 %v2095
    %v3309 = vunpack.c.h.b16 %v2095
    %v3310 = vunpack.c.l.b16 %v2096
    %v3311 = vunpack.c.h.b16 %v2096
    %v3312 = vunpack.c.l.b16 %v2097
    %v3313 = vunpack.c.h.b16 %v2097
    %v3314 = vunpack.c.l.b16 %v2098
    %v3315 = vunpack.c.h.b16 %v2098
    %v3316 = vunpack.c.l.b16 %v2099
    %v3317 = vunpack.c.h.b16 %v2099
    %v3318 = vunpack.c.l.b16 %v2100
    %v3319 = vunpack.c.h.b16 %v2100
    %v3320 = vunpack.c.l.b16 %v2101
    %v3321 = vunpack.c.h.b16 %v2101
    %v3322 = vunpack.c.l.b16 %v2102
    %v3323 = vunpack.c.h.b16 %v2102
    %v3324 = vunpack.c.l.b16 %v2103
    %v3325 = vunpack.c.h.b16 %v2103
    %v3326 = vunpack.c.l.b16 %v2104
    %v3327 = vunpack.c.h.b16 %v2104
    %v3328 = vunpack.c.l.b16 %v2105
    %v3329 = vunpack.c.h.b16 %v2105
    %v3330 = vunpack.c.l.b16 %v2106
    %v3331 = vunpack.c.h.b16 %v2106
    %v3332 = vunpack.c.l.b16 %v2107
    %v3333 = vunpack.c.h.b16 %v2107
    %v3334 = vunpack.c.l.b16 %v2108
    %v3335 = vunpack.c.h.b16 %v2108
    %v3336 = vunpack.c.l.b16 %v2109
    %v3337 = vunpack.c.h.b16 %v2109
    %v3338 = vunpack.c.l.b16 %v2110
    %v3339 = vunpack.c.h.b16 %v2110
    %v3340 = vunpack.c.l.b16 %v2111
    %v3341 = vunpack.c.h.b16 %v2111
    %v3342 = vunpack.c.l.b16 %v2112
    %v3343 = vunpack.c.h.b16 %v2112
    %v3344 = vunpack.c.l.b16 %v2113
    %v3345 = vunpack.c.h.b16 %v2113
    %v3346 = vunpack.c.l.b16 %v2114
    %v3347 = vunpack.c.h.b16 %v2114
    %v3348 = vunpack.c.l.b16 %v2115
    %v3349 = vunpack.c.h.b16 %v2115
    %v3350 = vunpack.c.l.b16 %v2116
    %v3351 = vunpack.c.h.b16 %v2116
    %v3352 = vunpack.c.l.b16 %v2117
    %v3353 = vunpack.c.h.b16 %v2117
    %v3354 = vunpack.c.l.b16 %v2118
    %v3355 = vunpack.c.h.b16 %v2118
    %v3356 = vunpack.c.l.b16 %v2119
    %v3357 = vunpack.c.h.b16 %v2119
    %v3358 = vunpack.c.l.b16 %v2120
    %v3359 = vunpack.c.h.b16 %v2120
    %v3360 = vunpack.c.l.b16 %v2121
    %v3361 = vunpack.c.h.b16 %v2121
    %v3362 = vunpack.c.l.b16 %v2122
    %v3363 = vunpack.c.h.b16 %v2122
    %v3364 = vunpack.c.l.b16 %v2123
    %v3365 = vunpack.c.h.b16 %v2123
    %v3366 = vunpack.c.l.b16 %v2124
    %v3367 = vunpack.c.h.b16 %v2124
    %v3368 = vunpack.c.l.b16 %v2125
    %v3369 = vunpack.c.h.b16 %v2125
    %v3370 = vunpack.c.l.b16 %v2126
    %v3371 = vunpack.c.h.b16 %v2126
    %v3372 = vunpack.c.l.b16 %v2127
    %v3373 = vunpack.c.h.b16 %v2127
    %v3374 = vunpack.c.l.b16 %v2128
    %v3375 = vunpack.c.h.b16 %v2128
    %v3376 = vunpack.c.l.b16 %v2129
    %v3377 = vunpack.c.h.b16 %v2129
    %v3378 = vunpack.c.l.b16 %v2130
    %v3379 = vunpack.c.h.b16 %v2130
    %v3380 = vunpack.c.l.b16 %v2131
    %v3381 = vunpack.c.h.b16 %v2131
    %v3382 = vunpack.c.l.b16 %v2132
    %v3383 = vunpack.c.h.b16 %v2132
    %v3384 = vunpack.c.l.b16 %v2133
    %v3385 = vunpack.c.h.b16 %v2133
    %v3386 = vunpack.c.l.b16 %v2134
    %v3387 = vunpack.c.h.b16 %v2134
    %v3388 = vunpack.c.l.b16 %v2135
    %v3389 = vunpack.c.h.b16 %v2135
    %v3390 = vunpack.c.l.b16 %v2136
    %v3391 = vunpack.c.h.b16 %v2136
    %v3392 = vunpack.c.l.b16 %v2137
    %v3393 = vunpack.c.h.b16 %v2137
    %v3394 = vunpack.c.l.b16 %v2138
    %v3395 = vunpack.c.h.b16 %v2138
    %v3396 = vunpack.c.l.b16 %v2139
    %v3397 = vunpack.c.h.b16 %v2139
    %v3398 = vunpack.c.l.b16 %v2140
    %v3399 = vunpack.c.h.b16 %v2140
    %v3400 = vunpack.c.l.b16 %v2141
    %v3401 = vunpack.c.h.b16 %v2141
    %v3402 = vunpack.c.l.b16 %v2142
    %v3403 = vunpack.c.h.b16 %v2142
    %v3404 = vunpack.c.l.b16 %v2143
    %v3405 = vunpack.c.h.b16 %v2143
    %v3406 = vunpack.c.l.b16 %v2144
    %v3407 = vunpack.c.h.b16 %v2144
    %v3408 = vunpack.c.l.b16 %v2145
    %v3409 = vunpack.c.h.b16 %v2145
    %v3410 = vunpack.c.l.b16 %v2146
    %v3411 = vunpack.c.h.b16 %v2146
    %v3412 = vunpack.c.l.b16 %v2147
    %v3413 = vunpack.c.h.b16 %v2147
    %v3414 = vunpack.c.l.b16 %v2148
    %v3415 = vunpack.c.h.b16 %v2148
    %v3416 = vunpack.c.l.b16 %v2149
    %v3417 = vunpack.c.h.b16 %v2149
    %v3418 = vunpack.c.l.b16 %v2150
    %v3419 = vunpack.c.h.b16 %v2150
    %v3420 = vunpack.c.l.b16 %v2151
    %v3421 = vunpack.c.h.b16 %v2151
    %v3422 = vunpack.c.l.b16 %v2152
    %v3423 = vunpack.c.h.b16 %v2152
    %v3424 = vunpack.c.l.b16 %v2153
    %v3425 = vunpack.c.h.b16 %v2153
    %v3426 = vunpack.c.l.b16 %v2154
    %v3427 = vunpack.c.h.b16 %v2154
    %v3428 = vunpack.c.l.b16 %v2155
    %v3429 = vunpack.c.h.b16 %v2155
    %v3430 = vunpack.c.l.b16 %v2156
    %v3431 = vunpack.c.h.b16 %v2156
    %v3432 = vunpack.c.l.b16 %v2157
    %v3433 = vunpack.c.h.b16 %v2157
    %v3434 = vunpack.c.l.b16 %v2158
    %v3435 = vunpack.c.h.b16 %v2158
    %v3436 = vunpack.c.l.b16 %v2159
    %v3437 = vunpack.c.h.b16 %v2159
    %v3438 = vunpack.c.l.b16 %v2160
    %v3439 = vunpack.c.h.b16 %v2160
    %v3440 = vunpack.c.l.b16 %v2161
    %v3441 = vunpack.c.h.b16 %v2161
    %v3442 = vunpack.c.l.b16 %v2162
    %v3443 = vunpack.c.h.b16 %v2162
    %v3444 = vunpack.c.l.b16 %v2163
    %v3445 = vunpack.c.h.b16 %v2163
    %v3446 = vunpack.c.l.b16 %v2164
    %v3447 = vunpack.c.h.b16 %v2164
    %v3448 = vunpack.c.l.b16 %v2165
    %v3449 = vunpack.c.h.b16 %v2165
    %v3450 = vunpack.c.l.b16 %v2166
    %v3451 = vunpack.c.h.b16 %v2166
    %v3452 = vunpack.c.l.b16 %v2167
    %v3453 = vunpack.c.h.b16 %v2167
    %v3454 = vunpack.c.l.b16 %v2168
    %v3455 = vunpack.c.h.b16 %v2168
    %v3456 = vunpack.c.l.b16 %v2169
    %v3457 = vunpack.c.h.b16 %v2169
    %v3458 = vunpack.c.l.b16 %v2170
    %v3459 = vunpack.c.h.b16 %v2170
    %v3460 = vunpack.c.l.b16 %v2171
    %v3461 = vunpack.c.h.b16 %v2171
    %v3462 = vunpack.c.l.b16 %v2172
    %v3463 = vunpack.c.h.b16 %v2172
    %v3464 = vunpack.c.l.b16 %v2173
    %v3465 = vunpack.c.h.b16 %v2173
    %v3466 = vunpack.c.l.b16 %v2174
    %v3467 = vunpack.c.h.b16 %v2174
    %v3468 = vunpack.c.l.b16 %v2175
    %v3469 = vunpack.c.h.b16 %v2175
    %v3470 = vunpack.c.l.b16 %v2176
    %v3471 = vunpack.c.h.b16 %v2176
    %v3472 = vunpack.c.l.b16 %v2177
    %v3473 = vunpack.c.h.b16 %v2177
    %v3474 = vunpack.c.l.b16 %v2178
    %v3475 = vunpack.c.h.b16 %v2178
    %v3476 = vunpack.c.l.b16 %v2179
    %v3477 = vunpack.c.h.b16 %v2179
    %v3478 = vunpack.c.l.b16 %v2180
    %v3479 = vunpack.c.h.b16 %v2180
    %v3480 = vunpack.c.l.b16 %v2181
    %v3481 = vunpack.c.h.b16 %v2181
    %v3482 = vunpack.c.l.b16 %v2182
    %v3483 = vunpack.c.h.b16 %v2182
    %v3484 = vunpack.c.l.b16 %v2183
    %v3485 = vunpack.c.h.b16 %v2183
    %v3486 = vunpack.c.l.b16 %v2184
    %v3487 = vunpack.c.h.b16 %v2184
    %v3488 = vunpack.c.l.b16 %v2185
    %v3489 = vunpack.c.h.b16 %v2185
    %v3490 = vunpack.c.l.b16 %v2186
    %v3491 = vunpack.c.h.b16 %v2186
    %v3492 = vunpack.c.l.b16 %v2187
    %v3493 = vunpack.c.h.b16 %v2187
    %v3494 = vunpack.c.l.b16 %v2188
    %v3495 = vunpack.c.h.b16 %v2188
    %v3496 = vunpack.c.l.b16 %v2189
    %v3497 = vunpack.c.h.b16 %v2189
    %v3498 = vunpack.c.l.b16 %v2190
    %v3499 = vunpack.c.h.b16 %v2190
    %v3500 = vunpack.c.l.b16 %v2191
    %v3501 = vunpack.c.h.b16 %v2191
    %v3502 = vunpack.c.l.b16 %v2192
    %v3503 = vunpack.c.h.b16 %v2192
    %v3504 = vunpack.c.l.b16 %v2193
    %v3505 = vunpack.c.h.b16 %v2193
    %v3506 = vunpack.c.l.b16 %v2194
    %v3507 = vunpack.c.h.b16 %v2194
    %v3508 = vunpack.c.l.b16 %v2195
    %v3509 = vunpack.c.h.b16 %v2195
    %v3510 = vunpack.c.l.b16 %v2196
    %v3511 = vunpack.c.h.b16 %v2196
    %v3512 = vunpack.c.l.b16 %v2197
    %v3513 = vunpack.c.h.b16 %v2197
    %v3514 = vunpack.c.l.b16 %v2198
    %v3515 = vunpack.c.h.b16 %v2198
    %v3516 = vunpack.c.l.b16 %v2199
    %v3517 = vunpack.c.h.b16 %v2199
    %v3518 = vunpack.c.l.b16 %v2200
    %v3519 = vunpack.c.h.b16 %v2200
    %v3520 = vunpack.c.l.b16 %v2201
    %v3521 = vunpack.c.h.b16 %v2201
    %v3522 = vunpack.c.l.b16 %v2202
    %v3523 = vunpack.c.h.b16 %v2202
    %v3524 = vunpack.c.l.b16 %v2203
    %v3525 = vunpack.c.h.b16 %v2203
    %v3526 = vunpack.c.l.b16 %v2204
    %v3527 = vunpack.c.h.b16 %v2204
    %v3528 = vunpack.c.l.b16 %v2205
    %v3529 = vunpack.c.h.b16 %v2205
    %v3530 = vunpack.c.l.b16 %v2206
    %v3531 = vunpack.c.h.b16 %v2206
    %v3532 = vunpack.c.l.b16 %v2207
    %v3533 = vunpack.c.h.b16 %v2207
    %v3534 = vunpack.c.l.b16 %v2208
    %v3535 = vunpack.c.h.b16 %v2208
    %v3536 = vunpack.c.l.b16 %v2209
    %v3537 = vunpack.c.h.b16 %v2209
    %v3538 = vunpack.c.l.b16 %v2210
    %v3539 = vunpack.c.h.b16 %v2210
    %v3540 = vunpack.c.l.b16 %v2211
    %v3541 = vunpack.c.h.b16 %v2211
    %v3542 = vunpack.c.l.b16 %v2212
    %v3543 = vunpack.c.h.b16 %v2212
    %v3544 = vunpack.c.l.b16 %v2213
    %v3545 = vunpack.c.h.b16 %v2213
    %v3546 = vunpack.c.l.b16 %v2214
    %v3547 = vunpack.c.h.b16 %v2214
    %v3548 = vunpack.c.l.b16 %v2215
    %v3549 = vunpack.c.h.b16 %v2215
    %v3550 = vunpack.c.l.b16 %v2216
    %v3551 = vunpack.c.h.b16 %v2216
    %v3552 = vunpack.c.l.b16 %v2217
    %v3553 = vunpack.c.h.b16 %v2217
    %v3554 = vunpack.c.l.b16 %v2218
    %v3555 = vunpack.c.h.b16 %v2218
    %v3556 = vunpack.c.l.b16 %v2219
    %v3557 = vunpack.c.h.b16 %v2219
    %v3558 = vunpack.c.l.b16 %v2220
    %v3559 = vunpack.c.h.b16 %v2220
    %v3560 = vunpack.c.l.b16 %v2221
    %v3561 = vunpack.c.h.b16 %v2221
    %v3562 = vunpack.c.l.b16 %v2222
    %v3563 = vunpack.c.h.b16 %v2222
    %v3564 = vunpack.c.l.b16 %v2223
    %v3565 = vunpack.c.h.b16 %v2223
    %v3566 = vunpack.c.l.b16 %v2224
    %v3567 = vunpack.c.h.b16 %v2224
    %v3568 = vunpack.c.l.b16 %v2225
    %v3569 = vunpack.c.h.b16 %v2225
    %v3570 = vunpack.c.l.b16 %v2226
    %v3571 = vunpack.c.h.b16 %v2226
    %v3572 = vunpack.c.l.b16 %v2227
    %v3573 = vunpack.c.h.b16 %v2227
    %v3574 = vunpack.c.l.b16 %v2228
    %v3575 = vunpack.c.h.b16 %v2228
    %v3576 = vunpack.c.l.b16 %v2229
    %v3577 = vunpack.c.h.b16 %v2229
    %v3578 = vunpack.c.l.b16 %v2230
    %v3579 = vunpack.c.h.b16 %v2230
    %v3580 = vunpack.c.l.b16 %v2231
    %v3581 = vunpack.c.h.b16 %v2231
    %v3582 = vunpack.c.l.b16 %v2232
    %v3583 = vunpack.c.h.b16 %v2232
    %v3584 = vunpack.c.l.b16 %v2233
    %v3585 = vunpack.c.h.b16 %v2233
    %v3586 = vunpack.c.l.b16 %v2234
    %v3587 = vunpack.c.h.b16 %v2234
    %v3588 = vunpack.c.l.b16 %v2235
    %v3589 = vunpack.c.h.b16 %v2235
    %v3590 = vunpack.c.l.b16 %v2236
    %v3591 = vunpack.c.h.b16 %v2236
    %v3592 = vunpack.c.l.b16 %v2237
    %v3593 = vunpack.c.h.b16 %v2237
    %v3594 = vunpack.c.l.b16 %v2238
    %v3595 = vunpack.c.h.b16 %v2238
    %v3596 = vunpack.c.l.b16 %v2239
    %v3597 = vunpack.c.h.b16 %v2239
    %v3598 = vunpack.c.l.b16 %v2240
    %v3599 = vunpack.c.h.b16 %v2240
    %v3600 = vunpack.c.l.b16 %v2241
    %v3601 = vunpack.c.h.b16 %v2241
    %v3602 = vunpack.c.l.b16 %v2242
    %v3603 = vunpack.c.h.b16 %v2242
    %v3604 = vunpack.c.l.b16 %v2243
    %v3605 = vunpack.c.h.b16 %v2243
    %v3606 = vunpack.c.l.b16 %v2244
    %v3607 = vunpack.c.h.b16 %v2244
    %v3608 = vunpack.c.l.b16 %v2245
    %v3609 = vunpack.c.h.b16 %v2245
    %v3610 = vunpack.c.l.b16 %v2246
    %v3611 = vunpack.c.h.b16 %v2246
    %v3612 = vunpack.c.l.b16 %v2247
    %v3613 = vunpack.c.h.b16 %v2247
    %v3614 = vunpack.c.l.b16 %v2248
    %v3615 = vunpack.c.h.b16 %v2248
    %v3616 = vunpack.c.l.b16 %v2249
    %v3617 = vunpack.c.h.b16 %v2249
    %v3618 = vunpack.c.l.b16 %v2250
    %v3619 = vunpack.c.h.b16 %v2250
    %v3620 = vunpack.c.l.b16 %v2251
    %v3621 = vunpack.c.h.b16 %v2251
    %v3622 = vunpack.c.l.b16 %v2252
    %v3623 = vunpack.c.h.b16 %v2252
    %v3624 = vunpack.c.l.b16 %v2253
    %v3625 = vunpack.c.h.b16 %v2253
    %v3626 = vunpack.c.l.b16 %v2254
    %v3627 = vunpack.c.h.b16 %v2254
    %v3628 = vunpack.c.l.b16 %v2255
    %v3629 = vunpack.c.h.b16 %v2255
    %v3630 = vunpack.c.l.b16 %v2256
    %v3631 = vunpack.c.h.b16 %v2256
    %v3632 = vunpack.c.l.b16 %v2257
    %v3633 = vunpack.c.h.b16 %v2257
    %v3634 = vunpack.c.l.b16 %v2258
    %v3635 = vunpack.c.h.b16 %v2258
    %v3636 = vunpack.c.l.b16 %v2259
    %v3637 = vunpack.c.h.b16 %v2259
    %v3638 = vunpack.c.l.b16 %v2260
    %v3639 = vunpack.c.h.b16 %v2260
    %v3640 = vunpack.c.l.b16 %v2261
    %v3641 = vunpack.c.h.b16 %v2261
    %v3642 = vunpack.c.l.b16 %v2262
    %v3643 = vunpack.c.h.b16 %v2262
    %v3644 = vunpack.c.l.b16 %v2263
    %v3645 = vunpack.c.h.b16 %v2263
    %v3646 = vunpack.c.l.b16 %v2264
    %v3647 = vunpack.c.h.b16 %v2264
    %v3648 = vunpack.c.l.b16 %v2265
    %v3649 = vunpack.c.h.b16 %v2265
    %v3650 = vunpack.c.l.b16 %v2266
    %v3651 = vunpack.c.h.b16 %v2266
    %v3652 = vunpack.c.l.b16 %v2267
    %v3653 = vunpack.c.h.b16 %v2267
    %v3654 = vunpack.c.l.b16 %v2268
    %v3655 = vunpack.c.h.b16 %v2268
    %v3656 = vunpack.c.l.b16 %v2269
    %v3657 = vunpack.c.h.b16 %v2269
    %v3658 = vunpack.c.l.b16 %v2270
    %v3659 = vunpack.c.h.b16 %v2270
    %v3660 = vunpack.c.l.b16 %v2271
    %v3661 = vunpack.c.h.b16 %v2271
    %v3662 = vunpack.c.l.b16 %v2272
    %v3663 = vunpack.c.h.b16 %v2272
    %v3664 = vunpack.c.l.b16 %v2273
    %v3665 = vunpack.c.h.b16 %v2273
    %v3666 = vunpack.c.l.b16 %v2274
    %v3667 = vunpack.c.h.b16 %v2274
    %v3668 = vunpack.c.l.b16 %v2275
    %v3669 = vunpack.c.h.b16 %v2275
    %v3670 = vunpack.c.l.b16 %v2276
    %v3671 = vunpack.c.h.b16 %v2276
    %v3672 = vunpack.c.l.b16 %v2277
    %v3673 = vunpack.c.h.b16 %v2277
    %v3674 = vunpack.c.l.b16 %v2278
    %v3675 = vunpack.c.h.b16 %v2278
    %v3676 = vunpack.c.l.b16 %v2279
    %v3677 = vunpack.c.h.b16 %v2279
    %v3678 = vunpack.c.l.b16 %v2280
    %v3679 = vunpack.c.h.b16 %v2280
    %v3680 = vunpack.c.l.b16 %v2281
    %v3681 = vunpack.c.h.b16 %v2281
    %v3682 = vunpack.c.l.b16 %v2282
    %v3683 = vunpack.c.h.b16 %v2282
    %v3684 = vunpack.c.l.b16 %v2283
    %v3685 = vunpack.c.h.b16 %v2283
    %v3686 = vunpack.c.l.b16 %v2284
    %v3687 = vunpack.c.h.b16 %v2284
    %v3688 = vunpack.c.l.b16 %v2285
    %v3689 = vunpack.c.h.b16 %v2285
    %v3690 = vunpack.c.l.b16 %v2286
    %v3691 = vunpack.c.h.b16 %v2286
    %v3692 = vunpack.c.l.b16 %v2287
    %v3693 = vunpack.c.h.b16 %v2287
    %v3694 = vunpack.c.l.b16 %v2288
    %v3695 = vunpack.c.h.b16 %v2288
    %v3696 = vunpack.c.l.b16 %v2289
    %v3697 = vunpack.c.h.b16 %v2289
    %v3698 = vunpack.c.l.b16 %v2290
    %v3699 = vunpack.c.h.b16 %v2290
    %v3700 = vunpack.c.l.b16 %v2291
    %v3701 = vunpack.c.h.b16 %v2291
    %v3702 = vunpack.c.l.b16 %v2292
    %v3703 = vunpack.c.h.b16 %v2292
    %v3704 = vunpack.c.l.b16 %v2293
    %v3705 = vunpack.c.h.b16 %v2293
    %v3706 = vunpack.c.l.b16 %v2294
    %v3707 = vunpack.c.h.b16 %v2294
    %v3708 = vunpack.c.l.b16 %v2295
    %v3709 = vunpack.c.h.b16 %v2295
    %v3710 = vunpack.c.l.b16 %v2296
    %v3711 = vunpack.c.h.b16 %v2296
    %v3712 = vunpack.c.l.b16 %v2297
    %v3713 = vunpack.c.h.b16 %v2297
    %v3714 = vunpack.c.l.b16 %v2298
    %v3715 = vunpack.c.h.b16 %v2298
    %v3716 = vunpack.c.l.b16 %v2299
    %v3717 = vunpack.c.h.b16 %v2299
    %v3718 = vunpack.c.l.b16 %v2300
    %v3719 = vunpack.c.h.b16 %v2300
    %v3720 = vunpack.c.l.b16 %v2301
    %v3721 = vunpack.c.h.b16 %v2301
    %v3722 = vunpack.c.l.b16 %v2302
    %v3723 = vunpack.c.h.b16 %v2302
    %v3724 = vunpack.c.l.b16 %v2303
    %v3725 = vunpack.c.h.b16 %v2303
    %v3726 = vunpack.c.l.b16 %v2304
    %v3727 = vunpack.c.h.b16 %v2304
    %v3728 = vunpack.c.l.b16 %v2305
    %v3729 = vunpack.c.h.b16 %v2305
    %v3730 = vunpack.c.l.b16 %v2306
    %v3731 = vunpack.c.h.b16 %v2306
    %v3732 = vunpack.c.l.b16 %v2307
    %v3733 = vunpack.c.h.b16 %v2307
    %v3734 = vunpack.c.l.b16 %v2308
    %v3735 = vunpack.c.h.b16 %v2308
    %v3736 = vunpack.c.l.b16 %v2309
    %v3737 = vunpack.c.h.b16 %v2309
    %v3738 = vunpack.c.l.b16 %v2310
    %v3739 = vunpack.c.h.b16 %v2310
    %v3740 = vunpack.c.l.b16 %v2311
    %v3741 = vunpack.c.h.b16 %v2311
    %v3742 = vunpack.c.l.b16 %v2312
    %v3743 = vunpack.c.h.b16 %v2312
    %v3744 = vunpack.c.l.b16 %v2313
    %v3745 = vunpack.c.h.b16 %v2313
    %v3746 = vunpack.c.l.b16 %v2314
    %v3747 = vunpack.c.h.b16 %v2314
    %v3748 = vunpack.c.l.b16 %v2315
    %v3749 = vunpack.c.h.b16 %v2315
    %v3750 = vunpack.c.l.b16 %v2316
    %v3751 = vunpack.c.h.b16 %v2316
    %v3752 = vunpack.c.l.b16 %v2317
    %v3753 = vunpack.c.h.b16 %v2317
    %v3754 = vunpack.c.l.b16 %v2318
    %v3755 = vunpack.c.h.b16 %v2318
    %v3756 = vunpack.c.l.b16 %v2319
    %v3757 = vunpack.c.h.b16 %v2319
    %v3758 = vunpack.c.l.b16 %v2320
    %v3759 = vunpack.c.h.b16 %v2320
    %v3760 = vunpack.c.l.b16 %v2321
    %v3761 = vunpack.c.h.b16 %v2321
    %v3762 = vunpack.c.l.b16 %v2322
    %v3763 = vunpack.c.h.b16 %v2322
    %v3764 = vunpack.c.l.b16 %v2323
    %v3765 = vunpack.c.h.b16 %v2323
    %v3766 = vunpack.c.l.b16 %v2324
    %v3767 = vunpack.c.h.b16 %v2324
    %v3768 = vunpack.c.l.b16 %v2325
    %v3769 = vunpack.c.h.b16 %v2325
    %v3770 = vunpack.c.l.b16 %v2326
    %v3771 = vunpack.c.h.b16 %v2326
    %v3772 = vunpack.c.l.b16 %v2327
    %v3773 = vunpack.c.h.b16 %v2327
    %v3774 = vunpack.c.l.b16 %v2328
    %v3775 = vunpack.c.h.b16 %v2328
    %v3776 = vunpack.c.l.b16 %v2329
    %v3777 = vunpack.c.h.b16 %v2329
    %v3778 = vunpack.c.l.b16 %v2330
    %v3779 = vunpack.c.h.b16 %v2330
    %v3780 = vunpack.c.l.b16 %v2331
    %v3781 = vunpack.c.h.b16 %v2331
    %v3782 = vunpack.c.l.b16 %v2332
    %v3783 = vunpack.c.h.b16 %v2332
    %v3784 = vunpack.c.l.b16 %v2333
    %v3785 = vunpack.c.h.b16 %v2333
    %v3786 = vunpack.c.l.b16 %v2334
    %v3787 = vunpack.c.h.b16 %v2334
    %v3788 = vunpack.c.l.b16 %v2335
    %v3789 = vunpack.c.h.b16 %v2335
    %v3790 = vunpack.c.l.b16 %v2336
    %v3791 = vunpack.c.h.b16 %v2336
    %v3792 = vunpack.c.l.b16 %v2337
    %v3793 = vunpack.c.h.b16 %v2337
    %v3794 = vunpack.c.l.b16 %v2338
    %v3795 = vunpack.c.h.b16 %v2338
    %v3796 = vunpack.c.l.b16 %v2339
    %v3797 = vunpack.c.h.b16 %v2339
    %v3798 = vunpack.c.l.b16 %v2340
    %v3799 = vunpack.c.h.b16 %v2340
    %v3800 = vunpack.c.l.b16 %v2341
    %v3801 = vunpack.c.h.b16 %v2341
    %v3802 = vunpack.c.l.b16 %v2342
    %v3803 = vunpack.c.h.b16 %v2342
    %v3804 = vunpack.c.l.b16 %v2343
    %v3805 = vunpack.c.h.b16 %v2343
    %v3806 = vunpack.c.l.b16 %v2344
    %v3807 = vunpack.c.h.b16 %v2344
    %v3808 = vunpack.c.l.b16 %v2345
    %v3809 = vunpack.c.h.b16 %v2345
    %v3810 = vunpack.c.l.b16 %v2346
    %v3811 = vunpack.c.h.b16 %v2346
    %v3812 = vunpack.c.l.b16 %v2347
    %v3813 = vunpack.c.h.b16 %v2347
    %v3814 = vunpack.c.l.b16 %v2348
    %v3815 = vunpack.c.h.b16 %v2348
    %v3816 = vunpack.c.l.b16 %v2349
    %v3817 = vunpack.c.h.b16 %v2349
    %v3818 = vunpack.c.l.b16 %v2350
    %v3819 = vunpack.c.h.b16 %v2350
    %v3820 = vunpack.c.l.b16 %v2351
    %v3821 = vunpack.c.h.b16 %v2351
    %v3822 = vunpack.c.l.b16 %v2352
    %v3823 = vunpack.c.h.b16 %v2352
    %v3824 = vunpack.c.l.b16 %v2353
    %v3825 = vunpack.c.h.b16 %v2353
    %v3826 = vunpack.c.l.b16 %v2354
    %v3827 = vunpack.c.h.b16 %v2354
    %v3828 = vunpack.c.l.b16 %v2355
    %v3829 = vunpack.c.h.b16 %v2355
    %v3830 = vunpack.c.l.b16 %v2356
    %v3831 = vunpack.c.h.b16 %v2356
    %v3832 = vunpack.c.l.b16 %v2357
    %v3833 = vunpack.c.h.b16 %v2357
    %v3834 = vunpack.c.l.b16 %v2358
    %v3835 = vunpack.c.h.b16 %v2358
    %v3836 = vunpack.c.l.b16 %v2359
    %v3837 = vunpack.c.h.b16 %v2359
    %v3838 = vunpack.c.l.b16 %v2360
    %v3839 = vunpack.c.h.b16 %v2360
    %v3840 = vunpack.c.l.b16 %v2361
    %v3841 = vunpack.c.h.b16 %v2361
    %v3842 = vunpack.c.l.b16 %v2362
    %v3843 = vunpack.c.h.b16 %v2362
    %v3844 = vunpack.c.l.b16 %v2363
    %v3845 = vunpack.c.h.b16 %v2363
    %v3846 = vunpack.c.l.b16 %v2364
    %v3847 = vunpack.c.h.b16 %v2364
    %v3848 = vunpack.c.l.b16 %v2365
    %v3849 = vunpack.c.h.b16 %v2365
    %v3850 = vunpack.c.l.b16 %v2366
    %v3851 = vunpack.c.h.b16 %v2366
    %v3852 = vunpack.c.l.b16 %v2367
    %v3853 = vunpack.c.h.b16 %v2367
    %v3854 = vunpack.c.l.b16 %v2368
    %v3855 = vunpack.c.h.b16 %v2368
    %v3856 = vunpack.c.l.b16 %v2369
    %v3857 = vunpack.c.h.b16 %v2369
    %v3858 = vunpack.c.l.b16 %v2370
    %v3859 = vunpack.c.h.b16 %v2370
    %v3860 = vunpack.c.l.b16 %v2371
    %v3861 = vunpack.c.h.b16 %v2371
    %v3862 = vunpack.c.l.b16 %v2372
    %v3863 = vunpack.c.h.b16 %v2372
    %v3864 = vunpack.c.l.b16 %v2373
    %v3865 = vunpack.c.h.b16 %v2373
    %v3866 = vunpack.c.l.b16 %v2374
    %v3867 = vunpack.c.h.b16 %v2374
    %v3868 = vunpack.c.l.b16 %v2375
    %v3869 = vunpack.c.h.b16 %v2375
    %v3870 = vunpack.c.l.b16 %v2376
    %v3871 = vunpack.c.h.b16 %v2376
    %v3872 = vunpack.c.l.b16 %v2377
    %v3873 = vunpack.c.h.b16 %v2377
    %v3874 = vunpack.c.l.b16 %v2378
    %v3875 = vunpack.c.h.b16 %v2378
    %v3876 = vunpack.c.l.b16 %v2379
    %v3877 = vunpack.c.h.b16 %v2379
    %v3878 = vunpack.c.l.b16 %v2380
    %v3879 = vunpack.c.h.b16 %v2380
    %v3880 = vunpack.c.l.b16 %v2381
    %v3881 = vunpack.c.h.b16 %v2381
    %v3882 = vunpack.c.l.b16 %v2382
    %v3883 = vunpack.c.h.b16 %v2382
    %v3884 = vunpack.c.l.b16 %v2383
    %v3885 = vunpack.c.h.b16 %v2383
    %v3886 = vunpack.c.l.b16 %v2384
    %v3887 = vunpack.c.h.b16 %v2384
    %v3888 = vunpack.c.l.b16 %v2385
    %v3889 = vunpack.c.h.b16 %v2385
    %v3890 = vunpack.c.l.b16 %v2386
    %v3891 = vunpack.c.h.b16 %v2386
    %v3892 = vunpack.c.l.b16 %v2387
    %v3893 = vunpack.c.h.b16 %v2387
    %v3894 = vunpack.c.l.b16 %v2388
    %v3895 = vunpack.c.h.b16 %v2388
    %v3896 = vunpack.c.l.b16 %v2389
    %v3897 = vunpack.c.h.b16 %v2389
    %v3898 = vunpack.c.l.b16 %v2390
    %v3899 = vunpack.c.h.b16 %v2390
    %v3900 = vunpack.c.l.b16 %v2391
    %v3901 = vunpack.c.h.b16 %v2391
    %v3902 = vunpack.c.l.b16 %v2392
    %v3903 = vunpack.c.h.b16 %v2392
    %v3904 = vunpack.c.l.b16 %v2393
    %v3905 = vunpack.c.h.b16 %v2393
    %v3906 = vunpack.c.l.b16 %v2394
    %v3907 = vunpack.c.h.b16 %v2394
    %v3908 = vunpack.c.l.b16 %v2395
    %v3909 = vunpack.c.h.b16 %v2395
    %v3910 = vunpack.c.l.b16 %v2396
    %v3911 = vunpack.c.h.b16 %v2396
    %v3912 = vunpack.c.l.b16 %v2397
    %v3913 = vunpack.c.h.b16 %v2397
    %v3914 = vunpack.c.l.b16 %v2398
    %v3915 = vunpack.c.h.b16 %v2398
    %v3916 = vunpack.c.l.b16 %v2399
    %v3917 = vunpack.c.h.b16 %v2399
    %v3918 = vunpack.c.l.b16 %v2400
    %v3919 = vunpack.c.h.b16 %v2400
    %v3920 = vunpack.c.l.b16 %v2401
    %v3921 = vunpack.c.h.b16 %v2401
    %v3922 = vunpack.c.l.b16 %v2402
    %v3923 = vunpack.c.h.b16 %v2402
    %v3924 = vunpack.c.l.b16 %v2403
    %v3925 = vunpack.c.h.b16 %v2403
    %v3926 = vunpack.c.l.b16 %v2404
    %v3927 = vunpack.c.h.b16 %v2404
    %v3928 = vunpack.c.l.b16 %v2405
    %v3929 = vunpack.c.h.b16 %v2405
    %v3930 = vunpack.c.l.b16 %v2406
    %v3931 = vunpack.c.h.b16 %v2406
    %v3932 = vunpack.c.l.b16 %v2407
    %v3933 = vunpack.c.h.b16 %v2407
    %v3934 = vunpack.c.l.b16 %v2408
    %v3935 = vunpack.c.h.b16 %v2408
    %v3936 = vunpack.c.l.b16 %v2409
    %v3937 = vunpack.c.h.b16 %v2409
    %v3938 = vunpack.c.l.b16 %v2410
    %v3939 = vunpack.c.h.b16 %v2410
    %v3940 = vunpack.c.l.b16 %v2411
    %v3941 = vunpack.c.h.b16 %v2411
    %v3942 = vunpack.c.l.b16 %v2412
    %v3943 = vunpack.c.h.b16 %v2412
    %v3944 = vunpack.c.l.b16 %v2413
    %v3945 = vunpack.c.h.b16 %v2413
    %v3946 = vunpack.c.l.b16 %v2414
    %v3947 = vunpack.c.h.b16 %v2414
    %v3948 = vunpack.c.l.b16 %v2415
    %v3949 = vunpack.c.h.b16 %v2415
    %v3950 = vunpack.c.l.b16 %v2416
    %v3951 = vunpack.c.h.b16 %v2416
    %v3952 = vunpack.c.l.b16 %v2417
    %v3953 = vunpack.c.h.b16 %v2417
    %v3954 = vunpack.c.l.b16 %v2418
    %v3955 = vunpack.c.h.b16 %v2418
    %v3956 = vunpack.c.l.b16 %v2419
    %v3957 = vunpack.c.h.b16 %v2419
    %v3958 = vunpack.c.l.b16 %v2420
    %v3959 = vunpack.c.h.b16 %v2420
    %v3960 = vunpack.c.l.b16 %v2421
    %v3961 = vunpack.c.h.b16 %v2421
    %v3962 = vunpack.c.l.b16 %v2422
    %v3963 = vunpack.c.h.b16 %v2422
    %v3964 = vunpack.c.l.b16 %v2423
    %v3965 = vunpack.c.h.b16 %v2423
    %v3966 = vunpack.c.l.b16 %v2424
    %v3967 = vunpack.c.h.b16 %v2424
    %v3968 = vunpack.c.l.b16 %v2425
    %v3969 = vunpack.c.h.b16 %v2425
    %v3970 = vunpack.c.l.b16 %v2426
    %v3971 = vunpack.c.h.b16 %v2426
    %v3972 = vunpack.c.l.b16 %v2427
    %v3973 = vunpack.c.h.b16 %v2427
    %v3974 = vunpack.c.l.b16 %v2428
    %v3975 = vunpack.c.h.b16 %v2428
    %v3976 = vunpack.c.l.b16 %v2429
    %v3977 = vunpack.c.h.b16 %v2429
    %v3978 = vunpack.c.l.b16 %v2430
    %v3979 = vunpack.c.h.b16 %v2430
    %v3980 = vunpack.c.l.b16 %v2431
    %v3981 = vunpack.c.h.b16 %v2431
    %v3982 = vunpack.c.l.b16 %v2432
    %v3983 = vunpack.c.h.b16 %v2432
    %v3984 = vunpack.c.l.b16 %v2433
    %v3985 = vunpack.c.h.b16 %v2433
    %v3986 = vpack.c.b16 %v2970, %v2962
    %v3987 = vpack.c.b16 %v2971, %v2963
    %v3988 = vpack.c.b16 %v2972, %v2964
    %v3989 = vpack.c.b16 %v2973, %v2965
    %v3990 = vpack.c.b16 %v2974, %v2966
    %v3991 = vpack.c.b16 %v2975, %v2967
    %v3992 = vpack.c.b16 %v2976, %v2968
    %v3993 = vpack.c.b16 %v2977, %v2969
    %v3994 = vpack.c.b16 %v2986, %v2978
    %v3995 = vpack.c.b16 %v2987, %v2979
    %v3996 = vpack.c.b16 %v2988, %v2980
    %v3997 = vpack.c.b16 %v2989, %v2981
    %v3998 = vpack.c.b16 %v2990, %v2982
    %v3999 = vpack.c.b16 %v2991, %v2983
    %v4000 = vpack.c.b16 %v2992, %v2984
    %v4001 = vpack.c.b16 %v2993, %v2985
    %v4002 = vpack.c.b16 %v3002, %v2994
    %v4003 = vpack.c.b16 %v3003, %v2995
    %v4004 = vpack.c.b16 %v3004, %v2996
    %v4005 = vpack.c.b16 %v3005, %v2997
    %v4006 = vpack.c.b16 %v3006, %v2998
    %v4007 = vpack.c.b16 %v3007, %v2999
    %v4008 = vpack.c.b16 %v3008, %v3000
    %v4009 = vpack.c.b16 %v3009, %v3001
    %v4010 = vpack.c.b16 %v3018, %v3010
    %v4011 = vpack.c.b16 %v3019, %v3011
    %v4012 = vpack.c.b16 %v3020, %v3012
    %v4013 = vpack.c.b16 %v3021, %v3013
    %v4014 = vpack.c.b16 %v3022, %v3014
    %v4015 = vpack.c.b16 %v3023, %v3015
    %v4016 = vpack.c.b16 %v3024, %v3016
    %v4017 = vpack.c.b16 %v3025, %v3017
    %v4018 = vpack.c.b16 %v3034, %v3026
    %v4019 = vpack.c.b16 %v3035, %v3027
    %v4020 = vpack.c.b16 %v3036, %v3028
    %v4021 = vpack.c.b16 %v3037, %v3029
    %v4022 = vpack.c.b16 %v3038, %v3030
    %v4023 = vpack.c.b16 %v3039, %v3031
    %v4024 = vpack.c.b16 %v3040, %v3032
    %v4025 = vpack.c.b16 %v3041, %v3033
    %v4026 = vpack.c.b16 %v3050, %v3042
    %v4027 = vpack.c.b16 %v3051, %v3043
    %v4028 = vpack.c.b16 %v3052, %v3044
    %v4029 = vpack.c.b16 %v3053, %v3045
    %v4030 = vpack.c.b16 %v3054, %v3046
    %v4031 = vpack.c.b16 %v3055, %v3047
    %v4032 = vpack.c.b16 %v3056, %v3048
    %v4033 = vpack.c.b16 %v3057, %v3049
    %v4034 = vpack.c.b16 %v3066, %v3058
    %v4035 = vpack.c.b16 %v3067, %v3059
    %v4036 = vpack.c.b16 %v3068, %v3060
    %v4037 = vpack.c.b16 %v3069, %v3061
    %v4038 = vpack.c.b16 %v3070, %v3062
    %v4039 = vpack.c.b16 %v3071, %v3063
    %v4040 = vpack.c.b16 %v3072, %v3064
    %v4041 = vpack.c.b16 %v3073, %v3065
    %v4042 = vpack.c.b16 %v3082, %v3074
    %v4043 = vpack.c.b16 %v3083, %v3075
    %v4044 = vpack.c.b16 %v3084, %v3076
    %v4045 = vpack.c.b16 %v3085, %v3077
    %v4046 = vpack.c.b16 %v3086, %v3078
    %v4047 = vpack.c.b16 %v3087, %v3079
    %v4048 = vpack.c.b16 %v3088, %v3080
    %v4049 = vpack.c.b16 %v3089, %v3081
    %v4050 = vpack.c.b16 %v3098, %v3090
    %v4051 = vpack.c.b16 %v3099, %v3091
    %v4052 = vpack.c.b16 %v3100, %v3092
    %v4053 = vpack.c.b16 %v3101, %v3093
    %v4054 = vpack.c.b16 %v3102, %v3094
    %v4055 = vpack.c.b16 %v3103, %v3095
    %v4056 = vpack.c.b16 %v3104, %v3096
    %v4057 = vpack.c.b16 %v3105, %v3097
    %v4058 = vpack.c.b16 %v3114, %v3106
    %v4059 = vpack.c.b16 %v3115, %v3107
    %v4060 = vpack.c.b16 %v3116, %v3108
    %v4061 = vpack.c.b16 %v3117, %v3109
    %v4062 = vpack.c.b16 %v3118, %v3110
    %v4063 = vpack.c.b16 %v3119, %v3111
    %v4064 = vpack.c.b16 %v3120, %v3112
    %v4065 = vpack.c.b16 %v3121, %v3113
    %v4066 = vpack.c.b16 %v3130, %v3122
    %v4067 = vpack.c.b16 %v3131, %v3123
    %v4068 = vpack.c.b16 %v3132, %v3124
    %v4069 = vpack.c.b16 %v3133, %v3125
    %v4070 = vpack.c.b16 %v3134, %v3126
    %v4071 = vpack.c.b16 %v3135, %v3127
    %v4072 = vpack.c.b16 %v3136, %v3128
    %v4073 = vpack.c.b16 %v3137, %v3129
    %v4074 = vpack.c.b16 %v3146, %v3138
    %v4075 = vpack.c.b16 %v3147, %v3139
    %v4076 = vpack.c.b16 %v3148, %v3140
    %v4077 = vpack.c.b16 %v3149, %v3141
    %v4078 = vpack.c.b16 %v3150, %v3142
    %v4079 = vpack.c.b16 %v3151, %v3143
    %v4080 = vpack.c.b16 %v3152, %v3144
    %v4081 = vpack.c.b16 %v3153, %v3145
    %v4082 = vpack.c.b16 %v3162, %v3154
    %v4083 = vpack.c.b16 %v3163, %v3155
    %v4084 = vpack.c.b16 %v3164, %v3156
    %v4085 = vpack.c.b16 %v3165, %v3157
    %v4086 = vpack.c.b16 %v3166, %v3158
    %v4087 = vpack.c.b16 %v3167, %v3159
    %v4088 = vpack.c.b16 %v3168, %v3160
    %v4089 = vpack.c.b16 %v3169, %v3161
    %v4090 = vpack.c.b16 %v3178, %v3170
    %v4091 = vpack.c.b16 %v3179, %v3171
    %v4092 = vpack.c.b16 %v3180, %v3172
    %v4093 = vpack.c.b16 %v3181, %v3173
    %v4094 = vpack.c.b16 %v3182, %v3174
    %v4095 = vpack.c.b16 %v3183, %v3175
    %v4096 = vpack.c.b16 %v3184, %v3176
    %v4097 = vpack.c.b16 %v3185, %v3177
    %v4098 = vpack.c.b16 %v3194, %v3186
    %v4099 = vpack.c.b16 %v3195, %v3187
    %v4100 = vpack.c.b16 %v3196, %v3188
    %v4101 = vpack.c.b16 %v3197, %v3189
    %v4102 = vpack.c.b16 %v3198, %v3190
    %v4103 = vpack.c.b16 %v3199, %v3191
    %v4104 = vpack.c.b16 %v3200, %v3192
    %v4105 = vpack.c.b16 %v3201, %v3193
    %v4106 = vpack.c.b16 %v3210, %v3202
    %v4107 = vpack.c.b16 %v3211, %v3203
    %v4108 = vpack.c.b16 %v3212, %v3204
    %v4109 = vpack.c.b16 %v3213, %v3205
    %v4110 = vpack.c.b16 %v3214, %v3206
    %v4111 = vpack.c.b16 %v3215, %v3207
    %v4112 = vpack.c.b16 %v3216, %v3208
    %v4113 = vpack.c.b16 %v3217, %v3209
    %v4114 = vpack.c.b16 %v3226, %v3218
    %v4115 = vpack.c.b16 %v3227, %v3219
    %v4116 = vpack.c.b16 %v3228, %v3220
    %v4117 = vpack.c.b16 %v3229, %v3221
    %v4118 = vpack.c.b16 %v3230, %v3222
    %v4119 = vpack.c.b16 %v3231, %v3223
    %v4120 = vpack.c.b16 %v3232, %v3224
    %v4121 = vpack.c.b16 %v3233, %v3225
    %v4122 = vpack.c.b16 %v3242, %v3234
    %v4123 = vpack.c.b16 %v3243, %v3235
    %v4124 = vpack.c.b16 %v3244, %v3236
    %v4125 = vpack.c.b16 %v3245, %v3237
    %v4126 = vpack.c.b16 %v3246, %v3238
    %v4127 = vpack.c.b16 %v3247, %v3239
    %v4128 = vpack.c.b16 %v3248, %v3240
    %v4129 = vpack.c.b16 %v3249, %v3241
    %v4130 = vpack.c.b16 %v3258, %v3250
    %v4131 = vpack.c.b16 %v3259, %v3251
    %v4132 = vpack.c.b16 %v3260, %v3252
    %v4133 = vpack.c.b16 %v3261, %v3253
    %v4134 = vpack.c.b16 %v3262, %v3254
    %v4135 = vpack.c.b16 %v3263, %v3255
    %v4136 = vpack.c.b16 %v3264, %v3256
    %v4137 = vpack.c.b16 %v3265, %v3257
    %v4138 = vpack.c.b16 %v3274, %v3266
    %v4139 = vpack.c.b16 %v3275, %v3267
    %v4140 = vpack.c.b16 %v3276, %v3268
    %v4141 = vpack.c.b16 %v3277, %v3269
    %v4142 = vpack.c.b16 %v3278, %v3270
    %v4143 = vpack.c.b16 %v3279, %v3271
    %v4144 = vpack.c.b16 %v3280, %v3272
    %v4145 = vpack.c.b16 %v3281, %v3273
    %v4146 = vpack.c.b16 %v3290, %v3282
    %v4147 = vpack.c.b16 %v3291, %v3283
    %v4148 = vpack.c.b16 %v3292, %v3284
    %v4149 = vpack.c.b16 %v3293, %v3285
    %v4150 = vpack.c.b16 %v3294, %v3286
    %v4151 = vpack.c.b16 %v3295, %v3287
    %v4152 = vpack.c.b16 %v3296, %v3288
    %v4153 = vpack.c.b16 %v3297, %v3289
    %v4154 = vpack.c.b16 %v3306, %v3298
    %v4155 = vpack.c.b16 %v3307, %v3299
    %v4156 = vpack.c.b16 %v3308, %v3300
    %v4157 = vpack.c.b16 %v3309, %v3301
    %v4158 = vpack.c.b16 %v3310, %v3302
    %v4159 = vpack.c.b16 %v3311, %v3303
    %v4160 = vpack.c.b16 %v3312, %v3304
    %v4161 = vpack.c.b16 %v3313, %v3305
    %v4162 = vpack.c.b16 %v3322, %v3314
    %v4163 = vpack.c.b16 %v3323, %v3315
    %v4164 = vpack.c.b16 %v3324, %v3316
    %v4165 = vpack.c.b16 %v3325, %v3317
    %v4166 = vpack.c.b16 %v3326, %v3318
    %v4167 = vpack.c.b16 %v3327, %v3319
    %v4168 = vpack.c.b16 %v3328, %v3320
    %v4169 = vpack.c.b16 %v3329, %v3321
    %v4170 = vpack.c.b16 %v3338, %v3330
    %v4171 = vpack.c.b16 %v3339, %v3331
    %v4172 = vpack.c.b16 %v3340, %v3332
    %v4173 = vpack.c.b16 %v3341, %v3333
    %v4174 = vpack.c.b16 %v3342, %v3334
    %v4175 = vpack.c.b16 %v3343, %v3335
    %v4176 = vpack.c.b16 %v3344, %v3336
    %v4177 = vpack.c.b16 %v3345, %v3337
    %v4178 = vpack.c.b16 %v3354, %v3346
    %v4179 = vpack.c.b16 %v3355, %v3347
    %v4180 = vpack.c.b16 %v3356, %v3348
    %v4181 = vpack.c.b16 %v3357, %v3349
    %v4182 = vpack.c.b16 %v3358, %v3350
    %v4183 = vpack.c.b16 %v3359, %v3351
    %v4184 = vpack.c.b16 %v3360, %v3352
    %v4185 = vpack.c.b16 %v3361, %v3353
    %v4186 = vpack.c.b16 %v3370, %v3362
    %v4187 = vpack.c.b16 %v3371, %v3363
    %v4188 = vpack.c.b16 %v3372, %v3364
    %v4189 = vpack.c.b16 %v3373, %v3365
    %v4190 = vpack.c.b16 %v3374, %v3366
    %v4191 = vpack.c.b16 %v3375, %v3367
    %v4192 = vpack.c.b16 %v3376, %v3368
    %v4193 = vpack.c.b16 %v3377, %v3369
    %v4194 = vpack.c.b16 %v3386, %v3378
    %v4195 = vpack.c.b16 %v3387, %v3379
    %v4196 = vpack.c.b16 %v3388, %v3380
    %v4197 = vpack.c.b16 %v3389, %v3381
    %v4198 = vpack.c.b16 %v3390, %v3382
    %v4199 = vpack.c.b16 %v3391, %v3383
    %v4200 = vpack.c.b16 %v3392, %v3384
    %v4201 = vpack.c.b16 %v3393, %v3385
    %v4202 = vpack.c.b16 %v3402, %v3394
    %v4203 = vpack.c.b16 %v3403, %v3395
    %v4204 = vpack.c.b16 %v3404, %v3396
    %v4205 = vpack.c.b16 %v3405, %v3397
    %v4206 = vpack.c.b16 %v3406, %v3398
    %v4207 = vpack.c.b16 %v3407, %v3399
    %v4208 = vpack.c.b16 %v3408, %v3400
    %v4209 = vpack.c.b16 %v3409, %v3401
    %v4210 = vpack.c.b16 %v3418, %v3410
    %v4211 = vpack.c.b16 %v3419, %v3411
    %v4212 = vpack.c.b16 %v3420, %v3412
    %v4213 = vpack.c.b16 %v3421, %v3413
    %v4214 = vpack.c.b16 %v3422, %v3414
    %v4215 = vpack.c.b16 %v3423, %v3415
    %v4216 = vpack.c.b16 %v3424, %v3416
    %v4217 = vpack.c.b16 %v3425, %v3417
    %v4218 = vpack.c.b16 %v3434, %v3426
    %v4219 = vpack.c.b16 %v3435, %v3427
    %v4220 = vpack.c.b16 %v3436, %v3428
    %v4221 = vpack.c.b16 %v3437, %v3429
    %v4222 = vpack.c.b16 %v3438, %v3430
    %v4223 = vpack.c.b16 %v3439, %v3431
    %v4224 = vpack.c.b16 %v3440, %v3432
    %v4225 = vpack.c.b16 %v3441, %v3433
    %v4226 = vpack.c.b16 %v3450, %v3442
    %v4227 = vpack.c.b16 %v3451, %v3443
    %v4228 = vpack.c.b16 %v3452, %v3444
    %v4229 = vpack.c.b16 %v3453, %v3445
    %v4230 = vpack.c.b16 %v3454, %v3446
    %v4231 = vpack.c.b16 %v3455, %v3447
    %v4232 = vpack.c.b16 %v3456, %v3448
    %v4233 = vpack.c.b16 %v3457, %v3449
    %v4234 = vpack.c.b16 %v3466, %v3458
    %v4235 = vpack.c.b16 %v3467, %v3459
    %v4236 = vpack.c.b16 %v3468, %v3460
    %v4237 = vpack.c.b16 %v3469, %v3461
    %v4238 = vpack.c.b16 %v3470, %v3462
    %v4239 = vpack.c.b16 %v3471, %v3463
    %v4240 = vpack.c.b16 %v3472, %v3464
    %v4241 = vpack.c.b16 %v3473, %v3465
    %v4242 = vpack.c.b16 %v3482, %v3474
    %v4243 = vpack.c.b16 %v3483, %v3475
    %v4244 = vpack.c.b16 %v3484, %v3476
    %v4245 = vpack.c.b16 %v3485, %v3477
    %v4246 = vpack.c.b16 %v3486, %v3478
    %v4247 = vpack.c.b16 %v3487, %v3479
    %v4248 = vpack.c.b16 %v3488, %v3480
    %v4249 = vpack.c.b16 %v3489, %v3481
    %v4250 = vpack.c.b16 %v3498, %v3490
    %v4251 = vpack.c.b16 %v3499, %v3491
    %v4252 = vpack.c.b16 %v3500, %v3492
    %v4253 = vpack.c.b16 %v3501, %v3493
    %v4254 = vpack.c.b16 %v3502, %v3494
    %v4255 = vpack.c.b16 %v3503, %v3495
    %v4256 = vpack.c.b16 %v3504, %v3496
    %v4257 = vpack.c.b16 %v3505, %v3497
    %v4258 = vpack.c.b16 %v3514, %v3506
    %v4259 = vpack.c.b16 %v3515, %v3507
    %v4260 = vpack.c.b16 %v3516, %v3508
    %v4261 = vpack.c.b16 %v3517, %v3509
    %v4262 = vpack.c.b16 %v3518, %v3510
    %v4263 = vpack.c.b16 %v3519, %v3511
    %v4264 = vpack.c.b16 %v3520, %v3512
    %v4265 = vpack.c.b16 %v3521, %v3513
    %v4266 = vpack.c.b16 %v3530, %v3522
    %v4267 = vpack.c.b16 %v3531, %v3523
    %v4268 = vpack.c.b16 %v3532, %v3524
    %v4269 = vpack.c.b16 %v3533, %v3525
    %v4270 = vpack.c.b16 %v3534, %v3526
    %v4271 = vpack.c.b16 %v3535, %v3527
    %v4272 = vpack.c.b16 %v3536, %v3528
    %v4273 = vpack.c.b16 %v3537, %v3529
    %v4274 = vpack.c.b16 %v3546, %v3538
    %v4275 = vpack.c.b16 %v3547, %v3539
    %v4276 = vpack.c.b16 %v3548, %v3540
    %v4277 = vpack.c.b16 %v3549, %v3541
    %v4278 = vpack.c.b16 %v3550, %v3542
    %v4279 = vpack.c.b16 %v3551, %v3543
    %v4280 = vpack.c.b16 %v3552, %v3544
    %v4281 = vpack.c.b16 %v3553, %v3545
    %v4282 = vpack.c.b16 %v3562, %v3554
    %v4283 = vpack.c.b16 %v3563, %v3555
    %v4284 = vpack.c.b16 %v3564, %v3556
    %v4285 = vpack.c.b16 %v3565, %v3557
    %v4286 = vpack.c.b16 %v3566, %v3558
    %v4287 = vpack.c.b16 %v3567, %v3559
    %v4288 = vpack.c.b16 %v3568, %v3560
    %v4289 = vpack.c.b16 %v3569, %v3561
    %v4290 = vpack.c.b16 %v3578, %v3570
    %v4291 = vpack.c.b16 %v3579, %v3571
    %v4292 = vpack.c.b16 %v3580, %v3572
    %v4293 = vpack.c.b16 %v3581, %v3573
    %v4294 = vpack.c.b16 %v3582, %v3574
    %v4295 = vpack.c.b16 %v3583, %v3575
    %v4296 = vpack.c.b16 %v3584, %v3576
    %v4297 = vpack.c.b16 %v3585, %v3577
    %v4298 = vpack.c.b16 %v3594, %v3586
    %v4299 = vpack.c.b16 %v3595, %v3587
    %v4300 = vpack.c.b16 %v3596, %v3588
    %v4301 = vpack.c.b16 %v3597, %v3589
    %v4302 = vpack.c.b16 %v3598, %v3590
    %v4303 = vpack.c.b16 %v3599, %v3591
    %v4304 = vpack.c.b16 %v3600, %v3592
    %v4305 = vpack.c.b16 %v3601, %v3593
    %v4306 = vpack.c.b16 %v3610, %v3602
    %v4307 = vpack.c.b16 %v3611, %v3603
    %v4308 = vpack.c.b16 %v3612, %v3604
    %v4309 = vpack.c.b16 %v3613, %v3605
    %v4310 = vpack.c.b16 %v3614, %v3606
    %v4311 = vpack.c.b16 %v3615, %v3607
    %v4312 = vpack.c.b16 %v3616, %v3608
    %v4313 = vpack.c.b16 %v3617, %v3609
    %v4314 = vpack.c.b16 %v3626, %v3618
    %v4315 = vpack.c.b16 %v3627, %v3619
    %v4316 = vpack.c.b16 %v3628, %v3620
    %v4317 = vpack.c.b16 %v3629, %v3621
    %v4318 = vpack.c.b16 %v3630, %v3622
    %v4319 = vpack.c.b16 %v3631, %v3623
    %v4320 = vpack.c.b16 %v3632, %v3624
    %v4321 = vpack.c.b16 %v3633, %v3625
    %v4322 = vpack.c.b16 %v3642, %v3634
    %v4323 = vpack.c.b16 %v3643, %v3635
    %v4324 = vpack.c.b16 %v3644, %v3636
    %v4325 = vpack.c.b16 %v3645, %v3637
    %v4326 = vpack.c.b16 %v3646, %v3638
    %v4327 = vpack.c.b16 %v3647, %v3639
    %v4328 = vpack.c.b16 %v3648, %v3640
    %v4329 = vpack.c.b16 %v3649, %v3641
    %v4330 = vpack.c.b16 %v3658, %v3650
    %v4331 = vpack.c.b16 %v3659, %v3651
    %v4332 = vpack.c.b16 %v3660, %v3652
    %v4333 = vpack.c.b16 %v3661, %v3653
    %v4334 = vpack.c.b16 %v3662, %v3654
    %v4335 = vpack.c.b16 %v3663, %v3655
    %v4336 = vpack.c.b16 %v3664, %v3656
    %v4337 = vpack.c.b16 %v3665, %v3657
    %v4338 = vpack.c.b16 %v3674, %v3666
    %v4339 = vpack.c.b16 %v3675, %v3667
    %v4340 = vpack.c.b16 %v3676, %v3668
    %v4341 = vpack.c.b16 %v3677, %v3669
    %v4342 = vpack.c.b16 %v3678, %v3670
    %v4343 = vpack.c.b16 %v3679, %v3671
    %v4344 = vpack.c.b16 %v3680, %v3672
    %v4345 = vpack.c.b16 %v3681, %v3673
    %v4346 = vpack.c.b16 %v3690, %v3682
    %v4347 = vpack.c.b16 %v3691, %v3683
    %v4348 = vpack.c.b16 %v3692, %v3684
    %v4349 = vpack.c.b16 %v3693, %v3685
    %v4350 = vpack.c.b16 %v3694, %v3686
    %v4351 = vpack.c.b16 %v3695, %v3687
    %v4352 = vpack.c.b16 %v3696, %v3688
    %v4353 = vpack.c.b16 %v3697, %v3689
    %v4354 = vpack.c.b16 %v3706, %v3698
    %v4355 = vpack.c.b16 %v3707, %v3699
    %v4356 = vpack.c.b16 %v3708, %v3700
    %v4357 = vpack.c.b16 %v3709, %v3701
    %v4358 = vpack.c.b16 %v3710, %v3702
    %v4359 = vpack.c.b16 %v3711, %v3703
    %v4360 = vpack.c.b16 %v3712, %v3704
    %v4361 = vpack.c.b16 %v3713, %v3705
    %v4362 = vpack.c.b16 %v3722, %v3714
    %v4363 = vpack.c.b16 %v3723, %v3715
    %v4364 = vpack.c.b16 %v3724, %v3716
    %v4365 = vpack.c.b16 %v3725, %v3717
    %v4366 = vpack.c.b16 %v3726, %v3718
    %v4367 = vpack.c.b16 %v3727, %v3719
    %v4368 = vpack.c.b16 %v3728, %v3720
    %v4369 = vpack.c.b16 %v3729, %v3721
    %v4370 = vpack.c.b16 %v3738, %v3730
    %v4371 = vpack.c.b16 %v3739, %v3731
    %v4372 = vpack.c.b16 %v3740, %v3732
    %v4373 = vpack.c.b16 %v3741, %v3733
    %v4374 = vpack.c.b16 %v3742, %v3734
    %v4375 = vpack.c.b16 %v3743, %v3735
    %v4376 = vpack.c.b16 %v3744, %v3736
    %v4377 = vpack.c.b16 %v3745, %v3737
    %v4378 = vpack.c.b16 %v3754, %v3746
    %v4379 = vpack.c.b16 %v3755, %v3747
    %v4380 = vpack.c.b16 %v3756, %v3748
    %v4381 = vpack.c.b16 %v3757, %v3749
    %v4382 = vpack.c.b16 %v3758, %v3750
    %v4383 = vpack.c.b16 %v3759, %v3751
    %v4384 = vpack.c.b16 %v3760, %v3752
    %v4385 = vpack.c.b16 %v3761, %v3753
    %v4386 = vpack.c.b16 %v3770, %v3762
    %v4387 = vpack.c.b16 %v3771, %v3763
    %v4388 = vpack.c.b16 %v3772, %v3764
    %v4389 = vpack.c.b16 %v3773, %v3765
    %v4390 = vpack.c.b16 %v3774, %v3766
    %v4391 = vpack.c.b16 %v3775, %v3767
    %v4392 = vpack.c.b16 %v3776, %v3768
    %v4393 = vpack.c.b16 %v3777, %v3769
    %v4394 = vpack.c.b16 %v3786, %v3778
    %v4395 = vpack.c.b16 %v3787, %v3779
    %v4396 = vpack.c.b16 %v3788, %v3780
    %v4397 = vpack.c.b16 %v3789, %v3781
    %v4398 = vpack.c.b16 %v3790, %v3782
    %v4399 = vpack.c.b16 %v3791, %v3783
    %v4400 = vpack.c.b16 %v3792, %v3784
    %v4401 = vpack.c.b16 %v3793, %v3785
    %v4402 = vpack.c.b16 %v3802, %v3794
    %v4403 = vpack.c.b16 %v3803, %v3795
    %v4404 = vpack.c.b16 %v3804, %v3796
    %v4405 = vpack.c.b16 %v3805, %v3797
    %v4406 = vpack.c.b16 %v3806, %v3798
    %v4407 = vpack.c.b16 %v3807, %v3799
    %v4408 = vpack.c.b16 %v3808, %v3800
    %v4409 = vpack.c.b16 %v3809, %v3801
    %v4410 = vpack.c.b16 %v3818, %v3810
    %v4411 = vpack.c.b16 %v3819, %v3811
    %v4412 = vpack.c.b16 %v3820, %v3812
    %v4413 = vpack.c.b16 %v3821, %v3813
    %v4414 = vpack.c.b16 %v3822, %v3814
    %v4415 = vpack.c.b16 %v3823, %v3815
    %v4416 = vpack.c.b16 %v3824, %v3816
    %v4417 = vpack.c.b16 %v3825, %v3817
    %v4418 = vpack.c.b16 %v3834, %v3826
    %v4419 = vpack.c.b16 %v3835, %v3827
    %v4420 = vpack.c.b16 %v3836, %v3828
    %v4421 = vpack.c.b16 %v3837, %v3829
    %v4422 = vpack.c.b16 %v3838, %v3830
    %v4423 = vpack.c.b16 %v3839, %v3831
    %v4424 = vpack.c.b16 %v3840, %v3832
    %v4425 = vpack.c.b16 %v3841, %v3833
    %v4426 = vpack.c.b16 %v3850, %v3842
    %v4427 = vpack.c.b16 %v3851, %v3843
    %v4428 = vpack.c.b16 %v3852, %v3844
    %v4429 = vpack.c.b16 %v3853, %v3845
    %v4430 = vpack.c.b16 %v3854, %v3846
    %v4431 = vpack.c.b16 %v3855, %v3847
    %v4432 = vpack.c.b16 %v3856, %v3848
    %v4433 = vpack.c.b16 %v3857, %v3849
    %v4434 = vpack.c.b16 %v3866, %v3858
    %v4435 = vpack.c.b16 %v3867, %v3859
    %v4436 = vpack.c.b16 %v3868, %v3860
    %v4437 = vpack.c.b16 %v3869, %v3861
    %v4438 = vpack.c.b16 %v3870, %v3862
    %v4439 = vpack.c.b16 %v3871, %v3863
    %v4440 = vpack.c.b16 %v3872, %v3864
    %v4441 = vpack.c.b16 %v3873, %v3865
    %v4442 = vpack.c.b16 %v3882, %v3874
    %v4443 = vpack.c.b16 %v3883, %v3875
    %v4444 = vpack.c.b16 %v3884, %v3876
    %v4445 = vpack.c.b16 %v3885, %v3877
    %v4446 = vpack.c.b16 %v3886, %v3878
    %v4447 = vpack.c.b16 %v3887, %v3879
    %v4448 = vpack.c.b16 %v3888, %v3880
    %v4449 = vpack.c.b16 %v3889, %v3881
    %v4450 = vpack.c.b16 %v3898, %v3890
    %v4451 = vpack.c.b16 %v3899, %v3891
    %v4452 = vpack.c.b16 %v3900, %v3892
    %v4453 = vpack.c.b16 %v3901, %v3893
    %v4454 = vpack.c.b16 %v3902, %v3894
    %v4455 = vpack.c.b16 %v3903, %v3895
    %v4456 = vpack.c.b16 %v3904, %v3896
    %v4457 = vpack.c.b16 %v3905, %v3897
    %v4458 = vpack.c.b16 %v3914, %v3906
    %v4459 = vpack.c.b16 %v3915, %v3907
    %v4460 = vpack.c.b16 %v3916, %v3908
    %v4461 = vpack.c.b16 %v3917, %v3909
    %v4462 = vpack.c.b16 %v3918, %v3910
    %v4463 = vpack.c.b16 %v3919, %v3911
    %v4464 = vpack.c.b16 %v3920, %v3912
    %v4465 = vpack.c.b16 %v3921, %v3913
    %v4466 = vpack.c.b16 %v3930, %v3922
    %v4467 = vpack.c.b16 %v3931, %v3923
    %v4468 = vpack.c.b16 %v3932, %v3924
    %v4469 = vpack.c.b16 %v3933, %v3925
    %v4470 = vpack.c.b16 %v3934, %v3926
    %v4471 = vpack.c.b16 %v3935, %v3927
    %v4472 = vpack.c.b16 %v3936, %v3928
    %v4473 = vpack.c.b16 %v3937, %v3929
    %v4474 = vpack.c.b16 %v3946, %v3938
    %v4475 = vpack.c.b16 %v3947, %v3939
    %v4476 = vpack.c.b16 %v3948, %v3940
    %v4477 = vpack.c.b16 %v3949, %v3941
    %v4478 = vpack.c.b16 %v3950, %v3942
    %v4479 = vpack.c.b16 %v3951, %v3943
    %v4480 = vpack.c.b16 %v3952, %v3944
    %v4481 = vpack.c.b16 %v3953, %v3945
    %v4482 = vpack.c.b16 %v3962, %v3954
    %v4483 = vpack.c.b16 %v3963, %v3955
    %v4484 = vpack.c.b16 %v3964, %v3956
    %v4485 = vpack.c.b16 %v3965, %v3957
    %v4486 = vpack.c.b16 %v3966, %v3958
    %v4487 = vpack.c.b16 %v3967, %v3959
    %v4488 = vpack.c.b16 %v3968, %v3960
    %v4489 = vpack.c.b16 %v3969, %v3961
    %v4490 = vpack.c.b16 %v3978, %v3970
    %v4491 = vpack.c.b16 %v3979, %v3971
    %v4492 = vpack.c.b16 %v3980, %v3972
    %v4493 = vpack.c.b16 %v3981, %v3973
    %v4494 = vpack.c.b16 %v3982, %v3974
    %v4495 = vpack.c.b16 %v3983, %v3975
    %v4496 = vpack.c.b16 %v3984, %v3976
    %v4497 = vpack.c.b16 %v3985, %v3977
    %5010 = vmatprep.subr.bf16.mxu0 %v4043
    %5011 = vmatpush1.bf16.msra.mxu0 %v4042
    %5012 = vmatprep.subr.bf16.mxu0 %v4035
    %5013 = vmatpush1.bf16.msra.mxu0 %v4034
    %5014 = vmatprep.subr.bf16.mxu0 %v4027
    %5015 = vmatpush1.bf16.msra.mxu0 %v4026
    %5016 = vmatprep.subr.bf16.mxu0 %v4019
    %5017 = vmatpush1.bf16.msra.mxu0 %v4018
    %5018 = vmatprep.subr.bf16.mxu0 %v4011
    %5019 = vmatpush1.bf16.msra.mxu0 %v4010
    %5020 = vmatprep.subr.bf16.mxu0 %v4003
    %5021 = vmatpush1.bf16.msra.mxu0 %v4002
    %5022 = vmatprep.subr.bf16.mxu0 %v3995
    %5023 = vmatpush1.bf16.msra.mxu0 %v3994
    %5024 = vmatprep.subr.bf16.mxu0 %v3987
    %5025 = vmatpush1.bf16.msra.mxu0 %v3986
    %5026 = vmatprep.subr.bf16.mxu0 %v4107
    %5027 = vmatpush2.bf16.msra.mxu0 %v4106
    %5028 = vmatprep.subr.bf16.mxu0 %v4099
    %5029 = vmatpush2.bf16.msra.mxu0 %v4098
    %5030 = vmatprep.subr.bf16.mxu0 %v4091
    %5031 = vmatpush2.bf16.msra.mxu0 %v4090
    %5032 = vmatprep.subr.bf16.mxu0 %v4083
    %5033 = vmatpush2.bf16.msra.mxu0 %v4082
    %5034 = vmatprep.subr.bf16.mxu0 %v4075
    %5035 = vmatpush2.bf16.msra.mxu0 %v4074
    %5036 = vmatprep.subr.bf16.mxu0 %v4067
    %5037 = vmatpush2.bf16.msra.mxu0 %v4066
    %5038 = vmatprep.subr.bf16.mxu0 %v4059
    %5039 = vmatpush2.bf16.msra.mxu0 %v4058
    %5040 = vmatprep.subr.bf16.mxu0 %v4051
    %5041 = vmatpush2.bf16.msra.mxu0 %v4050
    %5042 = vmatprep.mubr.bf16.mxu0 %v2435
    %5043 = vmatmul.mubr.bf16.gmra.mxu0 %v2434
    %v5044 = vpop.f32.mrf.mxu0
    %v5045 = vadd.f32 0.0, %v5044
    %v5046 = vpop.f32.mrf.mxu0
    %v5047 = vadd.f32 0.0, %v5046
    %v5048 = vpop.f32.mrf.mxu0
    %v5049 = vadd.f32 0.0, %v5048
    %v5050 = vpop.f32.mrf.mxu0
    %v5051 = vadd.f32 0.0, %v5050
    %5052 = vdwg.mxu0
    %5053 = vmatprep.subr.bf16.mxu0 %v4171
    %5054 = vmatpush1.bf16.msra.mxu0 %v4170
    %5055 = vmatprep.subr.bf16.mxu0 %v4163
    %5056 = vmatpush1.bf16.msra.mxu0 %v4162
    %5057 = vmatprep.subr.bf16.mxu0 %v4155
    %5058 = vmatpush1.bf16.msra.mxu0 %v4154
    %5059 = vmatprep.subr.bf16.mxu0 %v4147
    %5060 = vmatpush1.bf16.msra.mxu0 %v4146
    %5061 = vmatprep.subr.bf16.mxu0 %v4139
    %5062 = vmatpush1.bf16.msra.mxu0 %v4138
    %5063 = vmatprep.subr.bf16.mxu0 %v4131
    %5064 = vmatpush1.bf16.msra.mxu0 %v4130
    %5065 = vmatprep.subr.bf16.mxu0 %v4123
    %5066 = vmatpush1.bf16.msra.mxu0 %v4122
    %5067 = vmatprep.subr.bf16.mxu0 %v4115
    %5068 = vmatpush1.bf16.msra.mxu0 %v4114
    %5069 = vmatprep.subr.bf16.mxu0 %v4235
    %5070 = vmatpush2.bf16.msra.mxu0 %v4234
    %5071 = vmatprep.subr.bf16.mxu0 %v4227
    %5072 = vmatpush2.bf16.msra.mxu0 %v4226
    %5073 = vmatprep.subr.bf16.mxu0 %v4219
    %5074 = vmatpush2.bf16.msra.mxu0 %v4218
    %5075 = vmatprep.subr.bf16.mxu0 %v4211
    %5076 = vmatpush2.bf16.msra.mxu0 %v4210
    %5077 = vmatprep.subr.bf16.mxu0 %v4203
    %5078 = vmatpush2.bf16.msra.mxu0 %v4202
    %5079 = vmatprep.subr.bf16.mxu0 %v4195
    %5080 = vmatpush2.bf16.msra.mxu0 %v4194
    %5081 = vmatprep.subr.bf16.mxu0 %v4187
    %5082 = vmatpush2.bf16.msra.mxu0 %v4186
    %5083 = vmatprep.subr.bf16.mxu0 %v4179
    %5084 = vmatpush2.bf16.msra.mxu0 %v4178
    %5085 = vmatprep.mubr.bf16.mxu0 %v2437
    %5086 = vmatmul.mubr.bf16.gmra.mxu0 %v2436
    %v5087 = vpop.f32.mrf.mxu0
    %v5088 = vadd.f32 %v5045, %v5087
    %v5089 = vpop.f32.mrf.mxu0
    %v5090 = vadd.f32 %v5047, %v5089
    %v5091 = vpop.f32.mrf.mxu0
    %v5092 = vadd.f32 %v5049, %v5091
    %v5093 = vpop.f32.mrf.mxu0
    %v5094 = vadd.f32 %v5051, %v5093
    %5095 = vdwg.mxu0
    %5096 = vmatprep.subr.bf16.mxu0 %v4299
    %5097 = vmatpush1.bf16.msra.mxu0 %v4298
    %5098 = vmatprep.subr.bf16.mxu0 %v4291
    %5099 = vmatpush1.bf16.msra.mxu0 %v4290
    %5100 = vmatprep.subr.bf16.mxu0 %v4283
    %5101 = vmatpush1.bf16.msra.mxu0 %v4282
    %5102 = vmatprep.subr.bf16.mxu0 %v4275
    %5103 = vmatpush1.bf16.msra.mxu0 %v4274
    %5104 = vmatprep.subr.bf16.mxu0 %v4267
    %5105 = vmatpush1.bf16.msra.mxu0 %v4266
    %5106 = vmatprep.subr.bf16.mxu0 %v4259
    %5107 = vmatpush1.bf16.msra.mxu0 %v4258
    %5108 = vmatprep.subr.bf16.mxu0 %v4251
    %5109 = vmatpush1.bf16.msra.mxu0 %v4250
    %5110 = vmatprep.subr.bf16.mxu0 %v4243
    %5111 = vmatpush1.bf16.msra.mxu0 %v4242
    %5112 = vmatprep.subr.bf16.mxu0 %v4363
    %5113 = vmatpush2.bf16.msra.mxu0 %v4362
    %5114 = vmatprep.subr.bf16.mxu0 %v4355
    %5115 = vmatpush2.bf16.msra.mxu0 %v4354
    %5116 = vmatprep.subr.bf16.mxu0 %v4347
    %5117 = vmatpush2.bf16.msra.mxu0 %v4346
    %5118 = vmatprep.subr.bf16.mxu0 %v4339
    %5119 = vmatpush2.bf16.msra.mxu0 %v4338
    %5120 = vmatprep.subr.bf16.mxu0 %v4331
    %5121 = vmatpush2.bf16.msra.mxu0 %v4330
    %5122 = vmatprep.subr.bf16.mxu0 %v4323
    %5123 = vmatpush2.bf16.msra.mxu0 %v4322
    %5124 = vmatprep.subr.bf16.mxu0 %v4315
    %5125 = vmatpush2.bf16.msra.mxu0 %v4314
    %5126 = vmatprep.subr.bf16.mxu0 %v4307
    %5127 = vmatpush2.bf16.msra.mxu0 %v4306
    %5128 = vmatprep.mubr.bf16.mxu0 %v2439
    %5129 = vmatmul.mubr.bf16.gmra.mxu0 %v2438
    %v5130 = vpop.f32.mrf.mxu0
    %v5131 = vadd.f32 %v5088, %v5130
    %v5132 = vpop.f32.mrf.mxu0
    %v5133 = vadd.f32 %v5090, %v5132
    %v5134 = vpop.f32.mrf.mxu0
    %v5135 = vadd.f32 %v5092, %v5134
    %v5136 = vpop.f32.mrf.mxu0
    %v5137 = vadd.f32 %v5094, %v5136
    %5138 = vdwg.mxu0
    %5139 = vmatprep.subr.bf16.mxu0 %v4427
    %5140 = vmatpush1.bf16.msra.mxu0 %v4426
    %5141 = vmatprep.subr.bf16.mxu0 %v4419
    %5142 = vmatpush1.bf16.msra.mxu0 %v4418
    %5143 = vmatprep.subr.bf16.mxu0 %v4411
    %5144 = vmatpush1.bf16.msra.mxu0 %v4410
    %5145 = vmatprep.subr.bf16.mxu0 %v4403
    %5146 = vmatpush1.bf16.msra.mxu0 %v4402
    %5147 = vmatprep.subr.bf16.mxu0 %v4395
    %5148 = vmatpush1.bf16.msra.mxu0 %v4394
    %5149 = vmatprep.subr.bf16.mxu0 %v4387
    %5150 = vmatpush1.bf16.msra.mxu0 %v4386
    %5151 = vmatprep.subr.bf16.mxu0 %v4379
    %5152 = vmatpush1.bf16.msra.mxu0 %v4378
    %5153 = vmatprep.subr.bf16.mxu0 %v4371
    %5154 = vmatpush1.bf16.msra.mxu0 %v4370
    %5155 = vmatprep.subr.bf16.mxu0 %v4491
    %5156 = vmatpush2.bf16.msra.mxu0 %v4490
    %5157 = vmatprep.subr.bf16.mxu0 %v4483
    %5158 = vmatpush2.bf16.msra.mxu0 %v4482
    %5159 = vmatprep.subr.bf16.mxu0 %v4475
    %5160 = vmatpush2.bf16.msra.mxu0 %v4474
    %5161 = vmatprep.subr.bf16.mxu0 %v4467
    %5162 = vmatpush2.bf16.msra.mxu0 %v4466
    %5163 = vmatprep.subr.bf16.mxu0 %v4459
    %5164 = vmatpush2.bf16.msra.mxu0 %v4458
    %5165 = vmatprep.subr.bf16.mxu0 %v4451
    %5166 = vmatpush2.bf16.msra.mxu0 %v4450
    %5167 = vmatprep.subr.bf16.mxu0 %v4443
    %5168 = vmatpush2.bf16.msra.mxu0 %v4442
    %5169 = vmatprep.subr.bf16.mxu0 %v4435
    %5170 = vmatpush2.bf16.msra.mxu0 %v4434
    %5171 = vmatprep.mubr.bf16.mxu0 %v2441
    %5172 = vmatmul.mubr.bf16.gmra.mxu0 %v2440
    %v5173 = vpop.f32.mrf.mxu0
    %v5174 = vadd.f32 %v5131, %v5173
    %v5175 = vpop.f32.mrf.mxu0
    %v5176 = vadd.f32 %v5133, %v5175
    %v5177 = vpop.f32.mrf.mxu0
    %v5178 = vadd.f32 %v5135, %v5177
    %v5179 = vpop.f32.mrf.mxu0
    %v5180 = vadd.f32 %v5137, %v5179
    %5181 = vdwg.mxu0
    %5182 = vmatprep.subr.bf16.mxu0 %v4045
    %5183 = vmatpush1.bf16.msra.mxu0 %v4044
    %5184 = vmatprep.subr.bf16.mxu0 %v4037
    %5185 = vmatpush1.bf16.msra.mxu0 %v4036
    %5186 = vmatprep.subr.bf16.mxu0 %v4029
    %5187 = vmatpush1.bf16.msra.mxu0 %v4028
    %5188 = vmatprep.subr.bf16.mxu0 %v4021
    %5189 = vmatpush1.bf16.msra.mxu0 %v4020
    %5190 = vmatprep.subr.bf16.mxu0 %v4013
    %5191 = vmatpush1.bf16.msra.mxu0 %v4012
    %5192 = vmatprep.subr.bf16.mxu0 %v4005
    %5193 = vmatpush1.bf16.msra.mxu0 %v4004
    %5194 = vmatprep.subr.bf16.mxu0 %v3997
    %5195 = vmatpush1.bf16.msra.mxu0 %v3996
    %5196 = vmatprep.subr.bf16.mxu0 %v3989
    %5197 = vmatpush1.bf16.msra.mxu0 %v3988
    %5198 = vmatprep.subr.bf16.mxu0 %v4109
    %5199 = vmatpush2.bf16.msra.mxu0 %v4108
    %5200 = vmatprep.subr.bf16.mxu0 %v4101
    %5201 = vmatpush2.bf16.msra.mxu0 %v4100
    %5202 = vmatprep.subr.bf16.mxu0 %v4093
    %5203 = vmatpush2.bf16.msra.mxu0 %v4092
    %5204 = vmatprep.subr.bf16.mxu0 %v4085
    %5205 = vmatpush2.bf16.msra.mxu0 %v4084
    %5206 = vmatprep.subr.bf16.mxu0 %v4077
    %5207 = vmatpush2.bf16.msra.mxu0 %v4076
    %5208 = vmatprep.subr.bf16.mxu0 %v4069
    %5209 = vmatpush2.bf16.msra.mxu0 %v4068
    %5210 = vmatprep.subr.bf16.mxu0 %v4061
    %5211 = vmatpush2.bf16.msra.mxu0 %v4060
    %5212 = vmatprep.subr.bf16.mxu0 %v4053
    %5213 = vmatpush2.bf16.msra.mxu0 %v4052
    %5214 = vmatprep.mubr.bf16.mxu0 %v2435
    %5215 = vmatmul.mubr.bf16.gmra.mxu0 %v2434
    %v5216 = vpop.f32.mrf.mxu0
    %v5217 = vadd.f32 0.0, %v5216
    %v5218 = vpop.f32.mrf.mxu0
    %v5219 = vadd.f32 0.0, %v5218
    %v5220 = vpop.f32.mrf.mxu0
    %v5221 = vadd.f32 0.0, %v5220
    %v5222 = vpop.f32.mrf.mxu0
    %v5223 = vadd.f32 0.0, %v5222
    %5224 = vdwg.mxu0
    %5225 = vmatprep.subr.bf16.mxu0 %v4173
    %5226 = vmatpush1.bf16.msra.mxu0 %v4172
    %5227 = vmatprep.subr.bf16.mxu0 %v4165
    %5228 = vmatpush1.bf16.msra.mxu0 %v4164
    %5229 = vmatprep.subr.bf16.mxu0 %v4157
    %5230 = vmatpush1.bf16.msra.mxu0 %v4156
    %5231 = vmatprep.subr.bf16.mxu0 %v4149
    %5232 = vmatpush1.bf16.msra.mxu0 %v4148
    %5233 = vmatprep.subr.bf16.mxu0 %v4141
    %5234 = vmatpush1.bf16.msra.mxu0 %v4140
    %5235 = vmatprep.subr.bf16.mxu0 %v4133
    %5236 = vmatpush1.bf16.msra.mxu0 %v4132
    %5237 = vmatprep.subr.bf16.mxu0 %v4125
    %5238 = vmatpush1.bf16.msra.mxu0 %v4124
    %5239 = vmatprep.subr.bf16.mxu0 %v4117
    %5240 = vmatpush1.bf16.msra.mxu0 %v4116
    %5241 = vmatprep.subr.bf16.mxu0 %v4237
    %5242 = vmatpush2.bf16.msra.mxu0 %v4236
    %5243 = vmatprep.subr.bf16.mxu0 %v4229
    %5244 = vmatpush2.bf16.msra.mxu0 %v4228
    %5245 = vmatprep.subr.bf16.mxu0 %v4221
    %5246 = vmatpush2.bf16.msra.mxu0 %v4220
    %5247 = vmatprep.subr.bf16.mxu0 %v4213
    %5248 = vmatpush2.bf16.msra.mxu0 %v4212
    %5249 = vmatprep.subr.bf16.mxu0 %v4205
    %5250 = vmatpush2.bf16.msra.mxu0 %v4204
    %5251 = vmatprep.subr.bf16.mxu0 %v4197
    %5252 = vmatpush2.bf16.msra.mxu0 %v4196
    %5253 = vmatprep.subr.bf16.mxu0 %v4189
    %5254 = vmatpush2.bf16.msra.mxu0 %v4188
    %5255 = vmatprep.subr.bf16.mxu0 %v4181
    %5256 = vmatpush2.bf16.msra.mxu0 %v4180
    %5257 = vmatprep.mubr.bf16.mxu0 %v2437
    %5258 = vmatmul.mubr.bf16.gmra.mxu0 %v2436
    %v5259 = vpop.f32.mrf.mxu0
    %v5260 = vadd.f32 %v5217, %v5259
    %v5261 = vpop.f32.mrf.mxu0
    %v5262 = vadd.f32 %v5219, %v5261
    %v5263 = vpop.f32.mrf.mxu0
    %v5264 = vadd.f32 %v5221, %v5263
    %v5265 = vpop.f32.mrf.mxu0
    %v5266 = vadd.f32 %v5223, %v5265
    %5267 = vdwg.mxu0
    %5268 = vmatprep.subr.bf16.mxu0 %v4301
    %5269 = vmatpush1.bf16.msra.mxu0 %v4300
    %5270 = vmatprep.subr.bf16.mxu0 %v4293
    %5271 = vmatpush1.bf16.msra.mxu0 %v4292
    %5272 = vmatprep.subr.bf16.mxu0 %v4285
    %5273 = vmatpush1.bf16.msra.mxu0 %v4284
    %5274 = vmatprep.subr.bf16.mxu0 %v4277
    %5275 = vmatpush1.bf16.msra.mxu0 %v4276
    %5276 = vmatprep.subr.bf16.mxu0 %v4269
    %5277 = vmatpush1.bf16.msra.mxu0 %v4268
    %5278 = vmatprep.subr.bf16.mxu0 %v4261
    %5279 = vmatpush1.bf16.msra.mxu0 %v4260
    %5280 = vmatprep.subr.bf16.mxu0 %v4253
    %5281 = vmatpush1.bf16.msra.mxu0 %v4252
    %5282 = vmatprep.subr.bf16.mxu0 %v4245
    %5283 = vmatpush1.bf16.msra.mxu0 %v4244
    %5284 = vmatprep.subr.bf16.mxu0 %v4365
    %5285 = vmatpush2.bf16.msra.mxu0 %v4364
    %5286 = vmatprep.subr.bf16.mxu0 %v4357
    %5287 = vmatpush2.bf16.msra.mxu0 %v4356
    %5288 = vmatprep.subr.bf16.mxu0 %v4349
    %5289 = vmatpush2.bf16.msra.mxu0 %v4348
    %5290 = vmatprep.subr.bf16.mxu0 %v4341
    %5291 = vmatpush2.bf16.msra.mxu0 %v4340
    %5292 = vmatprep.subr.bf16.mxu0 %v4333
    %5293 = vmatpush2.bf16.msra.mxu0 %v4332
    %5294 = vmatprep.subr.bf16.mxu0 %v4325
    %5295 = vmatpush2.bf16.msra.mxu0 %v4324
    %5296 = vmatprep.subr.bf16.mxu0 %v4317
    %5297 = vmatpush2.bf16.msra.mxu0 %v4316
    %5298 = vmatprep.subr.bf16.mxu0 %v4309
    %5299 = vmatpush2.bf16.msra.mxu0 %v4308
    %5300 = vmatprep.mubr.bf16.mxu0 %v2439
    %5301 = vmatmul.mubr.bf16.gmra.mxu0 %v2438
    %v5302 = vpop.f32.mrf.mxu0
    %v5303 = vadd.f32 %v5260, %v5302
    %v5304 = vpop.f32.mrf.mxu0
    %v5305 = vadd.f32 %v5262, %v5304
    %v5306 = vpop.f32.mrf.mxu0
    %v5307 = vadd.f32 %v5264, %v5306
    %v5308 = vpop.f32.mrf.mxu0
    %v5309 = vadd.f32 %v5266, %v5308
    %5310 = vdwg.mxu0
    %5311 = vmatprep.subr.bf16.mxu0 %v4429
    %5312 = vmatpush1.bf16.msra.mxu0 %v4428
    %5313 = vmatprep.subr.bf16.mxu0 %v4421
    %5314 = vmatpush1.bf16.msra.mxu0 %v4420
    %5315 = vmatprep.subr.bf16.mxu0 %v4413
    %5316 = vmatpush1.bf16.msra.mxu0 %v4412
    %5317 = vmatprep.subr.bf16.mxu0 %v4405
    %5318 = vmatpush1.bf16.msra.mxu0 %v4404
    %5319 = vmatprep.subr.bf16.mxu0 %v4397
    %5320 = vmatpush1.bf16.msra.mxu0 %v4396
    %5321 = vmatprep.subr.bf16.mxu0 %v4389
    %5322 = vmatpush1.bf16.msra.mxu0 %v4388
    %5323 = vmatprep.subr.bf16.mxu0 %v4381
    %5324 = vmatpush1.bf16.msra.mxu0 %v4380
    %5325 = vmatprep.subr.bf16.mxu0 %v4373
    %5326 = vmatpush1.bf16.msra.mxu0 %v4372
    %5327 = vmatprep.subr.bf16.mxu0 %v4493
    %5328 = vmatpush2.bf16.msra.mxu0 %v4492
    %5329 = vmatprep.subr.bf16.mxu0 %v4485
    %5330 = vmatpush2.bf16.msra.mxu0 %v4484
    %5331 = vmatprep.subr.bf16.mxu0 %v4477
    %5332 = vmatpush2.bf16.msra.mxu0 %v4476
    %5333 = vmatprep.subr.bf16.mxu0 %v4469
    %5334 = vmatpush2.bf16.msra.mxu0 %v4468
    %5335 = vmatprep.subr.bf16.mxu0 %v4461
    %5336 = vmatpush2.bf16.msra.mxu0 %v4460
    %5337 = vmatprep.subr.bf16.mxu0 %v4453
    %5338 = vmatpush2.bf16.msra.mxu0 %v4452
    %5339 = vmatprep.subr.bf16.mxu0 %v4445
    %5340 = vmatpush2.bf16.msra.mxu0 %v4444
    %5341 = vmatprep.subr.bf16.mxu0 %v4437
    %5342 = vmatpush2.bf16.msra.mxu0 %v4436
    %5343 = vmatprep.mubr.bf16.mxu0 %v2441
    %5344 = vmatmul.mubr.bf16.gmra.mxu0 %v2440
    %v5345 = vpop.f32.mrf.mxu0
    %v5346 = vadd.f32 %v5303, %v5345
    %v5347 = vpop.f32.mrf.mxu0
    %v5348 = vadd.f32 %v5305, %v5347
    %v5349 = vpop.f32.mrf.mxu0
    %v5350 = vadd.f32 %v5307, %v5349
    %v5351 = vpop.f32.mrf.mxu0
    %v5352 = vadd.f32 %v5309, %v5351
    %5353 = vdwg.mxu0
    %5354 = vmatprep.subr.bf16.mxu0 %v4047
    %5355 = vmatpush1.bf16.msra.mxu0 %v4046
    %5356 = vmatprep.subr.bf16.mxu0 %v4039
    %5357 = vmatpush1.bf16.msra.mxu0 %v4038
    %5358 = vmatprep.subr.bf16.mxu0 %v4031
    %5359 = vmatpush1.bf16.msra.mxu0 %v4030
    %5360 = vmatprep.subr.bf16.mxu0 %v4023
    %5361 = vmatpush1.bf16.msra.mxu0 %v4022
    %5362 = vmatprep.subr.bf16.mxu0 %v4015
    %5363 = vmatpush1.bf16.msra.mxu0 %v4014
    %5364 = vmatprep.subr.bf16.mxu0 %v4007
    %5365 = vmatpush1.bf16.msra.mxu0 %v4006
    %5366 = vmatprep.subr.bf16.mxu0 %v3999
    %5367 = vmatpush1.bf16.msra.mxu0 %v3998
    %5368 = vmatprep.subr.bf16.mxu0 %v3991
    %5369 = vmatpush1.bf16.msra.mxu0 %v3990
    %5370 = vmatprep.subr.bf16.mxu0 %v4111
    %5371 = vmatpush2.bf16.msra.mxu0 %v4110
    %5372 = vmatprep.subr.bf16.mxu0 %v4103
    %5373 = vmatpush2.bf16.msra.mxu0 %v4102
    %5374 = vmatprep.subr.bf16.mxu0 %v4095
    %5375 = vmatpush2.bf16.msra.mxu0 %v4094
    %5376 = vmatprep.subr.bf16.mxu0 %v4087
    %5377 = vmatpush2.bf16.msra.mxu0 %v4086
    %5378 = vmatprep.subr.bf16.mxu0 %v4079
    %5379 = vmatpush2.bf16.msra.mxu0 %v4078
    %5380 = vmatprep.subr.bf16.mxu0 %v4071
    %5381 = vmatpush2.bf16.msra.mxu0 %v4070
    %5382 = vmatprep.subr.bf16.mxu0 %v4063
    %5383 = vmatpush2.bf16.msra.mxu0 %v4062
    %5384 = vmatprep.subr.bf16.mxu0 %v4055
    %5385 = vmatpush2.bf16.msra.mxu0 %v4054
    %5386 = vmatprep.mubr.bf16.mxu0 %v2435
    %5387 = vmatmul.mubr.bf16.gmra.mxu0 %v2434
    %v5388 = vpop.f32.mrf.mxu0
    %v5389 = vadd.f32 0.0, %v5388
    %v5390 = vpop.f32.mrf.mxu0
    %v5391 = vadd.f32 0.0, %v5390
    %v5392 = vpop.f32.mrf.mxu0
    %v5393 = vadd.f32 0.0, %v5392
    %v5394 = vpop.f32.mrf.mxu0
    %v5395 = vadd.f32 0.0, %v5394
    %5396 = vdwg.mxu0
    %5397 = vmatprep.subr.bf16.mxu0 %v4175
    %5398 = vmatpush1.bf16.msra.mxu0 %v4174
    %5399 = vmatprep.subr.bf16.mxu0 %v4167
    %5400 = vmatpush1.bf16.msra.mxu0 %v4166
    %5401 = vmatprep.subr.bf16.mxu0 %v4159
    %5402 = vmatpush1.bf16.msra.mxu0 %v4158
    %5403 = vmatprep.subr.bf16.mxu0 %v4151
    %5404 = vmatpush1.bf16.msra.mxu0 %v4150
    %5405 = vmatprep.subr.bf16.mxu0 %v4143
    %5406 = vmatpush1.bf16.msra.mxu0 %v4142
    %5407 = vmatprep.subr.bf16.mxu0 %v4135
    %5408 = vmatpush1.bf16.msra.mxu0 %v4134
    %5409 = vmatprep.subr.bf16.mxu0 %v4127
    %5410 = vmatpush1.bf16.msra.mxu0 %v4126
    %5411 = vmatprep.subr.bf16.mxu0 %v4119
    %5412 = vmatpush1.bf16.msra.mxu0 %v4118
    %5413 = vmatprep.subr.bf16.mxu0 %v4239
    %5414 = vmatpush2.bf16.msra.mxu0 %v4238
    %5415 = vmatprep.subr.bf16.mxu0 %v4231
    %5416 = vmatpush2.bf16.msra.mxu0 %v4230
    %5417 = vmatprep.subr.bf16.mxu0 %v4223
    %5418 = vmatpush2.bf16.msra.mxu0 %v4222
    %5419 = vmatprep.subr.bf16.mxu0 %v4215
    %5420 = vmatpush2.bf16.msra.mxu0 %v4214
    %5421 = vmatprep.subr.bf16.mxu0 %v4207
    %5422 = vmatpush2.bf16.msra.mxu0 %v4206
    %5423 = vmatprep.subr.bf16.mxu0 %v4199
    %5424 = vmatpush2.bf16.msra.mxu0 %v4198
    %5425 = vmatprep.subr.bf16.mxu0 %v4191
    %5426 = vmatpush2.bf16.msra.mxu0 %v4190
    %5427 = vmatprep.subr.bf16.mxu0 %v4183
    %5428 = vmatpush2.bf16.msra.mxu0 %v4182
    %5429 = vmatprep.mubr.bf16.mxu0 %v2437
    %5430 = vmatmul.mubr.bf16.gmra.mxu0 %v2436
    %v5431 = vpop.f32.mrf.mxu0
    %v5432 = vadd.f32 %v5389, %v5431
    %v5433 = vpop.f32.mrf.mxu0
    %v5434 = vadd.f32 %v5391, %v5433
    %v5435 = vpop.f32.mrf.mxu0
    %v5436 = vadd.f32 %v5393, %v5435
    %v5437 = vpop.f32.mrf.mxu0
    %v5438 = vadd.f32 %v5395, %v5437
    %5439 = vdwg.mxu0
    %5440 = vmatprep.subr.bf16.mxu0 %v4303
    %5441 = vmatpush1.bf16.msra.mxu0 %v4302
    %5442 = vmatprep.subr.bf16.mxu0 %v4295
    %5443 = vmatpush1.bf16.msra.mxu0 %v4294
    %5444 = vmatprep.subr.bf16.mxu0 %v4287
    %5445 = vmatpush1.bf16.msra.mxu0 %v4286
    %5446 = vmatprep.subr.bf16.mxu0 %v4279
    %5447 = vmatpush1.bf16.msra.mxu0 %v4278
    %5448 = vmatprep.subr.bf16.mxu0 %v4271
    %5449 = vmatpush1.bf16.msra.mxu0 %v4270
    %5450 = vmatprep.subr.bf16.mxu0 %v4263
    %5451 = vmatpush1.bf16.msra.mxu0 %v4262
    %5452 = vmatprep.subr.bf16.mxu0 %v4255
    %5453 = vmatpush1.bf16.msra.mxu0 %v4254
    %5454 = vmatprep.subr.bf16.mxu0 %v4247
    %5455 = vmatpush1.bf16.msra.mxu0 %v4246
    %5456 = vmatprep.subr.bf16.mxu0 %v4367
    %5457 = vmatpush2.bf16.msra.mxu0 %v4366
    %5458 = vmatprep.subr.bf16.mxu0 %v4359
    %5459 = vmatpush2.bf16.msra.mxu0 %v4358
    %5460 = vmatprep.subr.bf16.mxu0 %v4351
    %5461 = vmatpush2.bf16.msra.mxu0 %v4350
    %5462 = vmatprep.subr.bf16.mxu0 %v4343
    %5463 = vmatpush2.bf16.msra.mxu0 %v4342
    %5464 = vmatprep.subr.bf16.mxu0 %v4335
    %5465 = vmatpush2.bf16.msra.mxu0 %v4334
    %5466 = vmatprep.subr.bf16.mxu0 %v4327
    %5467 = vmatpush2.bf16.msra.mxu0 %v4326
    %5468 = vmatprep.subr.bf16.mxu0 %v4319
    %5469 = vmatpush2.bf16.msra.mxu0 %v4318
    %5470 = vmatprep.subr.bf16.mxu0 %v4311
    %5471 = vmatpush2.bf16.msra.mxu0 %v4310
    %5472 = vmatprep.mubr.bf16.mxu0 %v2439
    %5473 = vmatmul.mubr.bf16.gmra.mxu0 %v2438
    %v5474 = vpop.f32.mrf.mxu0
    %v5475 = vadd.f32 %v5432, %v5474
    %v5476 = vpop.f32.mrf.mxu0
    %v5477 = vadd.f32 %v5434, %v5476
    %v5478 = vpop.f32.mrf.mxu0
    %v5479 = vadd.f32 %v5436, %v5478
    %v5480 = vpop.f32.mrf.mxu0
    %v5481 = vadd.f32 %v5438, %v5480
    %5482 = vdwg.mxu0
    %5483 = vmatprep.subr.bf16.mxu0 %v4431
    %5484 = vmatpush1.bf16.msra.mxu0 %v4430
    %5485 = vmatprep.subr.bf16.mxu0 %v4423
    %5486 = vmatpush1.bf16.msra.mxu0 %v4422
    %5487 = vmatprep.subr.bf16.mxu0 %v4415
    %5488 = vmatpush1.bf16.msra.mxu0 %v4414
    %5489 = vmatprep.subr.bf16.mxu0 %v4407
    %5490 = vmatpush1.bf16.msra.mxu0 %v4406
    %5491 = vmatprep.subr.bf16.mxu0 %v4399
    %5492 = vmatpush1.bf16.msra.mxu0 %v4398
    %5493 = vmatprep.subr.bf16.mxu0 %v4391
    %5494 = vmatpush1.bf16.msra.mxu0 %v4390
    %5495 = vmatprep.subr.bf16.mxu0 %v4383
    %5496 = vmatpush1.bf16.msra.mxu0 %v4382
    %5497 = vmatprep.subr.bf16.mxu0 %v4375
    %5498 = vmatpush1.bf16.msra.mxu0 %v4374
    %5499 = vmatprep.subr.bf16.mxu0 %v4495
    %5500 = vmatpush2.bf16.msra.mxu0 %v4494
    %5501 = vmatprep.subr.bf16.mxu0 %v4487
    %5502 = vmatpush2.bf16.msra.mxu0 %v4486
    %5503 = vmatprep.subr.bf16.mxu0 %v4479
    %5504 = vmatpush2.bf16.msra.mxu0 %v4478
    %5505 = vmatprep.subr.bf16.mxu0 %v4471
    %5506 = vmatpush2.bf16.msra.mxu0 %v4470
    %5507 = vmatprep.subr.bf16.mxu0 %v4463
    %5508 = vmatpush2.bf16.msra.mxu0 %v4462
    %5509 = vmatprep.subr.bf16.mxu0 %v4455
    %5510 = vmatpush2.bf16.msra.mxu0 %v4454
    %5511 = vmatprep.subr.bf16.mxu0 %v4447
    %5512 = vmatpush2.bf16.msra.mxu0 %v4446
    %5513 = vmatprep.subr.bf16.mxu0 %v4439
    %5514 = vmatpush2.bf16.msra.mxu0 %v4438
    %5515 = vmatprep.mubr.bf16.mxu0 %v2441
    %5516 = vmatmul.mubr.bf16.gmra.mxu0 %v2440
    %v5517 = vpop.f32.mrf.mxu0
    %v5518 = vadd.f32 %v5475, %v5517
    %v5519 = vpop.f32.mrf.mxu0
    %v5520 = vadd.f32 %v5477, %v5519
    %v5521 = vpop.f32.mrf.mxu0
    %v5522 = vadd.f32 %v5479, %v5521
    %v5523 = vpop.f32.mrf.mxu0
    %v5524 = vadd.f32 %v5481, %v5523
    %5525 = vdwg.mxu0
    %5526 = vmatprep.subr.bf16.mxu0 %v4049
    %5527 = vmatpush1.bf16.msra.mxu0 %v4048
    %5528 = vmatprep.subr.bf16.mxu0 %v4041
    %5529 = vmatpush1.bf16.msra.mxu0 %v4040
    %5530 = vmatprep.subr.bf16.mxu0 %v4033
    %5531 = vmatpush1.bf16.msra.mxu0 %v4032
    %5532 = vmatprep.subr.bf16.mxu0 %v4025
    %5533 = vmatpush1.bf16.msra.mxu0 %v4024
    %5534 = vmatprep.subr.bf16.mxu0 %v4017
    %5535 = vmatpush1.bf16.msra.mxu0 %v4016
    %5536 = vmatprep.subr.bf16.mxu0 %v4009
    %5537 = vmatpush1.bf16.msra.mxu0 %v4008
    %5538 = vmatprep.subr.bf16.mxu0 %v4001
    %5539 = vmatpush1.bf16.msra.mxu0 %v4000
    %5540 = vmatprep.subr.bf16.mxu0 %v3993
    %5541 = vmatpush1.bf16.msra.mxu0 %v3992
    %5542 = vmatprep.subr.bf16.mxu0 %v4113
    %5543 = vmatpush2.bf16.msra.mxu0 %v4112
    %5544 = vmatprep.subr.bf16.mxu0 %v4105
    %5545 = vmatpush2.bf16.msra.mxu0 %v4104
    %5546 = vmatprep.subr.bf16.mxu0 %v4097
    %5547 = vmatpush2.bf16.msra.mxu0 %v4096
    %5548 = vmatprep.subr.bf16.mxu0 %v4089
    %5549 = vmatpush2.bf16.msra.mxu0 %v4088
    %5550 = vmatprep.subr.bf16.mxu0 %v4081
    %5551 = vmatpush2.bf16.msra.mxu0 %v4080
    %5552 = vmatprep.subr.bf16.mxu0 %v4073
    %5553 = vmatpush2.bf16.msra.mxu0 %v4072
    %5554 = vmatprep.subr.bf16.mxu0 %v4065
    %5555 = vmatpush2.bf16.msra.mxu0 %v4064
    %5556 = vmatprep.subr.bf16.mxu0 %v4057
    %5557 = vmatpush2.bf16.msra.mxu0 %v4056
    %5558 = vmatprep.mubr.bf16.mxu0 %v2435
    %5559 = vmatmul.mubr.bf16.gmra.mxu0 %v2434
    %v5560 = vpop.f32.mrf.mxu0
    %v5561 = vadd.f32 0.0, %v5560
    %v5562 = vpop.f32.mrf.mxu0
    %v5563 = vadd.f32 0.0, %v5562
    %v5564 = vpop.f32.mrf.mxu0
    %v5565 = vadd.f32 0.0, %v5564
    %v5566 = vpop.f32.mrf.mxu0
    %v5567 = vadd.f32 0.0, %v5566
    %5568 = vdwg.mxu0
    %5569 = vmatprep.subr.bf16.mxu0 %v4177
    %5570 = vmatpush1.bf16.msra.mxu0 %v4176
    %5571 = vmatprep.subr.bf16.mxu0 %v4169
    %5572 = vmatpush1.bf16.msra.mxu0 %v4168
    %5573 = vmatprep.subr.bf16.mxu0 %v4161
    %5574 = vmatpush1.bf16.msra.mxu0 %v4160
    %5575 = vmatprep.subr.bf16.mxu0 %v4153
    %5576 = vmatpush1.bf16.msra.mxu0 %v4152
    %5577 = vmatprep.subr.bf16.mxu0 %v4145
    %5578 = vmatpush1.bf16.msra.mxu0 %v4144
    %5579 = vmatprep.subr.bf16.mxu0 %v4137
    %5580 = vmatpush1.bf16.msra.mxu0 %v4136
    %5581 = vmatprep.subr.bf16.mxu0 %v4129
    %5582 = vmatpush1.bf16.msra.mxu0 %v4128
    %5583 = vmatprep.subr.bf16.mxu0 %v4121
    %5584 = vmatpush1.bf16.msra.mxu0 %v4120
    %5585 = vmatprep.subr.bf16.mxu0 %v4241
    %5586 = vmatpush2.bf16.msra.mxu0 %v4240
    %5587 = vmatprep.subr.bf16.mxu0 %v4233
    %5588 = vmatpush2.bf16.msra.mxu0 %v4232
    %5589 = vmatprep.subr.bf16.mxu0 %v4225
    %5590 = vmatpush2.bf16.msra.mxu0 %v4224
    %5591 = vmatprep.subr.bf16.mxu0 %v4217
    %5592 = vmatpush2.bf16.msra.mxu0 %v4216
    %5593 = vmatprep.subr.bf16.mxu0 %v4209
    %5594 = vmatpush2.bf16.msra.mxu0 %v4208
    %5595 = vmatprep.subr.bf16.mxu0 %v4201
    %5596 = vmatpush2.bf16.msra.mxu0 %v4200
    %5597 = vmatprep.subr.bf16.mxu0 %v4193
    %5598 = vmatpush2.bf16.msra.mxu0 %v4192
    %5599 = vmatprep.subr.bf16.mxu0 %v4185
    %5600 = vmatpush2.bf16.msra.mxu0 %v4184
    %5601 = vmatprep.mubr.bf16.mxu0 %v2437
    %5602 = vmatmul.mubr.bf16.gmra.mxu0 %v2436
    %v5603 = vpop.f32.mrf.mxu0
    %v5604 = vadd.f32 %v5561, %v5603
    %v5605 = vpop.f32.mrf.mxu0
    %v5606 = vadd.f32 %v5563, %v5605
    %v5607 = vpop.f32.mrf.mxu0
    %v5608 = vadd.f32 %v5565, %v5607
    %v5609 = vpop.f32.mrf.mxu0
    %v5610 = vadd.f32 %v5567, %v5609
    %5611 = vdwg.mxu0
    %5612 = vmatprep.subr.bf16.mxu0 %v4305
    %5613 = vmatpush1.bf16.msra.mxu0 %v4304
    %5614 = vmatprep.subr.bf16.mxu0 %v4297
    %5615 = vmatpush1.bf16.msra.mxu0 %v4296
    %5616 = vmatprep.subr.bf16.mxu0 %v4289
    %5617 = vmatpush1.bf16.msra.mxu0 %v4288
    %5618 = vmatprep.subr.bf16.mxu0 %v4281
    %5619 = vmatpush1.bf16.msra.mxu0 %v4280
    %5620 = vmatprep.subr.bf16.mxu0 %v4273
    %5621 = vmatpush1.bf16.msra.mxu0 %v4272
    %5622 = vmatprep.subr.bf16.mxu0 %v4265
    %5623 = vmatpush1.bf16.msra.mxu0 %v4264
    %5624 = vmatprep.subr.bf16.mxu0 %v4257
    %5625 = vmatpush1.bf16.msra.mxu0 %v4256
    %5626 = vmatprep.subr.bf16.mxu0 %v4249
    %5627 = vmatpush1.bf16.msra.mxu0 %v4248
    %5628 = vmatprep.subr.bf16.mxu0 %v4369
    %5629 = vmatpush2.bf16.msra.mxu0 %v4368
    %5630 = vmatprep.subr.bf16.mxu0 %v4361
    %5631 = vmatpush2.bf16.msra.mxu0 %v4360
    %5632 = vmatprep.subr.bf16.mxu0 %v4353
    %5633 = vmatpush2.bf16.msra.mxu0 %v4352
    %5634 = vmatprep.subr.bf16.mxu0 %v4345
    %5635 = vmatpush2.bf16.msra.mxu0 %v4344
    %5636 = vmatprep.subr.bf16.mxu0 %v4337
    %5637 = vmatpush2.bf16.msra.mxu0 %v4336
    %5638 = vmatprep.subr.bf16.mxu0 %v4329
    %5639 = vmatpush2.bf16.msra.mxu0 %v4328
    %5640 = vmatprep.subr.bf16.mxu0 %v4321
    %5641 = vmatpush2.bf16.msra.mxu0 %v4320
    %5642 = vmatprep.subr.bf16.mxu0 %v4313
    %5643 = vmatpush2.bf16.msra.mxu0 %v4312
    %5644 = vmatprep.mubr.bf16.mxu0 %v2439
    %5645 = vmatmul.mubr.bf16.gmra.mxu0 %v2438
    %v5646 = vpop.f32.mrf.mxu0
    %v5647 = vadd.f32 %v5604, %v5646
    %v5648 = vpop.f32.mrf.mxu0
    %v5649 = vadd.f32 %v5606, %v5648
    %v5650 = vpop.f32.mrf.mxu0
    %v5651 = vadd.f32 %v5608, %v5650
    %v5652 = vpop.f32.mrf.mxu0
    %v5653 = vadd.f32 %v5610, %v5652
    %5654 = vdwg.mxu0
    %5655 = vmatprep.subr.bf16.mxu0 %v4433
    %5656 = vmatpush1.bf16.msra.mxu0 %v4432
    %5657 = vmatprep.subr.bf16.mxu0 %v4425
    %5658 = vmatpush1.bf16.msra.mxu0 %v4424
    %5659 = vmatprep.subr.bf16.mxu0 %v4417
    %5660 = vmatpush1.bf16.msra.mxu0 %v4416
    %5661 = vmatprep.subr.bf16.mxu0 %v4409
    %5662 = vmatpush1.bf16.msra.mxu0 %v4408
    %5663 = vmatprep.subr.bf16.mxu0 %v4401
    %5664 = vmatpush1.bf16.msra.mxu0 %v4400
    %5665 = vmatprep.subr.bf16.mxu0 %v4393
    %5666 = vmatpush1.bf16.msra.mxu0 %v4392
    %5667 = vmatprep.subr.bf16.mxu0 %v4385
    %5668 = vmatpush1.bf16.msra.mxu0 %v4384
    %5669 = vmatprep.subr.bf16.mxu0 %v4377
    %5670 = vmatpush1.bf16.msra.mxu0 %v4376
    %5671 = vmatprep.subr.bf16.mxu0 %v4497
    %5672 = vmatpush2.bf16.msra.mxu0 %v4496
    %5673 = vmatprep.subr.bf16.mxu0 %v4489
    %5674 = vmatpush2.bf16.msra.mxu0 %v4488
    %5675 = vmatprep.subr.bf16.mxu0 %v4481
    %5676 = vmatpush2.bf16.msra.mxu0 %v4480
    %5677 = vmatprep.subr.bf16.mxu0 %v4473
    %5678 = vmatpush2.bf16.msra.mxu0 %v4472
    %5679 = vmatprep.subr.bf16.mxu0 %v4465
    %5680 = vmatpush2.bf16.msra.mxu0 %v4464
    %5681 = vmatprep.subr.bf16.mxu0 %v4457
    %5682 = vmatpush2.bf16.msra.mxu0 %v4456
    %5683 = vmatprep.subr.bf16.mxu0 %v4449
    %5684 = vmatpush2.bf16.msra.mxu0 %v4448
    %5685 = vmatprep.subr.bf16.mxu0 %v4441
    %5686 = vmatpush2.bf16.msra.mxu0 %v4440
    %5687 = vmatprep.mubr.bf16.mxu0 %v2441
    %5688 = vmatmul.mubr.bf16.gmra.mxu0 %v2440
    %v5689 = vpop.f32.mrf.mxu0
    %v5690 = vadd.f32 %v5647, %v5689
    %v5691 = vpop.f32.mrf.mxu0
    %v5692 = vadd.f32 %v5649, %v5691
    %v5693 = vpop.f32.mrf.mxu0
    %v5694 = vadd.f32 %v5651, %v5693
    %v5695 = vpop.f32.mrf.mxu0
    %v5696 = vadd.f32 %v5653, %v5695
    %5697 = vdwg.mxu0
    %v5698 = vmax.f32 %v5174, %v5346
    %v5699 = vmax.f32 %v5176, %v5348
    %v5700 = vmax.f32 %v5178, %v5350
    %v5701 = vmax.f32 %v5180, %v5352
    %v5702 = vmax.f32 %v5518, %v5690
    %v5703 = vmax.f32 %v5520, %v5692
    %v5704 = vmax.f32 %v5522, %v5694
    %v5705 = vmax.f32 %v5524, %v5696
    %v5706 = vmax.f32 %v5698, %v5702
    %v5707 = vmax.f32 %v5699, %v5703
    %v5708 = vmax.f32 %v5700, %v5704
    %v5709 = vmax.f32 %v5701, %v5705
    %v5710 = vld [vmem:[%s4] sm:$0x3]
    %v5712 = vlaneseq
    %v5713 = vshrl.u32 %v5712, 7
    %v5714 = vsub.s32 0, %v5713
    %v5715 = vrot.slane %v5710, %v5714
    %v5716 = vlaneseq
    %v5717 = vshrl.u32 %v5716, 7
    %v5718 = vsub.s32 1, %v5717
    %v5719 = vrot.slane %v5710, %v5718
    %v5722 = vadd.f32 %v5706, %v5715
    %v5723 = vadd.f32 %v5707, %v5719
    %v5724 = vadd.f32 %v5708, %v5715
    %v5725 = vadd.f32 %v5709, %v5719
    %v5726 = vmax.f32 %v5722, 0.0
    %v5727 = vmax.f32 %v5723, 0.0
    %v5728 = vmax.f32 %v5724, 0.0
    %v5729 = vmax.f32 %v5725, 0.0
    %v5730 = vpack.c.bf16 %v5728, %v5726
    %v5731 = vpack.c.bf16 %v5729, %v5727
    %v5734 = vunpack.c.l.b16 %v5730
    %v5735 = vunpack.c.l.b16 %v5731
    %v5736 = vunpack.c.h.b16 %v5730
    %v5737 = vunpack.c.h.b16 %v5731
    %v5738 = vpack.c.b16 %v5734, %v5734
    %v5739 = vpack.c.b16 %v5735, %v5735
    %v5740 = vpack.c.b16 %v5736, %v5736
    %v5741 = vpack.c.b16 %v5737, %v5737
    %v5742 = vunpack.c.l.b16 %v5738
    %v5743 = vunpack.c.l.b16 %v5739
    %v5744 = vunpack.c.l.b16 %v5740
    %v5745 = vunpack.c.l.b16 %v5741
    %v5746 = vrot.slane %v5744, 7
    %vm5747 = vcmask 1041409
    %v5748 = vsel %vm5747, %v5746, %v5742
    %v5749 = vrot.slane %v5745, 7
    %v5750 = vsel %vm5747, %v5749, %v5743
    %v5751 = vpack.c.b16 %v5748, %v5748
    %v5752 = vpack.c.b16 %v5750, %v5750
    %v5755 = vrot.slane %v5742, 1
    %v5756 = vsel %vm5747, %v5744, %v5755
    %v5757 = vrot.slane %v5743, 1
    %v5758 = vsel %vm5747, %v5745, %v5757
    %v5759 = vpack.c.b16 %v5756, %v5756
    %v5760 = vpack.c.b16 %v5758, %v5758
    %v5763 = vrot.slane %v5742, 2
    %v5764 = vrot.slane %v5744, 1
    %v5765 = vsel %vm5747, %v5764, %v5763
    %v5766 = vrot.slane %v5743, 2
    %v5767 = vrot.slane %v5745, 1
    %v5768 = vsel %vm5747, %v5767, %v5766
    %v5769 = vpack.c.b16 %v5765, %v5765
    %v5770 = vpack.c.b16 %v5768, %v5768
    %v5773 = vld [vmem:[%s5] sm:$0xff]
    %v5774 = vld [vmem:[%s5 + $0x8] sm:$0xff]
    %v5775 = vld [vmem:[%s5 + $0x10] sm:$0xff]
    %v5776 = vld [vmem:[%s5 + $0x18] sm:$0xff]
    %v5777 = vld [vmem:[%s5 + $0x20] sm:$0xff]
    %v5778 = vld [vmem:[%s5 + $0x28] sm:$0xff]
    %v5779 = vld [vmem:[%s5 + $0x30] sm:$0xff]
    %v5780 = vld [vmem:[%s5 + $0x38] sm:$0xff]
    %v5781 = vld [vmem:[%s5 + $0x40] sm:$0xff]
    %v5782 = vld [vmem:[%s5 + $0x48] sm:$0xff]
    %v5783 = vld [vmem:[%s5 + $0x50] sm:$0xff]
    %v5784 = vld [vmem:[%s5 + $0x58] sm:$0xff]
    %v5785 = vld [vmem:[%s5 + $0x60] sm:$0xff]
    %v5786 = vld [vmem:[%s5 + $0x68] sm:$0xff]
    %v5787 = vld [vmem:[%s5 + $0x70] sm:$0xff]
    %v5788 = vld [vmem:[%s5 + $0x78] sm:$0xff]
    %v5789 = vld [vmem:[%s5 + $0x80] sm:$0xff]
    %v5790 = vld [vmem:[%s5 + $0x88] sm:$0xff]
    %v5791 = vld [vmem:[%s5 + $0x90] sm:$0xff]
    %v5792 = vld [vmem:[%s5 + $0x98] sm:$0xff]
    %v5793 = vld [vmem:[%s5 + $0xa0] sm:$0xff]
    %v5794 = vld [vmem:[%s5 + $0xa8] sm:$0xff]
    %v5795 = vld [vmem:[%s5 + $0xb0] sm:$0xff]
    %v5796 = vld [vmem:[%s5 + $0xb8] sm:$0xff]
    %v5797 = vld [vmem:[%s5 + $0xc0] sm:$0xff]
    %v5798 = vld [vmem:[%s5 + $0xc8] sm:$0xff]
    %v5799 = vld [vmem:[%s5 + $0xd0] sm:$0xff]
    %v5800 = vld [vmem:[%s5 + $0xd8] sm:$0xff]
    %v5801 = vld [vmem:[%s5 + $0xe0] sm:$0xff]
    %v5802 = vld [vmem:[%s5 + $0xe8] sm:$0xff]
    %v5803 = vld [vmem:[%s5 + $0xf0] sm:$0xff]
    %v5804 = vld [vmem:[%s5 + $0xf8] sm:$0xff]
    %v5805 = vld [vmem:[%s5 + $0x100] sm:$0xff]
    %v5806 = vld [vmem:[%s5 + $0x108] sm:$0xff]
    %v5807 = vld [vmem:[%s5 + $0x110] sm:$0xff]
    %v5808 = vld [vmem:[%s5 + $0x118] sm:$0xff]
    %v5809 = vld [vmem:[%s5 + $0x120] sm:$0xff]
    %v5810 = vld [vmem:[%s5 + $0x128] sm:$0xff]
    %v5811 = vld [vmem:[%s5 + $0x130] sm:$0xff]
    %v5812 = vld [vmem:[%s5 + $0x138] sm:$0xff]
    %v5813 = vld [vmem:[%s5 + $0x140] sm:$0xff]
    %v5814 = vld [vmem:[%s5 + $0x148] sm:$0xff]
    %v5815 = vld [vmem:[%s5 + $0x150] sm:$0xff]
    %v5816 = vld [vmem:[%s5 + $0x158] sm:$0xff]
    %v5817 = vld [vmem:[%s5 + $0x160] sm:$0xff]
    %v5818 = vld [vmem:[%s5 + $0x168] sm:$0xff]
    %v5819 = vld [vmem:[%s5 + $0x170] sm:$0xff]
    %v5820 = vld [vmem:[%s5 + $0x178] sm:$0xff]
    %v5821 = vld [vmem:[%s5 + $0x180] sm:$0xff]
    %v5822 = vld [vmem:[%s5 + $0x188] sm:$0xff]
    %v5823 = vld [vmem:[%s5 + $0x190] sm:$0xff]
    %v5824 = vld [vmem:[%s5 + $0x198] sm:$0xff]
    %v5825 = vld [vmem:[%s5 + $0x1a0] sm:$0xff]
    %v5826 = vld [vmem:[%s5 + $0x1a8] sm:$0xff]
    %v5827 = vld [vmem:[%s5 + $0x1b0] sm:$0xff]
    %v5828 = vld [vmem:[%s5 + $0x1b8] sm:$0xff]
    %v5829 = vld [vmem:[%s5 + $0x1c0] sm:$0xff]
    %v5830 = vld [vmem:[%s5 + $0x1c8] sm:$0xff]
    %v5831 = vld [vmem:[%s5 + $0x1d0] sm:$0xff]
    %v5832 = vld [vmem:[%s5 + $0x1d8] sm:$0xff]
    %v5833 = vld [vmem:[%s5 + $0x1e0] sm:$0xff]
    %v5834 = vld [vmem:[%s5 + $0x1e8] sm:$0xff]
    %v5835 = vld [vmem:[%s5 + $0x1f0] sm:$0xff]
    %v5836 = vld [vmem:[%s5 + $0x1f8] sm:$0xff]
    %v5837 = vld [vmem:[%s5 + $0x200] sm:$0xff]
    %v5838 = vld [vmem:[%s5 + $0x208] sm:$0xff]
    %v5839 = vld [vmem:[%s5 + $0x210] sm:$0xff]
    %v5840 = vld [vmem:[%s5 + $0x218] sm:$0xff]
    %v5841 = vld [vmem:[%s5 + $0x220] sm:$0xff]
    %v5842 = vld [vmem:[%s5 + $0x228] sm:$0xff]
    %v5843 = vld [vmem:[%s5 + $0x230] sm:$0xff]
    %v5844 = vld [vmem:[%s5 + $0x238] sm:$0xff]
    %v5845 = vld [vmem:[%s5 + $0x240] sm:$0xff]
    %v5846 = vld [vmem:[%s5 + $0x248] sm:$0xff]
    %v5847 = vld [vmem:[%s5 + $0x250] sm:$0xff]
    %v5848 = vld [vmem:[%s5 + $0x258] sm:$0xff]
    %v5849 = vld [vmem:[%s5 + $0x260] sm:$0xff]
    %v5850 = vld [vmem:[%s5 + $0x268] sm:$0xff]
    %v5851 = vld [vmem:[%s5 + $0x270] sm:$0xff]
    %v5852 = vld [vmem:[%s5 + $0x278] sm:$0xff]
    %v5853 = vld [vmem:[%s5 + $0x280] sm:$0xff]
    %v5854 = vld [vmem:[%s5 + $0x288] sm:$0xff]
    %v5855 = vld [vmem:[%s5 + $0x290] sm:$0xff]
    %v5856 = vld [vmem:[%s5 + $0x298] sm:$0xff]
    %v5857 = vld [vmem:[%s5 + $0x2a0] sm:$0xff]
    %v5858 = vld [vmem:[%s5 + $0x2a8] sm:$0xff]
    %v5859 = vld [vmem:[%s5 + $0x2b0] sm:$0xff]
    %v5860 = vld [vmem:[%s5 + $0x2b8] sm:$0xff]
    %v5861 = vld [vmem:[%s5 + $0x2c0] sm:$0xff]
    %v5862 = vld [vmem:[%s5 + $0x2c8] sm:$0xff]
    %v5863 = vld [vmem:[%s5 + $0x2d0] sm:$0xff]
    %v5864 = vld [vmem:[%s5 + $0x2d8] sm:$0xff]
    %v5865 = vld [vmem:[%s5 + $0x2e0] sm:$0xff]
    %v5866 = vld [vmem:[%s5 + $0x2e8] sm:$0xff]
    %v5867 = vld [vmem:[%s5 + $0x2f0] sm:$0xff]
    %v5868 = vld [vmem:[%s5 + $0x2f8] sm:$0xff]
    %v5869 = vld [vmem:[%s5 + $0x300] sm:$0xff]
    %v5870 = vld [vmem:[%s5 + $0x308] sm:$0xff]
    %v5871 = vld [vmem:[%s5 + $0x310] sm:$0xff]
    %v5872 = vld [vmem:[%s5 + $0x318] sm:$0xff]
    %v5873 = vld [vmem:[%s5 + $0x320] sm:$0xff]
    %v5874 = vld [vmem:[%s5 + $0x328] sm:$0xff]
    %v5875 = vld [vmem:[%s5 + $0x330] sm:$0xff]
    %v5876 = vld [vmem:[%s5 + $0x338] sm:$0xff]
    %v5877 = vld [vmem:[%s5 + $0x340] sm:$0xff]
    %v5878 = vld [vmem:[%s5 + $0x348] sm:$0xff]
    %v5879 = vld [vmem:[%s5 + $0x350] sm:$0xff]
    %v5880 = vld [vmem:[%s5 + $0x358] sm:$0xff]
    %v5881 = vld [vmem:[%s5 + $0x360] sm:$0xff]
    %v5882 = vld [vmem:[%s5 + $0x368] sm:$0xff]
    %v5883 = vld [vmem:[%s5 + $0x370] sm:$0xff]
    %v5884 = vld [vmem:[%s5 + $0x378] sm:$0xff]
    %v5885 = vld [vmem:[%s5 + $0x380] sm:$0xff]
    %v5886 = vld [vmem:[%s5 + $0x388] sm:$0xff]
    %v5887 = vld [vmem:[%s5 + $0x390] sm:$0xff]
    %v5888 = vld [vmem:[%s5 + $0x398] sm:$0xff]
    %v5889 = vld [vmem:[%s5 + $0x3a0] sm:$0xff]
    %v5890 = vld [vmem:[%s5 + $0x3a8] sm:$0xff]
    %v5891 = vld [vmem:[%s5 + $0x3b0] sm:$0xff]
    %v5892 = vld [vmem:[%s5 + $0x3b8] sm:$0xff]
    %v5893 = vld [vmem:[%s5 + $0x3c0] sm:$0xff]
    %v5894 = vld [vmem:[%s5 + $0x3c8] sm:$0xff]
    %v5895 = vld [vmem:[%s5 + $0x3d0] sm:$0xff]
    %v5896 = vld [vmem:[%s5 + $0x3d8] sm:$0xff]
    %v5897 = vld [vmem:[%s5 + $0x3e0] sm:$0xff]
    %v5898 = vld [vmem:[%s5 + $0x3e8] sm:$0xff]
    %v5899 = vld [vmem:[%s5 + $0x3f0] sm:$0xff]
    %v5900 = vld [vmem:[%s5 + $0x3f8] sm:$0xff]
    %v5901 = vld [vmem:[%s5 + $0x400] sm:$0xff]
    %v5902 = vld [vmem:[%s5 + $0x408] sm:$0xff]
    %v5903 = vld [vmem:[%s5 + $0x410] sm:$0xff]
    %v5904 = vld [vmem:[%s5 + $0x418] sm:$0xff]
    %v5905 = vld [vmem:[%s5 + $0x420] sm:$0xff]
    %v5906 = vld [vmem:[%s5 + $0x428] sm:$0xff]
    %v5907 = vld [vmem:[%s5 + $0x430] sm:$0xff]
    %v5908 = vld [vmem:[%s5 + $0x438] sm:$0xff]
    %v5909 = vld [vmem:[%s5 + $0x440] sm:$0xff]
    %v5910 = vld [vmem:[%s5 + $0x448] sm:$0xff]
    %v5911 = vld [vmem:[%s5 + $0x450] sm:$0xff]
    %v5912 = vld [vmem:[%s5 + $0x458] sm:$0xff]
    %v5913 = vld [vmem:[%s5 + $0x460] sm:$0xff]
    %v5914 = vld [vmem:[%s5 + $0x468] sm:$0xff]
    %v5915 = vld [vmem:[%s5 + $0x470] sm:$0xff]
    %v5916 = vld [vmem:[%s5 + $0x478] sm:$0xff]
    %v5917 = vld [vmem:[%s5 + $0x480] sm:$0xff]
    %v5918 = vld [vmem:[%s5 + $0x488] sm:$0xff]
    %v5919 = vld [vmem:[%s5 + $0x490] sm:$0xff]
    %v5920 = vld [vmem:[%s5 + $0x498] sm:$0xff]
    %v5921 = vld [vmem:[%s5 + $0x4a0] sm:$0xff]
    %v5922 = vld [vmem:[%s5 + $0x4a8] sm:$0xff]
    %v5923 = vld [vmem:[%s5 + $0x4b0] sm:$0xff]
    %v5924 = vld [vmem:[%s5 + $0x4b8] sm:$0xff]
    %v5925 = vld [vmem:[%s5 + $0x4c0] sm:$0xff]
    %v5926 = vld [vmem:[%s5 + $0x4c8] sm:$0xff]
    %v5927 = vld [vmem:[%s5 + $0x4d0] sm:$0xff]
    %v5928 = vld [vmem:[%s5 + $0x4d8] sm:$0xff]
    %v5929 = vld [vmem:[%s5 + $0x4e0] sm:$0xff]
    %v5930 = vld [vmem:[%s5 + $0x4e8] sm:$0xff]
    %v5931 = vld [vmem:[%s5 + $0x4f0] sm:$0xff]
    %v5932 = vld [vmem:[%s5 + $0x4f8] sm:$0xff]
    %v5933 = vld [vmem:[%s5 + $0x500] sm:$0xff]
    %v5934 = vld [vmem:[%s5 + $0x508] sm:$0xff]
    %v5935 = vld [vmem:[%s5 + $0x510] sm:$0xff]
    %v5936 = vld [vmem:[%s5 + $0x518] sm:$0xff]
    %v5937 = vld [vmem:[%s5 + $0x520] sm:$0xff]
    %v5938 = vld [vmem:[%s5 + $0x528] sm:$0xff]
    %v5939 = vld [vmem:[%s5 + $0x530] sm:$0xff]
    %v5940 = vld [vmem:[%s5 + $0x538] sm:$0xff]
    %v5941 = vld [vmem:[%s5 + $0x540] sm:$0xff]
    %v5942 = vld [vmem:[%s5 + $0x548] sm:$0xff]
    %v5943 = vld [vmem:[%s5 + $0x550] sm:$0xff]
    %v5944 = vld [vmem:[%s5 + $0x558] sm:$0xff]
    %v5945 = vld [vmem:[%s5 + $0x560] sm:$0xff]
    %v5946 = vld [vmem:[%s5 + $0x568] sm:$0xff]
    %v5947 = vld [vmem:[%s5 + $0x570] sm:$0xff]
    %v5948 = vld [vmem:[%s5 + $0x578] sm:$0xff]
    %v5949 = vld [vmem:[%s5 + $0x580] sm:$0xff]
    %v5950 = vld [vmem:[%s5 + $0x588] sm:$0xff]
    %v5951 = vld [vmem:[%s5 + $0x590] sm:$0xff]
    %v5952 = vld [vmem:[%s5 + $0x598] sm:$0xff]
    %v5953 = vld [vmem:[%s5 + $0x5a0] sm:$0xff]
    %v5954 = vld [vmem:[%s5 + $0x5a8] sm:$0xff]
    %v5955 = vld [vmem:[%s5 + $0x5b0] sm:$0xff]
    %v5956 = vld [vmem:[%s5 + $0x5b8] sm:$0xff]
    %v5957 = vld [vmem:[%s5 + $0x5c0] sm:$0xff]
    %v5958 = vld [vmem:[%s5 + $0x5c8] sm:$0xff]
    %v5959 = vld [vmem:[%s5 + $0x5d0] sm:$0xff]
    %v5960 = vld [vmem:[%s5 + $0x5d8] sm:$0xff]
    %v5961 = vld [vmem:[%s5 + $0x5e0] sm:$0xff]
    %v5962 = vld [vmem:[%s5 + $0x5e8] sm:$0xff]
    %v5963 = vld [vmem:[%s5 + $0x5f0] sm:$0xff]
    %v5964 = vld [vmem:[%s5 + $0x5f8] sm:$0xff]
    %v5965 = vld [vmem:[%s5 + $0x600] sm:$0xff]
    %v5966 = vld [vmem:[%s5 + $0x608] sm:$0xff]
    %v5967 = vld [vmem:[%s5 + $0x610] sm:$0xff]
    %v5968 = vld [vmem:[%s5 + $0x618] sm:$0xff]
    %v5969 = vld [vmem:[%s5 + $0x620] sm:$0xff]
    %v5970 = vld [vmem:[%s5 + $0x628] sm:$0xff]
    %v5971 = vld [vmem:[%s5 + $0x630] sm:$0xff]
    %v5972 = vld [vmem:[%s5 + $0x638] sm:$0xff]
    %v5973 = vld [vmem:[%s5 + $0x640] sm:$0xff]
    %v5974 = vld [vmem:[%s5 + $0x648] sm:$0xff]
    %v5975 = vld [vmem:[%s5 + $0x650] sm:$0xff]
    %v5976 = vld [vmem:[%s5 + $0x658] sm:$0xff]
    %v5977 = vld [vmem:[%s5 + $0x660] sm:$0xff]
    %v5978 = vld [vmem:[%s5 + $0x668] sm:$0xff]
    %v5979 = vld [vmem:[%s5 + $0x670] sm:$0xff]
    %v5980 = vld [vmem:[%s5 + $0x678] sm:$0xff]
    %v5981 = vld [vmem:[%s5 + $0x680] sm:$0xff]
    %v5982 = vld [vmem:[%s5 + $0x688] sm:$0xff]
    %v5983 = vld [vmem:[%s5 + $0x690] sm:$0xff]
    %v5984 = vld [vmem:[%s5 + $0x698] sm:$0xff]
    %v5985 = vld [vmem:[%s5 + $0x6a0] sm:$0xff]
    %v5986 = vld [vmem:[%s5 + $0x6a8] sm:$0xff]
    %v5987 = vld [vmem:[%s5 + $0x6b0] sm:$0xff]
    %v5988 = vld [vmem:[%s5 + $0x6b8] sm:$0xff]
    %v5989 = vld [vmem:[%s5 + $0x6c0] sm:$0xff]
    %v5990 = vld [vmem:[%s5 + $0x6c8] sm:$0xff]
    %v5991 = vld [vmem:[%s5 + $0x6d0] sm:$0xff]
    %v5992 = vld [vmem:[%s5 + $0x6d8] sm:$0xff]
    %v5993 = vld [vmem:[%s5 + $0x6e0] sm:$0xff]
    %v5994 = vld [vmem:[%s5 + $0x6e8] sm:$0xff]
    %v5995 = vld [vmem:[%s5 + $0x6f0] sm:$0xff]
    %v5996 = vld [vmem:[%s5 + $0x6f8] sm:$0xff]
    %v5997 = vld [vmem:[%s5 + $0x700] sm:$0xff]
    %v5998 = vld [vmem:[%s5 + $0x708] sm:$0xff]
    %v5999 = vld [vmem:[%s5 + $0x710] sm:$0xff]
    %v6000 = vld [vmem:[%s5 + $0x718] sm:$0xff]
    %v6001 = vld [vmem:[%s5 + $0x720] sm:$0xff]
    %v6002 = vld [vmem:[%s5 + $0x728] sm:$0xff]
    %v6003 = vld [vmem:[%s5 + $0x730] sm:$0xff]
    %v6004 = vld [vmem:[%s5 + $0x738] sm:$0xff]
    %v6005 = vld [vmem:[%s5 + $0x740] sm:$0xff]
    %v6006 = vld [vmem:[%s5 + $0x748] sm:$0xff]
    %v6007 = vld [vmem:[%s5 + $0x750] sm:$0xff]
    %v6008 = vld [vmem:[%s5 + $0x758] sm:$0xff]
    %v6009 = vld [vmem:[%s5 + $0x760] sm:$0xff]
    %v6010 = vld [vmem:[%s5 + $0x768] sm:$0xff]
    %v6011 = vld [vmem:[%s5 + $0x770] sm:$0xff]
    %v6012 = vld [vmem:[%s5 + $0x778] sm:$0xff]
    %v6013 = vld [vmem:[%s5 + $0x780] sm:$0xff]
    %v6014 = vld [vmem:[%s5 + $0x788] sm:$0xff]
    %v6015 = vld [vmem:[%s5 + $0x790] sm:$0xff]
    %v6016 = vld [vmem:[%s5 + $0x798] sm:$0xff]
    %v6017 = vld [vmem:[%s5 + $0x7a0] sm:$0xff]
    %v6018 = vld [vmem:[%s5 + $0x7a8] sm:$0xff]
    %v6019 = vld [vmem:[%s5 + $0x7b0] sm:$0xff]
    %v6020 = vld [vmem:[%s5 + $0x7b8] sm:$0xff]
    %v6021 = vld [vmem:[%s5 + $0x7c0] sm:$0xff]
    %v6022 = vld [vmem:[%s5 + $0x7c8] sm:$0xff]
    %v6023 = vld [vmem:[%s5 + $0x7d0] sm:$0xff]
    %v6024 = vld [vmem:[%s5 + $0x7d8] sm:$0xff]
    %v6025 = vld [vmem:[%s5 + $0x7e0] sm:$0xff]
    %v6026 = vld [vmem:[%s5 + $0x7e8] sm:$0xff]
    %v6027 = vld [vmem:[%s5 + $0x7f0] sm:$0xff]
    %v6028 = vld [vmem:[%s5 + $0x7f8] sm:$0xff]
    %v6029 = vld [vmem:[%s5 + $0x800] sm:$0xff]
    %v6030 = vld [vmem:[%s5 + $0x808] sm:$0xff]
    %v6031 = vld [vmem:[%s5 + $0x810] sm:$0xff]
    %v6032 = vld [vmem:[%s5 + $0x818] sm:$0xff]
    %v6033 = vld [vmem:[%s5 + $0x820] sm:$0xff]
    %v6034 = vld [vmem:[%s5 + $0x828] sm:$0xff]
    %v6035 = vld [vmem:[%s5 + $0x830] sm:$0xff]
    %v6036 = vld [vmem:[%s5 + $0x838] sm:$0xff]
    %v6037 = vld [vmem:[%s5 + $0x840] sm:$0xff]
    %v6038 = vld [vmem:[%s5 + $0x848] sm:$0xff]
    %v6039 = vld [vmem:[%s5 + $0x850] sm:$0xff]
    %v6040 = vld [vmem:[%s5 + $0x858] sm:$0xff]
    %v6041 = vld [vmem:[%s5 + $0x860] sm:$0xff]
    %v6042 = vld [vmem:[%s5 + $0x868] sm:$0xff]
    %v6043 = vld [vmem:[%s5 + $0x870] sm:$0xff]
    %v6044 = vld [vmem:[%s5 + $0x878] sm:$0xff]
    %v6045 = vld [vmem:[%s5 + $0x880] sm:$0xff]
    %v6046 = vld [vmem:[%s5 + $0x888] sm:$0xff]
    %v6047 = vld [vmem:[%s5 + $0x890] sm:$0xff]
    %v6048 = vld [vmem:[%s5 + $0x898] sm:$0xff]
    %v6049 = vld [vmem:[%s5 + $0x8a0] sm:$0xff]
    %v6050 = vld [vmem:[%s5 + $0x8a8] sm:$0xff]
    %v6051 = vld [vmem:[%s5 + $0x8b0] sm:$0xff]
    %v6052 = vld [vmem:[%s5 + $0x8b8] sm:$0xff]
    %v6053 = vld [vmem:[%s5 + $0x8c0] sm:$0xff]
    %v6054 = vld [vmem:[%s5 + $0x8c8] sm:$0xff]
    %v6055 = vld [vmem:[%s5 + $0x8d0] sm:$0xff]
    %v6056 = vld [vmem:[%s5 + $0x8d8] sm:$0xff]
    %v6057 = vld [vmem:[%s5 + $0x8e0] sm:$0xff]
    %v6058 = vld [vmem:[%s5 + $0x8e8] sm:$0xff]
    %v6059 = vld [vmem:[%s5 + $0x8f0] sm:$0xff]
    %v6060 = vld [vmem:[%s5 + $0x8f8] sm:$0xff]
    %v6061 = vld [vmem:[%s5 + $0x900] sm:$0xff]
    %v6062 = vld [vmem:[%s5 + $0x908] sm:$0xff]
    %v6063 = vld [vmem:[%s5 + $0x910] sm:$0xff]
    %v6064 = vld [vmem:[%s5 + $0x918] sm:$0xff]
    %v6065 = vld [vmem:[%s5 + $0x920] sm:$0xff]
    %v6066 = vld [vmem:[%s5 + $0x928] sm:$0xff]
    %v6067 = vld [vmem:[%s5 + $0x930] sm:$0xff]
    %v6068 = vld [vmem:[%s5 + $0x938] sm:$0xff]
    %v6069 = vld [vmem:[%s5 + $0x940] sm:$0xff]
    %v6070 = vld [vmem:[%s5 + $0x948] sm:$0xff]
    %v6071 = vld [vmem:[%s5 + $0x950] sm:$0xff]
    %v6072 = vld [vmem:[%s5 + $0x958] sm:$0xff]
    %v6073 = vld [vmem:[%s5 + $0x960] sm:$0xff]
    %v6074 = vld [vmem:[%s5 + $0x968] sm:$0xff]
    %v6075 = vld [vmem:[%s5 + $0x970] sm:$0xff]
    %v6076 = vld [vmem:[%s5 + $0x978] sm:$0xff]
    %v6077 = vld [vmem:[%s5 + $0x980] sm:$0xff]
    %v6078 = vld [vmem:[%s5 + $0x988] sm:$0xff]
    %v6079 = vld [vmem:[%s5 + $0x990] sm:$0xff]
    %v6080 = vld [vmem:[%s5 + $0x998] sm:$0xff]
    %v6081 = vld [vmem:[%s5 + $0x9a0] sm:$0xff]
    %v6082 = vld [vmem:[%s5 + $0x9a8] sm:$0xff]
    %v6083 = vld [vmem:[%s5 + $0x9b0] sm:$0xff]
    %v6084 = vld [vmem:[%s5 + $0x9b8] sm:$0xff]
    %v6085 = vld [vmem:[%s5 + $0x9c0] sm:$0xff]
    %v6086 = vld [vmem:[%s5 + $0x9c8] sm:$0xff]
    %v6087 = vld [vmem:[%s5 + $0x9d0] sm:$0xff]
    %v6088 = vld [vmem:[%s5 + $0x9d8] sm:$0xff]
    %v6089 = vld [vmem:[%s5 + $0x9e0] sm:$0xff]
    %v6090 = vld [vmem:[%s5 + $0x9e8] sm:$0xff]
    %v6091 = vld [vmem:[%s5 + $0x9f0] sm:$0xff]
    %v6092 = vld [vmem:[%s5 + $0x9f8] sm:$0xff]
    %v6093 = vld [vmem:[%s5 + $0xa00] sm:$0xff]
    %v6094 = vld [vmem:[%s5 + $0xa08] sm:$0xff]
    %v6095 = vld [vmem:[%s5 + $0xa10] sm:$0xff]
    %v6096 = vld [vmem:[%s5 + $0xa18] sm:$0xff]
    %v6097 = vld [vmem:[%s5 + $0xa20] sm:$0xff]
    %v6098 = vld [vmem:[%s5 + $0xa28] sm:$0xff]
    %v6099 = vld [vmem:[%s5 + $0xa30] sm:$0xff]
    %v6100 = vld [vmem:[%s5 + $0xa38] sm:$0xff]
    %v6101 = vld [vmem:[%s5 + $0xa40] sm:$0xff]
    %v6102 = vld [vmem:[%s5 + $0xa48] sm:$0xff]
    %v6103 = vld [vmem:[%s5 + $0xa50] sm:$0xff]
    %v6104 = vld [vmem:[%s5 + $0xa58] sm:$0xff]
    %v6105 = vld [vmem:[%s5 + $0xa60] sm:$0xff]
    %v6106 = vld [vmem:[%s5 + $0xa68] sm:$0xff]
    %v6107 = vld [vmem:[%s5 + $0xa70] sm:$0xff]
    %v6108 = vld [vmem:[%s5 + $0xa78] sm:$0xff]
    %v6109 = vld [vmem:[%s5 + $0xa80] sm:$0xff]
    %v6110 = vld [vmem:[%s5 + $0xa88] sm:$0xff]
    %v6111 = vld [vmem:[%s5 + $0xa90] sm:$0xff]
    %v6112 = vld [vmem:[%s5 + $0xa98] sm:$0xff]
    %v6113 = vld [vmem:[%s5 + $0xaa0] sm:$0xff]
    %v6114 = vld [vmem:[%s5 + $0xaa8] sm:$0xff]
    %v6115 = vld [vmem:[%s5 + $0xab0] sm:$0xff]
    %v6116 = vld [vmem:[%s5 + $0xab8] sm:$0xff]
    %v6117 = vld [vmem:[%s5 + $0xac0] sm:$0xff]
    %v6118 = vld [vmem:[%s5 + $0xac8] sm:$0xff]
    %v6119 = vld [vmem:[%s5 + $0xad0] sm:$0xff]
    %v6120 = vld [vmem:[%s5 + $0xad8] sm:$0xff]
    %v6121 = vld [vmem:[%s5 + $0xae0] sm:$0xff]
    %v6122 = vld [vmem:[%s5 + $0xae8] sm:$0xff]
    %v6123 = vld [vmem:[%s5 + $0xaf0] sm:$0xff]
    %v6124 = vld [vmem:[%s5 + $0xaf8] sm:$0xff]
    %v6125 = vld [vmem:[%s5 + $0xb00] sm:$0xff]
    %v6126 = vld [vmem:[%s5 + $0xb08] sm:$0xff]
    %v6127 = vld [vmem:[%s5 + $0xb10] sm:$0xff]
    %v6128 = vld [vmem:[%s5 + $0xb18] sm:$0xff]
    %v6129 = vld [vmem:[%s5 + $0xb20] sm:$0xff]
    %v6130 = vld [vmem:[%s5 + $0xb28] sm:$0xff]
    %v6131 = vld [vmem:[%s5 + $0xb30] sm:$0xff]
    %v6132 = vld [vmem:[%s5 + $0xb38] sm:$0xff]
    %v6133 = vld [vmem:[%s5 + $0xb40] sm:$0xff]
    %v6134 = vld [vmem:[%s5 + $0xb48] sm:$0xff]
    %v6135 = vld [vmem:[%s5 + $0xb50] sm:$0xff]
    %v6136 = vld [vmem:[%s5 + $0xb58] sm:$0xff]
    %v6137 = vld [vmem:[%s5 + $0xb60] sm:$0xff]
    %v6138 = vld [vmem:[%s5 + $0xb68] sm:$0xff]
    %v6139 = vld [vmem:[%s5 + $0xb70] sm:$0xff]
    %v6140 = vld [vmem:[%s5 + $0xb78] sm:$0xff]
    %v6141 = vld [vmem:[%s5 + $0xb80] sm:$0xff]
    %v6142 = vld [vmem:[%s5 + $0xb88] sm:$0xff]
    %v6143 = vld [vmem:[%s5 + $0xb90] sm:$0xff]
    %v6144 = vld [vmem:[%s5 + $0xb98] sm:$0xff]
    %v6145 = vld [vmem:[%s5 + $0xba0] sm:$0xff]
    %v6146 = vld [vmem:[%s5 + $0xba8] sm:$0xff]
    %v6147 = vld [vmem:[%s5 + $0xbb0] sm:$0xff]
    %v6148 = vld [vmem:[%s5 + $0xbb8] sm:$0xff]
    %v6149 = vld [vmem:[%s5 + $0xbc0] sm:$0xff]
    %v6150 = vld [vmem:[%s5 + $0xbc8] sm:$0xff]
    %v6151 = vld [vmem:[%s5 + $0xbd0] sm:$0xff]
    %v6152 = vld [vmem:[%s5 + $0xbd8] sm:$0xff]
    %v6153 = vld [vmem:[%s5 + $0xbe0] sm:$0xff]
    %v6154 = vld [vmem:[%s5 + $0xbe8] sm:$0xff]
    %v6155 = vld [vmem:[%s5 + $0xbf0] sm:$0xff]
    %v6156 = vld [vmem:[%s5 + $0xbf8] sm:$0xff]
    %v6157 = vld [vmem:[%s5 + $0xc00] sm:$0xff]
    %v6158 = vld [vmem:[%s5 + $0xc08] sm:$0xff]
    %v6159 = vld [vmem:[%s5 + $0xc10] sm:$0xff]
    %v6160 = vld [vmem:[%s5 + $0xc18] sm:$0xff]
    %v6161 = vld [vmem:[%s5 + $0xc20] sm:$0xff]
    %v6162 = vld [vmem:[%s5 + $0xc28] sm:$0xff]
    %v6163 = vld [vmem:[%s5 + $0xc30] sm:$0xff]
    %v6164 = vld [vmem:[%s5 + $0xc38] sm:$0xff]
    %v6165 = vld [vmem:[%s5 + $0xc40] sm:$0xff]
    %v6166 = vld [vmem:[%s5 + $0xc48] sm:$0xff]
    %v6167 = vld [vmem:[%s5 + $0xc50] sm:$0xff]
    %v6168 = vld [vmem:[%s5 + $0xc58] sm:$0xff]
    %v6169 = vld [vmem:[%s5 + $0xc60] sm:$0xff]
    %v6170 = vld [vmem:[%s5 + $0xc68] sm:$0xff]
    %v6171 = vld [vmem:[%s5 + $0xc70] sm:$0xff]
    %v6172 = vld [vmem:[%s5 + $0xc78] sm:$0xff]
    %v6173 = vld [vmem:[%s5 + $0xc80] sm:$0xff]
    %v6174 = vld [vmem:[%s5 + $0xc88] sm:$0xff]
    %v6175 = vld [vmem:[%s5 + $0xc90] sm:$0xff]
    %v6176 = vld [vmem:[%s5 + $0xc98] sm:$0xff]
    %v6177 = vld [vmem:[%s5 + $0xca0] sm:$0xff]
    %v6178 = vld [vmem:[%s5 + $0xca8] sm:$0xff]
    %v6179 = vld [vmem:[%s5 + $0xcb0] sm:$0xff]
    %v6180 = vld [vmem:[%s5 + $0xcb8] sm:$0xff]
    %v6181 = vld [vmem:[%s5 + $0xcc0] sm:$0xff]
    %v6182 = vld [vmem:[%s5 + $0xcc8] sm:$0xff]
    %v6183 = vld [vmem:[%s5 + $0xcd0] sm:$0xff]
    %v6184 = vld [vmem:[%s5 + $0xcd8] sm:$0xff]
    %v6185 = vld [vmem:[%s5 + $0xce0] sm:$0xff]
    %v6186 = vld [vmem:[%s5 + $0xce8] sm:$0xff]
    %v6187 = vld [vmem:[%s5 + $0xcf0] sm:$0xff]
    %v6188 = vld [vmem:[%s5 + $0xcf8] sm:$0xff]
    %v6189 = vld [vmem:[%s5 + $0xd00] sm:$0xff]
    %v6190 = vld [vmem:[%s5 + $0xd08] sm:$0xff]
    %v6191 = vld [vmem:[%s5 + $0xd10] sm:$0xff]
    %v6192 = vld [vmem:[%s5 + $0xd18] sm:$0xff]
    %v6193 = vld [vmem:[%s5 + $0xd20] sm:$0xff]
    %v6194 = vld [vmem:[%s5 + $0xd28] sm:$0xff]
    %v6195 = vld [vmem:[%s5 + $0xd30] sm:$0xff]
    %v6196 = vld [vmem:[%s5 + $0xd38] sm:$0xff]
    %v6197 = vld [vmem:[%s5 + $0xd40] sm:$0xff]
    %v6198 = vld [vmem:[%s5 + $0xd48] sm:$0xff]
    %v6199 = vld [vmem:[%s5 + $0xd50] sm:$0xff]
    %v6200 = vld [vmem:[%s5 + $0xd58] sm:$0xff]
    %v6201 = vld [vmem:[%s5 + $0xd60] sm:$0xff]
    %v6202 = vld [vmem:[%s5 + $0xd68] sm:$0xff]
    %v6203 = vld [vmem:[%s5 + $0xd70] sm:$0xff]
    %v6204 = vld [vmem:[%s5 + $0xd78] sm:$0xff]
    %v6205 = vld [vmem:[%s5 + $0xd80] sm:$0xff]
    %v6206 = vld [vmem:[%s5 + $0xd88] sm:$0xff]
    %v6207 = vld [vmem:[%s5 + $0xd90] sm:$0xff]
    %v6208 = vld [vmem:[%s5 + $0xd98] sm:$0xff]
    %v6209 = vld [vmem:[%s5 + $0xda0] sm:$0xff]
    %v6210 = vld [vmem:[%s5 + $0xda8] sm:$0xff]
    %v6211 = vld [vmem:[%s5 + $0xdb0] sm:$0xff]
    %v6212 = vld [vmem:[%s5 + $0xdb8] sm:$0xff]
    %v6213 = vld [vmem:[%s5 + $0xdc0] sm:$0xff]
    %v6214 = vld [vmem:[%s5 + $0xdc8] sm:$0xff]
    %v6215 = vld [vmem:[%s5 + $0xdd0] sm:$0xff]
    %v6216 = vld [vmem:[%s5 + $0xdd8] sm:$0xff]
    %v6217 = vld [vmem:[%s5 + $0xde0] sm:$0xff]
    %v6218 = vld [vmem:[%s5 + $0xde8] sm:$0xff]
    %v6219 = vld [vmem:[%s5 + $0xdf0] sm:$0xff]
    %v6220 = vld [vmem:[%s5 + $0xdf8] sm:$0xff]
    %v6221 = vld [vmem:[%s5 + $0xe00] sm:$0xff]
    %v6222 = vld [vmem:[%s5 + $0xe08] sm:$0xff]
    %v6223 = vld [vmem:[%s5 + $0xe10] sm:$0xff]
    %v6224 = vld [vmem:[%s5 + $0xe18] sm:$0xff]
    %v6225 = vld [vmem:[%s5 + $0xe20] sm:$0xff]
    %v6226 = vld [vmem:[%s5 + $0xe28] sm:$0xff]
    %v6227 = vld [vmem:[%s5 + $0xe30] sm:$0xff]
    %v6228 = vld [vmem:[%s5 + $0xe38] sm:$0xff]
    %v6229 = vld [vmem:[%s5 + $0xe40] sm:$0xff]
    %v6230 = vld [vmem:[%s5 + $0xe48] sm:$0xff]
    %v6231 = vld [vmem:[%s5 + $0xe50] sm:$0xff]
    %v6232 = vld [vmem:[%s5 + $0xe58] sm:$0xff]
    %v6233 = vld [vmem:[%s5 + $0xe60] sm:$0xff]
    %v6234 = vld [vmem:[%s5 + $0xe68] sm:$0xff]
    %v6235 = vld [vmem:[%s5 + $0xe70] sm:$0xff]
    %v6236 = vld [vmem:[%s5 + $0xe78] sm:$0xff]
    %v6237 = vld [vmem:[%s5 + $0xe80] sm:$0xff]
    %v6238 = vld [vmem:[%s5 + $0xe88] sm:$0xff]
    %v6239 = vld [vmem:[%s5 + $0xe90] sm:$0xff]
    %v6240 = vld [vmem:[%s5 + $0xe98] sm:$0xff]
    %v6241 = vld [vmem:[%s5 + $0xea0] sm:$0xff]
    %v6242 = vld [vmem:[%s5 + $0xea8] sm:$0xff]
    %v6243 = vld [vmem:[%s5 + $0xeb0] sm:$0xff]
    %v6244 = vld [vmem:[%s5 + $0xeb8] sm:$0xff]
    %v6245 = vld [vmem:[%s5 + $0xec0] sm:$0xff]
    %v6246 = vld [vmem:[%s5 + $0xec8] sm:$0xff]
    %v6247 = vld [vmem:[%s5 + $0xed0] sm:$0xff]
    %v6248 = vld [vmem:[%s5 + $0xed8] sm:$0xff]
    %v6249 = vld [vmem:[%s5 + $0xee0] sm:$0xff]
    %v6250 = vld [vmem:[%s5 + $0xee8] sm:$0xff]
    %v6251 = vld [vmem:[%s5 + $0xef0] sm:$0xff]
    %v6252 = vld [vmem:[%s5 + $0xef8] sm:$0xff]
    %v6253 = vld [vmem:[%s5 + $0xf00] sm:$0xff]
    %v6254 = vld [vmem:[%s5 + $0xf08] sm:$0xff]
    %v6255 = vld [vmem:[%s5 + $0xf10] sm:$0xff]
    %v6256 = vld [vmem:[%s5 + $0xf18] sm:$0xff]
    %v6257 = vld [vmem:[%s5 + $0xf20] sm:$0xff]
    %v6258 = vld [vmem:[%s5 + $0xf28] sm:$0xff]
    %v6259 = vld [vmem:[%s5 + $0xf30] sm:$0xff]
    %v6260 = vld [vmem:[%s5 + $0xf38] sm:$0xff]
    %v6261 = vld [vmem:[%s5 + $0xf40] sm:$0xff]
    %v6262 = vld [vmem:[%s5 + $0xf48] sm:$0xff]
    %v6263 = vld [vmem:[%s5 + $0xf50] sm:$0xff]
    %v6264 = vld [vmem:[%s5 + $0xf58] sm:$0xff]
    %v6265 = vld [vmem:[%s5 + $0xf60] sm:$0xff]
    %v6266 = vld [vmem:[%s5 + $0xf68] sm:$0xff]
    %v6267 = vld [vmem:[%s5 + $0xf70] sm:$0xff]
    %v6268 = vld [vmem:[%s5 + $0xf78] sm:$0xff]
    %v6269 = vld [vmem:[%s5 + $0xf80] sm:$0xff]
    %v6270 = vld [vmem:[%s5 + $0xf88] sm:$0xff]
    %v6271 = vld [vmem:[%s5 + $0xf90] sm:$0xff]
    %v6272 = vld [vmem:[%s5 + $0xf98] sm:$0xff]
    %v6273 = vld [vmem:[%s5 + $0xfa0] sm:$0xff]
    %v6274 = vld [vmem:[%s5 + $0xfa8] sm:$0xff]
    %v6275 = vld [vmem:[%s5 + $0xfb0] sm:$0xff]
    %v6276 = vld [vmem:[%s5 + $0xfb8] sm:$0xff]
    %v6277 = vld [vmem:[%s5 + $0xfc0] sm:$0xff]
    %v6278 = vld [vmem:[%s5 + $0xfc8] sm:$0xff]
    %v6279 = vld [vmem:[%s5 + $0xfd0] sm:$0xff]
    %v6280 = vld [vmem:[%s5 + $0xfd8] sm:$0xff]
    %v6281 = vld [vmem:[%s5 + $0xfe0] sm:$0xff]
    %v6282 = vld [vmem:[%s5 + $0xfe8] sm:$0xff]
    %v6283 = vld [vmem:[%s5 + $0xff0] sm:$0xff]
    %v6284 = vld [vmem:[%s5 + $0xff8] sm:$0xff]
    %v6797 = vunpack.c.l.b16 %v5773
    %v6798 = vunpack.c.h.b16 %v5773
    %v6799 = vunpack.c.l.b16 %v5774
    %v6800 = vunpack.c.h.b16 %v5774
    %v6801 = vunpack.c.l.b16 %v5775
    %v6802 = vunpack.c.h.b16 %v5775
    %v6803 = vunpack.c.l.b16 %v5776
    %v6804 = vunpack.c.h.b16 %v5776
    %v6805 = vunpack.c.l.b16 %v5777
    %v6806 = vunpack.c.h.b16 %v5777
    %v6807 = vunpack.c.l.b16 %v5778
    %v6808 = vunpack.c.h.b16 %v5778
    %v6809 = vunpack.c.l.b16 %v5779
    %v6810 = vunpack.c.h.b16 %v5779
    %v6811 = vunpack.c.l.b16 %v5780
    %v6812 = vunpack.c.h.b16 %v5780
    %v6813 = vunpack.c.l.b16 %v5781
    %v6814 = vunpack.c.h.b16 %v5781
    %v6815 = vunpack.c.l.b16 %v5782
    %v6816 = vunpack.c.h.b16 %v5782
    %v6817 = vunpack.c.l.b16 %v5783
    %v6818 = vunpack.c.h.b16 %v5783
    %v6819 = vunpack.c.l.b16 %v5784
    %v6820 = vunpack.c.h.b16 %v5784
    %v6821 = vunpack.c.l.b16 %v5785
    %v6822 = vunpack.c.h.b16 %v5785
    %v6823 = vunpack.c.l.b16 %v5786
    %v6824 = vunpack.c.h.b16 %v5786
    %v6825 = vunpack.c.l.b16 %v5787
    %v6826 = vunpack.c.h.b16 %v5787
    %v6827 = vunpack.c.l.b16 %v5788
    %v6828 = vunpack.c.h.b16 %v5788
    %v6829 = vunpack.c.l.b16 %v5789
    %v6830 = vunpack.c.h.b16 %v5789
    %v6831 = vunpack.c.l.b16 %v5790
    %v6832 = vunpack.c.h.b16 %v5790
    %v6833 = vunpack.c.l.b16 %v5791
    %v6834 = vunpack.c.h.b16 %v5791
    %v6835 = vunpack.c.l.b16 %v5792
    %v6836 = vunpack.c.h.b16 %v5792
    %v6837 = vunpack.c.l.b16 %v5793
    %v6838 = vunpack.c.h.b16 %v5793
    %v6839 = vunpack.c.l.b16 %v5794
    %v6840 = vunpack.c.h.b16 %v5794
    %v6841 = vunpack.c.l.b16 %v5795
    %v6842 = vunpack.c.h.b16 %v5795
    %v6843 = vunpack.c.l.b16 %v5796
    %v6844 = vunpack.c.h.b16 %v5796
    %v6845 = vunpack.c.l.b16 %v5797
    %v6846 = vunpack.c.h.b16 %v5797
    %v6847 = vunpack.c.l.b16 %v5798
    %v6848 = vunpack.c.h.b16 %v5798
    %v6849 = vunpack.c.l.b16 %v5799
    %v6850 = vunpack.c.h.b16 %v5799
    %v6851 = vunpack.c.l.b16 %v5800
    %v6852 = vunpack.c.h.b16 %v5800
    %v6853 = vunpack.c.l.b16 %v5801
    %v6854 = vunpack.c.h.b16 %v5801
    %v6855 = vunpack.c.l.b16 %v5802
    %v6856 = vunpack.c.h.b16 %v5802
    %v6857 = vunpack.c.l.b16 %v5803
    %v6858 = vunpack.c.h.b16 %v5803
    %v6859 = vunpack.c.l.b16 %v5804
    %v6860 = vunpack.c.h.b16 %v5804
    %v6861 = vunpack.c.l.b16 %v5805
    %v6862 = vunpack.c.h.b16 %v5805
    %v6863 = vunpack.c.l.b16 %v5806
    %v6864 = vunpack.c.h.b16 %v5806
    %v6865 = vunpack.c.l.b16 %v5807
    %v6866 = vunpack.c.h.b16 %v5807
    %v6867 = vunpack.c.l.b16 %v5808
    %v6868 = vunpack.c.h.b16 %v5808
    %v6869 = vunpack.c.l.b16 %v5809
    %v6870 = vunpack.c.h.b16 %v5809
    %v6871 = vunpack.c.l.b16 %v5810
    %v6872 = vunpack.c.h.b16 %v5810
    %v6873 = vunpack.c.l.b16 %v5811
    %v6874 = vunpack.c.h.b16 %v5811
    %v6875 = vunpack.c.l.b16 %v5812
    %v6876 = vunpack.c.h.b16 %v5812
    %v6877 = vunpack.c.l.b16 %v5813
    %v6878 = vunpack.c.h.b16 %v5813
    %v6879 = vunpack.c.l.b16 %v5814
    %v6880 = vunpack.c.h.b16 %v5814
    %v6881 = vunpack.c.l.b16 %v5815
    %v6882 = vunpack.c.h.b16 %v5815
    %v6883 = vunpack.c.l.b16 %v5816
    %v6884 = vunpack.c.h.b16 %v5816
    %v6885 = vunpack.c.l.b16 %v5817
    %v6886 = vunpack.c.h.b16 %v5817
    %v6887 = vunpack.c.l.b16 %v5818
    %v6888 = vunpack.c.h.b16 %v5818
    %v6889 = vunpack.c.l.b16 %v5819
    %v6890 = vunpack.c.h.b16 %v5819
    %v6891 = vunpack.c.l.b16 %v5820
    %v6892 = vunpack.c.h.b16 %v5820
    %v6893 = vunpack.c.l.b16 %v5821
    %v6894 = vunpack.c.h.b16 %v5821
    %v6895 = vunpack.c.l.b16 %v5822
    %v6896 = vunpack.c.h.b16 %v5822
    %v6897 = vunpack.c.l.b16 %v5823
    %v6898 = vunpack.c.h.b16 %v5823
    %v6899 = vunpack.c.l.b16 %v5824
    %v6900 = vunpack.c.h.b16 %v5824
    %v6901 = vunpack.c.l.b16 %v5825
    %v6902 = vunpack.c.h.b16 %v5825
    %v6903 = vunpack.c.l.b16 %v5826
    %v6904 = vunpack.c.h.b16 %v5826
    %v6905 = vunpack.c.l.b16 %v5827
    %v6906 = vunpack.c.h.b16 %v5827
    %v6907 = vunpack.c.l.b16 %v5828
    %v6908 = vunpack.c.h.b16 %v5828
    %v6909 = vunpack.c.l.b16 %v5829
    %v6910 = vunpack.c.h.b16 %v5829
    %v6911 = vunpack.c.l.b16 %v5830
    %v6912 = vunpack.c.h.b16 %v5830
    %v6913 = vunpack.c.l.b16 %v5831
    %v6914 = vunpack.c.h.b16 %v5831
    %v6915 = vunpack.c.l.b16 %v5832
    %v6916 = vunpack.c.h.b16 %v5832
    %v6917 = vunpack.c.l.b16 %v5833
    %v6918 = vunpack.c.h.b16 %v5833
    %v6919 = vunpack.c.l.b16 %v5834
    %v6920 = vunpack.c.h.b16 %v5834
    %v6921 = vunpack.c.l.b16 %v5835
    %v6922 = vunpack.c.h.b16 %v5835
    %v6923 = vunpack.c.l.b16 %v5836
    %v6924 = vunpack.c.h.b16 %v5836
    %v6925 = vunpack.c.l.b16 %v5837
    %v6926 = vunpack.c.h.b16 %v5837
    %v6927 = vunpack.c.l.b16 %v5838
    %v6928 = vunpack.c.h.b16 %v5838
    %v6929 = vunpack.c.l.b16 %v5839
    %v6930 = vunpack.c.h.b16 %v5839
    %v6931 = vunpack.c.l.b16 %v5840
    %v6932 = vunpack.c.h.b16 %v5840
    %v6933 = vunpack.c.l.b16 %v5841
    %v6934 = vunpack.c.h.b16 %v5841
    %v6935 = vunpack.c.l.b16 %v5842
    %v6936 = vunpack.c.h.b16 %v5842
    %v6937 = vunpack.c.l.b16 %v5843
    %v6938 = vunpack.c.h.b16 %v5843
    %v6939 = vunpack.c.l.b16 %v5844
    %v6940 = vunpack.c.h.b16 %v5844
    %v6941 = vunpack.c.l.b16 %v5845
    %v6942 = vunpack.c.h.b16 %v5845
    %v6943 = vunpack.c.l.b16 %v5846
    %v6944 = vunpack.c.h.b16 %v5846
    %v6945 = vunpack.c.l.b16 %v5847
    %v6946 = vunpack.c.h.b16 %v5847
    %v6947 = vunpack.c.l.b16 %v5848
    %v6948 = vunpack.c.h.b16 %v5848
    %v6949 = vunpack.c.l.b16 %v5849
    %v6950 = vunpack.c.h.b16 %v5849
    %v6951 = vunpack.c.l.b16 %v5850
    %v6952 = vunpack.c.h.b16 %v5850
    %v6953 = vunpack.c.l.b16 %v5851
    %v6954 = vunpack.c.h.b16 %v5851
    %v6955 = vunpack.c.l.b16 %v5852
    %v6956 = vunpack.c.h.b16 %v5852
    %v6957 = vunpack.c.l.b16 %v5853
    %v6958 = vunpack.c.h.b16 %v5853
    %v6959 = vunpack.c.l.b16 %v5854
    %v6960 = vunpack.c.h.b16 %v5854
    %v6961 = vunpack.c.l.b16 %v5855
    %v6962 = vunpack.c.h.b16 %v5855
    %v6963 = vunpack.c.l.b16 %v5856
    %v6964 = vunpack.c.h.b16 %v5856
    %v6965 = vunpack.c.l.b16 %v5857
    %v6966 = vunpack.c.h.b16 %v5857
    %v6967 = vunpack.c.l.b16 %v5858
    %v6968 = vunpack.c.h.b16 %v5858
    %v6969 = vunpack.c.l.b16 %v5859
    %v6970 = vunpack.c.h.b16 %v5859
    %v6971 = vunpack.c.l.b16 %v5860
    %v6972 = vunpack.c.h.b16 %v5860
    %v6973 = vunpack.c.l.b16 %v5861
    %v6974 = vunpack.c.h.b16 %v5861
    %v6975 = vunpack.c.l.b16 %v5862
    %v6976 = vunpack.c.h.b16 %v5862
    %v6977 = vunpack.c.l.b16 %v5863
    %v6978 = vunpack.c.h.b16 %v5863
    %v6979 = vunpack.c.l.b16 %v5864
    %v6980 = vunpack.c.h.b16 %v5864
    %v6981 = vunpack.c.l.b16 %v5865
    %v6982 = vunpack.c.h.b16 %v5865
    %v6983 = vunpack.c.l.b16 %v5866
    %v6984 = vunpack.c.h.b16 %v5866
    %v6985 = vunpack.c.l.b16 %v5867
    %v6986 = vunpack.c.h.b16 %v5867
    %v6987 = vunpack.c.l.b16 %v5868
    %v6988 = vunpack.c.h.b16 %v5868
    %v6989 = vunpack.c.l.b16 %v5869
    %v6990 = vunpack.c.h.b16 %v5869
    %v6991 = vunpack.c.l.b16 %v5870
    %v6992 = vunpack.c.h.b16 %v5870
    %v6993 = vunpack.c.l.b16 %v5871
    %v6994 = vunpack.c.h.b16 %v5871
    %v6995 = vunpack.c.l.b16 %v5872
    %v6996 = vunpack.c.h.b16 %v5872
    %v6997 = vunpack.c.l.b16 %v5873
    %v6998 = vunpack.c.h.b16 %v5873
    %v6999 = vunpack.c.l.b16 %v5874
    %v7000 = vunpack.c.h.b16 %v5874
    %v7001 = vunpack.c.l.b16 %v5875
    %v7002 = vunpack.c.h.b16 %v5875
    %v7003 = vunpack.c.l.b16 %v5876
    %v7004 = vunpack.c.h.b16 %v5876
    %v7005 = vunpack.c.l.b16 %v5877
    %v7006 = vunpack.c.h.b16 %v5877
    %v7007 = vunpack.c.l.b16 %v5878
    %v7008 = vunpack.c.h.b16 %v5878
    %v7009 = vunpack.c.l.b16 %v5879
    %v7010 = vunpack.c.h.b16 %v5879
    %v7011 = vunpack.c.l.b16 %v5880
    %v7012 = vunpack.c.h.b16 %v5880
    %v7013 = vunpack.c.l.b16 %v5881
    %v7014 = vunpack.c.h.b16 %v5881
    %v7015 = vunpack.c.l.b16 %v5882
    %v7016 = vunpack.c.h.b16 %v5882
    %v7017 = vunpack.c.l.b16 %v5883
    %v7018 = vunpack.c.h.b16 %v5883
    %v7019 = vunpack.c.l.b16 %v5884
    %v7020 = vunpack.c.h.b16 %v5884
    %v7021 = vunpack.c.l.b16 %v5885
    %v7022 = vunpack.c.h.b16 %v5885
    %v7023 = vunpack.c.l.b16 %v5886
    %v7024 = vunpack.c.h.b16 %v5886
    %v7025 = vunpack.c.l.b16 %v5887
    %v7026 = vunpack.c.h.b16 %v5887
    %v7027 = vunpack.c.l.b16 %v5888
    %v7028 = vunpack.c.h.b16 %v5888
    %v7029 = vunpack.c.l.b16 %v5889
    %v7030 = vunpack.c.h.b16 %v5889
    %v7031 = vunpack.c.l.b16 %v5890
    %v7032 = vunpack.c.h.b16 %v5890
    %v7033 = vunpack.c.l.b16 %v5891
    %v7034 = vunpack.c.h.b16 %v5891
    %v7035 = vunpack.c.l.b16 %v5892
    %v7036 = vunpack.c.h.b16 %v5892
    %v7037 = vunpack.c.l.b16 %v5893
    %v7038 = vunpack.c.h.b16 %v5893
    %v7039 = vunpack.c.l.b16 %v5894
    %v7040 = vunpack.c.h.b16 %v5894
    %v7041 = vunpack.c.l.b16 %v5895
    %v7042 = vunpack.c.h.b16 %v5895
    %v7043 = vunpack.c.l.b16 %v5896
    %v7044 = vunpack.c.h.b16 %v5896
    %v7045 = vunpack.c.l.b16 %v5897
    %v7046 = vunpack.c.h.b16 %v5897
    %v7047 = vunpack.c.l.b16 %v5898
    %v7048 = vunpack.c.h.b16 %v5898
    %v7049 = vunpack.c.l.b16 %v5899
    %v7050 = vunpack.c.h.b16 %v5899
    %v7051 = vunpack.c.l.b16 %v5900
    %v7052 = vunpack.c.h.b16 %v5900
    %v7053 = vunpack.c.l.b16 %v5901
    %v7054 = vunpack.c.h.b16 %v5901
    %v7055 = vunpack.c.l.b16 %v5902
    %v7056 = vunpack.c.h.b16 %v5902
    %v7057 = vunpack.c.l.b16 %v5903
    %v7058 = vunpack.c.h.b16 %v5903
    %v7059 = vunpack.c.l.b16 %v5904
    %v7060 = vunpack.c.h.b16 %v5904
    %v7061 = vunpack.c.l.b16 %v5905
    %v7062 = vunpack.c.h.b16 %v5905
    %v7063 = vunpack.c.l.b16 %v5906
    %v7064 = vunpack.c.h.b16 %v5906
    %v7065 = vunpack.c.l.b16 %v5907
    %v7066 = vunpack.c.h.b16 %v5907
    %v7067 = vunpack.c.l.b16 %v5908
    %v7068 = vunpack.c.h.b16 %v5908
    %v7069 = vunpack.c.l.b16 %v5909
    %v7070 = vunpack.c.h.b16 %v5909
    %v7071 = vunpack.c.l.b16 %v5910
    %v7072 = vunpack.c.h.b16 %v5910
    %v7073 = vunpack.c.l.b16 %v5911
    %v7074 = vunpack.c.h.b16 %v5911
    %v7075 = vunpack.c.l.b16 %v5912
    %v7076 = vunpack.c.h.b16 %v5912
    %v7077 = vunpack.c.l.b16 %v5913
    %v7078 = vunpack.c.h.b16 %v5913
    %v7079 = vunpack.c.l.b16 %v5914
    %v7080 = vunpack.c.h.b16 %v5914
    %v7081 = vunpack.c.l.b16 %v5915
    %v7082 = vunpack.c.h.b16 %v5915
    %v7083 = vunpack.c.l.b16 %v5916
    %v7084 = vunpack.c.h.b16 %v5916
    %v7085 = vunpack.c.l.b16 %v5917
    %v7086 = vunpack.c.h.b16 %v5917
    %v7087 = vunpack.c.l.b16 %v5918
    %v7088 = vunpack.c.h.b16 %v5918
    %v7089 = vunpack.c.l.b16 %v5919
    %v7090 = vunpack.c.h.b16 %v5919
    %v7091 = vunpack.c.l.b16 %v5920
    %v7092 = vunpack.c.h.b16 %v5920
    %v7093 = vunpack.c.l.b16 %v5921
    %v7094 = vunpack.c.h.b16 %v5921
    %v7095 = vunpack.c.l.b16 %v5922
    %v7096 = vunpack.c.h.b16 %v5922
    %v7097 = vunpack.c.l.b16 %v5923
    %v7098 = vunpack.c.h.b16 %v5923
    %v7099 = vunpack.c.l.b16 %v5924
    %v7100 = vunpack.c.h.b16 %v5924
    %v7101 = vunpack.c.l.b16 %v5925
    %v7102 = vunpack.c.h.b16 %v5925
    %v7103 = vunpack.c.l.b16 %v5926
    %v7104 = vunpack.c.h.b16 %v5926
    %v7105 = vunpack.c.l.b16 %v5927
    %v7106 = vunpack.c.h.b16 %v5927
    %v7107 = vunpack.c.l.b16 %v5928
    %v7108 = vunpack.c.h.b16 %v5928
    %v7109 = vunpack.c.l.b16 %v5929
    %v7110 = vunpack.c.h.b16 %v5929
    %v7111 = vunpack.c.l.b16 %v5930
    %v7112 = vunpack.c.h.b16 %v5930
    %v7113 = vunpack.c.l.b16 %v5931
    %v7114 = vunpack.c.h.b16 %v5931
    %v7115 = vunpack.c.l.b16 %v5932
    %v7116 = vunpack.c.h.b16 %v5932
    %v7117 = vunpack.c.l.b16 %v5933
    %v7118 = vunpack.c.h.b16 %v5933
    %v7119 = vunpack.c.l.b16 %v5934
    %v7120 = vunpack.c.h.b16 %v5934
    %v7121 = vunpack.c.l.b16 %v5935
    %v7122 = vunpack.c.h.b16 %v5935
    %v7123 = vunpack.c.l.b16 %v5936
    %v7124 = vunpack.c.h.b16 %v5936
    %v7125 = vunpack.c.l.b16 %v5937
    %v7126 = vunpack.c.h.b16 %v5937
    %v7127 = vunpack.c.l.b16 %v5938
    %v7128 = vunpack.c.h.b16 %v5938
    %v7129 = vunpack.c.l.b16 %v5939
    %v7130 = vunpack.c.h.b16 %v5939
    %v7131 = vunpack.c.l.b16 %v5940
    %v7132 = vunpack.c.h.b16 %v5940
    %v7133 = vunpack.c.l.b16 %v5941
    %v7134 = vunpack.c.h.b16 %v5941
    %v7135 = vunpack.c.l.b16 %v5942
    %v7136 = vunpack.c.h.b16 %v5942
    %v7137 = vunpack.c.l.b16 %v5943
    %v7138 = vunpack.c.h.b16 %v5943
    %v7139 = vunpack.c.l.b16 %v5944
    %v7140 = vunpack.c.h.b16 %v5944
    %v7141 = vunpack.c.l.b16 %v5945
    %v7142 = vunpack.c.h.b16 %v5945
    %v7143 = vunpack.c.l.b16 %v5946
    %v7144 = vunpack.c.h.b16 %v5946
    %v7145 = vunpack.c.l.b16 %v5947
    %v7146 = vunpack.c.h.b16 %v5947
    %v7147 = vunpack.c.l.b16 %v5948
    %v7148 = vunpack.c.h.b16 %v5948
    %v7149 = vunpack.c.l.b16 %v5949
    %v7150 = vunpack.c.h.b16 %v5949
    %v7151 = vunpack.c.l.b16 %v5950
    %v7152 = vunpack.c.h.b16 %v5950
    %v7153 = vunpack.c.l.b16 %v5951
    %v7154 = vunpack.c.h.b16 %v5951
    %v7155 = vunpack.c.l.b16 %v5952
    %v7156 = vunpack.c.h.b16 %v5952
    %v7157 = vunpack.c.l.b16 %v5953
    %v7158 = vunpack.c.h.b16 %v5953
    %v7159 = vunpack.c.l.b16 %v5954
    %v7160 = vunpack.c.h.b16 %v5954
    %v7161 = vunpack.c.l.b16 %v5955
    %v7162 = vunpack.c.h.b16 %v5955
    %v7163 = vunpack.c.l.b16 %v5956
    %v7164 = vunpack.c.h.b16 %v5956
    %v7165 = vunpack.c.l.b16 %v5957
    %v7166 = vunpack.c.h.b16 %v5957
    %v7167 = vunpack.c.l.b16 %v5958
    %v7168 = vunpack.c.h.b16 %v5958
    %v7169 = vunpack.c.l.b16 %v5959
    %v7170 = vunpack.c.h.b16 %v5959
    %v7171 = vunpack.c.l.b16 %v5960
    %v7172 = vunpack.c.h.b16 %v5960
    %v7173 = vunpack.c.l.b16 %v5961
    %v7174 = vunpack.c.h.b16 %v5961
    %v7175 = vunpack.c.l.b16 %v5962
    %v7176 = vunpack.c.h.b16 %v5962
    %v7177 = vunpack.c.l.b16 %v5963
    %v7178 = vunpack.c.h.b16 %v5963
    %v7179 = vunpack.c.l.b16 %v5964
    %v7180 = vunpack.c.h.b16 %v5964
    %v7181 = vunpack.c.l.b16 %v5965
    %v7182 = vunpack.c.h.b16 %v5965
    %v7183 = vunpack.c.l.b16 %v5966
    %v7184 = vunpack.c.h.b16 %v5966
    %v7185 = vunpack.c.l.b16 %v5967
    %v7186 = vunpack.c.h.b16 %v5967
    %v7187 = vunpack.c.l.b16 %v5968
    %v7188 = vunpack.c.h.b16 %v5968
    %v7189 = vunpack.c.l.b16 %v5969
    %v7190 = vunpack.c.h.b16 %v5969
    %v7191 = vunpack.c.l.b16 %v5970
    %v7192 = vunpack.c.h.b16 %v5970
    %v7193 = vunpack.c.l.b16 %v5971
    %v7194 = vunpack.c.h.b16 %v5971
    %v7195 = vunpack.c.l.b16 %v5972
    %v7196 = vunpack.c.h.b16 %v5972
    %v7197 = vunpack.c.l.b16 %v5973
    %v7198 = vunpack.c.h.b16 %v5973
    %v7199 = vunpack.c.l.b16 %v5974
    %v7200 = vunpack.c.h.b16 %v5974
    %v7201 = vunpack.c.l.b16 %v5975
    %v7202 = vunpack.c.h.b16 %v5975
    %v7203 = vunpack.c.l.b16 %v5976
    %v7204 = vunpack.c.h.b16 %v5976
    %v7205 = vunpack.c.l.b16 %v5977
    %v7206 = vunpack.c.h.b16 %v5977
    %v7207 = vunpack.c.l.b16 %v5978
    %v7208 = vunpack.c.h.b16 %v5978
    %v7209 = vunpack.c.l.b16 %v5979
    %v7210 = vunpack.c.h.b16 %v5979
    %v7211 = vunpack.c.l.b16 %v5980
    %v7212 = vunpack.c.h.b16 %v5980
    %v7213 = vunpack.c.l.b16 %v5981
    %v7214 = vunpack.c.h.b16 %v5981
    %v7215 = vunpack.c.l.b16 %v5982
    %v7216 = vunpack.c.h.b16 %v5982
    %v7217 = vunpack.c.l.b16 %v5983
    %v7218 = vunpack.c.h.b16 %v5983
    %v7219 = vunpack.c.l.b16 %v5984
    %v7220 = vunpack.c.h.b16 %v5984
    %v7221 = vunpack.c.l.b16 %v5985
    %v7222 = vunpack.c.h.b16 %v5985
    %v7223 = vunpack.c.l.b16 %v5986
    %v7224 = vunpack.c.h.b16 %v5986
    %v7225 = vunpack.c.l.b16 %v5987
    %v7226 = vunpack.c.h.b16 %v5987
    %v7227 = vunpack.c.l.b16 %v5988
    %v7228 = vunpack.c.h.b16 %v5988
    %v7229 = vunpack.c.l.b16 %v5989
    %v7230 = vunpack.c.h.b16 %v5989
    %v7231 = vunpack.c.l.b16 %v5990
    %v7232 = vunpack.c.h.b16 %v5990
    %v7233 = vunpack.c.l.b16 %v5991
    %v7234 = vunpack.c.h.b16 %v5991
    %v7235 = vunpack.c.l.b16 %v5992
    %v7236 = vunpack.c.h.b16 %v5992
    %v7237 = vunpack.c.l.b16 %v5993
    %v7238 = vunpack.c.h.b16 %v5993
    %v7239 = vunpack.c.l.b16 %v5994
    %v7240 = vunpack.c.h.b16 %v5994
    %v7241 = vunpack.c.l.b16 %v5995
    %v7242 = vunpack.c.h.b16 %v5995
    %v7243 = vunpack.c.l.b16 %v5996
    %v7244 = vunpack.c.h.b16 %v5996
    %v7245 = vunpack.c.l.b16 %v5997
    %v7246 = vunpack.c.h.b16 %v5997
    %v7247 = vunpack.c.l.b16 %v5998
    %v7248 = vunpack.c.h.b16 %v5998
    %v7249 = vunpack.c.l.b16 %v5999
    %v7250 = vunpack.c.h.b16 %v5999
    %v7251 = vunpack.c.l.b16 %v6000
    %v7252 = vunpack.c.h.b16 %v6000
    %v7253 = vunpack.c.l.b16 %v6001
    %v7254 = vunpack.c.h.b16 %v6001
    %v7255 = vunpack.c.l.b16 %v6002
    %v7256 = vunpack.c.h.b16 %v6002
    %v7257 = vunpack.c.l.b16 %v6003
    %v7258 = vunpack.c.h.b16 %v6003
    %v7259 = vunpack.c.l.b16 %v6004
    %v7260 = vunpack.c.h.b16 %v6004
    %v7261 = vunpack.c.l.b16 %v6005
    %v7262 = vunpack.c.h.b16 %v6005
    %v7263 = vunpack.c.l.b16 %v6006
    %v7264 = vunpack.c.h.b16 %v6006
    %v7265 = vunpack.c.l.b16 %v6007
    %v7266 = vunpack.c.h.b16 %v6007
    %v7267 = vunpack.c.l.b16 %v6008
    %v7268 = vunpack.c.h.b16 %v6008
    %v7269 = vunpack.c.l.b16 %v6009
    %v7270 = vunpack.c.h.b16 %v6009
    %v7271 = vunpack.c.l.b16 %v6010
    %v7272 = vunpack.c.h.b16 %v6010
    %v7273 = vunpack.c.l.b16 %v6011
    %v7274 = vunpack.c.h.b16 %v6011
    %v7275 = vunpack.c.l.b16 %v6012
    %v7276 = vunpack.c.h.b16 %v6012
    %v7277 = vunpack.c.l.b16 %v6013
    %v7278 = vunpack.c.h.b16 %v6013
    %v7279 = vunpack.c.l.b16 %v6014
    %v7280 = vunpack.c.h.b16 %v6014
    %v7281 = vunpack.c.l.b16 %v6015
    %v7282 = vunpack.c.h.b16 %v6015
    %v7283 = vunpack.c.l.b16 %v6016
    %v7284 = vunpack.c.h.b16 %v6016
    %v7285 = vunpack.c.l.b16 %v6017
    %v7286 = vunpack.c.h.b16 %v6017
    %v7287 = vunpack.c.l.b16 %v6018
    %v7288 = vunpack.c.h.b16 %v6018
    %v7289 = vunpack.c.l.b16 %v6019
    %v7290 = vunpack.c.h.b16 %v6019
    %v7291 = vunpack.c.l.b16 %v6020
    %v7292 = vunpack.c.h.b16 %v6020
    %v7293 = vunpack.c.l.b16 %v6021
    %v7294 = vunpack.c.h.b16 %v6021
    %v7295 = vunpack.c.l.b16 %v6022
    %v7296 = vunpack.c.h.b16 %v6022
    %v7297 = vunpack.c.l.b16 %v6023
    %v7298 = vunpack.c.h.b16 %v6023
    %v7299 = vunpack.c.l.b16 %v6024
    %v7300 = vunpack.c.h.b16 %v6024
    %v7301 = vunpack.c.l.b16 %v6025
    %v7302 = vunpack.c.h.b16 %v6025
    %v7303 = vunpack.c.l.b16 %v6026
    %v7304 = vunpack.c.h.b16 %v6026
    %v7305 = vunpack.c.l.b16 %v6027
    %v7306 = vunpack.c.h.b16 %v6027
    %v7307 = vunpack.c.l.b16 %v6028
    %v7308 = vunpack.c.h.b16 %v6028
    %v7309 = vunpack.c.l.b16 %v6029
    %v7310 = vunpack.c.h.b16 %v6029
    %v7311 = vunpack.c.l.b16 %v6030
    %v7312 = vunpack.c.h.b16 %v6030
    %v7313 = vunpack.c.l.b16 %v6031
    %v7314 = vunpack.c.h.b16 %v6031
    %v7315 = vunpack.c.l.b16 %v6032
    %v7316 = vunpack.c.h.b16 %v6032
    %v7317 = vunpack.c.l.b16 %v6033
    %v7318 = vunpack.c.h.b16 %v6033
    %v7319 = vunpack.c.l.b16 %v6034
    %v7320 = vunpack.c.h.b16 %v6034
    %v7321 = vunpack.c.l.b16 %v6035
    %v7322 = vunpack.c.h.b16 %v6035
    %v7323 = vunpack.c.l.b16 %v6036
    %v7324 = vunpack.c.h.b16 %v6036
    %v7325 = vunpack.c.l.b16 %v6037
    %v7326 = vunpack.c.h.b16 %v6037
    %v7327 = vunpack.c.l.b16 %v6038
    %v7328 = vunpack.c.h.b16 %v6038
    %v7329 = vunpack.c.l.b16 %v6039
    %v7330 = vunpack.c.h.b16 %v6039
    %v7331 = vunpack.c.l.b16 %v6040
    %v7332 = vunpack.c.h.b16 %v6040
    %v7333 = vunpack.c.l.b16 %v6041
    %v7334 = vunpack.c.h.b16 %v6041
    %v7335 = vunpack.c.l.b16 %v6042
    %v7336 = vunpack.c.h.b16 %v6042
    %v7337 = vunpack.c.l.b16 %v6043
    %v7338 = vunpack.c.h.b16 %v6043
    %v7339 = vunpack.c.l.b16 %v6044
    %v7340 = vunpack.c.h.b16 %v6044
    %v7341 = vunpack.c.l.b16 %v6045
    %v7342 = vunpack.c.h.b16 %v6045
    %v7343 = vunpack.c.l.b16 %v6046
    %v7344 = vunpack.c.h.b16 %v6046
    %v7345 = vunpack.c.l.b16 %v6047
    %v7346 = vunpack.c.h.b16 %v6047
    %v7347 = vunpack.c.l.b16 %v6048
    %v7348 = vunpack.c.h.b16 %v6048
    %v7349 = vunpack.c.l.b16 %v6049
    %v7350 = vunpack.c.h.b16 %v6049
    %v7351 = vunpack.c.l.b16 %v6050
    %v7352 = vunpack.c.h.b16 %v6050
    %v7353 = vunpack.c.l.b16 %v6051
    %v7354 = vunpack.c.h.b16 %v6051
    %v7355 = vunpack.c.l.b16 %v6052
    %v7356 = vunpack.c.h.b16 %v6052
    %v7357 = vunpack.c.l.b16 %v6053
    %v7358 = vunpack.c.h.b16 %v6053
    %v7359 = vunpack.c.l.b16 %v6054
    %v7360 = vunpack.c.h.b16 %v6054
    %v7361 = vunpack.c.l.b16 %v6055
    %v7362 = vunpack.c.h.b16 %v6055
    %v7363 = vunpack.c.l.b16 %v6056
    %v7364 = vunpack.c.h.b16 %v6056
    %v7365 = vunpack.c.l.b16 %v6057
    %v7366 = vunpack.c.h.b16 %v6057
    %v7367 = vunpack.c.l.b16 %v6058
    %v7368 = vunpack.c.h.b16 %v6058
    %v7369 = vunpack.c.l.b16 %v6059
    %v7370 = vunpack.c.h.b16 %v6059
    %v7371 = vunpack.c.l.b16 %v6060
    %v7372 = vunpack.c.h.b16 %v6060
    %v7373 = vunpack.c.l.b16 %v6061
    %v7374 = vunpack.c.h.b16 %v6061
    %v7375 = vunpack.c.l.b16 %v6062
    %v7376 = vunpack.c.h.b16 %v6062
    %v7377 = vunpack.c.l.b16 %v6063
    %v7378 = vunpack.c.h.b16 %v6063
    %v7379 = vunpack.c.l.b16 %v6064
    %v7380 = vunpack.c.h.b16 %v6064
    %v7381 = vunpack.c.l.b16 %v6065
    %v7382 = vunpack.c.h.b16 %v6065
    %v7383 = vunpack.c.l.b16 %v6066
    %v7384 = vunpack.c.h.b16 %v6066
    %v7385 = vunpack.c.l.b16 %v6067
    %v7386 = vunpack.c.h.b16 %v6067
    %v7387 = vunpack.c.l.b16 %v6068
    %v7388 = vunpack.c.h.b16 %v6068
    %v7389 = vunpack.c.l.b16 %v6069
    %v7390 = vunpack.c.h.b16 %v6069
    %v7391 = vunpack.c.l.b16 %v6070
    %v7392 = vunpack.c.h.b16 %v6070
    %v7393 = vunpack.c.l.b16 %v6071
    %v7394 = vunpack.c.h.b16 %v6071
    %v7395 = vunpack.c.l.b16 %v6072
    %v7396 = vunpack.c.h.b16 %v6072
    %v7397 = vunpack.c.l.b16 %v6073
    %v7398 = vunpack.c.h.b16 %v6073
    %v7399 = vunpack.c.l.b16 %v6074
    %v7400 = vunpack.c.h.b16 %v6074
    %v7401 = vunpack.c.l.b16 %v6075
    %v7402 = vunpack.c.h.b16 %v6075
    %v7403 = vunpack.c.l.b16 %v6076
    %v7404 = vunpack.c.h.b16 %v6076
    %v7405 = vunpack.c.l.b16 %v6077
    %v7406 = vunpack.c.h.b16 %v6077
    %v7407 = vunpack.c.l.b16 %v6078
    %v7408 = vunpack.c.h.b16 %v6078
    %v7409 = vunpack.c.l.b16 %v6079
    %v7410 = vunpack.c.h.b16 %v6079
    %v7411 = vunpack.c.l.b16 %v6080
    %v7412 = vunpack.c.h.b16 %v6080
    %v7413 = vunpack.c.l.b16 %v6081
    %v7414 = vunpack.c.h.b16 %v6081
    %v7415 = vunpack.c.l.b16 %v6082
    %v7416 = vunpack.c.h.b16 %v6082
    %v7417 = vunpack.c.l.b16 %v6083
    %v7418 = vunpack.c.h.b16 %v6083
    %v7419 = vunpack.c.l.b16 %v6084
    %v7420 = vunpack.c.h.b16 %v6084
    %v7421 = vunpack.c.l.b16 %v6085
    %v7422 = vunpack.c.h.b16 %v6085
    %v7423 = vunpack.c.l.b16 %v6086
    %v7424 = vunpack.c.h.b16 %v6086
    %v7425 = vunpack.c.l.b16 %v6087
    %v7426 = vunpack.c.h.b16 %v6087
    %v7427 = vunpack.c.l.b16 %v6088
    %v7428 = vunpack.c.h.b16 %v6088
    %v7429 = vunpack.c.l.b16 %v6089
    %v7430 = vunpack.c.h.b16 %v6089
    %v7431 = vunpack.c.l.b16 %v6090
    %v7432 = vunpack.c.h.b16 %v6090
    %v7433 = vunpack.c.l.b16 %v6091
    %v7434 = vunpack.c.h.b16 %v6091
    %v7435 = vunpack.c.l.b16 %v6092
    %v7436 = vunpack.c.h.b16 %v6092
    %v7437 = vunpack.c.l.b16 %v6093
    %v7438 = vunpack.c.h.b16 %v6093
    %v7439 = vunpack.c.l.b16 %v6094
    %v7440 = vunpack.c.h.b16 %v6094
    %v7441 = vunpack.c.l.b16 %v6095
    %v7442 = vunpack.c.h.b16 %v6095
    %v7443 = vunpack.c.l.b16 %v6096
    %v7444 = vunpack.c.h.b16 %v6096
    %v7445 = vunpack.c.l.b16 %v6097
    %v7446 = vunpack.c.h.b16 %v6097
    %v7447 = vunpack.c.l.b16 %v6098
    %v7448 = vunpack.c.h.b16 %v6098
    %v7449 = vunpack.c.l.b16 %v6099
    %v7450 = vunpack.c.h.b16 %v6099
    %v7451 = vunpack.c.l.b16 %v6100
    %v7452 = vunpack.c.h.b16 %v6100
    %v7453 = vunpack.c.l.b16 %v6101
    %v7454 = vunpack.c.h.b16 %v6101
    %v7455 = vunpack.c.l.b16 %v6102
    %v7456 = vunpack.c.h.b16 %v6102
    %v7457 = vunpack.c.l.b16 %v6103
    %v7458 = vunpack.c.h.b16 %v6103
    %v7459 = vunpack.c.l.b16 %v6104
    %v7460 = vunpack.c.h.b16 %v6104
    %v7461 = vunpack.c.l.b16 %v6105
    %v7462 = vunpack.c.h.b16 %v6105
    %v7463 = vunpack.c.l.b16 %v6106
    %v7464 = vunpack.c.h.b16 %v6106
    %v7465 = vunpack.c.l.b16 %v6107
    %v7466 = vunpack.c.h.b16 %v6107
    %v7467 = vunpack.c.l.b16 %v6108
    %v7468 = vunpack.c.h.b16 %v6108
    %v7469 = vunpack.c.l.b16 %v6109
    %v7470 = vunpack.c.h.b16 %v6109
    %v7471 = vunpack.c.l.b16 %v6110
    %v7472 = vunpack.c.h.b16 %v6110
    %v7473 = vunpack.c.l.b16 %v6111
    %v7474 = vunpack.c.h.b16 %v6111
    %v7475 = vunpack.c.l.b16 %v6112
    %v7476 = vunpack.c.h.b16 %v6112
    %v7477 = vunpack.c.l.b16 %v6113
    %v7478 = vunpack.c.h.b16 %v6113
    %v7479 = vunpack.c.l.b16 %v6114
    %v7480 = vunpack.c.h.b16 %v6114
    %v7481 = vunpack.c.l.b16 %v6115
    %v7482 = vunpack.c.h.b16 %v6115
    %v7483 = vunpack.c.l.b16 %v6116
    %v7484 = vunpack.c.h.b16 %v6116
    %v7485 = vunpack.c.l.b16 %v6117
    %v7486 = vunpack.c.h.b16 %v6117
    %v7487 = vunpack.c.l.b16 %v6118
    %v7488 = vunpack.c.h.b16 %v6118
    %v7489 = vunpack.c.l.b16 %v6119
    %v7490 = vunpack.c.h.b16 %v6119
    %v7491 = vunpack.c.l.b16 %v6120
    %v7492 = vunpack.c.h.b16 %v6120
    %v7493 = vunpack.c.l.b16 %v6121
    %v7494 = vunpack.c.h.b16 %v6121
    %v7495 = vunpack.c.l.b16 %v6122
    %v7496 = vunpack.c.h.b16 %v6122
    %v7497 = vunpack.c.l.b16 %v6123
    %v7498 = vunpack.c.h.b16 %v6123
    %v7499 = vunpack.c.l.b16 %v6124
    %v7500 = vunpack.c.h.b16 %v6124
    %v7501 = vunpack.c.l.b16 %v6125
    %v7502 = vunpack.c.h.b16 %v6125
    %v7503 = vunpack.c.l.b16 %v6126
    %v7504 = vunpack.c.h.b16 %v6126
    %v7505 = vunpack.c.l.b16 %v6127
    %v7506 = vunpack.c.h.b16 %v6127
    %v7507 = vunpack.c.l.b16 %v6128
    %v7508 = vunpack.c.h.b16 %v6128
    %v7509 = vunpack.c.l.b16 %v6129
    %v7510 = vunpack.c.h.b16 %v6129
    %v7511 = vunpack.c.l.b16 %v6130
    %v7512 = vunpack.c.h.b16 %v6130
    %v7513 = vunpack.c.l.b16 %v6131
    %v7514 = vunpack.c.h.b16 %v6131
    %v7515 = vunpack.c.l.b16 %v6132
    %v7516 = vunpack.c.h.b16 %v6132
    %v7517 = vunpack.c.l.b16 %v6133
    %v7518 = vunpack.c.h.b16 %v6133
    %v7519 = vunpack.c.l.b16 %v6134
    %v7520 = vunpack.c.h.b16 %v6134
    %v7521 = vunpack.c.l.b16 %v6135
    %v7522 = vunpack.c.h.b16 %v6135
    %v7523 = vunpack.c.l.b16 %v6136
    %v7524 = vunpack.c.h.b16 %v6136
    %v7525 = vunpack.c.l.b16 %v6137
    %v7526 = vunpack.c.h.b16 %v6137
    %v7527 = vunpack.c.l.b16 %v6138
    %v7528 = vunpack.c.h.b16 %v6138
    %v7529 = vunpack.c.l.b16 %v6139
    %v7530 = vunpack.c.h.b16 %v6139
    %v7531 = vunpack.c.l.b16 %v6140
    %v7532 = vunpack.c.h.b16 %v6140
    %v7533 = vunpack.c.l.b16 %v6141
    %v7534 = vunpack.c.h.b16 %v6141
    %v7535 = vunpack.c.l.b16 %v6142
    %v7536 = vunpack.c.h.b16 %v6142
    %v7537 = vunpack.c.l.b16 %v6143
    %v7538 = vunpack.c.h.b16 %v6143
    %v7539 = vunpack.c.l.b16 %v6144
    %v7540 = vunpack.c.h.b16 %v6144
    %v7541 = vunpack.c.l.b16 %v6145
    %v7542 = vunpack.c.h.b16 %v6145
    %v7543 = vunpack.c.l.b16 %v6146
    %v7544 = vunpack.c.h.b16 %v6146
    %v7545 = vunpack.c.l.b16 %v6147
    %v7546 = vunpack.c.h.b16 %v6147
    %v7547 = vunpack.c.l.b16 %v6148
    %v7548 = vunpack.c.h.b16 %v6148
    %v7549 = vunpack.c.l.b16 %v6149
    %v7550 = vunpack.c.h.b16 %v6149
    %v7551 = vunpack.c.l.b16 %v6150
    %v7552 = vunpack.c.h.b16 %v6150
    %v7553 = vunpack.c.l.b16 %v6151
    %v7554 = vunpack.c.h.b16 %v6151
    %v7555 = vunpack.c.l.b16 %v6152
    %v7556 = vunpack.c.h.b16 %v6152
    %v7557 = vunpack.c.l.b16 %v6153
    %v7558 = vunpack.c.h.b16 %v6153
    %v7559 = vunpack.c.l.b16 %v6154
    %v7560 = vunpack.c.h.b16 %v6154
    %v7561 = vunpack.c.l.b16 %v6155
    %v7562 = vunpack.c.h.b16 %v6155
    %v7563 = vunpack.c.l.b16 %v6156
    %v7564 = vunpack.c.h.b16 %v6156
    %v7565 = vunpack.c.l.b16 %v6157
    %v7566 = vunpack.c.h.b16 %v6157
    %v7567 = vunpack.c.l.b16 %v6158
    %v7568 = vunpack.c.h.b16 %v6158
    %v7569 = vunpack.c.l.b16 %v6159
    %v7570 = vunpack.c.h.b16 %v6159
    %v7571 = vunpack.c.l.b16 %v6160
    %v7572 = vunpack.c.h.b16 %v6160
    %v7573 = vunpack.c.l.b16 %v6161
    %v7574 = vunpack.c.h.b16 %v6161
    %v7575 = vunpack.c.l.b16 %v6162
    %v7576 = vunpack.c.h.b16 %v6162
    %v7577 = vunpack.c.l.b16 %v6163
    %v7578 = vunpack.c.h.b16 %v6163
    %v7579 = vunpack.c.l.b16 %v6164
    %v7580 = vunpack.c.h.b16 %v6164
    %v7581 = vunpack.c.l.b16 %v6165
    %v7582 = vunpack.c.h.b16 %v6165
    %v7583 = vunpack.c.l.b16 %v6166
    %v7584 = vunpack.c.h.b16 %v6166
    %v7585 = vunpack.c.l.b16 %v6167
    %v7586 = vunpack.c.h.b16 %v6167
    %v7587 = vunpack.c.l.b16 %v6168
    %v7588 = vunpack.c.h.b16 %v6168
    %v7589 = vunpack.c.l.b16 %v6169
    %v7590 = vunpack.c.h.b16 %v6169
    %v7591 = vunpack.c.l.b16 %v6170
    %v7592 = vunpack.c.h.b16 %v6170
    %v7593 = vunpack.c.l.b16 %v6171
    %v7594 = vunpack.c.h.b16 %v6171
    %v7595 = vunpack.c.l.b16 %v6172
    %v7596 = vunpack.c.h.b16 %v6172
    %v7597 = vunpack.c.l.b16 %v6173
    %v7598 = vunpack.c.h.b16 %v6173
    %v7599 = vunpack.c.l.b16 %v6174
    %v7600 = vunpack.c.h.b16 %v6174
    %v7601 = vunpack.c.l.b16 %v6175
    %v7602 = vunpack.c.h.b16 %v6175
    %v7603 = vunpack.c.l.b16 %v6176
    %v7604 = vunpack.c.h.b16 %v6176
    %v7605 = vunpack.c.l.b16 %v6177
    %v7606 = vunpack.c.h.b16 %v6177
    %v7607 = vunpack.c.l.b16 %v6178
    %v7608 = vunpack.c.h.b16 %v6178
    %v7609 = vunpack.c.l.b16 %v6179
    %v7610 = vunpack.c.h.b16 %v6179
    %v7611 = vunpack.c.l.b16 %v6180
    %v7612 = vunpack.c.h.b16 %v6180
    %v7613 = vunpack.c.l.b16 %v6181
    %v7614 = vunpack.c.h.b16 %v6181
    %v7615 = vunpack.c.l.b16 %v6182
    %v7616 = vunpack.c.h.b16 %v6182
    %v7617 = vunpack.c.l.b16 %v6183
    %v7618 = vunpack.c.h.b16 %v6183
    %v7619 = vunpack.c.l.b16 %v6184
    %v7620 = vunpack.c.h.b16 %v6184
    %v7621 = vunpack.c.l.b16 %v6185
    %v7622 = vunpack.c.h.b16 %v6185
    %v7623 = vunpack.c.l.b16 %v6186
    %v7624 = vunpack.c.h.b16 %v6186
    %v7625 = vunpack.c.l.b16 %v6187
    %v7626 = vunpack.c.h.b16 %v6187
    %v7627 = vunpack.c.l.b16 %v6188
    %v7628 = vunpack.c.h.b16 %v6188
    %v7629 = vunpack.c.l.b16 %v6189
    %v7630 = vunpack.c.h.b16 %v6189
    %v7631 = vunpack.c.l.b16 %v6190
    %v7632 = vunpack.c.h.b16 %v6190
    %v7633 = vunpack.c.l.b16 %v6191
    %v7634 = vunpack.c.h.b16 %v6191
    %v7635 = vunpack.c.l.b16 %v6192
    %v7636 = vunpack.c.h.b16 %v6192
    %v7637 = vunpack.c.l.b16 %v6193
    %v7638 = vunpack.c.h.b16 %v6193
    %v7639 = vunpack.c.l.b16 %v6194
    %v7640 = vunpack.c.h.b16 %v6194
    %v7641 = vunpack.c.l.b16 %v6195
    %v7642 = vunpack.c.h.b16 %v6195
    %v7643 = vunpack.c.l.b16 %v6196
    %v7644 = vunpack.c.h.b16 %v6196
    %v7645 = vunpack.c.l.b16 %v6197
    %v7646 = vunpack.c.h.b16 %v6197
    %v7647 = vunpack.c.l.b16 %v6198
    %v7648 = vunpack.c.h.b16 %v6198
    %v7649 = vunpack.c.l.b16 %v6199
    %v7650 = vunpack.c.h.b16 %v6199
    %v7651 = vunpack.c.l.b16 %v6200
    %v7652 = vunpack.c.h.b16 %v6200
    %v7653 = vunpack.c.l.b16 %v6201
    %v7654 = vunpack.c.h.b16 %v6201
    %v7655 = vunpack.c.l.b16 %v6202
    %v7656 = vunpack.c.h.b16 %v6202
    %v7657 = vunpack.c.l.b16 %v6203
    %v7658 = vunpack.c.h.b16 %v6203
    %v7659 = vunpack.c.l.b16 %v6204
    %v7660 = vunpack.c.h.b16 %v6204
    %v7661 = vunpack.c.l.b16 %v6205
    %v7662 = vunpack.c.h.b16 %v6205
    %v7663 = vunpack.c.l.b16 %v6206
    %v7664 = vunpack.c.h.b16 %v6206
    %v7665 = vunpack.c.l.b16 %v6207
    %v7666 = vunpack.c.h.b16 %v6207
    %v7667 = vunpack.c.l.b16 %v6208
    %v7668 = vunpack.c.h.b16 %v6208
    %v7669 = vunpack.c.l.b16 %v6209
    %v7670 = vunpack.c.h.b16 %v6209
    %v7671 = vunpack.c.l.b16 %v6210
    %v7672 = vunpack.c.h.b16 %v6210
    %v7673 = vunpack.c.l.b16 %v6211
    %v7674 = vunpack.c.h.b16 %v6211
    %v7675 = vunpack.c.l.b16 %v6212
    %v7676 = vunpack.c.h.b16 %v6212
    %v7677 = vunpack.c.l.b16 %v6213
    %v7678 = vunpack.c.h.b16 %v6213
    %v7679 = vunpack.c.l.b16 %v6214
    %v7680 = vunpack.c.h.b16 %v6214
    %v7681 = vunpack.c.l.b16 %v6215
    %v7682 = vunpack.c.h.b16 %v6215
    %v7683 = vunpack.c.l.b16 %v6216
    %v7684 = vunpack.c.h.b16 %v6216
    %v7685 = vunpack.c.l.b16 %v6217
    %v7686 = vunpack.c.h.b16 %v6217
    %v7687 = vunpack.c.l.b16 %v6218
    %v7688 = vunpack.c.h.b16 %v6218
    %v7689 = vunpack.c.l.b16 %v6219
    %v7690 = vunpack.c.h.b16 %v6219
    %v7691 = vunpack.c.l.b16 %v6220
    %v7692 = vunpack.c.h.b16 %v6220
    %v7693 = vunpack.c.l.b16 %v6221
    %v7694 = vunpack.c.h.b16 %v6221
    %v7695 = vunpack.c.l.b16 %v6222
    %v7696 = vunpack.c.h.b16 %v6222
    %v7697 = vunpack.c.l.b16 %v6223
    %v7698 = vunpack.c.h.b16 %v6223
    %v7699 = vunpack.c.l.b16 %v6224
    %v7700 = vunpack.c.h.b16 %v6224
    %v7701 = vunpack.c.l.b16 %v6225
    %v7702 = vunpack.c.h.b16 %v6225
    %v7703 = vunpack.c.l.b16 %v6226
    %v7704 = vunpack.c.h.b16 %v6226
    %v7705 = vunpack.c.l.b16 %v6227
    %v7706 = vunpack.c.h.b16 %v6227
    %v7707 = vunpack.c.l.b16 %v6228
    %v7708 = vunpack.c.h.b16 %v6228
    %v7709 = vunpack.c.l.b16 %v6229
    %v7710 = vunpack.c.h.b16 %v6229
    %v7711 = vunpack.c.l.b16 %v6230
    %v7712 = vunpack.c.h.b16 %v6230
    %v7713 = vunpack.c.l.b16 %v6231
    %v7714 = vunpack.c.h.b16 %v6231
    %v7715 = vunpack.c.l.b16 %v6232
    %v7716 = vunpack.c.h.b16 %v6232
    %v7717 = vunpack.c.l.b16 %v6233
    %v7718 = vunpack.c.h.b16 %v6233
    %v7719 = vunpack.c.l.b16 %v6234
    %v7720 = vunpack.c.h.b16 %v6234
    %v7721 = vunpack.c.l.b16 %v6235
    %v7722 = vunpack.c.h.b16 %v6235
    %v7723 = vunpack.c.l.b16 %v6236
    %v7724 = vunpack.c.h.b16 %v6236
    %v7725 = vunpack.c.l.b16 %v6237
    %v7726 = vunpack.c.h.b16 %v6237
    %v7727 = vunpack.c.l.b16 %v6238
    %v7728 = vunpack.c.h.b16 %v6238
    %v7729 = vunpack.c.l.b16 %v6239
    %v7730 = vunpack.c.h.b16 %v6239
    %v7731 = vunpack.c.l.b16 %v6240
    %v7732 = vunpack.c.h.b16 %v6240
    %v7733 = vunpack.c.l.b16 %v6241
    %v7734 = vunpack.c.h.b16 %v6241
    %v7735 = vunpack.c.l.b16 %v6242
    %v7736 = vunpack.c.h.b16 %v6242
    %v7737 = vunpack.c.l.b16 %v6243
    %v7738 = vunpack.c.h.b16 %v6243
    %v7739 = vunpack.c.l.b16 %v6244
    %v7740 = vunpack.c.h.b16 %v6244
    %v7741 = vunpack.c.l.b16 %v6245
    %v7742 = vunpack.c.h.b16 %v6245
    %v7743 = vunpack.c.l.b16 %v6246
    %v7744 = vunpack.c.h.b16 %v6246
    %v7745 = vunpack.c.l.b16 %v6247
    %v7746 = vunpack.c.h.b16 %v6247
    %v7747 = vunpack.c.l.b16 %v6248
    %v7748 = vunpack.c.h.b16 %v6248
    %v7749 = vunpack.c.l.b16 %v6249
    %v7750 = vunpack.c.h.b16 %v6249
    %v7751 = vunpack.c.l.b16 %v6250
    %v7752 = vunpack.c.h.b16 %v6250
    %v7753 = vunpack.c.l.b16 %v6251
    %v7754 = vunpack.c.h.b16 %v6251
    %v7755 = vunpack.c.l.b16 %v6252
    %v7756 = vunpack.c.h.b16 %v6252
    %v7757 = vunpack.c.l.b16 %v6253
    %v7758 = vunpack.c.h.b16 %v6253
    %v7759 = vunpack.c.l.b16 %v6254
    %v7760 = vunpack.c.h.b16 %v6254
    %v7761 = vunpack.c.l.b16 %v6255
    %v7762 = vunpack.c.h.b16 %v6255
    %v7763 = vunpack.c.l.b16 %v6256
    %v7764 = vunpack.c.h.b16 %v6256
    %v7765 = vunpack.c.l.b16 %v6257
    %v7766 = vunpack.c.h.b16 %v6257
    %v7767 = vunpack.c.l.b16 %v6258
    %v7768 = vunpack.c.h.b16 %v6258
    %v7769 = vunpack.c.l.b16 %v6259
    %v7770 = vunpack.c.h.b16 %v6259
    %v7771 = vunpack.c.l.b16 %v6260
    %v7772 = vunpack.c.h.b16 %v6260
    %v7773 = vunpack.c.l.b16 %v6261
    %v7774 = vunpack.c.h.b16 %v6261
    %v7775 = vunpack.c.l.b16 %v6262
    %v7776 = vunpack.c.h.b16 %v6262
    %v7777 = vunpack.c.l.b16 %v6263
    %v7778 = vunpack.c.h.b16 %v6263
    %v7779 = vunpack.c.l.b16 %v6264
    %v7780 = vunpack.c.h.b16 %v6264
    %v7781 = vunpack.c.l.b16 %v6265
    %v7782 = vunpack.c.h.b16 %v6265
    %v7783 = vunpack.c.l.b16 %v6266
    %v7784 = vunpack.c.h.b16 %v6266
    %v7785 = vunpack.c.l.b16 %v6267
    %v7786 = vunpack.c.h.b16 %v6267
    %v7787 = vunpack.c.l.b16 %v6268
    %v7788 = vunpack.c.h.b16 %v6268
    %v7789 = vunpack.c.l.b16 %v6269
    %v7790 = vunpack.c.h.b16 %v6269
    %v7791 = vunpack.c.l.b16 %v6270
    %v7792 = vunpack.c.h.b16 %v6270
    %v7793 = vunpack.c.l.b16 %v6271
    %v7794 = vunpack.c.h.b16 %v6271
    %v7795 = vunpack.c.l.b16 %v6272
    %v7796 = vunpack.c.h.b16 %v6272
    %v7797 = vunpack.c.l.b16 %v6273
    %v7798 = vunpack.c.h.b16 %v6273
    %v7799 = vunpack.c.l.b16 %v6274
    %v7800 = vunpack.c.h.b16 %v6274
    %v7801 = vunpack.c.l.b16 %v6275
    %v7802 = vunpack.c.h.b16 %v6275
    %v7803 = vunpack.c.l.b16 %v6276
    %v7804 = vunpack.c.h.b16 %v6276
    %v7805 = vunpack.c.l.b16 %v6277
    %v7806 = vunpack.c.h.b16 %v6277
    %v7807 = vunpack.c.l.b16 %v6278
    %v7808 = vunpack.c.h.b16 %v6278
    %v7809 = vunpack.c.l.b16 %v6279
    %v7810 = vunpack.c.h.b16 %v6279
    %v7811 = vunpack.c.l.b16 %v6280
    %v7812 = vunpack.c.h.b16 %v6280
    %v7813 = vunpack.c.l.b16 %v6281
    %v7814 = vunpack.c.h.b16 %v6281
    %v7815 = vunpack.c.l.b16 %v6282
    %v7816 = vunpack.c.h.b16 %v6282
    %v7817 = vunpack.c.l.b16 %v6283
    %v7818 = vunpack.c.h.b16 %v6283
    %v7819 = vunpack.c.l.b16 %v6284
    %v7820 = vunpack.c.h.b16 %v6284
    %v7821 = vpack.c.b16 %v6805, %v6797
    %v7822 = vpack.c.b16 %v6806, %v6798
    %v7823 = vpack.c.b16 %v6807, %v6799
    %v7824 = vpack.c.b16 %v6808, %v6800
    %v7825 = vpack.c.b16 %v6809, %v6801
    %v7826 = vpack.c.b16 %v6810, %v6802
    %v7827 = vpack.c.b16 %v6811, %v6803
    %v7828 = vpack.c.b16 %v6812, %v6804
    %v7829 = vpack.c.b16 %v6821, %v6813
    %v7830 = vpack.c.b16 %v6822, %v6814
    %v7831 = vpack.c.b16 %v6823, %v6815
    %v7832 = vpack.c.b16 %v6824, %v6816
    %v7833 = vpack.c.b16 %v6825, %v6817
    %v7834 = vpack.c.b16 %v6826, %v6818
    %v7835 = vpack.c.b16 %v6827, %v6819
    %v7836 = vpack.c.b16 %v6828, %v6820
    %v7837 = vpack.c.b16 %v6837, %v6829
    %v7838 = vpack.c.b16 %v6838, %v6830
    %v7839 = vpack.c.b16 %v6839, %v6831
    %v7840 = vpack.c.b16 %v6840, %v6832
    %v7841 = vpack.c.b16 %v6841, %v6833
    %v7842 = vpack.c.b16 %v6842, %v6834
    %v7843 = vpack.c.b16 %v6843, %v6835
    %v7844 = vpack.c.b16 %v6844, %v6836
    %v7845 = vpack.c.b16 %v6853, %v6845
    %v7846 = vpack.c.b16 %v6854, %v6846
    %v7847 = vpack.c.b16 %v6855, %v6847
    %v7848 = vpack.c.b16 %v6856, %v6848
    %v7849 = vpack.c.b16 %v6857, %v6849
    %v7850 = vpack.c.b16 %v6858, %v6850
    %v7851 = vpack.c.b16 %v6859, %v6851
    %v7852 = vpack.c.b16 %v6860, %v6852
    %v7853 = vpack.c.b16 %v6869, %v6861
    %v7854 = vpack.c.b16 %v6870, %v6862
    %v7855 = vpack.c.b16 %v6871, %v6863
    %v7856 = vpack.c.b16 %v6872, %v6864
    %v7857 = vpack.c.b16 %v6873, %v6865
    %v7858 = vpack.c.b16 %v6874, %v6866
    %v7859 = vpack.c.b16 %v6875, %v6867
    %v7860 = vpack.c.b16 %v6876, %v6868
    %v7861 = vpack.c.b16 %v6885, %v6877
    %v7862 = vpack.c.b16 %v6886, %v6878
    %v7863 = vpack.c.b16 %v6887, %v6879
    %v7864 = vpack.c.b16 %v6888, %v6880
    %v7865 = vpack.c.b16 %v6889, %v6881
    %v7866 = vpack.c.b16 %v6890, %v6882
    %v7867 = vpack.c.b16 %v6891, %v6883
    %v7868 = vpack.c.b16 %v6892, %v6884
    %v7869 = vpack.c.b16 %v6901, %v6893
    %v7870 = vpack.c.b16 %v6902, %v6894
    %v7871 = vpack.c.b16 %v6903, %v6895
    %v7872 = vpack.c.b16 %v6904, %v6896
    %v7873 = vpack.c.b16 %v6905, %v6897
    %v7874 = vpack.c.b16 %v6906, %v6898
    %v7875 = vpack.c.b16 %v6907, %v6899
    %v7876 = vpack.c.b16 %v6908, %v6900
    %v7877 = vpack.c.b16 %v6917, %v6909
    %v7878 = vpack.c.b16 %v6918, %v6910
    %v7879 = vpack.c.b16 %v6919, %v6911
    %v7880 = vpack.c.b16 %v6920, %v6912
    %v7881 = vpack.c.b16 %v6921, %v6913
    %v7882 = vpack.c.b16 %v6922, %v6914
    %v7883 = vpack.c.b16 %v6923, %v6915
    %v7884 = vpack.c.b16 %v6924, %v6916
    %v7885 = vpack.c.b16 %v6933, %v6925
    %v7886 = vpack.c.b16 %v6934, %v6926
    %v7887 = vpack.c.b16 %v6935, %v6927
    %v7888 = vpack.c.b16 %v6936, %v6928
    %v7889 = vpack.c.b16 %v6937, %v6929
    %v7890 = vpack.c.b16 %v6938, %v6930
    %v7891 = vpack.c.b16 %v6939, %v6931
    %v7892 = vpack.c.b16 %v6940, %v6932
    %v7893 = vpack.c.b16 %v6949, %v6941
    %v7894 = vpack.c.b16 %v6950, %v6942
    %v7895 = vpack.c.b16 %v6951, %v6943
    %v7896 = vpack.c.b16 %v6952, %v6944
    %v7897 = vpack.c.b16 %v6953, %v6945
    %v7898 = vpack.c.b16 %v6954, %v6946
    %v7899 = vpack.c.b16 %v6955, %v6947
    %v7900 = vpack.c.b16 %v6956, %v6948
    %v7901 = vpack.c.b16 %v6965, %v6957
    %v7902 = vpack.c.b16 %v6966, %v6958
    %v7903 = vpack.c.b16 %v6967, %v6959
    %v7904 = vpack.c.b16 %v6968, %v6960
    %v7905 = vpack.c.b16 %v6969, %v6961
    %v7906 = vpack.c.b16 %v6970, %v6962
    %v7907 = vpack.c.b16 %v6971, %v6963
    %v7908 = vpack.c.b16 %v6972, %v6964
    %v7909 = vpack.c.b16 %v6981, %v6973
    %v7910 = vpack.c.b16 %v6982, %v6974
    %v7911 = vpack.c.b16 %v6983, %v6975
    %v7912 = vpack.c.b16 %v6984, %v6976
    %v7913 = vpack.c.b16 %v6985, %v6977
    %v7914 = vpack.c.b16 %v6986, %v6978
    %v7915 = vpack.c.b16 %v6987, %v6979
    %v7916 = vpack.c.b16 %v6988, %v6980
    %v7917 = vpack.c.b16 %v6997, %v6989
    %v7918 = vpack.c.b16 %v6998, %v6990
    %v7919 = vpack.c.b16 %v6999, %v6991
    %v7920 = vpack.c.b16 %v7000, %v6992
    %v7921 = vpack.c.b16 %v7001, %v6993
    %v7922 = vpack.c.b16 %v7002, %v6994
    %v7923 = vpack.c.b16 %v7003, %v6995
    %v7924 = vpack.c.b16 %v7004, %v6996
    %v7925 = vpack.c.b16 %v7013, %v7005
    %v7926 = vpack.c.b16 %v7014, %v7006
    %v7927 = vpack.c.b16 %v7015, %v7007
    %v7928 = vpack.c.b16 %v7016, %v7008
    %v7929 = vpack.c.b16 %v7017, %v7009
    %v7930 = vpack.c.b16 %v7018, %v7010
    %v7931 = vpack.c.b16 %v7019, %v7011
    %v7932 = vpack.c.b16 %v7020, %v7012
    %v7933 = vpack.c.b16 %v7029, %v7021
    %v7934 = vpack.c.b16 %v7030, %v7022
    %v7935 = vpack.c.b16 %v7031, %v7023
    %v7936 = vpack.c.b16 %v7032, %v7024
    %v7937 = vpack.c.b16 %v7033, %v7025
    %v7938 = vpack.c.b16 %v7034, %v7026
    %v7939 = vpack.c.b16 %v7035, %v7027
    %v7940 = vpack.c.b16 %v7036, %v7028
    %v7941 = vpack.c.b16 %v7045, %v7037
    %v7942 = vpack.c.b16 %v7046, %v7038
    %v7943 = vpack.c.b16 %v7047, %v7039
    %v7944 = vpack.c.b16 %v7048, %v7040
    %v7945 = vpack.c.b16 %v7049, %v7041
    %v7946 = vpack.c.b16 %v7050, %v7042
    %v7947 = vpack.c.b16 %v7051, %v7043
    %v7948 = vpack.c.b16 %v7052, %v7044
    %v7949 = vpack.c.b16 %v7061, %v7053
    %v7950 = vpack.c.b16 %v7062, %v7054
    %v7951 = vpack.c.b16 %v7063, %v7055
    %v7952 = vpack.c.b16 %v7064, %v7056
    %v7953 = vpack.c.b16 %v7065, %v7057
    %v7954 = vpack.c.b16 %v7066, %v7058
    %v7955 = vpack.c.b16 %v7067, %v7059
    %v7956 = vpack.c.b16 %v7068, %v7060
    %v7957 = vpack.c.b16 %v7077, %v7069
    %v7958 = vpack.c.b16 %v7078, %v7070
    %v7959 = vpack.c.b16 %v7079, %v7071
    %v7960 = vpack.c.b16 %v7080, %v7072
    %v7961 = vpack.c.b16 %v7081, %v7073
    %v7962 = vpack.c.b16 %v7082, %v7074
    %v7963 = vpack.c.b16 %v7083, %v7075
    %v7964 = vpack.c.b16 %v7084, %v7076
    %v7965 = vpack.c.b16 %v7093, %v7085
    %v7966 = vpack.c.b16 %v7094, %v7086
    %v7967 = vpack.c.b16 %v7095, %v7087
    %v7968 = vpack.c.b16 %v7096, %v7088
    %v7969 = vpack.c.b16 %v7097, %v7089
    %v7970 = vpack.c.b16 %v7098, %v7090
    %v7971 = vpack.c.b16 %v7099, %v7091
    %v7972 = vpack.c.b16 %v7100, %v7092
    %v7973 = vpack.c.b16 %v7109, %v7101
    %v7974 = vpack.c.b16 %v7110, %v7102
    %v7975 = vpack.c.b16 %v7111, %v7103
    %v7976 = vpack.c.b16 %v7112, %v7104
    %v7977 = vpack.c.b16 %v7113, %v7105
    %v7978 = vpack.c.b16 %v7114, %v7106
    %v7979 = vpack.c.b16 %v7115, %v7107
    %v7980 = vpack.c.b16 %v7116, %v7108
    %v7981 = vpack.c.b16 %v7125, %v7117
    %v7982 = vpack.c.b16 %v7126, %v7118
    %v7983 = vpack.c.b16 %v7127, %v7119
    %v7984 = vpack.c.b16 %v7128, %v7120
    %v7985 = vpack.c.b16 %v7129, %v7121
    %v7986 = vpack.c.b16 %v7130, %v7122
    %v7987 = vpack.c.b16 %v7131, %v7123
    %v7988 = vpack.c.b16 %v7132, %v7124
    %v7989 = vpack.c.b16 %v7141, %v7133
    %v7990 = vpack.c.b16 %v7142, %v7134
    %v7991 = vpack.c.b16 %v7143, %v7135
    %v7992 = vpack.c.b16 %v7144, %v7136
    %v7993 = vpack.c.b16 %v7145, %v7137
    %v7994 = vpack.c.b16 %v7146, %v7138
    %v7995 = vpack.c.b16 %v7147, %v7139
    %v7996 = vpack.c.b16 %v7148, %v7140
    %v7997 = vpack.c.b16 %v7157, %v7149
    %v7998 = vpack.c.b16 %v7158, %v7150
    %v7999 = vpack.c.b16 %v7159, %v7151
    %v8000 = vpack.c.b16 %v7160, %v7152
    %v8001 = vpack.c.b16 %v7161, %v7153
    %v8002 = vpack.c.b16 %v7162, %v7154
    %v8003 = vpack.c.b16 %v7163, %v7155
    %v8004 = vpack.c.b16 %v7164, %v7156
    %v8005 = vpack.c.b16 %v7173, %v7165
    %v8006 = vpack.c.b16 %v7174, %v7166
    %v8007 = vpack.c.b16 %v7175, %v7167
    %v8008 = vpack.c.b16 %v7176, %v7168
    %v8009 = vpack.c.b16 %v7177, %v7169
    %v8010 = vpack.c.b16 %v7178, %v7170
    %v8011 = vpack.c.b16 %v7179, %v7171
    %v8012 = vpack.c.b16 %v7180, %v7172
    %v8013 = vpack.c.b16 %v7189, %v7181
    %v8014 = vpack.c.b16 %v7190, %v7182
    %v8015 = vpack.c.b16 %v7191, %v7183
    %v8016 = vpack.c.b16 %v7192, %v7184
    %v8017 = vpack.c.b16 %v7193, %v7185
    %v8018 = vpack.c.b16 %v7194, %v7186
    %v8019 = vpack.c.b16 %v7195, %v7187
    %v8020 = vpack.c.b16 %v7196, %v7188
    %v8021 = vpack.c.b16 %v7205, %v7197
    %v8022 = vpack.c.b16 %v7206, %v7198
    %v8023 = vpack.c.b16 %v7207, %v7199
    %v8024 = vpack.c.b16 %v7208, %v7200
    %v8025 = vpack.c.b16 %v7209, %v7201
    %v8026 = vpack.c.b16 %v7210, %v7202
    %v8027 = vpack.c.b16 %v7211, %v7203
    %v8028 = vpack.c.b16 %v7212, %v7204
    %v8029 = vpack.c.b16 %v7221, %v7213
    %v8030 = vpack.c.b16 %v7222, %v7214
    %v8031 = vpack.c.b16 %v7223, %v7215
    %v8032 = vpack.c.b16 %v7224, %v7216
    %v8033 = vpack.c.b16 %v7225, %v7217
    %v8034 = vpack.c.b16 %v7226, %v7218
    %v8035 = vpack.c.b16 %v7227, %v7219
    %v8036 = vpack.c.b16 %v7228, %v7220
    %v8037 = vpack.c.b16 %v7237, %v7229
    %v8038 = vpack.c.b16 %v7238, %v7230
    %v8039 = vpack.c.b16 %v7239, %v7231
    %v8040 = vpack.c.b16 %v7240, %v7232
    %v8041 = vpack.c.b16 %v7241, %v7233
    %v8042 = vpack.c.b16 %v7242, %v7234
    %v8043 = vpack.c.b16 %v7243, %v7235
    %v8044 = vpack.c.b16 %v7244, %v7236
    %v8045 = vpack.c.b16 %v7253, %v7245
    %v8046 = vpack.c.b16 %v7254, %v7246
    %v8047 = vpack.c.b16 %v7255, %v7247
    %v8048 = vpack.c.b16 %v7256, %v7248
    %v8049 = vpack.c.b16 %v7257, %v7249
    %v8050 = vpack.c.b16 %v7258, %v7250
    %v8051 = vpack.c.b16 %v7259, %v7251
    %v8052 = vpack.c.b16 %v7260, %v7252
    %v8053 = vpack.c.b16 %v7269, %v7261
    %v8054 = vpack.c.b16 %v7270, %v7262
    %v8055 = vpack.c.b16 %v7271, %v7263
    %v8056 = vpack.c.b16 %v7272, %v7264
    %v8057 = vpack.c.b16 %v7273, %v7265
    %v8058 = vpack.c.b16 %v7274, %v7266
    %v8059 = vpack.c.b16 %v7275, %v7267
    %v8060 = vpack.c.b16 %v7276, %v7268
    %v8061 = vpack.c.b16 %v7285, %v7277
    %v8062 = vpack.c.b16 %v7286, %v7278
    %v8063 = vpack.c.b16 %v7287, %v7279
    %v8064 = vpack.c.b16 %v7288, %v7280
    %v8065 = vpack.c.b16 %v7289, %v7281
    %v8066 = vpack.c.b16 %v7290, %v7282
    %v8067 = vpack.c.b16 %v7291, %v7283
    %v8068 = vpack.c.b16 %v7292, %v7284
    %v8069 = vpack.c.b16 %v7301, %v7293
    %v8070 = vpack.c.b16 %v7302, %v7294
    %v8071 = vpack.c.b16 %v7303, %v7295
    %v8072 = vpack.c.b16 %v7304, %v7296
    %v8073 = vpack.c.b16 %v7305, %v7297
    %v8074 = vpack.c.b16 %v7306, %v7298
    %v8075 = vpack.c.b16 %v7307, %v7299
    %v8076 = vpack.c.b16 %v7308, %v7300
    %v8077 = vpack.c.b16 %v7317, %v7309
    %v8078 = vpack.c.b16 %v7318, %v7310
    %v8079 = vpack.c.b16 %v7319, %v7311
    %v8080 = vpack.c.b16 %v7320, %v7312
    %v8081 = vpack.c.b16 %v7321, %v7313
    %v8082 = vpack.c.b16 %v7322, %v7314
    %v8083 = vpack.c.b16 %v7323, %v7315
    %v8084 = vpack.c.b16 %v7324, %v7316
    %v8085 = vpack.c.b16 %v7333, %v7325
    %v8086 = vpack.c.b16 %v7334, %v7326
    %v8087 = vpack.c.b16 %v7335, %v7327
    %v8088 = vpack.c.b16 %v7336, %v7328
    %v8089 = vpack.c.b16 %v7337, %v7329
    %v8090 = vpack.c.b16 %v7338, %v7330
    %v8091 = vpack.c.b16 %v7339, %v7331
    %v8092 = vpack.c.b16 %v7340, %v7332
    %v8093 = vpack.c.b16 %v7349, %v7341
    %v8094 = vpack.c.b16 %v7350, %v7342
    %v8095 = vpack.c.b16 %v7351, %v7343
    %v8096 = vpack.c.b16 %v7352, %v7344
    %v8097 = vpack.c.b16 %v7353, %v7345
    %v8098 = vpack.c.b16 %v7354, %v7346
    %v8099 = vpack.c.b16 %v7355, %v7347
    %v8100 = vpack.c.b16 %v7356, %v7348
    %v8101 = vpack.c.b16 %v7365, %v7357
    %v8102 = vpack.c.b16 %v7366, %v7358
    %v8103 = vpack.c.b16 %v7367, %v7359
    %v8104 = vpack.c.b16 %v7368, %v7360
    %v8105 = vpack.c.b16 %v7369, %v7361
    %v8106 = vpack.c.b16 %v7370, %v7362
    %v8107 = vpack.c.b16 %v7371, %v7363
    %v8108 = vpack.c.b16 %v7372, %v7364
    %v8109 = vpack.c.b16 %v7381, %v7373
    %v8110 = vpack.c.b16 %v7382, %v7374
    %v8111 = vpack.c.b16 %v7383, %v7375
    %v8112 = vpack.c.b16 %v7384, %v7376
    %v8113 = vpack.c.b16 %v7385, %v7377
    %v8114 = vpack.c.b16 %v7386, %v7378
    %v8115 = vpack.c.b16 %v7387, %v7379
    %v8116 = vpack.c.b16 %v7388, %v7380
    %v8117 = vpack.c.b16 %v7397, %v7389
    %v8118 = vpack.c.b16 %v7398, %v7390
    %v8119 = vpack.c.b16 %v7399, %v7391
    %v8120 = vpack.c.b16 %v7400, %v7392
    %v8121 = vpack.c.b16 %v7401, %v7393
    %v8122 = vpack.c.b16 %v7402, %v7394
    %v8123 = vpack.c.b16 %v7403, %v7395
    %v8124 = vpack.c.b16 %v7404, %v7396
    %v8125 = vpack.c.b16 %v7413, %v7405
    %v8126 = vpack.c.b16 %v7414, %v7406
    %v8127 = vpack.c.b16 %v7415, %v7407
    %v8128 = vpack.c.b16 %v7416, %v7408
    %v8129 = vpack.c.b16 %v7417, %v7409
    %v8130 = vpack.c.b16 %v7418, %v7410
    %v8131 = vpack.c.b16 %v7419, %v7411
    %v8132 = vpack.c.b16 %v7420, %v7412
    %v8133 = vpack.c.b16 %v7429, %v7421
    %v8134 = vpack.c.b16 %v7430, %v7422
    %v8135 = vpack.c.b16 %v7431, %v7423
    %v8136 = vpack.c.b16 %v7432, %v7424
    %v8137 = vpack.c.b16 %v7433, %v7425
    %v8138 = vpack.c.b16 %v7434, %v7426
    %v8139 = vpack.c.b16 %v7435, %v7427
    %v8140 = vpack.c.b16 %v7436, %v7428
    %v8141 = vpack.c.b16 %v7445, %v7437
    %v8142 = vpack.c.b16 %v7446, %v7438
    %v8143 = vpack.c.b16 %v7447, %v7439
    %v8144 = vpack.c.b16 %v7448, %v7440
    %v8145 = vpack.c.b16 %v7449, %v7441
    %v8146 = vpack.c.b16 %v7450, %v7442
    %v8147 = vpack.c.b16 %v7451, %v7443
    %v8148 = vpack.c.b16 %v7452, %v7444
    %v8149 = vpack.c.b16 %v7461, %v7453
    %v8150 = vpack.c.b16 %v7462, %v7454
    %v8151 = vpack.c.b16 %v7463, %v7455
    %v8152 = vpack.c.b16 %v7464, %v7456
    %v8153 = vpack.c.b16 %v7465, %v7457
    %v8154 = vpack.c.b16 %v7466, %v7458
    %v8155 = vpack.c.b16 %v7467, %v7459
    %v8156 = vpack.c.b16 %v7468, %v7460
    %v8157 = vpack.c.b16 %v7477, %v7469
    %v8158 = vpack.c.b16 %v7478, %v7470
    %v8159 = vpack.c.b16 %v7479, %v7471
    %v8160 = vpack.c.b16 %v7480, %v7472
    %v8161 = vpack.c.b16 %v7481, %v7473
    %v8162 = vpack.c.b16 %v7482, %v7474
    %v8163 = vpack.c.b16 %v7483, %v7475
    %v8164 = vpack.c.b16 %v7484, %v7476
    %v8165 = vpack.c.b16 %v7493, %v7485
    %v8166 = vpack.c.b16 %v7494, %v7486
    %v8167 = vpack.c.b16 %v7495, %v7487
    %v8168 = vpack.c.b16 %v7496, %v7488
    %v8169 = vpack.c.b16 %v7497, %v7489
    %v8170 = vpack.c.b16 %v7498, %v7490
    %v8171 = vpack.c.b16 %v7499, %v7491
    %v8172 = vpack.c.b16 %v7500, %v7492
    %v8173 = vpack.c.b16 %v7509, %v7501
    %v8174 = vpack.c.b16 %v7510, %v7502
    %v8175 = vpack.c.b16 %v7511, %v7503
    %v8176 = vpack.c.b16 %v7512, %v7504
    %v8177 = vpack.c.b16 %v7513, %v7505
    %v8178 = vpack.c.b16 %v7514, %v7506
    %v8179 = vpack.c.b16 %v7515, %v7507
    %v8180 = vpack.c.b16 %v7516, %v7508
    %v8181 = vpack.c.b16 %v7525, %v7517
    %v8182 = vpack.c.b16 %v7526, %v7518
    %v8183 = vpack.c.b16 %v7527, %v7519
    %v8184 = vpack.c.b16 %v7528, %v7520
    %v8185 = vpack.c.b16 %v7529, %v7521
    %v8186 = vpack.c.b16 %v7530, %v7522
    %v8187 = vpack.c.b16 %v7531, %v7523
    %v8188 = vpack.c.b16 %v7532, %v7524
    %v8189 = vpack.c.b16 %v7541, %v7533
    %v8190 = vpack.c.b16 %v7542, %v7534
    %v8191 = vpack.c.b16 %v7543, %v7535
    %v8192 = vpack.c.b16 %v7544, %v7536
    %v8193 = vpack.c.b16 %v7545, %v7537
    %v8194 = vpack.c.b16 %v7546, %v7538
    %v8195 = vpack.c.b16 %v7547, %v7539
    %v8196 = vpack.c.b16 %v7548, %v7540
    %v8197 = vpack.c.b16 %v7557, %v7549
    %v8198 = vpack.c.b16 %v7558, %v7550
    %v8199 = vpack.c.b16 %v7559, %v7551
    %v8200 = vpack.c.b16 %v7560, %v7552
    %v8201 = vpack.c.b16 %v7561, %v7553
    %v8202 = vpack.c.b16 %v7562, %v7554
    %v8203 = vpack.c.b16 %v7563, %v7555
    %v8204 = vpack.c.b16 %v7564, %v7556
    %v8205 = vpack.c.b16 %v7573, %v7565
    %v8206 = vpack.c.b16 %v7574, %v7566
    %v8207 = vpack.c.b16 %v7575, %v7567
    %v8208 = vpack.c.b16 %v7576, %v7568
    %v8209 = vpack.c.b16 %v7577, %v7569
    %v8210 = vpack.c.b16 %v7578, %v7570
    %v8211 = vpack.c.b16 %v7579, %v7571
    %v8212 = vpack.c.b16 %v7580, %v7572
    %v8213 = vpack.c.b16 %v7589, %v7581
    %v8214 = vpack.c.b16 %v7590, %v7582
    %v8215 = vpack.c.b16 %v7591, %v7583
    %v8216 = vpack.c.b16 %v7592, %v7584
    %v8217 = vpack.c.b16 %v7593, %v7585
    %v8218 = vpack.c.b16 %v7594, %v7586
    %v8219 = vpack.c.b16 %v7595, %v7587
    %v8220 = vpack.c.b16 %v7596, %v7588
    %v8221 = vpack.c.b16 %v7605, %v7597
    %v8222 = vpack.c.b16 %v7606, %v7598
    %v8223 = vpack.c.b16 %v7607, %v7599
    %v8224 = vpack.c.b16 %v7608, %v7600
    %v8225 = vpack.c.b16 %v7609, %v7601
    %v8226 = vpack.c.b16 %v7610, %v7602
    %v8227 = vpack.c.b16 %v7611, %v7603
    %v8228 = vpack.c.b16 %v7612, %v7604
    %v8229 = vpack.c.b16 %v7621, %v7613
    %v8230 = vpack.c.b16 %v7622, %v7614
    %v8231 = vpack.c.b16 %v7623, %v7615
    %v8232 = vpack.c.b16 %v7624, %v7616
    %v8233 = vpack.c.b16 %v7625, %v7617
    %v8234 = vpack.c.b16 %v7626, %v7618
    %v8235 = vpack.c.b16 %v7627, %v7619
    %v8236 = vpack.c.b16 %v7628, %v7620
    %v8237 = vpack.c.b16 %v7637, %v7629
    %v8238 = vpack.c.b16 %v7638, %v7630
    %v8239 = vpack.c.b16 %v7639, %v7631
    %v8240 = vpack.c.b16 %v7640, %v7632
    %v8241 = vpack.c.b16 %v7641, %v7633
    %v8242 = vpack.c.b16 %v7642, %v7634
    %v8243 = vpack.c.b16 %v7643, %v7635
    %v8244 = vpack.c.b16 %v7644, %v7636
    %v8245 = vpack.c.b16 %v7653, %v7645
    %v8246 = vpack.c.b16 %v7654, %v7646
    %v8247 = vpack.c.b16 %v7655, %v7647
    %v8248 = vpack.c.b16 %v7656, %v7648
    %v8249 = vpack.c.b16 %v7657, %v7649
    %v8250 = vpack.c.b16 %v7658, %v7650
    %v8251 = vpack.c.b16 %v7659, %v7651
    %v8252 = vpack.c.b16 %v7660, %v7652
    %v8253 = vpack.c.b16 %v7669, %v7661
    %v8254 = vpack.c.b16 %v7670, %v7662
    %v8255 = vpack.c.b16 %v7671, %v7663
    %v8256 = vpack.c.b16 %v7672, %v7664
    %v8257 = vpack.c.b16 %v7673, %v7665
    %v8258 = vpack.c.b16 %v7674, %v7666
    %v8259 = vpack.c.b16 %v7675, %v7667
    %v8260 = vpack.c.b16 %v7676, %v7668
    %v8261 = vpack.c.b16 %v7685, %v7677
    %v8262 = vpack.c.b16 %v7686, %v7678
    %v8263 = vpack.c.b16 %v7687, %v7679
    %v8264 = vpack.c.b16 %v7688, %v7680
    %v8265 = vpack.c.b16 %v7689, %v7681
    %v8266 = vpack.c.b16 %v7690, %v7682
    %v8267 = vpack.c.b16 %v7691, %v7683
    %v8268 = vpack.c.b16 %v7692, %v7684
    %v8269 = vpack.c.b16 %v7701, %v7693
    %v8270 = vpack.c.b16 %v7702, %v7694
    %v8271 = vpack.c.b16 %v7703, %v7695
    %v8272 = vpack.c.b16 %v7704, %v7696
    %v8273 = vpack.c.b16 %v7705, %v7697
    %v8274 = vpack.c.b16 %v7706, %v7698
    %v8275 = vpack.c.b16 %v7707, %v7699
    %v8276 = vpack.c.b16 %v7708, %v7700
    %v8277 = vpack.c.b16 %v7717, %v7709
    %v8278 = vpack.c.b16 %v7718, %v7710
    %v8279 = vpack.c.b16 %v7719, %v7711
    %v8280 = vpack.c.b16 %v7720, %v7712
    %v8281 = vpack.c.b16 %v7721, %v7713
    %v8282 = vpack.c.b16 %v7722, %v7714
    %v8283 = vpack.c.b16 %v7723, %v7715
    %v8284 = vpack.c.b16 %v7724, %v7716
    %v8285 = vpack.c.b16 %v7733, %v7725
    %v8286 = vpack.c.b16 %v7734, %v7726
    %v8287 = vpack.c.b16 %v7735, %v7727
    %v8288 = vpack.c.b16 %v7736, %v7728
    %v8289 = vpack.c.b16 %v7737, %v7729
    %v8290 = vpack.c.b16 %v7738, %v7730
    %v8291 = vpack.c.b16 %v7739, %v7731
    %v8292 = vpack.c.b16 %v7740, %v7732
    %v8293 = vpack.c.b16 %v7749, %v7741
    %v8294 = vpack.c.b16 %v7750, %v7742
    %v8295 = vpack.c.b16 %v7751, %v7743
    %v8296 = vpack.c.b16 %v7752, %v7744
    %v8297 = vpack.c.b16 %v7753, %v7745
    %v8298 = vpack.c.b16 %v7754, %v7746
    %v8299 = vpack.c.b16 %v7755, %v7747
    %v8300 = vpack.c.b16 %v7756, %v7748
    %v8301 = vpack.c.b16 %v7765, %v7757
    %v8302 = vpack.c.b16 %v7766, %v7758
    %v8303 = vpack.c.b16 %v7767, %v7759
    %v8304 = vpack.c.b16 %v7768, %v7760
    %v8305 = vpack.c.b16 %v7769, %v7761
    %v8306 = vpack.c.b16 %v7770, %v7762
    %v8307 = vpack.c.b16 %v7771, %v7763
    %v8308 = vpack.c.b16 %v7772, %v7764
    %v8309 = vpack.c.b16 %v7781, %v7773
    %v8310 = vpack.c.b16 %v7782, %v7774
    %v8311 = vpack.c.b16 %v7783, %v7775
    %v8312 = vpack.c.b16 %v7784, %v7776
    %v8313 = vpack.c.b16 %v7785, %v7777
    %v8314 = vpack.c.b16 %v7786, %v7778
    %v8315 = vpack.c.b16 %v7787, %v7779
    %v8316 = vpack.c.b16 %v7788, %v7780
    %v8317 = vpack.c.b16 %v7797, %v7789
    %v8318 = vpack.c.b16 %v7798, %v7790
    %v8319 = vpack.c.b16 %v7799, %v7791
    %v8320 = vpack.c.b16 %v7800, %v7792
    %v8321 = vpack.c.b16 %v7801, %v7793
    %v8322 = vpack.c.b16 %v7802, %v7794
    %v8323 = vpack.c.b16 %v7803, %v7795
    %v8324 = vpack.c.b16 %v7804, %v7796
    %v8325 = vpack.c.b16 %v7813, %v7805
    %v8326 = vpack.c.b16 %v7814, %v7806
    %v8327 = vpack.c.b16 %v7815, %v7807
    %v8328 = vpack.c.b16 %v7816, %v7808
    %v8329 = vpack.c.b16 %v7817, %v7809
    %v8330 = vpack.c.b16 %v7818, %v7810
    %v8331 = vpack.c.b16 %v7819, %v7811
    %v8332 = vpack.c.b16 %v7820, %v7812
    %8845 = vmatprep.subr.bf16.mxu0 %v7878
    %8846 = vmatpush1.bf16.msra.mxu0 %v7877
    %8847 = vmatprep.subr.bf16.mxu0 %v7870
    %8848 = vmatpush1.bf16.msra.mxu0 %v7869
    %8849 = vmatprep.subr.bf16.mxu0 %v7862
    %8850 = vmatpush1.bf16.msra.mxu0 %v7861
    %8851 = vmatprep.subr.bf16.mxu0 %v7854
    %8852 = vmatpush1.bf16.msra.mxu0 %v7853
    %8853 = vmatprep.subr.bf16.mxu0 %v7846
    %8854 = vmatpush1.bf16.msra.mxu0 %v7845
    %8855 = vmatprep.subr.bf16.mxu0 %v7838
    %8856 = vmatpush1.bf16.msra.mxu0 %v7837
    %8857 = vmatprep.subr.bf16.mxu0 %v7830
    %8858 = vmatpush1.bf16.msra.mxu0 %v7829
    %8859 = vmatprep.subr.bf16.mxu0 %v7822
    %8860 = vmatpush1.bf16.msra.mxu0 %v7821
    %8861 = vmatprep.subr.bf16.mxu0 %v7942
    %8862 = vmatpush2.bf16.msra.mxu0 %v7941
    %8863 = vmatprep.subr.bf16.mxu0 %v7934
    %8864 = vmatpush2.bf16.msra.mxu0 %v7933
    %8865 = vmatprep.subr.bf16.mxu0 %v7926
    %8866 = vmatpush2.bf16.msra.mxu0 %v7925
    %8867 = vmatprep.subr.bf16.mxu0 %v7918
    %8868 = vmatpush2.bf16.msra.mxu0 %v7917
    %8869 = vmatprep.subr.bf16.mxu0 %v7910
    %8870 = vmatpush2.bf16.msra.mxu0 %v7909
    %8871 = vmatprep.subr.bf16.mxu0 %v7902
    %8872 = vmatpush2.bf16.msra.mxu0 %v7901
    %8873 = vmatprep.subr.bf16.mxu0 %v7894
    %8874 = vmatpush2.bf16.msra.mxu0 %v7893
    %8875 = vmatprep.subr.bf16.mxu0 %v7886
    %8876 = vmatpush2.bf16.msra.mxu0 %v7885
    %8877 = vmatprep.mubr.bf16.mxu0 0
    %8878 = vmatmul.mubr.bf16.gmra.mxu0 0
    %v8879 = vpop.f32.mrf.mxu0
    %v8880 = vadd.f32 0.0, %v8879
    %v8881 = vpop.f32.mrf.mxu0
    %v8882 = vadd.f32 0.0, %v8881
    %v8883 = vpop.f32.mrf.mxu0
    %v8884 = vpop.f32.mrf.mxu0
    %8885 = vdwg.mxu0
    %8886 = vmatprep.subr.bf16.mxu0 %v8006
    %8887 = vmatpush1.bf16.msra.mxu0 %v8005
    %8888 = vmatprep.subr.bf16.mxu0 %v7998
    %8889 = vmatpush1.bf16.msra.mxu0 %v7997
    %8890 = vmatprep.subr.bf16.mxu0 %v7990
    %8891 = vmatpush1.bf16.msra.mxu0 %v7989
    %8892 = vmatprep.subr.bf16.mxu0 %v7982
    %8893 = vmatpush1.bf16.msra.mxu0 %v7981
    %8894 = vmatprep.subr.bf16.mxu0 %v7974
    %8895 = vmatpush1.bf16.msra.mxu0 %v7973
    %8896 = vmatprep.subr.bf16.mxu0 %v7966
    %8897 = vmatpush1.bf16.msra.mxu0 %v7965
    %8898 = vmatprep.subr.bf16.mxu0 %v7958
    %8899 = vmatpush1.bf16.msra.mxu0 %v7957
    %8900 = vmatprep.subr.bf16.mxu0 %v7950
    %8901 = vmatpush1.bf16.msra.mxu0 %v7949
    %8902 = vmatprep.subr.bf16.mxu0 %v8070
    %8903 = vmatpush2.bf16.msra.mxu0 %v8069
    %8904 = vmatprep.subr.bf16.mxu0 %v8062
    %8905 = vmatpush2.bf16.msra.mxu0 %v8061
    %8906 = vmatprep.subr.bf16.mxu0 %v8054
    %8907 = vmatpush2.bf16.msra.mxu0 %v8053
    %8908 = vmatprep.subr.bf16.mxu0 %v8046
    %8909 = vmatpush2.bf16.msra.mxu0 %v8045
    %8910 = vmatprep.subr.bf16.mxu0 %v8038
    %8911 = vmatpush2.bf16.msra.mxu0 %v8037
    %8912 = vmatprep.subr.bf16.mxu0 %v8030
    %8913 = vmatpush2.bf16.msra.mxu0 %v8029
    %8914 = vmatprep.subr.bf16.mxu0 %v8022
    %8915 = vmatpush2.bf16.msra.mxu0 %v8021
    %8916 = vmatprep.subr.bf16.mxu0 %v8014
    %8917 = vmatpush2.bf16.msra.mxu0 %v8013
    %8918 = vmatprep.mubr.bf16.mxu0 %v5752
    %8919 = vmatmul.mubr.bf16.gmra.mxu0 %v5751
    %v8920 = vpop.f32.mrf.mxu0
    %v8921 = vadd.f32 %v8880, %v8920
    %v8922 = vpop.f32.mrf.mxu0
    %v8923 = vadd.f32 %v8882, %v8922
    %v8924 = vpop.f32.mrf.mxu0
    %v8925 = vpop.f32.mrf.mxu0
    %8926 = vdwg.mxu0
    %8927 = vmatprep.subr.bf16.mxu0 %v8134
    %8928 = vmatpush1.bf16.msra.mxu0 %v8133
    %8929 = vmatprep.subr.bf16.mxu0 %v8126
    %8930 = vmatpush1.bf16.msra.mxu0 %v8125
    %8931 = vmatprep.subr.bf16.mxu0 %v8118
    %8932 = vmatpush1.bf16.msra.mxu0 %v8117
    %8933 = vmatprep.subr.bf16.mxu0 %v8110
    %8934 = vmatpush1.bf16.msra.mxu0 %v8109
    %8935 = vmatprep.subr.bf16.mxu0 %v8102
    %8936 = vmatpush1.bf16.msra.mxu0 %v8101
    %8937 = vmatprep.subr.bf16.mxu0 %v8094
    %8938 = vmatpush1.bf16.msra.mxu0 %v8093
    %8939 = vmatprep.subr.bf16.mxu0 %v8086
    %8940 = vmatpush1.bf16.msra.mxu0 %v8085
    %8941 = vmatprep.subr.bf16.mxu0 %v8078
    %8942 = vmatpush1.bf16.msra.mxu0 %v8077
    %8943 = vmatprep.subr.bf16.mxu0 %v8198
    %8944 = vmatpush2.bf16.msra.mxu0 %v8197
    %8945 = vmatprep.subr.bf16.mxu0 %v8190
    %8946 = vmatpush2.bf16.msra.mxu0 %v8189
    %8947 = vmatprep.subr.bf16.mxu0 %v8182
    %8948 = vmatpush2.bf16.msra.mxu0 %v8181
    %8949 = vmatprep.subr.bf16.mxu0 %v8174
    %8950 = vmatpush2.bf16.msra.mxu0 %v8173
    %8951 = vmatprep.subr.bf16.mxu0 %v8166
    %8952 = vmatpush2.bf16.msra.mxu0 %v8165
    %8953 = vmatprep.subr.bf16.mxu0 %v8158
    %8954 = vmatpush2.bf16.msra.mxu0 %v8157
    %8955 = vmatprep.subr.bf16.mxu0 %v8150
    %8956 = vmatpush2.bf16.msra.mxu0 %v8149
    %8957 = vmatprep.subr.bf16.mxu0 %v8142
    %8958 = vmatpush2.bf16.msra.mxu0 %v8141
    %8959 = vmatprep.mubr.bf16.mxu0 %v5760
    %8960 = vmatmul.mubr.bf16.gmra.mxu0 %v5759
    %v8961 = vpop.f32.mrf.mxu0
    %v8962 = vadd.f32 %v8921, %v8961
    %v8963 = vpop.f32.mrf.mxu0
    %v8964 = vadd.f32 %v8923, %v8963
    %v8965 = vpop.f32.mrf.mxu0
    %v8966 = vpop.f32.mrf.mxu0
    %8967 = vdwg.mxu0
    %8968 = vmatprep.subr.bf16.mxu0 %v8262
    %8969 = vmatpush1.bf16.msra.mxu0 %v8261
    %8970 = vmatprep.subr.bf16.mxu0 %v8254
    %8971 = vmatpush1.bf16.msra.mxu0 %v8253
    %8972 = vmatprep.subr.bf16.mxu0 %v8246
    %8973 = vmatpush1.bf16.msra.mxu0 %v8245
    %8974 = vmatprep.subr.bf16.mxu0 %v8238
    %8975 = vmatpush1.bf16.msra.mxu0 %v8237
    %8976 = vmatprep.subr.bf16.mxu0 %v8230
    %8977 = vmatpush1.bf16.msra.mxu0 %v8229
    %8978 = vmatprep.subr.bf16.mxu0 %v8222
    %8979 = vmatpush1.bf16.msra.mxu0 %v8221
    %8980 = vmatprep.subr.bf16.mxu0 %v8214
    %8981 = vmatpush1.bf16.msra.mxu0 %v8213
    %8982 = vmatprep.subr.bf16.mxu0 %v8206
    %8983 = vmatpush1.bf16.msra.mxu0 %v8205
    %8984 = vmatprep.subr.bf16.mxu0 %v8326
    %8985 = vmatpush2.bf16.msra.mxu0 %v8325
    %8986 = vmatprep.subr.bf16.mxu0 %v8318
    %8987 = vmatpush2.bf16.msra.mxu0 %v8317
    %8988 = vmatprep.subr.bf16.mxu0 %v8310
    %8989 = vmatpush2.bf16.msra.mxu0 %v8309
    %8990 = vmatprep.subr.bf16.mxu0 %v8302
    %8991 = vmatpush2.bf16.msra.mxu0 %v8301
    %8992 = vmatprep.subr.bf16.mxu0 %v8294
    %8993 = vmatpush2.bf16.msra.mxu0 %v8293
    %8994 = vmatprep.subr.bf16.mxu0 %v8286
    %8995 = vmatpush2.bf16.msra.mxu0 %v8285
    %8996 = vmatprep.subr.bf16.mxu0 %v8278
    %8997 = vmatpush2.bf16.msra.mxu0 %v8277
    %8998 = vmatprep.subr.bf16.mxu0 %v8270
    %8999 = vmatpush2.bf16.msra.mxu0 %v8269
    %9000 = vmatprep.mubr.bf16.mxu0 %v5770
    %9001 = vmatmul.mubr.bf16.gmra.mxu0 %v5769
    %v9002 = vpop.f32.mrf.mxu0
    %v9003 = vadd.f32 %v8962, %v9002
    %v9004 = vpop.f32.mrf.mxu0
    %v9005 = vadd.f32 %v8964, %v9004
    %v9006 = vpop.f32.mrf.mxu0
    %v9007 = vpop.f32.mrf.mxu0
    %9008 = vdwg.mxu0
    %9009 = vmatprep.subr.bf16.mxu0 %v7880
    %9010 = vmatpush1.bf16.msra.mxu0 %v7879
    %9011 = vmatprep.subr.bf16.mxu0 %v7872
    %9012 = vmatpush1.bf16.msra.mxu0 %v7871
    %9013 = vmatprep.subr.bf16.mxu0 %v7864
    %9014 = vmatpush1.bf16.msra.mxu0 %v7863
    %9015 = vmatprep.subr.bf16.mxu0 %v7856
    %9016 = vmatpush1.bf16.msra.mxu0 %v7855
    %9017 = vmatprep.subr.bf16.mxu0 %v7848
    %9018 = vmatpush1.bf16.msra.mxu0 %v7847
    %9019 = vmatprep.subr.bf16.mxu0 %v7840
    %9020 = vmatpush1.bf16.msra.mxu0 %v7839
    %9021 = vmatprep.subr.bf16.mxu0 %v7832
    %9022 = vmatpush1.bf16.msra.mxu0 %v7831
    %9023 = vmatprep.subr.bf16.mxu0 %v7824
    %9024 = vmatpush1.bf16.msra.mxu0 %v7823
    %9025 = vmatprep.subr.bf16.mxu0 %v7944
    %9026 = vmatpush2.bf16.msra.mxu0 %v7943
    %9027 = vmatprep.subr.bf16.mxu0 %v7936
    %9028 = vmatpush2.bf16.msra.mxu0 %v7935
    %9029 = vmatprep.subr.bf16.mxu0 %v7928
    %9030 = vmatpush2.bf16.msra.mxu0 %v7927
    %9031 = vmatprep.subr.bf16.mxu0 %v7920
    %9032 = vmatpush2.bf16.msra.mxu0 %v7919
    %9033 = vmatprep.subr.bf16.mxu0 %v7912
    %9034 = vmatpush2.bf16.msra.mxu0 %v7911
    %9035 = vmatprep.subr.bf16.mxu0 %v7904
    %9036 = vmatpush2.bf16.msra.mxu0 %v7903
    %9037 = vmatprep.subr.bf16.mxu0 %v7896
    %9038 = vmatpush2.bf16.msra.mxu0 %v7895
    %9039 = vmatprep.subr.bf16.mxu0 %v7888
    %9040 = vmatpush2.bf16.msra.mxu0 %v7887
    %9041 = vmatprep.mubr.bf16.mxu0 0
    %9042 = vmatmul.mubr.bf16.gmra.mxu0 0
    %v9043 = vpop.f32.mrf.mxu0
    %v9044 = vadd.f32 0.0, %v9043
    %v9045 = vpop.f32.mrf.mxu0
    %v9046 = vadd.f32 0.0, %v9045
    %v9047 = vpop.f32.mrf.mxu0
    %v9048 = vpop.f32.mrf.mxu0
    %9049 = vdwg.mxu0
    %9050 = vmatprep.subr.bf16.mxu0 %v8008
    %9051 = vmatpush1.bf16.msra.mxu0 %v8007
    %9052 = vmatprep.subr.bf16.mxu0 %v8000
    %9053 = vmatpush1.bf16.msra.mxu0 %v7999
    %9054 = vmatprep.subr.bf16.mxu0 %v7992
    %9055 = vmatpush1.bf16.msra.mxu0 %v7991
    %9056 = vmatprep.subr.bf16.mxu0 %v7984
    %9057 = vmatpush1.bf16.msra.mxu0 %v7983
    %9058 = vmatprep.subr.bf16.mxu0 %v7976
    %9059 = vmatpush1.bf16.msra.mxu0 %v7975
    %9060 = vmatprep.subr.bf16.mxu0 %v7968
    %9061 = vmatpush1.bf16.msra.mxu0 %v7967
    %9062 = vmatprep.subr.bf16.mxu0 %v7960
    %9063 = vmatpush1.bf16.msra.mxu0 %v7959
    %9064 = vmatprep.subr.bf16.mxu0 %v7952
    %9065 = vmatpush1.bf16.msra.mxu0 %v7951
    %9066 = vmatprep.subr.bf16.mxu0 %v8072
    %9067 = vmatpush2.bf16.msra.mxu0 %v8071
    %9068 = vmatprep.subr.bf16.mxu0 %v8064
    %9069 = vmatpush2.bf16.msra.mxu0 %v8063
    %9070 = vmatprep.subr.bf16.mxu0 %v8056
    %9071 = vmatpush2.bf16.msra.mxu0 %v8055
    %9072 = vmatprep.subr.bf16.mxu0 %v8048
    %9073 = vmatpush2.bf16.msra.mxu0 %v8047
    %9074 = vmatprep.subr.bf16.mxu0 %v8040
    %9075 = vmatpush2.bf16.msra.mxu0 %v8039
    %9076 = vmatprep.subr.bf16.mxu0 %v8032
    %9077 = vmatpush2.bf16.msra.mxu0 %v8031
    %9078 = vmatprep.subr.bf16.mxu0 %v8024
    %9079 = vmatpush2.bf16.msra.mxu0 %v8023
    %9080 = vmatprep.subr.bf16.mxu0 %v8016
    %9081 = vmatpush2.bf16.msra.mxu0 %v8015
    %9082 = vmatprep.mubr.bf16.mxu0 %v5752
    %9083 = vmatmul.mubr.bf16.gmra.mxu0 %v5751
    %v9084 = vpop.f32.mrf.mxu0
    %v9085 = vadd.f32 %v9044, %v9084
    %v9086 = vpop.f32.mrf.mxu0
    %v9087 = vadd.f32 %v9046, %v9086
    %v9088 = vpop.f32.mrf.mxu0
    %v9089 = vpop.f32.mrf.mxu0
    %9090 = vdwg.mxu0
    %9091 = vmatprep.subr.bf16.mxu0 %v8136
    %9092 = vmatpush1.bf16.msra.mxu0 %v8135
    %9093 = vmatprep.subr.bf16.mxu0 %v8128
    %9094 = vmatpush1.bf16.msra.mxu0 %v8127
    %9095 = vmatprep.subr.bf16.mxu0 %v8120
    %9096 = vmatpush1.bf16.msra.mxu0 %v8119
    %9097 = vmatprep.subr.bf16.mxu0 %v8112
    %9098 = vmatpush1.bf16.msra.mxu0 %v8111
    %9099 = vmatprep.subr.bf16.mxu0 %v8104
    %9100 = vmatpush1.bf16.msra.mxu0 %v8103
    %9101 = vmatprep.subr.bf16.mxu0 %v8096
    %9102 = vmatpush1.bf16.msra.mxu0 %v8095
    %9103 = vmatprep.subr.bf16.mxu0 %v8088
    %9104 = vmatpush1.bf16.msra.mxu0 %v8087
    %9105 = vmatprep.subr.bf16.mxu0 %v8080
    %9106 = vmatpush1.bf16.msra.mxu0 %v8079
    %9107 = vmatprep.subr.bf16.mxu0 %v8200
    %9108 = vmatpush2.bf16.msra.mxu0 %v8199
    %9109 = vmatprep.subr.bf16.mxu0 %v8192
    %9110 = vmatpush2.bf16.msra.mxu0 %v8191
    %9111 = vmatprep.subr.bf16.mxu0 %v8184
    %9112 = vmatpush2.bf16.msra.mxu0 %v8183
    %9113 = vmatprep.subr.bf16.mxu0 %v8176
    %9114 = vmatpush2.bf16.msra.mxu0 %v8175
    %9115 = vmatprep.subr.bf16.mxu0 %v8168
    %9116 = vmatpush2.bf16.msra.mxu0 %v8167
    %9117 = vmatprep.subr.bf16.mxu0 %v8160
    %9118 = vmatpush2.bf16.msra.mxu0 %v8159
    %9119 = vmatprep.subr.bf16.mxu0 %v8152
    %9120 = vmatpush2.bf16.msra.mxu0 %v8151
    %9121 = vmatprep.subr.bf16.mxu0 %v8144
    %9122 = vmatpush2.bf16.msra.mxu0 %v8143
    %9123 = vmatprep.mubr.bf16.mxu0 %v5760
    %9124 = vmatmul.mubr.bf16.gmra.mxu0 %v5759
    %v9125 = vpop.f32.mrf.mxu0
    %v9126 = vadd.f32 %v9085, %v9125
    %v9127 = vpop.f32.mrf.mxu0
    %v9128 = vadd.f32 %v9087, %v9127
    %v9129 = vpop.f32.mrf.mxu0
    %v9130 = vpop.f32.mrf.mxu0
    %9131 = vdwg.mxu0
    %9132 = vmatprep.subr.bf16.mxu0 %v8264
    %9133 = vmatpush1.bf16.msra.mxu0 %v8263
    %9134 = vmatprep.subr.bf16.mxu0 %v8256
    %9135 = vmatpush1.bf16.msra.mxu0 %v8255
    %9136 = vmatprep.subr.bf16.mxu0 %v8248
    %9137 = vmatpush1.bf16.msra.mxu0 %v8247
    %9138 = vmatprep.subr.bf16.mxu0 %v8240
    %9139 = vmatpush1.bf16.msra.mxu0 %v8239
    %9140 = vmatprep.subr.bf16.mxu0 %v8232
    %9141 = vmatpush1.bf16.msra.mxu0 %v8231
    %9142 = vmatprep.subr.bf16.mxu0 %v8224
    %9143 = vmatpush1.bf16.msra.mxu0 %v8223
    %9144 = vmatprep.subr.bf16.mxu0 %v8216
    %9145 = vmatpush1.bf16.msra.mxu0 %v8215
    %9146 = vmatprep.subr.bf16.mxu0 %v8208
    %9147 = vmatpush1.bf16.msra.mxu0 %v8207
    %9148 = vmatprep.subr.bf16.mxu0 %v8328
    %9149 = vmatpush2.bf16.msra.mxu0 %v8327
    %9150 = vmatprep.subr.bf16.mxu0 %v8320
    %9151 = vmatpush2.bf16.msra.mxu0 %v8319
    %9152 = vmatprep.subr.bf16.mxu0 %v8312
    %9153 = vmatpush2.bf16.msra.mxu0 %v8311
    %9154 = vmatprep.subr.bf16.mxu0 %v8304
    %9155 = vmatpush2.bf16.msra.mxu0 %v8303
    %9156 = vmatprep.subr.bf16.mxu0 %v8296
    %9157 = vmatpush2.bf16.msra.mxu0 %v8295
    %9158 = vmatprep.subr.bf16.mxu0 %v8288
    %9159 = vmatpush2.bf16.msra.mxu0 %v8287
    %9160 = vmatprep.subr.bf16.mxu0 %v8280
    %9161 = vmatpush2.bf16.msra.mxu0 %v8279
    %9162 = vmatprep.subr.bf16.mxu0 %v8272
    %9163 = vmatpush2.bf16.msra.mxu0 %v8271
    %9164 = vmatprep.mubr.bf16.mxu0 %v5770
    %9165 = vmatmul.mubr.bf16.gmra.mxu0 %v5769
    %v9166 = vpop.f32.mrf.mxu0
    %v9167 = vadd.f32 %v9126, %v9166
    %v9168 = vpop.f32.mrf.mxu0
    %v9169 = vadd.f32 %v9128, %v9168
    %v9170 = vpop.f32.mrf.mxu0
    %v9171 = vpop.f32.mrf.mxu0
    %9172 = vdwg.mxu0
    %9173 = vmatprep.subr.bf16.mxu0 %v7882
    %9174 = vmatpush1.bf16.msra.mxu0 %v7881
    %9175 = vmatprep.subr.bf16.mxu0 %v7874
    %9176 = vmatpush1.bf16.msra.mxu0 %v7873
    %9177 = vmatprep.subr.bf16.mxu0 %v7866
    %9178 = vmatpush1.bf16.msra.mxu0 %v7865
    %9179 = vmatprep.subr.bf16.mxu0 %v7858
    %9180 = vmatpush1.bf16.msra.mxu0 %v7857
    %9181 = vmatprep.subr.bf16.mxu0 %v7850
    %9182 = vmatpush1.bf16.msra.mxu0 %v7849
    %9183 = vmatprep.subr.bf16.mxu0 %v7842
    %9184 = vmatpush1.bf16.msra.mxu0 %v7841
    %9185 = vmatprep.subr.bf16.mxu0 %v7834
    %9186 = vmatpush1.bf16.msra.mxu0 %v7833
    %9187 = vmatprep.subr.bf16.mxu0 %v7826
    %9188 = vmatpush1.bf16.msra.mxu0 %v7825
    %9189 = vmatprep.subr.bf16.mxu0 %v7946
    %9190 = vmatpush2.bf16.msra.mxu0 %v7945
    %9191 = vmatprep.subr.bf16.mxu0 %v7938
    %9192 = vmatpush2.bf16.msra.mxu0 %v7937
    %9193 = vmatprep.subr.bf16.mxu0 %v7930
    %9194 = vmatpush2.bf16.msra.mxu0 %v7929
    %9195 = vmatprep.subr.bf16.mxu0 %v7922
    %9196 = vmatpush2.bf16.msra.mxu0 %v7921
    %9197 = vmatprep.subr.bf16.mxu0 %v7914
    %9198 = vmatpush2.bf16.msra.mxu0 %v7913
    %9199 = vmatprep.subr.bf16.mxu0 %v7906
    %9200 = vmatpush2.bf16.msra.mxu0 %v7905
    %9201 = vmatprep.subr.bf16.mxu0 %v7898
    %9202 = vmatpush2.bf16.msra.mxu0 %v7897
    %9203 = vmatprep.subr.bf16.mxu0 %v7890
    %9204 = vmatpush2.bf16.msra.mxu0 %v7889
    %9205 = vmatprep.mubr.bf16.mxu0 0
    %9206 = vmatmul.mubr.bf16.gmra.mxu0 0
    %v9207 = vpop.f32.mrf.mxu0
    %v9208 = vadd.f32 0.0, %v9207
    %v9209 = vpop.f32.mrf.mxu0
    %v9210 = vadd.f32 0.0, %v9209
    %v9211 = vpop.f32.mrf.mxu0
    %v9212 = vpop.f32.mrf.mxu0
    %9213 = vdwg.mxu0
    %9214 = vmatprep.subr.bf16.mxu0 %v8010
    %9215 = vmatpush1.bf16.msra.mxu0 %v8009
    %9216 = vmatprep.subr.bf16.mxu0 %v8002
    %9217 = vmatpush1.bf16.msra.mxu0 %v8001
    %9218 = vmatprep.subr.bf16.mxu0 %v7994
    %9219 = vmatpush1.bf16.msra.mxu0 %v7993
    %9220 = vmatprep.subr.bf16.mxu0 %v7986
    %9221 = vmatpush1.bf16.msra.mxu0 %v7985
    %9222 = vmatprep.subr.bf16.mxu0 %v7978
    %9223 = vmatpush1.bf16.msra.mxu0 %v7977
    %9224 = vmatprep.subr.bf16.mxu0 %v7970
    %9225 = vmatpush1.bf16.msra.mxu0 %v7969
    %9226 = vmatprep.subr.bf16.mxu0 %v7962
    %9227 = vmatpush1.bf16.msra.mxu0 %v7961
    %9228 = vmatprep.subr.bf16.mxu0 %v7954
    %9229 = vmatpush1.bf16.msra.mxu0 %v7953
    %9230 = vmatprep.subr.bf16.mxu0 %v8074
    %9231 = vmatpush2.bf16.msra.mxu0 %v8073
    %9232 = vmatprep.subr.bf16.mxu0 %v8066
    %9233 = vmatpush2.bf16.msra.mxu0 %v8065
    %9234 = vmatprep.subr.bf16.mxu0 %v8058
    %9235 = vmatpush2.bf16.msra.mxu0 %v8057
    %9236 = vmatprep.subr.bf16.mxu0 %v8050
    %9237 = vmatpush2.bf16.msra.mxu0 %v8049
    %9238 = vmatprep.subr.bf16.mxu0 %v8042
    %9239 = vmatpush2.bf16.msra.mxu0 %v8041
    %9240 = vmatprep.subr.bf16.mxu0 %v8034
    %9241 = vmatpush2.bf16.msra.mxu0 %v8033
    %9242 = vmatprep.subr.bf16.mxu0 %v8026
    %9243 = vmatpush2.bf16.msra.mxu0 %v8025
    %9244 = vmatprep.subr.bf16.mxu0 %v8018
    %9245 = vmatpush2.bf16.msra.mxu0 %v8017
    %9246 = vmatprep.mubr.bf16.mxu0 %v5752
    %9247 = vmatmul.mubr.bf16.gmra.mxu0 %v5751
    %v9248 = vpop.f32.mrf.mxu0
    %v9249 = vadd.f32 %v9208, %v9248
    %v9250 = vpop.f32.mrf.mxu0
    %v9251 = vadd.f32 %v9210, %v9250
    %v9252 = vpop.f32.mrf.mxu0
    %v9253 = vpop.f32.mrf.mxu0
    %9254 = vdwg.mxu0
    %9255 = vmatprep.subr.bf16.mxu0 %v8138
    %9256 = vmatpush1.bf16.msra.mxu0 %v8137
    %9257 = vmatprep.subr.bf16.mxu0 %v8130
    %9258 = vmatpush1.bf16.msra.mxu0 %v8129
    %9259 = vmatprep.subr.bf16.mxu0 %v8122
    %9260 = vmatpush1.bf16.msra.mxu0 %v8121
    %9261 = vmatprep.subr.bf16.mxu0 %v8114
    %9262 = vmatpush1.bf16.msra.mxu0 %v8113
    %9263 = vmatprep.subr.bf16.mxu0 %v8106
    %9264 = vmatpush1.bf16.msra.mxu0 %v8105
    %9265 = vmatprep.subr.bf16.mxu0 %v8098
    %9266 = vmatpush1.bf16.msra.mxu0 %v8097
    %9267 = vmatprep.subr.bf16.mxu0 %v8090
    %9268 = vmatpush1.bf16.msra.mxu0 %v8089
    %9269 = vmatprep.subr.bf16.mxu0 %v8082
    %9270 = vmatpush1.bf16.msra.mxu0 %v8081
    %9271 = vmatprep.subr.bf16.mxu0 %v8202
    %9272 = vmatpush2.bf16.msra.mxu0 %v8201
    %9273 = vmatprep.subr.bf16.mxu0 %v8194
    %9274 = vmatpush2.bf16.msra.mxu0 %v8193
    %9275 = vmatprep.subr.bf16.mxu0 %v8186
    %9276 = vmatpush2.bf16.msra.mxu0 %v8185
    %9277 = vmatprep.subr.bf16.mxu0 %v8178
    %9278 = vmatpush2.bf16.msra.mxu0 %v8177
    %9279 = vmatprep.subr.bf16.mxu0 %v8170
    %9280 = vmatpush2.bf16.msra.mxu0 %v8169
    %9281 = vmatprep.subr.bf16.mxu0 %v8162
    %9282 = vmatpush2.bf16.msra.mxu0 %v8161
    %9283 = vmatprep.subr.bf16.mxu0 %v8154
    %9284 = vmatpush2.bf16.msra.mxu0 %v8153
    %9285 = vmatprep.subr.bf16.mxu0 %v8146
    %9286 = vmatpush2.bf16.msra.mxu0 %v8145
    %9287 = vmatprep.mubr.bf16.mxu0 %v5760
    %9288 = vmatmul.mubr.bf16.gmra.mxu0 %v5759
    %v9289 = vpop.f32.mrf.mxu0
    %v9290 = vadd.f32 %v9249, %v9289
    %v9291 = vpop.f32.mrf.mxu0
    %v9292 = vadd.f32 %v9251, %v9291
    %v9293 = vpop.f32.mrf.mxu0
    %v9294 = vpop.f32.mrf.mxu0
    %9295 = vdwg.mxu0
    %9296 = vmatprep.subr.bf16.mxu0 %v8266
    %9297 = vmatpush1.bf16.msra.mxu0 %v8265
    %9298 = vmatprep.subr.bf16.mxu0 %v8258
    %9299 = vmatpush1.bf16.msra.mxu0 %v8257
    %9300 = vmatprep.subr.bf16.mxu0 %v8250
    %9301 = vmatpush1.bf16.msra.mxu0 %v8249
    %9302 = vmatprep.subr.bf16.mxu0 %v8242
    %9303 = vmatpush1.bf16.msra.mxu0 %v8241
    %9304 = vmatprep.subr.bf16.mxu0 %v8234
    %9305 = vmatpush1.bf16.msra.mxu0 %v8233
    %9306 = vmatprep.subr.bf16.mxu0 %v8226
    %9307 = vmatpush1.bf16.msra.mxu0 %v8225
    %9308 = vmatprep.subr.bf16.mxu0 %v8218
    %9309 = vmatpush1.bf16.msra.mxu0 %v8217
    %9310 = vmatprep.subr.bf16.mxu0 %v8210
    %9311 = vmatpush1.bf16.msra.mxu0 %v8209
    %9312 = vmatprep.subr.bf16.mxu0 %v8330
    %9313 = vmatpush2.bf16.msra.mxu0 %v8329
    %9314 = vmatprep.subr.bf16.mxu0 %v8322
    %9315 = vmatpush2.bf16.msra.mxu0 %v8321
    %9316 = vmatprep.subr.bf16.mxu0 %v8314
    %9317 = vmatpush2.bf16.msra.mxu0 %v8313
    %9318 = vmatprep.subr.bf16.mxu0 %v8306
    %9319 = vmatpush2.bf16.msra.mxu0 %v8305
    %9320 = vmatprep.subr.bf16.mxu0 %v8298
    %9321 = vmatpush2.bf16.msra.mxu0 %v8297
    %9322 = vmatprep.subr.bf16.mxu0 %v8290
    %9323 = vmatpush2.bf16.msra.mxu0 %v8289
    %9324 = vmatprep.subr.bf16.mxu0 %v8282
    %9325 = vmatpush2.bf16.msra.mxu0 %v8281
    %9326 = vmatprep.subr.bf16.mxu0 %v8274
    %9327 = vmatpush2.bf16.msra.mxu0 %v8273
    %9328 = vmatprep.mubr.bf16.mxu0 %v5770
    %9329 = vmatmul.mubr.bf16.gmra.mxu0 %v5769
    %v9330 = vpop.f32.mrf.mxu0
    %v9331 = vadd.f32 %v9290, %v9330
    %v9332 = vpop.f32.mrf.mxu0
    %v9333 = vadd.f32 %v9292, %v9332
    %v9334 = vpop.f32.mrf.mxu0
    %v9335 = vpop.f32.mrf.mxu0
    %9336 = vdwg.mxu0
    %9337 = vmatprep.subr.bf16.mxu0 %v7884
    %9338 = vmatpush1.bf16.msra.mxu0 %v7883
    %9339 = vmatprep.subr.bf16.mxu0 %v7876
    %9340 = vmatpush1.bf16.msra.mxu0 %v7875
    %9341 = vmatprep.subr.bf16.mxu0 %v7868
    %9342 = vmatpush1.bf16.msra.mxu0 %v7867
    %9343 = vmatprep.subr.bf16.mxu0 %v7860
    %9344 = vmatpush1.bf16.msra.mxu0 %v7859
    %9345 = vmatprep.subr.bf16.mxu0 %v7852
    %9346 = vmatpush1.bf16.msra.mxu0 %v7851
    %9347 = vmatprep.subr.bf16.mxu0 %v7844
    %9348 = vmatpush1.bf16.msra.mxu0 %v7843
    %9349 = vmatprep.subr.bf16.mxu0 %v7836
    %9350 = vmatpush1.bf16.msra.mxu0 %v7835
    %9351 = vmatprep.subr.bf16.mxu0 %v7828
    %9352 = vmatpush1.bf16.msra.mxu0 %v7827
    %9353 = vmatprep.subr.bf16.mxu0 %v7948
    %9354 = vmatpush2.bf16.msra.mxu0 %v7947
    %9355 = vmatprep.subr.bf16.mxu0 %v7940
    %9356 = vmatpush2.bf16.msra.mxu0 %v7939
    %9357 = vmatprep.subr.bf16.mxu0 %v7932
    %9358 = vmatpush2.bf16.msra.mxu0 %v7931
    %9359 = vmatprep.subr.bf16.mxu0 %v7924
    %9360 = vmatpush2.bf16.msra.mxu0 %v7923
    %9361 = vmatprep.subr.bf16.mxu0 %v7916
    %9362 = vmatpush2.bf16.msra.mxu0 %v7915
    %9363 = vmatprep.subr.bf16.mxu0 %v7908
    %9364 = vmatpush2.bf16.msra.mxu0 %v7907
    %9365 = vmatprep.subr.bf16.mxu0 %v7900
    %9366 = vmatpush2.bf16.msra.mxu0 %v7899
    %9367 = vmatprep.subr.bf16.mxu0 %v7892
    %9368 = vmatpush2.bf16.msra.mxu0 %v7891
    %9369 = vmatprep.mubr.bf16.mxu0 0
    %9370 = vmatmul.mubr.bf16.gmra.mxu0 0
    %v9371 = vpop.f32.mrf.mxu0
    %v9372 = vadd.f32 0.0, %v9371
    %v9373 = vpop.f32.mrf.mxu0
    %v9374 = vadd.f32 0.0, %v9373
    %v9375 = vpop.f32.mrf.mxu0
    %v9376 = vpop.f32.mrf.mxu0
    %9377 = vdwg.mxu0
    %9378 = vmatprep.subr.bf16.mxu0 %v8012
    %9379 = vmatpush1.bf16.msra.mxu0 %v8011
    %9380 = vmatprep.subr.bf16.mxu0 %v8004
    %9381 = vmatpush1.bf16.msra.mxu0 %v8003
    %9382 = vmatprep.subr.bf16.mxu0 %v7996
    %9383 = vmatpush1.bf16.msra.mxu0 %v7995
    %9384 = vmatprep.subr.bf16.mxu0 %v7988
    %9385 = vmatpush1.bf16.msra.mxu0 %v7987
    %9386 = vmatprep.subr.bf16.mxu0 %v7980
    %9387 = vmatpush1.bf16.msra.mxu0 %v7979
    %9388 = vmatprep.subr.bf16.mxu0 %v7972
    %9389 = vmatpush1.bf16.msra.mxu0 %v7971
    %9390 = vmatprep.subr.bf16.mxu0 %v7964
    %9391 = vmatpush1.bf16.msra.mxu0 %v7963
    %9392 = vmatprep.subr.bf16.mxu0 %v7956
    %9393 = vmatpush1.bf16.msra.mxu0 %v7955
    %9394 = vmatprep.subr.bf16.mxu0 %v8076
    %9395 = vmatpush2.bf16.msra.mxu0 %v8075
    %9396 = vmatprep.subr.bf16.mxu0 %v8068
    %9397 = vmatpush2.bf16.msra.mxu0 %v8067
    %9398 = vmatprep.subr.bf16.mxu0 %v8060
    %9399 = vmatpush2.bf16.msra.mxu0 %v8059
    %9400 = vmatprep.subr.bf16.mxu0 %v8052
    %9401 = vmatpush2.bf16.msra.mxu0 %v8051
    %9402 = vmatprep.subr.bf16.mxu0 %v8044
    %9403 = vmatpush2.bf16.msra.mxu0 %v8043
    %9404 = vmatprep.subr.bf16.mxu0 %v8036
    %9405 = vmatpush2.bf16.msra.mxu0 %v8035
    %9406 = vmatprep.subr.bf16.mxu0 %v8028
    %9407 = vmatpush2.bf16.msra.mxu0 %v8027
    %9408 = vmatprep.subr.bf16.mxu0 %v8020
    %9409 = vmatpush2.bf16.msra.mxu0 %v8019
    %9410 = vmatprep.mubr.bf16.mxu0 %v5752
    %9411 = vmatmul.mubr.bf16.gmra.mxu0 %v5751
    %v9412 = vpop.f32.mrf.mxu0
    %v9413 = vadd.f32 %v9372, %v9412
    %v9414 = vpop.f32.mrf.mxu0
    %v9415 = vadd.f32 %v9374, %v9414
    %v9416 = vpop.f32.mrf.mxu0
    %v9417 = vpop.f32.mrf.mxu0
    %9418 = vdwg.mxu0
    %9419 = vmatprep.subr.bf16.mxu0 %v8140
    %9420 = vmatpush1.bf16.msra.mxu0 %v8139
    %9421 = vmatprep.subr.bf16.mxu0 %v8132
    %9422 = vmatpush1.bf16.msra.mxu0 %v8131
    %9423 = vmatprep.subr.bf16.mxu0 %v8124
    %9424 = vmatpush1.bf16.msra.mxu0 %v8123
    %9425 = vmatprep.subr.bf16.mxu0 %v8116
    %9426 = vmatpush1.bf16.msra.mxu0 %v8115
    %9427 = vmatprep.subr.bf16.mxu0 %v8108
    %9428 = vmatpush1.bf16.msra.mxu0 %v8107
    %9429 = vmatprep.subr.bf16.mxu0 %v8100
    %9430 = vmatpush1.bf16.msra.mxu0 %v8099
    %9431 = vmatprep.subr.bf16.mxu0 %v8092
    %9432 = vmatpush1.bf16.msra.mxu0 %v8091
    %9433 = vmatprep.subr.bf16.mxu0 %v8084
    %9434 = vmatpush1.bf16.msra.mxu0 %v8083
    %9435 = vmatprep.subr.bf16.mxu0 %v8204
    %9436 = vmatpush2.bf16.msra.mxu0 %v8203
    %9437 = vmatprep.subr.bf16.mxu0 %v8196
    %9438 = vmatpush2.bf16.msra.mxu0 %v8195
    %9439 = vmatprep.subr.bf16.mxu0 %v8188
    %9440 = vmatpush2.bf16.msra.mxu0 %v8187
    %9441 = vmatprep.subr.bf16.mxu0 %v8180
    %9442 = vmatpush2.bf16.msra.mxu0 %v8179
    %9443 = vmatprep.subr.bf16.mxu0 %v8172
    %9444 = vmatpush2.bf16.msra.mxu0 %v8171
    %9445 = vmatprep.subr.bf16.mxu0 %v8164
    %9446 = vmatpush2.bf16.msra.mxu0 %v8163
    %9447 = vmatprep.subr.bf16.mxu0 %v8156
    %9448 = vmatpush2.bf16.msra.mxu0 %v8155
    %9449 = vmatprep.subr.bf16.mxu0 %v8148
    %9450 = vmatpush2.bf16.msra.mxu0 %v8147
    %9451 = vmatprep.mubr.bf16.mxu0 %v5760
    %9452 = vmatmul.mubr.bf16.gmra.mxu0 %v5759
    %v9453 = vpop.f32.mrf.mxu0
    %v9454 = vadd.f32 %v9413, %v9453
    %v9455 = vpop.f32.mrf.mxu0
    %v9456 = vadd.f32 %v9415, %v9455
    %v9457 = vpop.f32.mrf.mxu0
    %v9458 = vpop.f32.mrf.mxu0
    %9459 = vdwg.mxu0
    %9460 = vmatprep.subr.bf16.mxu0 %v8268
    %9461 = vmatpush1.bf16.msra.mxu0 %v8267
    %9462 = vmatprep.subr.bf16.mxu0 %v8260
    %9463 = vmatpush1.bf16.msra.mxu0 %v8259
    %9464 = vmatprep.subr.bf16.mxu0 %v8252
    %9465 = vmatpush1.bf16.msra.mxu0 %v8251
    %9466 = vmatprep.subr.bf16.mxu0 %v8244
    %9467 = vmatpush1.bf16.msra.mxu0 %v8243
    %9468 = vmatprep.subr.bf16.mxu0 %v8236
    %9469 = vmatpush1.bf16.msra.mxu0 %v8235
    %9470 = vmatprep.subr.bf16.mxu0 %v8228
    %9471 = vmatpush1.bf16.msra.mxu0 %v8227
    %9472 = vmatprep.subr.bf16.mxu0 %v8220
    %9473 = vmatpush1.bf16.msra.mxu0 %v8219
    %9474 = vmatprep.subr.bf16.mxu0 %v8212
    %9475 = vmatpush1.bf16.msra.mxu0 %v8211
    %9476 = vmatprep.subr.bf16.mxu0 %v8332
    %9477 = vmatpush2.bf16.msra.mxu0 %v8331
    %9478 = vmatprep.subr.bf16.mxu0 %v8324
    %9479 = vmatpush2.bf16.msra.mxu0 %v8323
    %9480 = vmatprep.subr.bf16.mxu0 %v8316
    %9481 = vmatpush2.bf16.msra.mxu0 %v8315
    %9482 = vmatprep.subr.bf16.mxu0 %v8308
    %9483 = vmatpush2.bf16.msra.mxu0 %v8307
    %9484 = vmatprep.subr.bf16.mxu0 %v8300
    %9485 = vmatpush2.bf16.msra.mxu0 %v8299
    %9486 = vmatprep.subr.bf16.mxu0 %v8292
    %9487 = vmatpush2.bf16.msra.mxu0 %v8291
    %9488 = vmatprep.subr.bf16.mxu0 %v8284
    %9489 = vmatpush2.bf16.msra.mxu0 %v8283
    %9490 = vmatprep.subr.bf16.mxu0 %v8276
    %9491 = vmatpush2.bf16.msra.mxu0 %v8275
    %9492 = vmatprep.mubr.bf16.mxu0 %v5770
    %9493 = vmatmul.mubr.bf16.gmra.mxu0 %v5769
    %v9494 = vpop.f32.mrf.mxu0
    %v9495 = vadd.f32 %v9454, %v9494
    %v9496 = vpop.f32.mrf.mxu0
    %v9497 = vadd.f32 %v9456, %v9496
    %v9498 = vpop.f32.mrf.mxu0
    %v9499 = vpop.f32.mrf.mxu0
    %9500 = vdwg.mxu0
    %v9501 = vmax.f32 %v9003, %v9167
    %v9502 = vmax.f32 %v9005, %v9169
    %v9503 = vmax.f32 %v9331, %v9495
    %v9504 = vmax.f32 %v9333, %v9497
    %v9505 = vmax.f32 %v9501, %v9503
    %v9506 = vmax.f32 %v9502, %v9504
    %v9507 = vld [vmem:[%s6] sm:$0x3]
    %v9509 = vlaneseq
    %v9510 = vshrl.u32 %v9509, 7
    %v9511 = vsub.s32 0, %v9510
    %v9512 = vrot.slane %v9507, %v9511
    %v9513 = vlaneseq
    %v9514 = vshrl.u32 %v9513, 7
    %v9515 = vsub.s32 1, %v9514
    %v9516 = vrot.slane %v9507, %v9515
    %v9519 = vadd.f32 %v9505, %v9512
    %v9520 = vadd.f32 %v9506, %v9516
    %v9521 = vmax.f32 %v9519, 0.0
    %v9522 = vmax.f32 %v9520, 0.0
    %v9523 = vpack.c.bf16 %v9521, %v9521
    %v9524 = vpack.c.bf16 %v9522, %v9522
    %vm9525 = vcmask 1042434
    %v9526 = vsel %vm9525, %v5746, %v5742
    %v9527 = vsel %vm9525, %v5749, %v5743
    %v9528 = vpack.c.b16 %v9526, %v9526
    %v9529 = vpack.c.b16 %v9527, %v9527
    %v9530 = vsel %vm9525, %v5744, %v5755
    %v9531 = vsel %vm9525, %v5745, %v5757
    %v9532 = vpack.c.b16 %v9530, %v9530
    %v9533 = vpack.c.b16 %v9531, %v9531
    %v9534 = vsel %vm9525, %v5764, %v5763
    %v9535 = vsel %vm9525, %v5767, %v5766
    %v9536 = vpack.c.b16 %v9534, %v9534
    %v9537 = vpack.c.b16 %v9535, %v9535
    %v9538 = vrot.slane %v5742, 3
    %v9539 = vrot.slane %v5744, 2
    %v9540 = vsel %vm9525, %v9539, %v9538
    %v9541 = vrot.slane %v5743, 3
    %v9542 = vrot.slane %v5745, 2
    %v9543 = vsel %vm9525, %v9542, %v9541
    %v9544 = vpack.c.b16 %v9540, %v9540
    %v9545 = vpack.c.b16 %v9543, %v9543
    %v9547 = vshrl.u32 %v9528, 16
    %v9549 = vshll.u32 %v9528, 16
    %v9551 = vrot.slane %v9549, 1
    %v9552 = vor.u32 %v9547, %v9551
    %v9554 = vshrl.u32 %v9529, 16
    %v9556 = vshll.u32 %v9529, 16
    %v9558 = vrot.slane %v9556, 1
    %v9559 = vor.u32 %v9554, %v9558
    %v9561 = vshrl.u32 %v9532, 16
    %v9563 = vshll.u32 %v9532, 16
    %v9565 = vrot.slane %v9563, 1
    %v9566 = vor.u32 %v9561, %v9565
    %v9568 = vshrl.u32 %v9533, 16
    %v9570 = vshll.u32 %v9533, 16
    %v9572 = vrot.slane %v9570, 1
    %v9573 = vor.u32 %v9568, %v9572
    %v9575 = vshrl.u32 %v9536, 16
    %v9577 = vshll.u32 %v9536, 16
    %v9579 = vrot.slane %v9577, 1
    %v9580 = vor.u32 %v9575, %v9579
    %v9582 = vshrl.u32 %v9537, 16
    %v9584 = vshll.u32 %v9537, 16
    %v9586 = vrot.slane %v9584, 1
    %v9587 = vor.u32 %v9582, %v9586
    %v9589 = vshrl.u32 %v9544, 16
    %v9591 = vshll.u32 %v9544, 16
    %v9593 = vrot.slane %v9591, 1
    %v9594 = vor.u32 %v9589, %v9593
    %v9596 = vshrl.u32 %v9545, 16
    %v9598 = vshll.u32 %v9545, 16
    %v9600 = vrot.slane %v9598, 1
    %v9601 = vor.u32 %v9596, %v9600
    %9610 = vmatprep.subr.bf16.mxu0 %v7878
    %9611 = vmatpush1.bf16.msra.mxu0 %v7877
    %9612 = vmatprep.subr.bf16.mxu0 %v7870
    %9613 = vmatpush1.bf16.msra.mxu0 %v7869
    %9614 = vmatprep.subr.bf16.mxu0 %v7862
    %9615 = vmatpush1.bf16.msra.mxu0 %v7861
    %9616 = vmatprep.subr.bf16.mxu0 %v7854
    %9617 = vmatpush1.bf16.msra.mxu0 %v7853
    %9618 = vmatprep.subr.bf16.mxu0 %v7846
    %9619 = vmatpush1.bf16.msra.mxu0 %v7845
    %9620 = vmatprep.subr.bf16.mxu0 %v7838
    %9621 = vmatpush1.bf16.msra.mxu0 %v7837
    %9622 = vmatprep.subr.bf16.mxu0 %v7830
    %9623 = vmatpush1.bf16.msra.mxu0 %v7829
    %9624 = vmatprep.subr.bf16.mxu0 %v7822
    %9625 = vmatpush1.bf16.msra.mxu0 %v7821
    %9626 = vmatprep.subr.bf16.mxu0 %v7942
    %9627 = vmatpush2.bf16.msra.mxu0 %v7941
    %9628 = vmatprep.subr.bf16.mxu0 %v7934
    %9629 = vmatpush2.bf16.msra.mxu0 %v7933
    %9630 = vmatprep.subr.bf16.mxu0 %v7926
    %9631 = vmatpush2.bf16.msra.mxu0 %v7925
    %9632 = vmatprep.subr.bf16.mxu0 %v7918
    %9633 = vmatpush2.bf16.msra.mxu0 %v7917
    %9634 = vmatprep.subr.bf16.mxu0 %v7910
    %9635 = vmatpush2.bf16.msra.mxu0 %v7909
    %9636 = vmatprep.subr.bf16.mxu0 %v7902
    %9637 = vmatpush2.bf16.msra.mxu0 %v7901
    %9638 = vmatprep.subr.bf16.mxu0 %v7894
    %9639 = vmatpush2.bf16.msra.mxu0 %v7893
    %9640 = vmatprep.subr.bf16.mxu0 %v7886
    %9641 = vmatpush2.bf16.msra.mxu0 %v7885
    %9642 = vmatprep.mubr.bf16.mxu0 %v9559
    %9643 = vmatmul.mubr.bf16.gmra.mxu0 %v9552
    %v9644 = vpop.f32.mrf.mxu0
    %v9645 = vadd.f32 0.0, %v9644
    %v9646 = vpop.f32.mrf.mxu0
    %v9647 = vadd.f32 0.0, %v9646
    %v9648 = vpop.f32.mrf.mxu0
    %v9649 = vpop.f32.mrf.mxu0
    %9650 = vdwg.mxu0
    %9651 = vmatprep.subr.bf16.mxu0 %v8006
    %9652 = vmatpush1.bf16.msra.mxu0 %v8005
    %9653 = vmatprep.subr.bf16.mxu0 %v7998
    %9654 = vmatpush1.bf16.msra.mxu0 %v7997
    %9655 = vmatprep.subr.bf16.mxu0 %v7990
    %9656 = vmatpush1.bf16.msra.mxu0 %v7989
    %9657 = vmatprep.subr.bf16.mxu0 %v7982
    %9658 = vmatpush1.bf16.msra.mxu0 %v7981
    %9659 = vmatprep.subr.bf16.mxu0 %v7974
    %9660 = vmatpush1.bf16.msra.mxu0 %v7973
    %9661 = vmatprep.subr.bf16.mxu0 %v7966
    %9662 = vmatpush1.bf16.msra.mxu0 %v7965
    %9663 = vmatprep.subr.bf16.mxu0 %v7958
    %9664 = vmatpush1.bf16.msra.mxu0 %v7957
    %9665 = vmatprep.subr.bf16.mxu0 %v7950
    %9666 = vmatpush1.bf16.msra.mxu0 %v7949
    %9667 = vmatprep.subr.bf16.mxu0 %v8070
    %9668 = vmatpush2.bf16.msra.mxu0 %v8069
    %9669 = vmatprep.subr.bf16.mxu0 %v8062
    %9670 = vmatpush2.bf16.msra.mxu0 %v8061
    %9671 = vmatprep.subr.bf16.mxu0 %v8054
    %9672 = vmatpush2.bf16.msra.mxu0 %v8053
    %9673 = vmatprep.subr.bf16.mxu0 %v8046
    %9674 = vmatpush2.bf16.msra.mxu0 %v8045
    %9675 = vmatprep.subr.bf16.mxu0 %v8038
    %9676 = vmatpush2.bf16.msra.mxu0 %v8037
    %9677 = vmatprep.subr.bf16.mxu0 %v8030
    %9678 = vmatpush2.bf16.msra.mxu0 %v8029
    %9679 = vmatprep.subr.bf16.mxu0 %v8022
    %9680 = vmatpush2.bf16.msra.mxu0 %v8021
    %9681 = vmatprep.subr.bf16.mxu0 %v8014
    %9682 = vmatpush2.bf16.msra.mxu0 %v8013
    %9683 = vmatprep.mubr.bf16.mxu0 %v9573
    %9684 = vmatmul.mubr.bf16.gmra.mxu0 %v9566
    %v9685 = vpop.f32.mrf.mxu0
    %v9686 = vadd.f32 %v9645, %v9685
    %v9687 = vpop.f32.mrf.mxu0
    %v9688 = vadd.f32 %v9647, %v9687
    %v9689 = vpop.f32.mrf.mxu0
    %v9690 = vpop.f32.mrf.mxu0
    %9691 = vdwg.mxu0
    %9692 = vmatprep.subr.bf16.mxu0 %v8134
    %9693 = vmatpush1.bf16.msra.mxu0 %v8133
    %9694 = vmatprep.subr.bf16.mxu0 %v8126
    %9695 = vmatpush1.bf16.msra.mxu0 %v8125
    %9696 = vmatprep.subr.bf16.mxu0 %v8118
    %9697 = vmatpush1.bf16.msra.mxu0 %v8117
    %9698 = vmatprep.subr.bf16.mxu0 %v8110
    %9699 = vmatpush1.bf16.msra.mxu0 %v8109
    %9700 = vmatprep.subr.bf16.mxu0 %v8102
    %9701 = vmatpush1.bf16.msra.mxu0 %v8101
    %9702 = vmatprep.subr.bf16.mxu0 %v8094
    %9703 = vmatpush1.bf16.msra.mxu0 %v8093
    %9704 = vmatprep.subr.bf16.mxu0 %v8086
    %9705 = vmatpush1.bf16.msra.mxu0 %v8085
    %9706 = vmatprep.subr.bf16.mxu0 %v8078
    %9707 = vmatpush1.bf16.msra.mxu0 %v8077
    %9708 = vmatprep.subr.bf16.mxu0 %v8198
    %9709 = vmatpush2.bf16.msra.mxu0 %v8197
    %9710 = vmatprep.subr.bf16.mxu0 %v8190
    %9711 = vmatpush2.bf16.msra.mxu0 %v8189
    %9712 = vmatprep.subr.bf16.mxu0 %v8182
    %9713 = vmatpush2.bf16.msra.mxu0 %v8181
    %9714 = vmatprep.subr.bf16.mxu0 %v8174
    %9715 = vmatpush2.bf16.msra.mxu0 %v8173
    %9716 = vmatprep.subr.bf16.mxu0 %v8166
    %9717 = vmatpush2.bf16.msra.mxu0 %v8165
    %9718 = vmatprep.subr.bf16.mxu0 %v8158
    %9719 = vmatpush2.bf16.msra.mxu0 %v8157
    %9720 = vmatprep.subr.bf16.mxu0 %v8150
    %9721 = vmatpush2.bf16.msra.mxu0 %v8149
    %9722 = vmatprep.subr.bf16.mxu0 %v8142
    %9723 = vmatpush2.bf16.msra.mxu0 %v8141
    %9724 = vmatprep.mubr.bf16.mxu0 %v9587
    %9725 = vmatmul.mubr.bf16.gmra.mxu0 %v9580
    %v9726 = vpop.f32.mrf.mxu0
    %v9727 = vadd.f32 %v9686, %v9726
    %v9728 = vpop.f32.mrf.mxu0
    %v9729 = vadd.f32 %v9688, %v9728
    %v9730 = vpop.f32.mrf.mxu0
    %v9731 = vpop.f32.mrf.mxu0
    %9732 = vdwg.mxu0
    %9733 = vmatprep.subr.bf16.mxu0 %v8262
    %9734 = vmatpush1.bf16.msra.mxu0 %v8261
    %9735 = vmatprep.subr.bf16.mxu0 %v8254
    %9736 = vmatpush1.bf16.msra.mxu0 %v8253
    %9737 = vmatprep.subr.bf16.mxu0 %v8246
    %9738 = vmatpush1.bf16.msra.mxu0 %v8245
    %9739 = vmatprep.subr.bf16.mxu0 %v8238
    %9740 = vmatpush1.bf16.msra.mxu0 %v8237
    %9741 = vmatprep.subr.bf16.mxu0 %v8230
    %9742 = vmatpush1.bf16.msra.mxu0 %v8229
    %9743 = vmatprep.subr.bf16.mxu0 %v8222
    %9744 = vmatpush1.bf16.msra.mxu0 %v8221
    %9745 = vmatprep.subr.bf16.mxu0 %v8214
    %9746 = vmatpush1.bf16.msra.mxu0 %v8213
    %9747 = vmatprep.subr.bf16.mxu0 %v8206
    %9748 = vmatpush1.bf16.msra.mxu0 %v8205
    %9749 = vmatprep.subr.bf16.mxu0 %v8326
    %9750 = vmatpush2.bf16.msra.mxu0 %v8325
    %9751 = vmatprep.subr.bf16.mxu0 %v8318
    %9752 = vmatpush2.bf16.msra.mxu0 %v8317
    %9753 = vmatprep.subr.bf16.mxu0 %v8310
    %9754 = vmatpush2.bf16.msra.mxu0 %v8309
    %9755 = vmatprep.subr.bf16.mxu0 %v8302
    %9756 = vmatpush2.bf16.msra.mxu0 %v8301
    %9757 = vmatprep.subr.bf16.mxu0 %v8294
    %9758 = vmatpush2.bf16.msra.mxu0 %v8293
    %9759 = vmatprep.subr.bf16.mxu0 %v8286
    %9760 = vmatpush2.bf16.msra.mxu0 %v8285
    %9761 = vmatprep.subr.bf16.mxu0 %v8278
    %9762 = vmatpush2.bf16.msra.mxu0 %v8277
    %9763 = vmatprep.subr.bf16.mxu0 %v8270
    %9764 = vmatpush2.bf16.msra.mxu0 %v8269
    %9765 = vmatprep.mubr.bf16.mxu0 %v9601
    %9766 = vmatmul.mubr.bf16.gmra.mxu0 %v9594
    %v9767 = vpop.f32.mrf.mxu0
    %v9768 = vadd.f32 %v9727, %v9767
    %v9769 = vpop.f32.mrf.mxu0
    %v9770 = vadd.f32 %v9729, %v9769
    %v9771 = vpop.f32.mrf.mxu0
    %v9772 = vpop.f32.mrf.mxu0
    %9773 = vdwg.mxu0
    %9774 = vmatprep.subr.bf16.mxu0 %v7880
    %9775 = vmatpush1.bf16.msra.mxu0 %v7879
    %9776 = vmatprep.subr.bf16.mxu0 %v7872
    %9777 = vmatpush1.bf16.msra.mxu0 %v7871
    %9778 = vmatprep.subr.bf16.mxu0 %v7864
    %9779 = vmatpush1.bf16.msra.mxu0 %v7863
    %9780 = vmatprep.subr.bf16.mxu0 %v7856
    %9781 = vmatpush1.bf16.msra.mxu0 %v7855
    %9782 = vmatprep.subr.bf16.mxu0 %v7848
    %9783 = vmatpush1.bf16.msra.mxu0 %v7847
    %9784 = vmatprep.subr.bf16.mxu0 %v7840
    %9785 = vmatpush1.bf16.msra.mxu0 %v7839
    %9786 = vmatprep.subr.bf16.mxu0 %v7832
    %9787 = vmatpush1.bf16.msra.mxu0 %v7831
    %9788 = vmatprep.subr.bf16.mxu0 %v7824
    %9789 = vmatpush1.bf16.msra.mxu0 %v7823
    %9790 = vmatprep.subr.bf16.mxu0 %v7944
    %9791 = vmatpush2.bf16.msra.mxu0 %v7943
    %9792 = vmatprep.subr.bf16.mxu0 %v7936
    %9793 = vmatpush2.bf16.msra.mxu0 %v7935
    %9794 = vmatprep.subr.bf16.mxu0 %v7928
    %9795 = vmatpush2.bf16.msra.mxu0 %v7927
    %9796 = vmatprep.subr.bf16.mxu0 %v7920
    %9797 = vmatpush2.bf16.msra.mxu0 %v7919
    %9798 = vmatprep.subr.bf16.mxu0 %v7912
    %9799 = vmatpush2.bf16.msra.mxu0 %v7911
    %9800 = vmatprep.subr.bf16.mxu0 %v7904
    %9801 = vmatpush2.bf16.msra.mxu0 %v7903
    %9802 = vmatprep.subr.bf16.mxu0 %v7896
    %9803 = vmatpush2.bf16.msra.mxu0 %v7895
    %9804 = vmatprep.subr.bf16.mxu0 %v7888
    %9805 = vmatpush2.bf16.msra.mxu0 %v7887
    %9806 = vmatprep.mubr.bf16.mxu0 %v9559
    %9807 = vmatmul.mubr.bf16.gmra.mxu0 %v9552
    %v9808 = vpop.f32.mrf.mxu0
    %v9809 = vadd.f32 0.0, %v9808
    %v9810 = vpop.f32.mrf.mxu0
    %v9811 = vadd.f32 0.0, %v9810
    %v9812 = vpop.f32.mrf.mxu0
    %v9813 = vpop.f32.mrf.mxu0
    %9814 = vdwg.mxu0
    %9815 = vmatprep.subr.bf16.mxu0 %v8008
    %9816 = vmatpush1.bf16.msra.mxu0 %v8007
    %9817 = vmatprep.subr.bf16.mxu0 %v8000
    %9818 = vmatpush1.bf16.msra.mxu0 %v7999
    %9819 = vmatprep.subr.bf16.mxu0 %v7992
    %9820 = vmatpush1.bf16.msra.mxu0 %v7991
    %9821 = vmatprep.subr.bf16.mxu0 %v7984
    %9822 = vmatpush1.bf16.msra.mxu0 %v7983
    %9823 = vmatprep.subr.bf16.mxu0 %v7976
    %9824 = vmatpush1.bf16.msra.mxu0 %v7975
    %9825 = vmatprep.subr.bf16.mxu0 %v7968
    %9826 = vmatpush1.bf16.msra.mxu0 %v7967
    %9827 = vmatprep.subr.bf16.mxu0 %v7960
    %9828 = vmatpush1.bf16.msra.mxu0 %v7959
    %9829 = vmatprep.subr.bf16.mxu0 %v7952
    %9830 = vmatpush1.bf16.msra.mxu0 %v7951
    %9831 = vmatprep.subr.bf16.mxu0 %v8072
    %9832 = vmatpush2.bf16.msra.mxu0 %v8071
    %9833 = vmatprep.subr.bf16.mxu0 %v8064
    %9834 = vmatpush2.bf16.msra.mxu0 %v8063
    %9835 = vmatprep.subr.bf16.mxu0 %v8056
    %9836 = vmatpush2.bf16.msra.mxu0 %v8055
    %9837 = vmatprep.subr.bf16.mxu0 %v8048
    %9838 = vmatpush2.bf16.msra.mxu0 %v8047
    %9839 = vmatprep.subr.bf16.mxu0 %v8040
    %9840 = vmatpush2.bf16.msra.mxu0 %v8039
    %9841 = vmatprep.subr.bf16.mxu0 %v8032
    %9842 = vmatpush2.bf16.msra.mxu0 %v8031
    %9843 = vmatprep.subr.bf16.mxu0 %v8024
    %9844 = vmatpush2.bf16.msra.mxu0 %v8023
    %9845 = vmatprep.subr.bf16.mxu0 %v8016
    %9846 = vmatpush2.bf16.msra.mxu0 %v8015
    %9847 = vmatprep.mubr.bf16.mxu0 %v9573
    %9848 = vmatmul.mubr.bf16.gmra.mxu0 %v9566
    %v9849 = vpop.f32.mrf.mxu0
    %v9850 = vadd.f32 %v9809, %v9849
    %v9851 = vpop.f32.mrf.mxu0
    %v9852 = vadd.f32 %v9811, %v9851
    %v9853 = vpop.f32.mrf.mxu0
    %v9854 = vpop.f32.mrf.mxu0
    %9855 = vdwg.mxu0
    %9856 = vmatprep.subr.bf16.mxu0 %v8136
    %9857 = vmatpush1.bf16.msra.mxu0 %v8135
    %9858 = vmatprep.subr.bf16.mxu0 %v8128
    %9859 = vmatpush1.bf16.msra.mxu0 %v8127
    %9860 = vmatprep.subr.bf16.mxu0 %v8120
    %9861 = vmatpush1.bf16.msra.mxu0 %v8119
    %9862 = vmatprep.subr.bf16.mxu0 %v8112
    %9863 = vmatpush1.bf16.msra.mxu0 %v8111
    %9864 = vmatprep.subr.bf16.mxu0 %v8104
    %9865 = vmatpush1.bf16.msra.mxu0 %v8103
    %9866 = vmatprep.subr.bf16.mxu0 %v8096
    %9867 = vmatpush1.bf16.msra.mxu0 %v8095
    %9868 = vmatprep.subr.bf16.mxu0 %v8088
    %9869 = vmatpush1.bf16.msra.mxu0 %v8087
    %9870 = vmatprep.subr.bf16.mxu0 %v8080
    %9871 = vmatpush1.bf16.msra.mxu0 %v8079
    %9872 = vmatprep.subr.bf16.mxu0 %v8200
    %9873 = vmatpush2.bf16.msra.mxu0 %v8199
    %9874 = vmatprep.subr.bf16.mxu0 %v8192
    %9875 = vmatpush2.bf16.msra.mxu0 %v8191
    %9876 = vmatprep.subr.bf16.mxu0 %v8184
    %9877 = vmatpush2.bf16.msra.mxu0 %v8183
    %9878 = vmatprep.subr.bf16.mxu0 %v8176
    %9879 = vmatpush2.bf16.msra.mxu0 %v8175
    %9880 = vmatprep.subr.bf16.mxu0 %v8168
    %9881 = vmatpush2.bf16.msra.mxu0 %v8167
    %9882 = vmatprep.subr.bf16.mxu0 %v8160
    %9883 = vmatpush2.bf16.msra.mxu0 %v8159
    %9884 = vmatprep.subr.bf16.mxu0 %v8152
    %9885 = vmatpush2.bf16.msra.mxu0 %v8151
    %9886 = vmatprep.subr.bf16.mxu0 %v8144
    %9887 = vmatpush2.bf16.msra.mxu0 %v8143
    %9888 = vmatprep.mubr.bf16.mxu0 %v9587
    %9889 = vmatmul.mubr.bf16.gmra.mxu0 %v9580
    %v9890 = vpop.f32.mrf.mxu0
    %v9891 = vadd.f32 %v9850, %v9890
    %v9892 = vpop.f32.mrf.mxu0
    %v9893 = vadd.f32 %v9852, %v9892
    %v9894 = vpop.f32.mrf.mxu0
    %v9895 = vpop.f32.mrf.mxu0
    %9896 = vdwg.mxu0
    %9897 = vmatprep.subr.bf16.mxu0 %v8264
    %9898 = vmatpush1.bf16.msra.mxu0 %v8263
    %9899 = vmatprep.subr.bf16.mxu0 %v8256
    %9900 = vmatpush1.bf16.msra.mxu0 %v8255
    %9901 = vmatprep.subr.bf16.mxu0 %v8248
    %9902 = vmatpush1.bf16.msra.mxu0 %v8247
    %9903 = vmatprep.subr.bf16.mxu0 %v8240
    %9904 = vmatpush1.bf16.msra.mxu0 %v8239
    %9905 = vmatprep.subr.bf16.mxu0 %v8232
    %9906 = vmatpush1.bf16.msra.mxu0 %v8231
    %9907 = vmatprep.subr.bf16.mxu0 %v8224
    %9908 = vmatpush1.bf16.msra.mxu0 %v8223
    %9909 = vmatprep.subr.bf16.mxu0 %v8216
    %9910 = vmatpush1.bf16.msra.mxu0 %v8215
    %9911 = vmatprep.subr.bf16.mxu0 %v8208
    %9912 = vmatpush1.bf16.msra.mxu0 %v8207
    %9913 = vmatprep.subr.bf16.mxu0 %v8328
    %9914 = vmatpush2.bf16.msra.mxu0 %v8327
    %9915 = vmatprep.subr.bf16.mxu0 %v8320
    %9916 = vmatpush2.bf16.msra.mxu0 %v8319
    %9917 = vmatprep.subr.bf16.mxu0 %v8312
    %9918 = vmatpush2.bf16.msra.mxu0 %v8311
    %9919 = vmatprep.subr.bf16.mxu0 %v8304
    %9920 = vmatpush2.bf16.msra.mxu0 %v8303
    %9921 = vmatprep.subr.bf16.mxu0 %v8296
    %9922 = vmatpush2.bf16.msra.mxu0 %v8295
    %9923 = vmatprep.subr.bf16.mxu0 %v8288
    %9924 = vmatpush2.bf16.msra.mxu0 %v8287
    %9925 = vmatprep.subr.bf16.mxu0 %v8280
    %9926 = vmatpush2.bf16.msra.mxu0 %v8279
    %9927 = vmatprep.subr.bf16.mxu0 %v8272
    %9928 = vmatpush2.bf16.msra.mxu0 %v8271
    %9929 = vmatprep.mubr.bf16.mxu0 %v9601
    %9930 = vmatmul.mubr.bf16.gmra.mxu0 %v9594
    %v9931 = vpop.f32.mrf.mxu0
    %v9932 = vadd.f32 %v9891, %v9931
    %v9933 = vpop.f32.mrf.mxu0
    %v9934 = vadd.f32 %v9893, %v9933
    %v9935 = vpop.f32.mrf.mxu0
    %v9936 = vpop.f32.mrf.mxu0
    %9937 = vdwg.mxu0
    %9938 = vmatprep.subr.bf16.mxu0 %v7882
    %9939 = vmatpush1.bf16.msra.mxu0 %v7881
    %9940 = vmatprep.subr.bf16.mxu0 %v7874
    %9941 = vmatpush1.bf16.msra.mxu0 %v7873
    %9942 = vmatprep.subr.bf16.mxu0 %v7866
    %9943 = vmatpush1.bf16.msra.mxu0 %v7865
    %9944 = vmatprep.subr.bf16.mxu0 %v7858
    %9945 = vmatpush1.bf16.msra.mxu0 %v7857
    %9946 = vmatprep.subr.bf16.mxu0 %v7850
    %9947 = vmatpush1.bf16.msra.mxu0 %v7849
    %9948 = vmatprep.subr.bf16.mxu0 %v7842
    %9949 = vmatpush1.bf16.msra.mxu0 %v7841
    %9950 = vmatprep.subr.bf16.mxu0 %v7834
    %9951 = vmatpush1.bf16.msra.mxu0 %v7833
    %9952 = vmatprep.subr.bf16.mxu0 %v7826
    %9953 = vmatpush1.bf16.msra.mxu0 %v7825
    %9954 = vmatprep.subr.bf16.mxu0 %v7946
    %9955 = vmatpush2.bf16.msra.mxu0 %v7945
    %9956 = vmatprep.subr.bf16.mxu0 %v7938
    %9957 = vmatpush2.bf16.msra.mxu0 %v7937
    %9958 = vmatprep.subr.bf16.mxu0 %v7930
    %9959 = vmatpush2.bf16.msra.mxu0 %v7929
    %9960 = vmatprep.subr.bf16.mxu0 %v7922
    %9961 = vmatpush2.bf16.msra.mxu0 %v7921
    %9962 = vmatprep.subr.bf16.mxu0 %v7914
    %9963 = vmatpush2.bf16.msra.mxu0 %v7913
    %9964 = vmatprep.subr.bf16.mxu0 %v7906
    %9965 = vmatpush2.bf16.msra.mxu0 %v7905
    %9966 = vmatprep.subr.bf16.mxu0 %v7898
    %9967 = vmatpush2.bf16.msra.mxu0 %v7897
    %9968 = vmatprep.subr.bf16.mxu0 %v7890
    %9969 = vmatpush2.bf16.msra.mxu0 %v7889
    %9970 = vmatprep.mubr.bf16.mxu0 %v9559
    %9971 = vmatmul.mubr.bf16.gmra.mxu0 %v9552
    %v9972 = vpop.f32.mrf.mxu0
    %v9973 = vadd.f32 0.0, %v9972
    %v9974 = vpop.f32.mrf.mxu0
    %v9975 = vadd.f32 0.0, %v9974
    %v9976 = vpop.f32.mrf.mxu0
    %v9977 = vpop.f32.mrf.mxu0
    %9978 = vdwg.mxu0
    %9979 = vmatprep.subr.bf16.mxu0 %v8010
    %9980 = vmatpush1.bf16.msra.mxu0 %v8009
    %9981 = vmatprep.subr.bf16.mxu0 %v8002
    %9982 = vmatpush1.bf16.msra.mxu0 %v8001
    %9983 = vmatprep.subr.bf16.mxu0 %v7994
    %9984 = vmatpush1.bf16.msra.mxu0 %v7993
    %9985 = vmatprep.subr.bf16.mxu0 %v7986
    %9986 = vmatpush1.bf16.msra.mxu0 %v7985
    %9987 = vmatprep.subr.bf16.mxu0 %v7978
    %9988 = vmatpush1.bf16.msra.mxu0 %v7977
    %9989 = vmatprep.subr.bf16.mxu0 %v7970
    %9990 = vmatpush1.bf16.msra.mxu0 %v7969
    %9991 = vmatprep.subr.bf16.mxu0 %v7962
    %9992 = vmatpush1.bf16.msra.mxu0 %v7961
    %9993 = vmatprep.subr.bf16.mxu0 %v7954
    %9994 = vmatpush1.bf16.msra.mxu0 %v7953
    %9995 = vmatprep.subr.bf16.mxu0 %v8074
    %9996 = vmatpush2.bf16.msra.mxu0 %v8073
    %9997 = vmatprep.subr.bf16.mxu0 %v8066
    %9998 = vmatpush2.bf16.msra.mxu0 %v8065
    %9999 = vmatprep.subr.bf16.mxu0 %v8058
    %10000 = vmatpush2.bf16.msra.mxu0 %v8057
    %10001 = vmatprep.subr.bf16.mxu0 %v8050
    %10002 = vmatpush2.bf16.msra.mxu0 %v8049
    %10003 = vmatprep.subr.bf16.mxu0 %v8042
    %10004 = vmatpush2.bf16.msra.mxu0 %v8041
    %10005 = vmatprep.subr.bf16.mxu0 %v8034
    %10006 = vmatpush2.bf16.msra.mxu0 %v8033
    %10007 = vmatprep.subr.bf16.mxu0 %v8026
    %10008 = vmatpush2.bf16.msra.mxu0 %v8025
    %10009 = vmatprep.subr.bf16.mxu0 %v8018
    %10010 = vmatpush2.bf16.msra.mxu0 %v8017
    %10011 = vmatprep.mubr.bf16.mxu0 %v9573
    %10012 = vmatmul.mubr.bf16.gmra.mxu0 %v9566
    %v10013 = vpop.f32.mrf.mxu0
    %v10014 = vadd.f32 %v9973, %v10013
    %v10015 = vpop.f32.mrf.mxu0
    %v10016 = vadd.f32 %v9975, %v10015
    %v10017 = vpop.f32.mrf.mxu0
    %v10018 = vpop.f32.mrf.mxu0
    %10019 = vdwg.mxu0
    %10020 = vmatprep.subr.bf16.mxu0 %v8138
    %10021 = vmatpush1.bf16.msra.mxu0 %v8137
    %10022 = vmatprep.subr.bf16.mxu0 %v8130
    %10023 = vmatpush1.bf16.msra.mxu0 %v8129
    %10024 = vmatprep.subr.bf16.mxu0 %v8122
    %10025 = vmatpush1.bf16.msra.mxu0 %v8121
    %10026 = vmatprep.subr.bf16.mxu0 %v8114
    %10027 = vmatpush1.bf16.msra.mxu0 %v8113
    %10028 = vmatprep.subr.bf16.mxu0 %v8106
    %10029 = vmatpush1.bf16.msra.mxu0 %v8105
    %10030 = vmatprep.subr.bf16.mxu0 %v8098
    %10031 = vmatpush1.bf16.msra.mxu0 %v8097
    %10032 = vmatprep.subr.bf16.mxu0 %v8090
    %10033 = vmatpush1.bf16.msra.mxu0 %v8089
    %10034 = vmatprep.subr.bf16.mxu0 %v8082
    %10035 = vmatpush1.bf16.msra.mxu0 %v8081
    %10036 = vmatprep.subr.bf16.mxu0 %v8202
    %10037 = vmatpush2.bf16.msra.mxu0 %v8201
    %10038 = vmatprep.subr.bf16.mxu0 %v8194
    %10039 = vmatpush2.bf16.msra.mxu0 %v8193
    %10040 = vmatprep.subr.bf16.mxu0 %v8186
    %10041 = vmatpush2.bf16.msra.mxu0 %v8185
    %10042 = vmatprep.subr.bf16.mxu0 %v8178
    %10043 = vmatpush2.bf16.msra.mxu0 %v8177
    %10044 = vmatprep.subr.bf16.mxu0 %v8170
    %10045 = vmatpush2.bf16.msra.mxu0 %v8169
    %10046 = vmatprep.subr.bf16.mxu0 %v8162
    %10047 = vmatpush2.bf16.msra.mxu0 %v8161
    %10048 = vmatprep.subr.bf16.mxu0 %v8154
    %10049 = vmatpush2.bf16.msra.mxu0 %v8153
    %10050 = vmatprep.subr.bf16.mxu0 %v8146
    %10051 = vmatpush2.bf16.msra.mxu0 %v8145
    %10052 = vmatprep.mubr.bf16.mxu0 %v9587
    %10053 = vmatmul.mubr.bf16.gmra.mxu0 %v9580
    %v10054 = vpop.f32.mrf.mxu0
    %v10055 = vadd.f32 %v10014, %v10054
    %v10056 = vpop.f32.mrf.mxu0
    %v10057 = vadd.f32 %v10016, %v10056
    %v10058 = vpop.f32.mrf.mxu0
    %v10059 = vpop.f32.mrf.mxu0
    %10060 = vdwg.mxu0
    %10061 = vmatprep.subr.bf16.mxu0 %v8266
    %10062 = vmatpush1.bf16.msra.mxu0 %v8265
    %10063 = vmatprep.subr.bf16.mxu0 %v8258
    %10064 = vmatpush1.bf16.msra.mxu0 %v8257
    %10065 = vmatprep.subr.bf16.mxu0 %v8250
    %10066 = vmatpush1.bf16.msra.mxu0 %v8249
    %10067 = vmatprep.subr.bf16.mxu0 %v8242
    %10068 = vmatpush1.bf16.msra.mxu0 %v8241
    %10069 = vmatprep.subr.bf16.mxu0 %v8234
    %10070 = vmatpush1.bf16.msra.mxu0 %v8233
    %10071 = vmatprep.subr.bf16.mxu0 %v8226
    %10072 = vmatpush1.bf16.msra.mxu0 %v8225
    %10073 = vmatprep.subr.bf16.mxu0 %v8218
    %10074 = vmatpush1.bf16.msra.mxu0 %v8217
    %10075 = vmatprep.subr.bf16.mxu0 %v8210
    %10076 = vmatpush1.bf16.msra.mxu0 %v8209
    %10077 = vmatprep.subr.bf16.mxu0 %v8330
    %10078 = vmatpush2.bf16.msra.mxu0 %v8329
    %10079 = vmatprep.subr.bf16.mxu0 %v8322
    %10080 = vmatpush2.bf16.msra.mxu0 %v8321
    %10081 = vmatprep.subr.bf16.mxu0 %v8314
    %10082 = vmatpush2.bf16.msra.mxu0 %v8313
    %10083 = vmatprep.subr.bf16.mxu0 %v8306
    %10084 = vmatpush2.bf16.msra.mxu0 %v8305
    %10085 = vmatprep.subr.bf16.mxu0 %v8298
    %10086 = vmatpush2.bf16.msra.mxu0 %v8297
    %10087 = vmatprep.subr.bf16.mxu0 %v8290
    %10088 = vmatpush2.bf16.msra.mxu0 %v8289
    %10089 = vmatprep.subr.bf16.mxu0 %v8282
    %10090 = vmatpush2.bf16.msra.mxu0 %v8281
    %10091 = vmatprep.subr.bf16.mxu0 %v8274
    %10092 = vmatpush2.bf16.msra.mxu0 %v8273
    %10093 = vmatprep.mubr.bf16.mxu0 %v9601
    %10094 = vmatmul.mubr.bf16.gmra.mxu0 %v9594
    %v10095 = vpop.f32.mrf.mxu0
    %v10096 = vadd.f32 %v10055, %v10095
    %v10097 = vpop.f32.mrf.mxu0
    %v10098 = vadd.f32 %v10057, %v10097
    %v10099 = vpop.f32.mrf.mxu0
    %v10100 = vpop.f32.mrf.mxu0
    %10101 = vdwg.mxu0
    %10102 = vmatprep.subr.bf16.mxu0 %v7884
    %10103 = vmatpush1.bf16.msra.mxu0 %v7883
    %10104 = vmatprep.subr.bf16.mxu0 %v7876
    %10105 = vmatpush1.bf16.msra.mxu0 %v7875
    %10106 = vmatprep.subr.bf16.mxu0 %v7868
    %10107 = vmatpush1.bf16.msra.mxu0 %v7867
    %10108 = vmatprep.subr.bf16.mxu0 %v7860
    %10109 = vmatpush1.bf16.msra.mxu0 %v7859
    %10110 = vmatprep.subr.bf16.mxu0 %v7852
    %10111 = vmatpush1.bf16.msra.mxu0 %v7851
    %10112 = vmatprep.subr.bf16.mxu0 %v7844
    %10113 = vmatpush1.bf16.msra.mxu0 %v7843
    %10114 = vmatprep.subr.bf16.mxu0 %v7836
    %10115 = vmatpush1.bf16.msra.mxu0 %v7835
    %10116 = vmatprep.subr.bf16.mxu0 %v7828
    %10117 = vmatpush1.bf16.msra.mxu0 %v7827
    %10118 = vmatprep.subr.bf16.mxu0 %v7948
    %10119 = vmatpush2.bf16.msra.mxu0 %v7947
    %10120 = vmatprep.subr.bf16.mxu0 %v7940
    %10121 = vmatpush2.bf16.msra.mxu0 %v7939
    %10122 = vmatprep.subr.bf16.mxu0 %v7932
    %10123 = vmatpush2.bf16.msra.mxu0 %v7931
    %10124 = vmatprep.subr.bf16.mxu0 %v7924
    %10125 = vmatpush2.bf16.msra.mxu0 %v7923
    %10126 = vmatprep.subr.bf16.mxu0 %v7916
    %10127 = vmatpush2.bf16.msra.mxu0 %v7915
    %10128 = vmatprep.subr.bf16.mxu0 %v7908
    %10129 = vmatpush2.bf16.msra.mxu0 %v7907
    %10130 = vmatprep.subr.bf16.mxu0 %v7900
    %10131 = vmatpush2.bf16.msra.mxu0 %v7899
    %10132 = vmatprep.subr.bf16.mxu0 %v7892
    %10133 = vmatpush2.bf16.msra.mxu0 %v7891
    %10134 = vmatprep.mubr.bf16.mxu0 %v9559
    %10135 = vmatmul.mubr.bf16.gmra.mxu0 %v9552
    %v10136 = vpop.f32.mrf.mxu0
    %v10137 = vadd.f32 0.0, %v10136
    %v10138 = vpop.f32.mrf.mxu0
    %v10139 = vadd.f32 0.0, %v10138
    %v10140 = vpop.f32.mrf.mxu0
    %v10141 = vpop.f32.mrf.mxu0
    %10142 = vdwg.mxu0
    %10143 = vmatprep.subr.bf16.mxu0 %v8012
    %10144 = vmatpush1.bf16.msra.mxu0 %v8011
    %10145 = vmatprep.subr.bf16.mxu0 %v8004
    %10146 = vmatpush1.bf16.msra.mxu0 %v8003
    %10147 = vmatprep.subr.bf16.mxu0 %v7996
    %10148 = vmatpush1.bf16.msra.mxu0 %v7995
    %10149 = vmatprep.subr.bf16.mxu0 %v7988
    %10150 = vmatpush1.bf16.msra.mxu0 %v7987
    %10151 = vmatprep.subr.bf16.mxu0 %v7980
    %10152 = vmatpush1.bf16.msra.mxu0 %v7979
    %10153 = vmatprep.subr.bf16.mxu0 %v7972
    %10154 = vmatpush1.bf16.msra.mxu0 %v7971
    %10155 = vmatprep.subr.bf16.mxu0 %v7964
    %10156 = vmatpush1.bf16.msra.mxu0 %v7963
    %10157 = vmatprep.subr.bf16.mxu0 %v7956
    %10158 = vmatpush1.bf16.msra.mxu0 %v7955
    %10159 = vmatprep.subr.bf16.mxu0 %v8076
    %10160 = vmatpush2.bf16.msra.mxu0 %v8075
    %10161 = vmatprep.subr.bf16.mxu0 %v8068
    %10162 = vmatpush2.bf16.msra.mxu0 %v8067
    %10163 = vmatprep.subr.bf16.mxu0 %v8060
    %10164 = vmatpush2.bf16.msra.mxu0 %v8059
    %10165 = vmatprep.subr.bf16.mxu0 %v8052
    %10166 = vmatpush2.bf16.msra.mxu0 %v8051
    %10167 = vmatprep.subr.bf16.mxu0 %v8044
    %10168 = vmatpush2.bf16.msra.mxu0 %v8043
    %10169 = vmatprep.subr.bf16.mxu0 %v8036
    %10170 = vmatpush2.bf16.msra.mxu0 %v8035
    %10171 = vmatprep.subr.bf16.mxu0 %v8028
    %10172 = vmatpush2.bf16.msra.mxu0 %v8027
    %10173 = vmatprep.subr.bf16.mxu0 %v8020
    %10174 = vmatpush2.bf16.msra.mxu0 %v8019
    %10175 = vmatprep.mubr.bf16.mxu0 %v9573
    %10176 = vmatmul.mubr.bf16.gmra.mxu0 %v9566
    %v10177 = vpop.f32.mrf.mxu0
    %v10178 = vadd.f32 %v10137, %v10177
    %v10179 = vpop.f32.mrf.mxu0
    %v10180 = vadd.f32 %v10139, %v10179
    %v10181 = vpop.f32.mrf.mxu0
    %v10182 = vpop.f32.mrf.mxu0
    %10183 = vdwg.mxu0
    %10184 = vmatprep.subr.bf16.mxu0 %v8140
    %10185 = vmatpush1.bf16.msra.mxu0 %v8139
    %10186 = vmatprep.subr.bf16.mxu0 %v8132
    %10187 = vmatpush1.bf16.msra.mxu0 %v8131
    %10188 = vmatprep.subr.bf16.mxu0 %v8124
    %10189 = vmatpush1.bf16.msra.mxu0 %v8123
    %10190 = vmatprep.subr.bf16.mxu0 %v8116
    %10191 = vmatpush1.bf16.msra.mxu0 %v8115
    %10192 = vmatprep.subr.bf16.mxu0 %v8108
    %10193 = vmatpush1.bf16.msra.mxu0 %v8107
    %10194 = vmatprep.subr.bf16.mxu0 %v8100
    %10195 = vmatpush1.bf16.msra.mxu0 %v8099
    %10196 = vmatprep.subr.bf16.mxu0 %v8092
    %10197 = vmatpush1.bf16.msra.mxu0 %v8091
    %10198 = vmatprep.subr.bf16.mxu0 %v8084
    %10199 = vmatpush1.bf16.msra.mxu0 %v8083
    %10200 = vmatprep.subr.bf16.mxu0 %v8204
    %10201 = vmatpush2.bf16.msra.mxu0 %v8203
    %10202 = vmatprep.subr.bf16.mxu0 %v8196
    %10203 = vmatpush2.bf16.msra.mxu0 %v8195
    %10204 = vmatprep.subr.bf16.mxu0 %v8188
    %10205 = vmatpush2.bf16.msra.mxu0 %v8187
    %10206 = vmatprep.subr.bf16.mxu0 %v8180
    %10207 = vmatpush2.bf16.msra.mxu0 %v8179
    %10208 = vmatprep.subr.bf16.mxu0 %v8172
    %10209 = vmatpush2.bf16.msra.mxu0 %v8171
    %10210 = vmatprep.subr.bf16.mxu0 %v8164
    %10211 = vmatpush2.bf16.msra.mxu0 %v8163
    %10212 = vmatprep.subr.bf16.mxu0 %v8156
    %10213 = vmatpush2.bf16.msra.mxu0 %v8155
    %10214 = vmatprep.subr.bf16.mxu0 %v8148
    %10215 = vmatpush2.bf16.msra.mxu0 %v8147
    %10216 = vmatprep.mubr.bf16.mxu0 %v9587
    %10217 = vmatmul.mubr.bf16.gmra.mxu0 %v9580
    %v10218 = vpop.f32.mrf.mxu0
    %v10219 = vadd.f32 %v10178, %v10218
    %v10220 = vpop.f32.mrf.mxu0
    %v10221 = vadd.f32 %v10180, %v10220
    %v10222 = vpop.f32.mrf.mxu0
    %v10223 = vpop.f32.mrf.mxu0
    %10224 = vdwg.mxu0
    %10225 = vmatprep.subr.bf16.mxu0 %v8268
    %10226 = vmatpush1.bf16.msra.mxu0 %v8267
    %10227 = vmatprep.subr.bf16.mxu0 %v8260
    %10228 = vmatpush1.bf16.msra.mxu0 %v8259
    %10229 = vmatprep.subr.bf16.mxu0 %v8252
    %10230 = vmatpush1.bf16.msra.mxu0 %v8251
    %10231 = vmatprep.subr.bf16.mxu0 %v8244
    %10232 = vmatpush1.bf16.msra.mxu0 %v8243
    %10233 = vmatprep.subr.bf16.mxu0 %v8236
    %10234 = vmatpush1.bf16.msra.mxu0 %v8235
    %10235 = vmatprep.subr.bf16.mxu0 %v8228
    %10236 = vmatpush1.bf16.msra.mxu0 %v8227
    %10237 = vmatprep.subr.bf16.mxu0 %v8220
    %10238 = vmatpush1.bf16.msra.mxu0 %v8219
    %10239 = vmatprep.subr.bf16.mxu0 %v8212
    %10240 = vmatpush1.bf16.msra.mxu0 %v8211
    %10241 = vmatprep.subr.bf16.mxu0 %v8332
    %10242 = vmatpush2.bf16.msra.mxu0 %v8331
    %10243 = vmatprep.subr.bf16.mxu0 %v8324
    %10244 = vmatpush2.bf16.msra.mxu0 %v8323
    %10245 = vmatprep.subr.bf16.mxu0 %v8316
    %10246 = vmatpush2.bf16.msra.mxu0 %v8315
    %10247 = vmatprep.subr.bf16.mxu0 %v8308
    %10248 = vmatpush2.bf16.msra.mxu0 %v8307
    %10249 = vmatprep.subr.bf16.mxu0 %v8300
    %10250 = vmatpush2.bf16.msra.mxu0 %v8299
    %10251 = vmatprep.subr.bf16.mxu0 %v8292
    %10252 = vmatpush2.bf16.msra.mxu0 %v8291
    %10253 = vmatprep.subr.bf16.mxu0 %v8284
    %10254 = vmatpush2.bf16.msra.mxu0 %v8283
    %10255 = vmatprep.subr.bf16.mxu0 %v8276
    %10256 = vmatpush2.bf16.msra.mxu0 %v8275
    %10257 = vmatprep.mubr.bf16.mxu0 %v9601
    %10258 = vmatmul.mubr.bf16.gmra.mxu0 %v9594
    %v10259 = vpop.f32.mrf.mxu0
    %v10260 = vadd.f32 %v10219, %v10259
    %v10261 = vpop.f32.mrf.mxu0
    %v10262 = vadd.f32 %v10221, %v10261
    %v10263 = vpop.f32.mrf.mxu0
    %v10264 = vpop.f32.mrf.mxu0
    %10265 = vdwg.mxu0
    %v10266 = vmax.f32 %v9768, %v9932
    %v10267 = vmax.f32 %v9770, %v9934
    %v10268 = vmax.f32 %v10096, %v10260
    %v10269 = vmax.f32 %v10098, %v10262
    %v10270 = vmax.f32 %v10266, %v10268
    %v10271 = vmax.f32 %v10267, %v10269
    %v10272 = vadd.f32 %v10270, %v9512
    %v10273 = vadd.f32 %v10271, %v9516
    %v10274 = vmax.f32 %v10272, 0.0
    %v10275 = vmax.f32 %v10273, 0.0
    %v10276 = vpack.c.bf16 %v10274, %v10274
    %v10277 = vpack.c.bf16 %v10275, %v10275
    %vm10278 = vcmask 1044484
    %v10279 = vsel %vm10278, %v5746, %v5742
    %v10280 = vsel %vm10278, %v5749, %v5743
    %v10281 = vpack.c.b16 %v10279, %v10279
    %v10282 = vpack.c.b16 %v10280, %v10280
    %v10283 = vsel %vm10278, %v5744, %v5755
    %v10284 = vsel %vm10278, %v5745, %v5757
    %v10285 = vpack.c.b16 %v10283, %v10283
    %v10286 = vpack.c.b16 %v10284, %v10284
    %v10287 = vsel %vm10278, %v5764, %v5763
    %v10288 = vsel %vm10278, %v5767, %v5766
    %v10289 = vpack.c.b16 %v10287, %v10287
    %v10290 = vpack.c.b16 %v10288, %v10288
    %v10291 = vsel %vm10278, %v9539, %v9538
    %v10292 = vsel %vm10278, %v9542, %v9541
    %v10293 = vpack.c.b16 %v10291, %v10291
    %v10294 = vpack.c.b16 %v10292, %v10292
    %v10296 = vshrl.u32 %v10281, 16
    %v10298 = vrot.slane %v10296, 1
    %v10299 = vshll.u32 %v10281, 16
    %v10301 = vrot.slane %v10299, 2
    %v10302 = vor.u32 %v10298, %v10301
    %v10304 = vshrl.u32 %v10282, 16
    %v10306 = vrot.slane %v10304, 1
    %v10307 = vshll.u32 %v10282, 16
    %v10309 = vrot.slane %v10307, 2
    %v10310 = vor.u32 %v10306, %v10309
    %v10312 = vshrl.u32 %v10285, 16
    %v10314 = vrot.slane %v10312, 1
    %v10315 = vshll.u32 %v10285, 16
    %v10317 = vrot.slane %v10315, 2
    %v10318 = vor.u32 %v10314, %v10317
    %v10320 = vshrl.u32 %v10286, 16
    %v10322 = vrot.slane %v10320, 1
    %v10323 = vshll.u32 %v10286, 16
    %v10325 = vrot.slane %v10323, 2
    %v10326 = vor.u32 %v10322, %v10325
    %v10328 = vshrl.u32 %v10289, 16
    %v10330 = vrot.slane %v10328, 1
    %v10331 = vshll.u32 %v10289, 16
    %v10333 = vrot.slane %v10331, 2
    %v10334 = vor.u32 %v10330, %v10333
    %v10336 = vshrl.u32 %v10290, 16
    %v10338 = vrot.slane %v10336, 1
    %v10339 = vshll.u32 %v10290, 16
    %v10341 = vrot.slane %v10339, 2
    %v10342 = vor.u32 %v10338, %v10341
    %v10344 = vshrl.u32 %v10293, 16
    %v10346 = vrot.slane %v10344, 1
    %v10347 = vshll.u32 %v10293, 16
    %v10349 = vrot.slane %v10347, 2
    %v10350 = vor.u32 %v10346, %v10349
    %v10352 = vshrl.u32 %v10294, 16
    %v10354 = vrot.slane %v10352, 1
    %v10355 = vshll.u32 %v10294, 16
    %v10357 = vrot.slane %v10355, 2
    %v10358 = vor.u32 %v10354, %v10357
    %10367 = vmatprep.subr.bf16.mxu0 %v7878
    %10368 = vmatpush1.bf16.msra.mxu0 %v7877
    %10369 = vmatprep.subr.bf16.mxu0 %v7870
    %10370 = vmatpush1.bf16.msra.mxu0 %v7869
    %10371 = vmatprep.subr.bf16.mxu0 %v7862
    %10372 = vmatpush1.bf16.msra.mxu0 %v7861
    %10373 = vmatprep.subr.bf16.mxu0 %v7854
    %10374 = vmatpush1.bf16.msra.mxu0 %v7853
    %10375 = vmatprep.subr.bf16.mxu0 %v7846
    %10376 = vmatpush1.bf16.msra.mxu0 %v7845
    %10377 = vmatprep.subr.bf16.mxu0 %v7838
    %10378 = vmatpush1.bf16.msra.mxu0 %v7837
    %10379 = vmatprep.subr.bf16.mxu0 %v7830
    %10380 = vmatpush1.bf16.msra.mxu0 %v7829
    %10381 = vmatprep.subr.bf16.mxu0 %v7822
    %10382 = vmatpush1.bf16.msra.mxu0 %v7821
    %10383 = vmatprep.subr.bf16.mxu0 %v7942
    %10384 = vmatpush2.bf16.msra.mxu0 %v7941
    %10385 = vmatprep.subr.bf16.mxu0 %v7934
    %10386 = vmatpush2.bf16.msra.mxu0 %v7933
    %10387 = vmatprep.subr.bf16.mxu0 %v7926
    %10388 = vmatpush2.bf16.msra.mxu0 %v7925
    %10389 = vmatprep.subr.bf16.mxu0 %v7918
    %10390 = vmatpush2.bf16.msra.mxu0 %v7917
    %10391 = vmatprep.subr.bf16.mxu0 %v7910
    %10392 = vmatpush2.bf16.msra.mxu0 %v7909
    %10393 = vmatprep.subr.bf16.mxu0 %v7902
    %10394 = vmatpush2.bf16.msra.mxu0 %v7901
    %10395 = vmatprep.subr.bf16.mxu0 %v7894
    %10396 = vmatpush2.bf16.msra.mxu0 %v7893
    %10397 = vmatprep.subr.bf16.mxu0 %v7886
    %10398 = vmatpush2.bf16.msra.mxu0 %v7885
    %10399 = vmatprep.mubr.bf16.mxu0 %v10310
    %10400 = vmatmul.mubr.bf16.gmra.mxu0 %v10302
    %v10401 = vpop.f32.mrf.mxu0
    %v10402 = vadd.f32 0.0, %v10401
    %v10403 = vpop.f32.mrf.mxu0
    %v10404 = vadd.f32 0.0, %v10403
    %v10405 = vpop.f32.mrf.mxu0
    %v10406 = vpop.f32.mrf.mxu0
    %10407 = vdwg.mxu0
    %10408 = vmatprep.subr.bf16.mxu0 %v8006
    %10409 = vmatpush1.bf16.msra.mxu0 %v8005
    %10410 = vmatprep.subr.bf16.mxu0 %v7998
    %10411 = vmatpush1.bf16.msra.mxu0 %v7997
    %10412 = vmatprep.subr.bf16.mxu0 %v7990
    %10413 = vmatpush1.bf16.msra.mxu0 %v7989
    %10414 = vmatprep.subr.bf16.mxu0 %v7982
    %10415 = vmatpush1.bf16.msra.mxu0 %v7981
    %10416 = vmatprep.subr.bf16.mxu0 %v7974
    %10417 = vmatpush1.bf16.msra.mxu0 %v7973
    %10418 = vmatprep.subr.bf16.mxu0 %v7966
    %10419 = vmatpush1.bf16.msra.mxu0 %v7965
    %10420 = vmatprep.subr.bf16.mxu0 %v7958
    %10421 = vmatpush1.bf16.msra.mxu0 %v7957
    %10422 = vmatprep.subr.bf16.mxu0 %v7950
    %10423 = vmatpush1.bf16.msra.mxu0 %v7949
    %10424 = vmatprep.subr.bf16.mxu0 %v8070
    %10425 = vmatpush2.bf16.msra.mxu0 %v8069
    %10426 = vmatprep.subr.bf16.mxu0 %v8062
    %10427 = vmatpush2.bf16.msra.mxu0 %v8061
    %10428 = vmatprep.subr.bf16.mxu0 %v8054
    %10429 = vmatpush2.bf16.msra.mxu0 %v8053
    %10430 = vmatprep.subr.bf16.mxu0 %v8046
    %10431 = vmatpush2.bf16.msra.mxu0 %v8045
    %10432 = vmatprep.subr.bf16.mxu0 %v8038
    %10433 = vmatpush2.bf16.msra.mxu0 %v8037
    %10434 = vmatprep.subr.bf16.mxu0 %v8030
    %10435 = vmatpush2.bf16.msra.mxu0 %v8029
    %10436 = vmatprep.subr.bf16.mxu0 %v8022
    %10437 = vmatpush2.bf16.msra.mxu0 %v8021
    %10438 = vmatprep.subr.bf16.mxu0 %v8014
    %10439 = vmatpush2.bf16.msra.mxu0 %v8013
    %10440 = vmatprep.mubr.bf16.mxu0 %v10326
    %10441 = vmatmul.mubr.bf16.gmra.mxu0 %v10318
    %v10442 = vpop.f32.mrf.mxu0
    %v10443 = vadd.f32 %v10402, %v10442
    %v10444 = vpop.f32.mrf.mxu0
    %v10445 = vadd.f32 %v10404, %v10444
    %v10446 = vpop.f32.mrf.mxu0
    %v10447 = vpop.f32.mrf.mxu0
    %10448 = vdwg.mxu0
    %10449 = vmatprep.subr.bf16.mxu0 %v8134
    %10450 = vmatpush1.bf16.msra.mxu0 %v8133
    %10451 = vmatprep.subr.bf16.mxu0 %v8126
    %10452 = vmatpush1.bf16.msra.mxu0 %v8125
    %10453 = vmatprep.subr.bf16.mxu0 %v8118
    %10454 = vmatpush1.bf16.msra.mxu0 %v8117
    %10455 = vmatprep.subr.bf16.mxu0 %v8110
    %10456 = vmatpush1.bf16.msra.mxu0 %v8109
    %10457 = vmatprep.subr.bf16.mxu0 %v8102
    %10458 = vmatpush1.bf16.msra.mxu0 %v8101
    %10459 = vmatprep.subr.bf16.mxu0 %v8094
    %10460 = vmatpush1.bf16.msra.mxu0 %v8093
    %10461 = vmatprep.subr.bf16.mxu0 %v8086
    %10462 = vmatpush1.bf16.msra.mxu0 %v8085
    %10463 = vmatprep.subr.bf16.mxu0 %v8078
    %10464 = vmatpush1.bf16.msra.mxu0 %v8077
    %10465 = vmatprep.subr.bf16.mxu0 %v8198
    %10466 = vmatpush2.bf16.msra.mxu0 %v8197
    %10467 = vmatprep.subr.bf16.mxu0 %v8190
    %10468 = vmatpush2.bf16.msra.mxu0 %v8189
    %10469 = vmatprep.subr.bf16.mxu0 %v8182
    %10470 = vmatpush2.bf16.msra.mxu0 %v8181
    %10471 = vmatprep.subr.bf16.mxu0 %v8174
    %10472 = vmatpush2.bf16.msra.mxu0 %v8173
    %10473 = vmatprep.subr.bf16.mxu0 %v8166
    %10474 = vmatpush2.bf16.msra.mxu0 %v8165
    %10475 = vmatprep.subr.bf16.mxu0 %v8158
    %10476 = vmatpush2.bf16.msra.mxu0 %v8157
    %10477 = vmatprep.subr.bf16.mxu0 %v8150
    %10478 = vmatpush2.bf16.msra.mxu0 %v8149
    %10479 = vmatprep.subr.bf16.mxu0 %v8142
    %10480 = vmatpush2.bf16.msra.mxu0 %v8141
    %10481 = vmatprep.mubr.bf16.mxu0 %v10342
    %10482 = vmatmul.mubr.bf16.gmra.mxu0 %v10334
    %v10483 = vpop.f32.mrf.mxu0
    %v10484 = vadd.f32 %v10443, %v10483
    %v10485 = vpop.f32.mrf.mxu0
    %v10486 = vadd.f32 %v10445, %v10485
    %v10487 = vpop.f32.mrf.mxu0
    %v10488 = vpop.f32.mrf.mxu0
    %10489 = vdwg.mxu0
    %10490 = vmatprep.subr.bf16.mxu0 %v8262
    %10491 = vmatpush1.bf16.msra.mxu0 %v8261
    %10492 = vmatprep.subr.bf16.mxu0 %v8254
    %10493 = vmatpush1.bf16.msra.mxu0 %v8253
    %10494 = vmatprep.subr.bf16.mxu0 %v8246
    %10495 = vmatpush1.bf16.msra.mxu0 %v8245
    %10496 = vmatprep.subr.bf16.mxu0 %v8238
    %10497 = vmatpush1.bf16.msra.mxu0 %v8237
    %10498 = vmatprep.subr.bf16.mxu0 %v8230
    %10499 = vmatpush1.bf16.msra.mxu0 %v8229
    %10500 = vmatprep.subr.bf16.mxu0 %v8222
    %10501 = vmatpush1.bf16.msra.mxu0 %v8221
    %10502 = vmatprep.subr.bf16.mxu0 %v8214
    %10503 = vmatpush1.bf16.msra.mxu0 %v8213
    %10504 = vmatprep.subr.bf16.mxu0 %v8206
    %10505 = vmatpush1.bf16.msra.mxu0 %v8205
    %10506 = vmatprep.subr.bf16.mxu0 %v8326
    %10507 = vmatpush2.bf16.msra.mxu0 %v8325
    %10508 = vmatprep.subr.bf16.mxu0 %v8318
    %10509 = vmatpush2.bf16.msra.mxu0 %v8317
    %10510 = vmatprep.subr.bf16.mxu0 %v8310
    %10511 = vmatpush2.bf16.msra.mxu0 %v8309
    %10512 = vmatprep.subr.bf16.mxu0 %v8302
    %10513 = vmatpush2.bf16.msra.mxu0 %v8301
    %10514 = vmatprep.subr.bf16.mxu0 %v8294
    %10515 = vmatpush2.bf16.msra.mxu0 %v8293
    %10516 = vmatprep.subr.bf16.mxu0 %v8286
    %10517 = vmatpush2.bf16.msra.mxu0 %v8285
    %10518 = vmatprep.subr.bf16.mxu0 %v8278
    %10519 = vmatpush2.bf16.msra.mxu0 %v8277
    %10520 = vmatprep.subr.bf16.mxu0 %v8270
    %10521 = vmatpush2.bf16.msra.mxu0 %v8269
    %10522 = vmatprep.mubr.bf16.mxu0 %v10358
    %10523 = vmatmul.mubr.bf16.gmra.mxu0 %v10350
    %v10524 = vpop.f32.mrf.mxu0
    %v10525 = vadd.f32 %v10484, %v10524
    %v10526 = vpop.f32.mrf.mxu0
    %v10527 = vadd.f32 %v10486, %v10526
    %v10528 = vpop.f32.mrf.mxu0
    %v10529 = vpop.f32.mrf.mxu0
    %10530 = vdwg.mxu0
    %10531 = vmatprep.subr.bf16.mxu0 %v7880
    %10532 = vmatpush1.bf16.msra.mxu0 %v7879
    %10533 = vmatprep.subr.bf16.mxu0 %v7872
    %10534 = vmatpush1.bf16.msra.mxu0 %v7871
    %10535 = vmatprep.subr.bf16.mxu0 %v7864
    %10536 = vmatpush1.bf16.msra.mxu0 %v7863
    %10537 = vmatprep.subr.bf16.mxu0 %v7856
    %10538 = vmatpush1.bf16.msra.mxu0 %v7855
    %10539 = vmatprep.subr.bf16.mxu0 %v7848
    %10540 = vmatpush1.bf16.msra.mxu0 %v7847
    %10541 = vmatprep.subr.bf16.mxu0 %v7840
    %10542 = vmatpush1.bf16.msra.mxu0 %v7839
    %10543 = vmatprep.subr.bf16.mxu0 %v7832
    %10544 = vmatpush1.bf16.msra.mxu0 %v7831
    %10545 = vmatprep.subr.bf16.mxu0 %v7824
    %10546 = vmatpush1.bf16.msra.mxu0 %v7823
    %10547 = vmatprep.subr.bf16.mxu0 %v7944
    %10548 = vmatpush2.bf16.msra.mxu0 %v7943
    %10549 = vmatprep.subr.bf16.mxu0 %v7936
    %10550 = vmatpush2.bf16.msra.mxu0 %v7935
    %10551 = vmatprep.subr.bf16.mxu0 %v7928
    %10552 = vmatpush2.bf16.msra.mxu0 %v7927
    %10553 = vmatprep.subr.bf16.mxu0 %v7920
    %10554 = vmatpush2.bf16.msra.mxu0 %v7919
    %10555 = vmatprep.subr.bf16.mxu0 %v7912
    %10556 = vmatpush2.bf16.msra.mxu0 %v7911
    %10557 = vmatprep.subr.bf16.mxu0 %v7904
    %10558 = vmatpush2.bf16.msra.mxu0 %v7903
    %10559 = vmatprep.subr.bf16.mxu0 %v7896
    %10560 = vmatpush2.bf16.msra.mxu0 %v7895
    %10561 = vmatprep.subr.bf16.mxu0 %v7888
    %10562 = vmatpush2.bf16.msra.mxu0 %v7887
    %10563 = vmatprep.mubr.bf16.mxu0 %v10310
    %10564 = vmatmul.mubr.bf16.gmra.mxu0 %v10302
    %v10565 = vpop.f32.mrf.mxu0
    %v10566 = vadd.f32 0.0, %v10565
    %v10567 = vpop.f32.mrf.mxu0
    %v10568 = vadd.f32 0.0, %v10567
    %v10569 = vpop.f32.mrf.mxu0
    %v10570 = vpop.f32.mrf.mxu0
    %10571 = vdwg.mxu0
    %10572 = vmatprep.subr.bf16.mxu0 %v8008
    %10573 = vmatpush1.bf16.msra.mxu0 %v8007
    %10574 = vmatprep.subr.bf16.mxu0 %v8000
    %10575 = vmatpush1.bf16.msra.mxu0 %v7999
    %10576 = vmatprep.subr.bf16.mxu0 %v7992
    %10577 = vmatpush1.bf16.msra.mxu0 %v7991
    %10578 = vmatprep.subr.bf16.mxu0 %v7984
    %10579 = vmatpush1.bf16.msra.mxu0 %v7983
    %10580 = vmatprep.subr.bf16.mxu0 %v7976
    %10581 = vmatpush1.bf16.msra.mxu0 %v7975
    %10582 = vmatprep.subr.bf16.mxu0 %v7968
    %10583 = vmatpush1.bf16.msra.mxu0 %v7967
    %10584 = vmatprep.subr.bf16.mxu0 %v7960
    %10585 = vmatpush1.bf16.msra.mxu0 %v7959
    %10586 = vmatprep.subr.bf16.mxu0 %v7952
    %10587 = vmatpush1.bf16.msra.mxu0 %v7951
    %10588 = vmatprep.subr.bf16.mxu0 %v8072
    %10589 = vmatpush2.bf16.msra.mxu0 %v8071
    %10590 = vmatprep.subr.bf16.mxu0 %v8064
    %10591 = vmatpush2.bf16.msra.mxu0 %v8063
    %10592 = vmatprep.subr.bf16.mxu0 %v8056
    %10593 = vmatpush2.bf16.msra.mxu0 %v8055
    %10594 = vmatprep.subr.bf16.mxu0 %v8048
    %10595 = vmatpush2.bf16.msra.mxu0 %v8047
    %10596 = vmatprep.subr.bf16.mxu0 %v8040
    %10597 = vmatpush2.bf16.msra.mxu0 %v8039
    %10598 = vmatprep.subr.bf16.mxu0 %v8032
    %10599 = vmatpush2.bf16.msra.mxu0 %v8031
    %10600 = vmatprep.subr.bf16.mxu0 %v8024
    %10601 = vmatpush2.bf16.msra.mxu0 %v8023
    %10602 = vmatprep.subr.bf16.mxu0 %v8016
    %10603 = vmatpush2.bf16.msra.mxu0 %v8015
    %10604 = vmatprep.mubr.bf16.mxu0 %v10326
    %10605 = vmatmul.mubr.bf16.gmra.mxu0 %v10318
    %v10606 = vpop.f32.mrf.mxu0
    %v10607 = vadd.f32 %v10566, %v10606
    %v10608 = vpop.f32.mrf.mxu0
    %v10609 = vadd.f32 %v10568, %v10608
    %v10610 = vpop.f32.mrf.mxu0
    %v10611 = vpop.f32.mrf.mxu0
    %10612 = vdwg.mxu0
    %10613 = vmatprep.subr.bf16.mxu0 %v8136
    %10614 = vmatpush1.bf16.msra.mxu0 %v8135
    %10615 = vmatprep.subr.bf16.mxu0 %v8128
    %10616 = vmatpush1.bf16.msra.mxu0 %v8127
    %10617 = vmatprep.subr.bf16.mxu0 %v8120
    %10618 = vmatpush1.bf16.msra.mxu0 %v8119
    %10619 = vmatprep.subr.bf16.mxu0 %v8112
    %10620 = vmatpush1.bf16.msra.mxu0 %v8111
    %10621 = vmatprep.subr.bf16.mxu0 %v8104
    %10622 = vmatpush1.bf16.msra.mxu0 %v8103
    %10623 = vmatprep.subr.bf16.mxu0 %v8096
    %10624 = vmatpush1.bf16.msra.mxu0 %v8095
    %10625 = vmatprep.subr.bf16.mxu0 %v8088
    %10626 = vmatpush1.bf16.msra.mxu0 %v8087
    %10627 = vmatprep.subr.bf16.mxu0 %v8080
    %10628 = vmatpush1.bf16.msra.mxu0 %v8079
    %10629 = vmatprep.subr.bf16.mxu0 %v8200
    %10630 = vmatpush2.bf16.msra.mxu0 %v8199
    %10631 = vmatprep.subr.bf16.mxu0 %v8192
    %10632 = vmatpush2.bf16.msra.mxu0 %v8191
    %10633 = vmatprep.subr.bf16.mxu0 %v8184
    %10634 = vmatpush2.bf16.msra.mxu0 %v8183
    %10635 = vmatprep.subr.bf16.mxu0 %v8176
    %10636 = vmatpush2.bf16.msra.mxu0 %v8175
    %10637 = vmatprep.subr.bf16.mxu0 %v8168
    %10638 = vmatpush2.bf16.msra.mxu0 %v8167
    %10639 = vmatprep.subr.bf16.mxu0 %v8160
    %10640 = vmatpush2.bf16.msra.mxu0 %v8159
    %10641 = vmatprep.subr.bf16.mxu0 %v8152
    %10642 = vmatpush2.bf16.msra.mxu0 %v8151
    %10643 = vmatprep.subr.bf16.mxu0 %v8144
    %10644 = vmatpush2.bf16.msra.mxu0 %v8143
    %10645 = vmatprep.mubr.bf16.mxu0 %v10342
    %10646 = vmatmul.mubr.bf16.gmra.mxu0 %v10334
    %v10647 = vpop.f32.mrf.mxu0
    %v10648 = vadd.f32 %v10607, %v10647
    %v10649 = vpop.f32.mrf.mxu0
    %v10650 = vadd.f32 %v10609, %v10649
    %v10651 = vpop.f32.mrf.mxu0
    %v10652 = vpop.f32.mrf.mxu0
    %10653 = vdwg.mxu0
    %10654 = vmatprep.subr.bf16.mxu0 %v8264
    %10655 = vmatpush1.bf16.msra.mxu0 %v8263
    %10656 = vmatprep.subr.bf16.mxu0 %v8256
    %10657 = vmatpush1.bf16.msra.mxu0 %v8255
    %10658 = vmatprep.subr.bf16.mxu0 %v8248
    %10659 = vmatpush1.bf16.msra.mxu0 %v8247
    %10660 = vmatprep.subr.bf16.mxu0 %v8240
    %10661 = vmatpush1.bf16.msra.mxu0 %v8239
    %10662 = vmatprep.subr.bf16.mxu0 %v8232
    %10663 = vmatpush1.bf16.msra.mxu0 %v8231
    %10664 = vmatprep.subr.bf16.mxu0 %v8224
    %10665 = vmatpush1.bf16.msra.mxu0 %v8223
    %10666 = vmatprep.subr.bf16.mxu0 %v8216
    %10667 = vmatpush1.bf16.msra.mxu0 %v8215
    %10668 = vmatprep.subr.bf16.mxu0 %v8208
    %10669 = vmatpush1.bf16.msra.mxu0 %v8207
    %10670 = vmatprep.subr.bf16.mxu0 %v8328
    %10671 = vmatpush2.bf16.msra.mxu0 %v8327
    %10672 = vmatprep.subr.bf16.mxu0 %v8320
    %10673 = vmatpush2.bf16.msra.mxu0 %v8319
    %10674 = vmatprep.subr.bf16.mxu0 %v8312
    %10675 = vmatpush2.bf16.msra.mxu0 %v8311
    %10676 = vmatprep.subr.bf16.mxu0 %v8304
    %10677 = vmatpush2.bf16.msra.mxu0 %v8303
    %10678 = vmatprep.subr.bf16.mxu0 %v8296
    %10679 = vmatpush2.bf16.msra.mxu0 %v8295
    %10680 = vmatprep.subr.bf16.mxu0 %v8288
    %10681 = vmatpush2.bf16.msra.mxu0 %v8287
    %10682 = vmatprep.subr.bf16.mxu0 %v8280
    %10683 = vmatpush2.bf16.msra.mxu0 %v8279
    %10684 = vmatprep.subr.bf16.mxu0 %v8272
    %10685 = vmatpush2.bf16.msra.mxu0 %v8271
    %10686 = vmatprep.mubr.bf16.mxu0 %v10358
    %10687 = vmatmul.mubr.bf16.gmra.mxu0 %v10350
    %v10688 = vpop.f32.mrf.mxu0
    %v10689 = vadd.f32 %v10648, %v10688
    %v10690 = vpop.f32.mrf.mxu0
    %v10691 = vadd.f32 %v10650, %v10690
    %v10692 = vpop.f32.mrf.mxu0
    %v10693 = vpop.f32.mrf.mxu0
    %10694 = vdwg.mxu0
    %10695 = vmatprep.subr.bf16.mxu0 %v7882
    %10696 = vmatpush1.bf16.msra.mxu0 %v7881
    %10697 = vmatprep.subr.bf16.mxu0 %v7874
    %10698 = vmatpush1.bf16.msra.mxu0 %v7873
    %10699 = vmatprep.subr.bf16.mxu0 %v7866
    %10700 = vmatpush1.bf16.msra.mxu0 %v7865
    %10701 = vmatprep.subr.bf16.mxu0 %v7858
    %10702 = vmatpush1.bf16.msra.mxu0 %v7857
    %10703 = vmatprep.subr.bf16.mxu0 %v7850
    %10704 = vmatpush1.bf16.msra.mxu0 %v7849
    %10705 = vmatprep.subr.bf16.mxu0 %v7842
    %10706 = vmatpush1.bf16.msra.mxu0 %v7841
    %10707 = vmatprep.subr.bf16.mxu0 %v7834
    %10708 = vmatpush1.bf16.msra.mxu0 %v7833
    %10709 = vmatprep.subr.bf16.mxu0 %v7826
    %10710 = vmatpush1.bf16.msra.mxu0 %v7825
    %10711 = vmatprep.subr.bf16.mxu0 %v7946
    %10712 = vmatpush2.bf16.msra.mxu0 %v7945
    %10713 = vmatprep.subr.bf16.mxu0 %v7938
    %10714 = vmatpush2.bf16.msra.mxu0 %v7937
    %10715 = vmatprep.subr.bf16.mxu0 %v7930
    %10716 = vmatpush2.bf16.msra.mxu0 %v7929
    %10717 = vmatprep.subr.bf16.mxu0 %v7922
    %10718 = vmatpush2.bf16.msra.mxu0 %v7921
    %10719 = vmatprep.subr.bf16.mxu0 %v7914
    %10720 = vmatpush2.bf16.msra.mxu0 %v7913
    %10721 = vmatprep.subr.bf16.mxu0 %v7906
    %10722 = vmatpush2.bf16.msra.mxu0 %v7905
    %10723 = vmatprep.subr.bf16.mxu0 %v7898
    %10724 = vmatpush2.bf16.msra.mxu0 %v7897
    %10725 = vmatprep.subr.bf16.mxu0 %v7890
    %10726 = vmatpush2.bf16.msra.mxu0 %v7889
    %10727 = vmatprep.mubr.bf16.mxu0 %v10310
    %10728 = vmatmul.mubr.bf16.gmra.mxu0 %v10302
    %v10729 = vpop.f32.mrf.mxu0
    %v10730 = vadd.f32 0.0, %v10729
    %v10731 = vpop.f32.mrf.mxu0
    %v10732 = vadd.f32 0.0, %v10731
    %v10733 = vpop.f32.mrf.mxu0
    %v10734 = vpop.f32.mrf.mxu0
    %10735 = vdwg.mxu0
    %10736 = vmatprep.subr.bf16.mxu0 %v8010
    %10737 = vmatpush1.bf16.msra.mxu0 %v8009
    %10738 = vmatprep.subr.bf16.mxu0 %v8002
    %10739 = vmatpush1.bf16.msra.mxu0 %v8001
    %10740 = vmatprep.subr.bf16.mxu0 %v7994
    %10741 = vmatpush1.bf16.msra.mxu0 %v7993
    %10742 = vmatprep.subr.bf16.mxu0 %v7986
    %10743 = vmatpush1.bf16.msra.mxu0 %v7985
    %10744 = vmatprep.subr.bf16.mxu0 %v7978
    %10745 = vmatpush1.bf16.msra.mxu0 %v7977
    %10746 = vmatprep.subr.bf16.mxu0 %v7970
    %10747 = vmatpush1.bf16.msra.mxu0 %v7969
    %10748 = vmatprep.subr.bf16.mxu0 %v7962
    %10749 = vmatpush1.bf16.msra.mxu0 %v7961
    %10750 = vmatprep.subr.bf16.mxu0 %v7954
    %10751 = vmatpush1.bf16.msra.mxu0 %v7953
    %10752 = vmatprep.subr.bf16.mxu0 %v8074
    %10753 = vmatpush2.bf16.msra.mxu0 %v8073
    %10754 = vmatprep.subr.bf16.mxu0 %v8066
    %10755 = vmatpush2.bf16.msra.mxu0 %v8065
    %10756 = vmatprep.subr.bf16.mxu0 %v8058
    %10757 = vmatpush2.bf16.msra.mxu0 %v8057
    %10758 = vmatprep.subr.bf16.mxu0 %v8050
    %10759 = vmatpush2.bf16.msra.mxu0 %v8049
    %10760 = vmatprep.subr.bf16.mxu0 %v8042
    %10761 = vmatpush2.bf16.msra.mxu0 %v8041
    %10762 = vmatprep.subr.bf16.mxu0 %v8034
    %10763 = vmatpush2.bf16.msra.mxu0 %v8033
    %10764 = vmatprep.subr.bf16.mxu0 %v8026
    %10765 = vmatpush2.bf16.msra.mxu0 %v8025
    %10766 = vmatprep.subr.bf16.mxu0 %v8018
    %10767 = vmatpush2.bf16.msra.mxu0 %v8017
    %10768 = vmatprep.mubr.bf16.mxu0 %v10326
    %10769 = vmatmul.mubr.bf16.gmra.mxu0 %v10318
    %v10770 = vpop.f32.mrf.mxu0
    %v10771 = vadd.f32 %v10730, %v10770
    %v10772 = vpop.f32.mrf.mxu0
    %v10773 = vadd.f32 %v10732, %v10772
    %v10774 = vpop.f32.mrf.mxu0
    %v10775 = vpop.f32.mrf.mxu0
    %10776 = vdwg.mxu0
    %10777 = vmatprep.subr.bf16.mxu0 %v8138
    %10778 = vmatpush1.bf16.msra.mxu0 %v8137
    %10779 = vmatprep.subr.bf16.mxu0 %v8130
    %10780 = vmatpush1.bf16.msra.mxu0 %v8129
    %10781 = vmatprep.subr.bf16.mxu0 %v8122
    %10782 = vmatpush1.bf16.msra.mxu0 %v8121
    %10783 = vmatprep.subr.bf16.mxu0 %v8114
    %10784 = vmatpush1.bf16.msra.mxu0 %v8113
    %10785 = vmatprep.subr.bf16.mxu0 %v8106
    %10786 = vmatpush1.bf16.msra.mxu0 %v8105
    %10787 = vmatprep.subr.bf16.mxu0 %v8098
    %10788 = vmatpush1.bf16.msra.mxu0 %v8097
    %10789 = vmatprep.subr.bf16.mxu0 %v8090
    %10790 = vmatpush1.bf16.msra.mxu0 %v8089
    %10791 = vmatprep.subr.bf16.mxu0 %v8082
    %10792 = vmatpush1.bf16.msra.mxu0 %v8081
    %10793 = vmatprep.subr.bf16.mxu0 %v8202
    %10794 = vmatpush2.bf16.msra.mxu0 %v8201
    %10795 = vmatprep.subr.bf16.mxu0 %v8194
    %10796 = vmatpush2.bf16.msra.mxu0 %v8193
    %10797 = vmatprep.subr.bf16.mxu0 %v8186
    %10798 = vmatpush2.bf16.msra.mxu0 %v8185
    %10799 = vmatprep.subr.bf16.mxu0 %v8178
    %10800 = vmatpush2.bf16.msra.mxu0 %v8177
    %10801 = vmatprep.subr.bf16.mxu0 %v8170
    %10802 = vmatpush2.bf16.msra.mxu0 %v8169
    %10803 = vmatprep.subr.bf16.mxu0 %v8162
    %10804 = vmatpush2.bf16.msra.mxu0 %v8161
    %10805 = vmatprep.subr.bf16.mxu0 %v8154
    %10806 = vmatpush2.bf16.msra.mxu0 %v8153
    %10807 = vmatprep.subr.bf16.mxu0 %v8146
    %10808 = vmatpush2.bf16.msra.mxu0 %v8145
    %10809 = vmatprep.mubr.bf16.mxu0 %v10342
    %10810 = vmatmul.mubr.bf16.gmra.mxu0 %v10334
    %v10811 = vpop.f32.mrf.mxu0
    %v10812 = vadd.f32 %v10771, %v10811
    %v10813 = vpop.f32.mrf.mxu0
    %v10814 = vadd.f32 %v10773, %v10813
    %v10815 = vpop.f32.mrf.mxu0
    %v10816 = vpop.f32.mrf.mxu0
    %10817 = vdwg.mxu0
    %10818 = vmatprep.subr.bf16.mxu0 %v8266
    %10819 = vmatpush1.bf16.msra.mxu0 %v8265
    %10820 = vmatprep.subr.bf16.mxu0 %v8258
    %10821 = vmatpush1.bf16.msra.mxu0 %v8257
    %10822 = vmatprep.subr.bf16.mxu0 %v8250
    %10823 = vmatpush1.bf16.msra.mxu0 %v8249
    %10824 = vmatprep.subr.bf16.mxu0 %v8242
    %10825 = vmatpush1.bf16.msra.mxu0 %v8241
    %10826 = vmatprep.subr.bf16.mxu0 %v8234
    %10827 = vmatpush1.bf16.msra.mxu0 %v8233
    %10828 = vmatprep.subr.bf16.mxu0 %v8226
    %10829 = vmatpush1.bf16.msra.mxu0 %v8225
    %10830 = vmatprep.subr.bf16.mxu0 %v8218
    %10831 = vmatpush1.bf16.msra.mxu0 %v8217
    %10832 = vmatprep.subr.bf16.mxu0 %v8210
    %10833 = vmatpush1.bf16.msra.mxu0 %v8209
    %10834 = vmatprep.subr.bf16.mxu0 %v8330
    %10835 = vmatpush2.bf16.msra.mxu0 %v8329
    %10836 = vmatprep.subr.bf16.mxu0 %v8322
    %10837 = vmatpush2.bf16.msra.mxu0 %v8321
    %10838 = vmatprep.subr.bf16.mxu0 %v8314
    %10839 = vmatpush2.bf16.msra.mxu0 %v8313
    %10840 = vmatprep.subr.bf16.mxu0 %v8306
    %10841 = vmatpush2.bf16.msra.mxu0 %v8305
    %10842 = vmatprep.subr.bf16.mxu0 %v8298
    %10843 = vmatpush2.bf16.msra.mxu0 %v8297
    %10844 = vmatprep.subr.bf16.mxu0 %v8290
    %10845 = vmatpush2.bf16.msra.mxu0 %v8289
    %10846 = vmatprep.subr.bf16.mxu0 %v8282
    %10847 = vmatpush2.bf16.msra.mxu0 %v8281
    %10848 = vmatprep.subr.bf16.mxu0 %v8274
    %10849 = vmatpush2.bf16.msra.mxu0 %v8273
    %10850 = vmatprep.mubr.bf16.mxu0 %v10358
    %10851 = vmatmul.mubr.bf16.gmra.mxu0 %v10350
    %v10852 = vpop.f32.mrf.mxu0
    %v10853 = vadd.f32 %v10812, %v10852
    %v10854 = vpop.f32.mrf.mxu0
    %v10855 = vadd.f32 %v10814, %v10854
    %v10856 = vpop.f32.mrf.mxu0
    %v10857 = vpop.f32.mrf.mxu0
    %10858 = vdwg.mxu0
    %10859 = vmatprep.subr.bf16.mxu0 %v7884
    %10860 = vmatpush1.bf16.msra.mxu0 %v7883
    %10861 = vmatprep.subr.bf16.mxu0 %v7876
    %10862 = vmatpush1.bf16.msra.mxu0 %v7875
    %10863 = vmatprep.subr.bf16.mxu0 %v7868
    %10864 = vmatpush1.bf16.msra.mxu0 %v7867
    %10865 = vmatprep.subr.bf16.mxu0 %v7860
    %10866 = vmatpush1.bf16.msra.mxu0 %v7859
    %10867 = vmatprep.subr.bf16.mxu0 %v7852
    %10868 = vmatpush1.bf16.msra.mxu0 %v7851
    %10869 = vmatprep.subr.bf16.mxu0 %v7844
    %10870 = vmatpush1.bf16.msra.mxu0 %v7843
    %10871 = vmatprep.subr.bf16.mxu0 %v7836
    %10872 = vmatpush1.bf16.msra.mxu0 %v7835
    %10873 = vmatprep.subr.bf16.mxu0 %v7828
    %10874 = vmatpush1.bf16.msra.mxu0 %v7827
    %10875 = vmatprep.subr.bf16.mxu0 %v7948
    %10876 = vmatpush2.bf16.msra.mxu0 %v7947
    %10877 = vmatprep.subr.bf16.mxu0 %v7940
    %10878 = vmatpush2.bf16.msra.mxu0 %v7939
    %10879 = vmatprep.subr.bf16.mxu0 %v7932
    %10880 = vmatpush2.bf16.msra.mxu0 %v7931
    %10881 = vmatprep.subr.bf16.mxu0 %v7924
    %10882 = vmatpush2.bf16.msra.mxu0 %v7923
    %10883 = vmatprep.subr.bf16.mxu0 %v7916
    %10884 = vmatpush2.bf16.msra.mxu0 %v7915
    %10885 = vmatprep.subr.bf16.mxu0 %v7908
    %10886 = vmatpush2.bf16.msra.mxu0 %v7907
    %10887 = vmatprep.subr.bf16.mxu0 %v7900
    %10888 = vmatpush2.bf16.msra.mxu0 %v7899
    %10889 = vmatprep.subr.bf16.mxu0 %v7892
    %10890 = vmatpush2.bf16.msra.mxu0 %v7891
    %10891 = vmatprep.mubr.bf16.mxu0 %v10310
    %10892 = vmatmul.mubr.bf16.gmra.mxu0 %v10302
    %v10893 = vpop.f32.mrf.mxu0
    %v10894 = vadd.f32 0.0, %v10893
    %v10895 = vpop.f32.mrf.mxu0
    %v10896 = vadd.f32 0.0, %v10895
    %v10897 = vpop.f32.mrf.mxu0
    %v10898 = vpop.f32.mrf.mxu0
    %10899 = vdwg.mxu0
    %10900 = vmatprep.subr.bf16.mxu0 %v8012
    %10901 = vmatpush1.bf16.msra.mxu0 %v8011
    %10902 = vmatprep.subr.bf16.mxu0 %v8004
    %10903 = vmatpush1.bf16.msra.mxu0 %v8003
    %10904 = vmatprep.subr.bf16.mxu0 %v7996
    %10905 = vmatpush1.bf16.msra.mxu0 %v7995
    %10906 = vmatprep.subr.bf16.mxu0 %v7988
    %10907 = vmatpush1.bf16.msra.mxu0 %v7987
    %10908 = vmatprep.subr.bf16.mxu0 %v7980
    %10909 = vmatpush1.bf16.msra.mxu0 %v7979
    %10910 = vmatprep.subr.bf16.mxu0 %v7972
    %10911 = vmatpush1.bf16.msra.mxu0 %v7971
    %10912 = vmatprep.subr.bf16.mxu0 %v7964
    %10913 = vmatpush1.bf16.msra.mxu0 %v7963
    %10914 = vmatprep.subr.bf16.mxu0 %v7956
    %10915 = vmatpush1.bf16.msra.mxu0 %v7955
    %10916 = vmatprep.subr.bf16.mxu0 %v8076
    %10917 = vmatpush2.bf16.msra.mxu0 %v8075
    %10918 = vmatprep.subr.bf16.mxu0 %v8068
    %10919 = vmatpush2.bf16.msra.mxu0 %v8067
    %10920 = vmatprep.subr.bf16.mxu0 %v8060
    %10921 = vmatpush2.bf16.msra.mxu0 %v8059
    %10922 = vmatprep.subr.bf16.mxu0 %v8052
    %10923 = vmatpush2.bf16.msra.mxu0 %v8051
    %10924 = vmatprep.subr.bf16.mxu0 %v8044
    %10925 = vmatpush2.bf16.msra.mxu0 %v8043
    %10926 = vmatprep.subr.bf16.mxu0 %v8036
    %10927 = vmatpush2.bf16.msra.mxu0 %v8035
    %10928 = vmatprep.subr.bf16.mxu0 %v8028
    %10929 = vmatpush2.bf16.msra.mxu0 %v8027
    %10930 = vmatprep.subr.bf16.mxu0 %v8020
    %10931 = vmatpush2.bf16.msra.mxu0 %v8019
    %10932 = vmatprep.mubr.bf16.mxu0 %v10326
    %10933 = vmatmul.mubr.bf16.gmra.mxu0 %v10318
    %v10934 = vpop.f32.mrf.mxu0
    %v10935 = vadd.f32 %v10894, %v10934
    %v10936 = vpop.f32.mrf.mxu0
    %v10937 = vadd.f32 %v10896, %v10936
    %v10938 = vpop.f32.mrf.mxu0
    %v10939 = vpop.f32.mrf.mxu0
    %10940 = vdwg.mxu0
    %10941 = vmatprep.subr.bf16.mxu0 %v8140
    %10942 = vmatpush1.bf16.msra.mxu0 %v8139
    %10943 = vmatprep.subr.bf16.mxu0 %v8132
    %10944 = vmatpush1.bf16.msra.mxu0 %v8131
    %10945 = vmatprep.subr.bf16.mxu0 %v8124
    %10946 = vmatpush1.bf16.msra.mxu0 %v8123
    %10947 = vmatprep.subr.bf16.mxu0 %v8116
    %10948 = vmatpush1.bf16.msra.mxu0 %v8115
    %10949 = vmatprep.subr.bf16.mxu0 %v8108
    %10950 = vmatpush1.bf16.msra.mxu0 %v8107
    %10951 = vmatprep.subr.bf16.mxu0 %v8100
    %10952 = vmatpush1.bf16.msra.mxu0 %v8099
    %10953 = vmatprep.subr.bf16.mxu0 %v8092
    %10954 = vmatpush1.bf16.msra.mxu0 %v8091
    %10955 = vmatprep.subr.bf16.mxu0 %v8084
    %10956 = vmatpush1.bf16.msra.mxu0 %v8083
    %10957 = vmatprep.subr.bf16.mxu0 %v8204
    %10958 = vmatpush2.bf16.msra.mxu0 %v8203
    %10959 = vmatprep.subr.bf16.mxu0 %v8196
    %10960 = vmatpush2.bf16.msra.mxu0 %v8195
    %10961 = vmatprep.subr.bf16.mxu0 %v8188
    %10962 = vmatpush2.bf16.msra.mxu0 %v8187
    %10963 = vmatprep.subr.bf16.mxu0 %v8180
    %10964 = vmatpush2.bf16.msra.mxu0 %v8179
    %10965 = vmatprep.subr.bf16.mxu0 %v8172
    %10966 = vmatpush2.bf16.msra.mxu0 %v8171
    %10967 = vmatprep.subr.bf16.mxu0 %v8164
    %10968 = vmatpush2.bf16.msra.mxu0 %v8163
    %10969 = vmatprep.subr.bf16.mxu0 %v8156
    %10970 = vmatpush2.bf16.msra.mxu0 %v8155
    %10971 = vmatprep.subr.bf16.mxu0 %v8148
    %10972 = vmatpush2.bf16.msra.mxu0 %v8147
    %10973 = vmatprep.mubr.bf16.mxu0 %v10342
    %10974 = vmatmul.mubr.bf16.gmra.mxu0 %v10334
    %v10975 = vpop.f32.mrf.mxu0
    %v10976 = vadd.f32 %v10935, %v10975
    %v10977 = vpop.f32.mrf.mxu0
    %v10978 = vadd.f32 %v10937, %v10977
    %v10979 = vpop.f32.mrf.mxu0
    %v10980 = vpop.f32.mrf.mxu0
    %10981 = vdwg.mxu0
    %10982 = vmatprep.subr.bf16.mxu0 %v8268
    %10983 = vmatpush1.bf16.msra.mxu0 %v8267
    %10984 = vmatprep.subr.bf16.mxu0 %v8260
    %10985 = vmatpush1.bf16.msra.mxu0 %v8259
    %10986 = vmatprep.subr.bf16.mxu0 %v8252
    %10987 = vmatpush1.bf16.msra.mxu0 %v8251
    %10988 = vmatprep.subr.bf16.mxu0 %v8244
    %10989 = vmatpush1.bf16.msra.mxu0 %v8243
    %10990 = vmatprep.subr.bf16.mxu0 %v8236
    %10991 = vmatpush1.bf16.msra.mxu0 %v8235
    %10992 = vmatprep.subr.bf16.mxu0 %v8228
    %10993 = vmatpush1.bf16.msra.mxu0 %v8227
    %10994 = vmatprep.subr.bf16.mxu0 %v8220
    %10995 = vmatpush1.bf16.msra.mxu0 %v8219
    %10996 = vmatprep.subr.bf16.mxu0 %v8212
    %10997 = vmatpush1.bf16.msra.mxu0 %v8211
    %10998 = vmatprep.subr.bf16.mxu0 %v8332
    %10999 = vmatpush2.bf16.msra.mxu0 %v8331
    %11000 = vmatprep.subr.bf16.mxu0 %v8324
    %11001 = vmatpush2.bf16.msra.mxu0 %v8323
    %11002 = vmatprep.subr.bf16.mxu0 %v8316
    %11003 = vmatpush2.bf16.msra.mxu0 %v8315
    %11004 = vmatprep.subr.bf16.mxu0 %v8308
    %11005 = vmatpush2.bf16.msra.mxu0 %v8307
    %11006 = vmatprep.subr.bf16.mxu0 %v8300
    %11007 = vmatpush2.bf16.msra.mxu0 %v8299
    %11008 = vmatprep.subr.bf16.mxu0 %v8292
    %11009 = vmatpush2.bf16.msra.mxu0 %v8291
    %11010 = vmatprep.subr.bf16.mxu0 %v8284
    %11011 = vmatpush2.bf16.msra.mxu0 %v8283
    %11012 = vmatprep.subr.bf16.mxu0 %v8276
    %11013 = vmatpush2.bf16.msra.mxu0 %v8275
    %11014 = vmatprep.mubr.bf16.mxu0 %v10358
    %11015 = vmatmul.mubr.bf16.gmra.mxu0 %v10350
    %v11016 = vpop.f32.mrf.mxu0
    %v11017 = vadd.f32 %v10976, %v11016
    %v11018 = vpop.f32.mrf.mxu0
    %v11019 = vadd.f32 %v10978, %v11018
    %v11020 = vpop.f32.mrf.mxu0
    %v11021 = vpop.f32.mrf.mxu0
    %11022 = vdwg.mxu0
    %v11023 = vmax.f32 %v10525, %v10689
    %v11024 = vmax.f32 %v10527, %v10691
    %v11025 = vmax.f32 %v10853, %v11017
    %v11026 = vmax.f32 %v10855, %v11019
    %v11027 = vmax.f32 %v11023, %v11025
    %v11028 = vmax.f32 %v11024, %v11026
    %v11029 = vadd.f32 %v11027, %v9512
    %v11030 = vadd.f32 %v11028, %v9516
    %v11031 = vmax.f32 %v11029, 0.0
    %v11032 = vmax.f32 %v11030, 0.0
    %v11033 = vpack.c.bf16 %v11031, %v11031
    %v11034 = vpack.c.bf16 %v11032, %v11032
    %vm11035 = vcmask 1046534
    %v11036 = vsel %vm11035, %v5746, %v5742
    %v11037 = vsel %vm11035, %v5749, %v5743
    %v11038 = vpack.c.b16 %v11036, %v11036
    %v11039 = vpack.c.b16 %v11037, %v11037
    %v11040 = vsel %vm11035, %v5744, %v5755
    %v11041 = vsel %vm11035, %v5745, %v5757
    %v11042 = vpack.c.b16 %v11040, %v11040
    %v11043 = vpack.c.b16 %v11041, %v11041
    %v11044 = vsel %vm11035, %v5764, %v5763
    %v11045 = vsel %vm11035, %v5767, %v5766
    %v11046 = vpack.c.b16 %v11044, %v11044
    %v11047 = vpack.c.b16 %v11045, %v11045
    %v11049 = vshrl.u32 %v11038, 16
    %v11051 = vrot.slane %v11049, 2
    %v11052 = vshll.u32 %v11038, 16
    %v11054 = vrot.slane %v11052, 3
    %v11055 = vor.u32 %v11051, %v11054
    %v11057 = vshrl.u32 %v11039, 16
    %v11059 = vrot.slane %v11057, 2
    %v11060 = vshll.u32 %v11039, 16
    %v11062 = vrot.slane %v11060, 3
    %v11063 = vor.u32 %v11059, %v11062
    %v11065 = vshrl.u32 %v11042, 16
    %v11067 = vrot.slane %v11065, 2
    %v11068 = vshll.u32 %v11042, 16
    %v11070 = vrot.slane %v11068, 3
    %v11071 = vor.u32 %v11067, %v11070
    %v11073 = vshrl.u32 %v11043, 16
    %v11075 = vrot.slane %v11073, 2
    %v11076 = vshll.u32 %v11043, 16
    %v11078 = vrot.slane %v11076, 3
    %v11079 = vor.u32 %v11075, %v11078
    %v11081 = vshrl.u32 %v11046, 16
    %v11083 = vrot.slane %v11081, 2
    %v11084 = vshll.u32 %v11046, 16
    %v11086 = vrot.slane %v11084, 3
    %v11087 = vor.u32 %v11083, %v11086
    %v11089 = vshrl.u32 %v11047, 16
    %v11091 = vrot.slane %v11089, 2
    %v11092 = vshll.u32 %v11047, 16
    %v11094 = vrot.slane %v11092, 3
    %v11095 = vor.u32 %v11091, %v11094
    %v11097 = vshrl.u32 0, 16
    %v11099 = vrot.slane %v11097, 2
    %v11100 = vshll.u32 0, 16
    %v11102 = vrot.slane %v11100, 3
    %v11103 = vor.u32 %v11099, %v11102
    %11111 = vmatprep.subr.bf16.mxu0 %v7878
    %11112 = vmatpush1.bf16.msra.mxu0 %v7877
    %11113 = vmatprep.subr.bf16.mxu0 %v7870
    %11114 = vmatpush1.bf16.msra.mxu0 %v7869
    %11115 = vmatprep.subr.bf16.mxu0 %v7862
    %11116 = vmatpush1.bf16.msra.mxu0 %v7861
    %11117 = vmatprep.subr.bf16.mxu0 %v7854
    %11118 = vmatpush1.bf16.msra.mxu0 %v7853
    %11119 = vmatprep.subr.bf16.mxu0 %v7846
    %11120 = vmatpush1.bf16.msra.mxu0 %v7845
    %11121 = vmatprep.subr.bf16.mxu0 %v7838
    %11122 = vmatpush1.bf16.msra.mxu0 %v7837
    %11123 = vmatprep.subr.bf16.mxu0 %v7830
    %11124 = vmatpush1.bf16.msra.mxu0 %v7829
    %11125 = vmatprep.subr.bf16.mxu0 %v7822
    %11126 = vmatpush1.bf16.msra.mxu0 %v7821
    %11127 = vmatprep.subr.bf16.mxu0 %v7942
    %11128 = vmatpush2.bf16.msra.mxu0 %v7941
    %11129 = vmatprep.subr.bf16.mxu0 %v7934
    %11130 = vmatpush2.bf16.msra.mxu0 %v7933
    %11131 = vmatprep.subr.bf16.mxu0 %v7926
    %11132 = vmatpush2.bf16.msra.mxu0 %v7925
    %11133 = vmatprep.subr.bf16.mxu0 %v7918
    %11134 = vmatpush2.bf16.msra.mxu0 %v7917
    %11135 = vmatprep.subr.bf16.mxu0 %v7910
    %11136 = vmatpush2.bf16.msra.mxu0 %v7909
    %11137 = vmatprep.subr.bf16.mxu0 %v7902
    %11138 = vmatpush2.bf16.msra.mxu0 %v7901
    %11139 = vmatprep.subr.bf16.mxu0 %v7894
    %11140 = vmatpush2.bf16.msra.mxu0 %v7893
    %11141 = vmatprep.subr.bf16.mxu0 %v7886
    %11142 = vmatpush2.bf16.msra.mxu0 %v7885
    %11143 = vmatprep.mubr.bf16.mxu0 %v11063
    %11144 = vmatmul.mubr.bf16.gmra.mxu0 %v11055
    %v11145 = vpop.f32.mrf.mxu0
    %v11146 = vadd.f32 0.0, %v11145
    %v11147 = vpop.f32.mrf.mxu0
    %v11148 = vadd.f32 0.0, %v11147
    %v11149 = vpop.f32.mrf.mxu0
    %v11150 = vpop.f32.mrf.mxu0
    %11151 = vdwg.mxu0
    %11152 = vmatprep.subr.bf16.mxu0 %v8006
    %11153 = vmatpush1.bf16.msra.mxu0 %v8005
    %11154 = vmatprep.subr.bf16.mxu0 %v7998
    %11155 = vmatpush1.bf16.msra.mxu0 %v7997
    %11156 = vmatprep.subr.bf16.mxu0 %v7990
    %11157 = vmatpush1.bf16.msra.mxu0 %v7989
    %11158 = vmatprep.subr.bf16.mxu0 %v7982
    %11159 = vmatpush1.bf16.msra.mxu0 %v7981
    %11160 = vmatprep.subr.bf16.mxu0 %v7974
    %11161 = vmatpush1.bf16.msra.mxu0 %v7973
    %11162 = vmatprep.subr.bf16.mxu0 %v7966
    %11163 = vmatpush1.bf16.msra.mxu0 %v7965
    %11164 = vmatprep.subr.bf16.mxu0 %v7958
    %11165 = vmatpush1.bf16.msra.mxu0 %v7957
    %11166 = vmatprep.subr.bf16.mxu0 %v7950
    %11167 = vmatpush1.bf16.msra.mxu0 %v7949
    %11168 = vmatprep.subr.bf16.mxu0 %v8070
    %11169 = vmatpush2.bf16.msra.mxu0 %v8069
    %11170 = vmatprep.subr.bf16.mxu0 %v8062
    %11171 = vmatpush2.bf16.msra.mxu0 %v8061
    %11172 = vmatprep.subr.bf16.mxu0 %v8054
    %11173 = vmatpush2.bf16.msra.mxu0 %v8053
    %11174 = vmatprep.subr.bf16.mxu0 %v8046
    %11175 = vmatpush2.bf16.msra.mxu0 %v8045
    %11176 = vmatprep.subr.bf16.mxu0 %v8038
    %11177 = vmatpush2.bf16.msra.mxu0 %v8037
    %11178 = vmatprep.subr.bf16.mxu0 %v8030
    %11179 = vmatpush2.bf16.msra.mxu0 %v8029
    %11180 = vmatprep.subr.bf16.mxu0 %v8022
    %11181 = vmatpush2.bf16.msra.mxu0 %v8021
    %11182 = vmatprep.subr.bf16.mxu0 %v8014
    %11183 = vmatpush2.bf16.msra.mxu0 %v8013
    %11184 = vmatprep.mubr.bf16.mxu0 %v11079
    %11185 = vmatmul.mubr.bf16.gmra.mxu0 %v11071
    %v11186 = vpop.f32.mrf.mxu0
    %v11187 = vadd.f32 %v11146, %v11186
    %v11188 = vpop.f32.mrf.mxu0
    %v11189 = vadd.f32 %v11148, %v11188
    %v11190 = vpop.f32.mrf.mxu0
    %v11191 = vpop.f32.mrf.mxu0
    %11192 = vdwg.mxu0
    %11193 = vmatprep.subr.bf16.mxu0 %v8134
    %11194 = vmatpush1.bf16.msra.mxu0 %v8133
    %11195 = vmatprep.subr.bf16.mxu0 %v8126
    %11196 = vmatpush1.bf16.msra.mxu0 %v8125
    %11197 = vmatprep.subr.bf16.mxu0 %v8118
    %11198 = vmatpush1.bf16.msra.mxu0 %v8117
    %11199 = vmatprep.subr.bf16.mxu0 %v8110
    %11200 = vmatpush1.bf16.msra.mxu0 %v8109
    %11201 = vmatprep.subr.bf16.mxu0 %v8102
    %11202 = vmatpush1.bf16.msra.mxu0 %v8101
    %11203 = vmatprep.subr.bf16.mxu0 %v8094
    %11204 = vmatpush1.bf16.msra.mxu0 %v8093
    %11205 = vmatprep.subr.bf16.mxu0 %v8086
    %11206 = vmatpush1.bf16.msra.mxu0 %v8085
    %11207 = vmatprep.subr.bf16.mxu0 %v8078
    %11208 = vmatpush1.bf16.msra.mxu0 %v8077
    %11209 = vmatprep.subr.bf16.mxu0 %v8198
    %11210 = vmatpush2.bf16.msra.mxu0 %v8197
    %11211 = vmatprep.subr.bf16.mxu0 %v8190
    %11212 = vmatpush2.bf16.msra.mxu0 %v8189
    %11213 = vmatprep.subr.bf16.mxu0 %v8182
    %11214 = vmatpush2.bf16.msra.mxu0 %v8181
    %11215 = vmatprep.subr.bf16.mxu0 %v8174
    %11216 = vmatpush2.bf16.msra.mxu0 %v8173
    %11217 = vmatprep.subr.bf16.mxu0 %v8166
    %11218 = vmatpush2.bf16.msra.mxu0 %v8165
    %11219 = vmatprep.subr.bf16.mxu0 %v8158
    %11220 = vmatpush2.bf16.msra.mxu0 %v8157
    %11221 = vmatprep.subr.bf16.mxu0 %v8150
    %11222 = vmatpush2.bf16.msra.mxu0 %v8149
    %11223 = vmatprep.subr.bf16.mxu0 %v8142
    %11224 = vmatpush2.bf16.msra.mxu0 %v8141
    %11225 = vmatprep.mubr.bf16.mxu0 %v11095
    %11226 = vmatmul.mubr.bf16.gmra.mxu0 %v11087
    %v11227 = vpop.f32.mrf.mxu0
    %v11228 = vadd.f32 %v11187, %v11227
    %v11229 = vpop.f32.mrf.mxu0
    %v11230 = vadd.f32 %v11189, %v11229
    %v11231 = vpop.f32.mrf.mxu0
    %v11232 = vpop.f32.mrf.mxu0
    %11233 = vdwg.mxu0
    %11234 = vmatprep.subr.bf16.mxu0 %v8262
    %11235 = vmatpush1.bf16.msra.mxu0 %v8261
    %11236 = vmatprep.subr.bf16.mxu0 %v8254
    %11237 = vmatpush1.bf16.msra.mxu0 %v8253
    %11238 = vmatprep.subr.bf16.mxu0 %v8246
    %11239 = vmatpush1.bf16.msra.mxu0 %v8245
    %11240 = vmatprep.subr.bf16.mxu0 %v8238
    %11241 = vmatpush1.bf16.msra.mxu0 %v8237
    %11242 = vmatprep.subr.bf16.mxu0 %v8230
    %11243 = vmatpush1.bf16.msra.mxu0 %v8229
    %11244 = vmatprep.subr.bf16.mxu0 %v8222
    %11245 = vmatpush1.bf16.msra.mxu0 %v8221
    %11246 = vmatprep.subr.bf16.mxu0 %v8214
    %11247 = vmatpush1.bf16.msra.mxu0 %v8213
    %11248 = vmatprep.subr.bf16.mxu0 %v8206
    %11249 = vmatpush1.bf16.msra.mxu0 %v8205
    %11250 = vmatprep.subr.bf16.mxu0 %v8326
    %11251 = vmatpush2.bf16.msra.mxu0 %v8325
    %11252 = vmatprep.subr.bf16.mxu0 %v8318
    %11253 = vmatpush2.bf16.msra.mxu0 %v8317
    %11254 = vmatprep.subr.bf16.mxu0 %v8310
    %11255 = vmatpush2.bf16.msra.mxu0 %v8309
    %11256 = vmatprep.subr.bf16.mxu0 %v8302
    %11257 = vmatpush2.bf16.msra.mxu0 %v8301
    %11258 = vmatprep.subr.bf16.mxu0 %v8294
    %11259 = vmatpush2.bf16.msra.mxu0 %v8293
    %11260 = vmatprep.subr.bf16.mxu0 %v8286
    %11261 = vmatpush2.bf16.msra.mxu0 %v8285
    %11262 = vmatprep.subr.bf16.mxu0 %v8278
    %11263 = vmatpush2.bf16.msra.mxu0 %v8277
    %11264 = vmatprep.subr.bf16.mxu0 %v8270
    %11265 = vmatpush2.bf16.msra.mxu0 %v8269
    %11266 = vmatprep.mubr.bf16.mxu0 %v11103
    %11267 = vmatmul.mubr.bf16.gmra.mxu0 %v11103
    %v11268 = vpop.f32.mrf.mxu0
    %v11269 = vadd.f32 %v11228, %v11268
    %v11270 = vpop.f32.mrf.mxu0
    %v11271 = vadd.f32 %v11230, %v11270
    %v11272 = vpop.f32.mrf.mxu0
    %v11273 = vpop.f32.mrf.mxu0
    %11274 = vdwg.mxu0
    %11275 = vmatprep.subr.bf16.mxu0 %v7880
    %11276 = vmatpush1.bf16.msra.mxu0 %v7879
    %11277 = vmatprep.subr.bf16.mxu0 %v7872
    %11278 = vmatpush1.bf16.msra.mxu0 %v7871
    %11279 = vmatprep.subr.bf16.mxu0 %v7864
    %11280 = vmatpush1.bf16.msra.mxu0 %v7863
    %11281 = vmatprep.subr.bf16.mxu0 %v7856
    %11282 = vmatpush1.bf16.msra.mxu0 %v7855
    %11283 = vmatprep.subr.bf16.mxu0 %v7848
    %11284 = vmatpush1.bf16.msra.mxu0 %v7847
    %11285 = vmatprep.subr.bf16.mxu0 %v7840
    %11286 = vmatpush1.bf16.msra.mxu0 %v7839
    %11287 = vmatprep.subr.bf16.mxu0 %v7832
    %11288 = vmatpush1.bf16.msra.mxu0 %v7831
    %11289 = vmatprep.subr.bf16.mxu0 %v7824
    %11290 = vmatpush1.bf16.msra.mxu0 %v7823
    %11291 = vmatprep.subr.bf16.mxu0 %v7944
    %11292 = vmatpush2.bf16.msra.mxu0 %v7943
    %11293 = vmatprep.subr.bf16.mxu0 %v7936
    %11294 = vmatpush2.bf16.msra.mxu0 %v7935
    %11295 = vmatprep.subr.bf16.mxu0 %v7928
    %11296 = vmatpush2.bf16.msra.mxu0 %v7927
    %11297 = vmatprep.subr.bf16.mxu0 %v7920
    %11298 = vmatpush2.bf16.msra.mxu0 %v7919
    %11299 = vmatprep.subr.bf16.mxu0 %v7912
    %11300 = vmatpush2.bf16.msra.mxu0 %v7911
    %11301 = vmatprep.subr.bf16.mxu0 %v7904
    %11302 = vmatpush2.bf16.msra.mxu0 %v7903
    %11303 = vmatprep.subr.bf16.mxu0 %v7896
    %11304 = vmatpush2.bf16.msra.mxu0 %v7895
    %11305 = vmatprep.subr.bf16.mxu0 %v7888
    %11306 = vmatpush2.bf16.msra.mxu0 %v7887
    %11307 = vmatprep.mubr.bf16.mxu0 %v11063
    %11308 = vmatmul.mubr.bf16.gmra.mxu0 %v11055
    %v11309 = vpop.f32.mrf.mxu0
    %v11310 = vadd.f32 0.0, %v11309
    %v11311 = vpop.f32.mrf.mxu0
    %v11312 = vadd.f32 0.0, %v11311
    %v11313 = vpop.f32.mrf.mxu0
    %v11314 = vpop.f32.mrf.mxu0
    %11315 = vdwg.mxu0
    %11316 = vmatprep.subr.bf16.mxu0 %v8008
    %11317 = vmatpush1.bf16.msra.mxu0 %v8007
    %11318 = vmatprep.subr.bf16.mxu0 %v8000
    %11319 = vmatpush1.bf16.msra.mxu0 %v7999
    %11320 = vmatprep.subr.bf16.mxu0 %v7992
    %11321 = vmatpush1.bf16.msra.mxu0 %v7991
    %11322 = vmatprep.subr.bf16.mxu0 %v7984
    %11323 = vmatpush1.bf16.msra.mxu0 %v7983
    %11324 = vmatprep.subr.bf16.mxu0 %v7976
    %11325 = vmatpush1.bf16.msra.mxu0 %v7975
    %11326 = vmatprep.subr.bf16.mxu0 %v7968
    %11327 = vmatpush1.bf16.msra.mxu0 %v7967
    %11328 = vmatprep.subr.bf16.mxu0 %v7960
    %11329 = vmatpush1.bf16.msra.mxu0 %v7959
    %11330 = vmatprep.subr.bf16.mxu0 %v7952
    %11331 = vmatpush1.bf16.msra.mxu0 %v7951
    %11332 = vmatprep.subr.bf16.mxu0 %v8072
    %11333 = vmatpush2.bf16.msra.mxu0 %v8071
    %11334 = vmatprep.subr.bf16.mxu0 %v8064
    %11335 = vmatpush2.bf16.msra.mxu0 %v8063
    %11336 = vmatprep.subr.bf16.mxu0 %v8056
    %11337 = vmatpush2.bf16.msra.mxu0 %v8055
    %11338 = vmatprep.subr.bf16.mxu0 %v8048
    %11339 = vmatpush2.bf16.msra.mxu0 %v8047
    %11340 = vmatprep.subr.bf16.mxu0 %v8040
    %11341 = vmatpush2.bf16.msra.mxu0 %v8039
    %11342 = vmatprep.subr.bf16.mxu0 %v8032
    %11343 = vmatpush2.bf16.msra.mxu0 %v8031
    %11344 = vmatprep.subr.bf16.mxu0 %v8024
    %11345 = vmatpush2.bf16.msra.mxu0 %v8023
    %11346 = vmatprep.subr.bf16.mxu0 %v8016
    %11347 = vmatpush2.bf16.msra.mxu0 %v8015
    %11348 = vmatprep.mubr.bf16.mxu0 %v11079
    %11349 = vmatmul.mubr.bf16.gmra.mxu0 %v11071
    %v11350 = vpop.f32.mrf.mxu0
    %v11351 = vadd.f32 %v11310, %v11350
    %v11352 = vpop.f32.mrf.mxu0
    %v11353 = vadd.f32 %v11312, %v11352
    %v11354 = vpop.f32.mrf.mxu0
    %v11355 = vpop.f32.mrf.mxu0
    %11356 = vdwg.mxu0
    %11357 = vmatprep.subr.bf16.mxu0 %v8136
    %11358 = vmatpush1.bf16.msra.mxu0 %v8135
    %11359 = vmatprep.subr.bf16.mxu0 %v8128
    %11360 = vmatpush1.bf16.msra.mxu0 %v8127
    %11361 = vmatprep.subr.bf16.mxu0 %v8120
    %11362 = vmatpush1.bf16.msra.mxu0 %v8119
    %11363 = vmatprep.subr.bf16.mxu0 %v8112
    %11364 = vmatpush1.bf16.msra.mxu0 %v8111
    %11365 = vmatprep.subr.bf16.mxu0 %v8104
    %11366 = vmatpush1.bf16.msra.mxu0 %v8103
    %11367 = vmatprep.subr.bf16.mxu0 %v8096
    %11368 = vmatpush1.bf16.msra.mxu0 %v8095
    %11369 = vmatprep.subr.bf16.mxu0 %v8088
    %11370 = vmatpush1.bf16.msra.mxu0 %v8087
    %11371 = vmatprep.subr.bf16.mxu0 %v8080
    %11372 = vmatpush1.bf16.msra.mxu0 %v8079
    %11373 = vmatprep.subr.bf16.mxu0 %v8200
    %11374 = vmatpush2.bf16.msra.mxu0 %v8199
    %11375 = vmatprep.subr.bf16.mxu0 %v8192
    %11376 = vmatpush2.bf16.msra.mxu0 %v8191
    %11377 = vmatprep.subr.bf16.mxu0 %v8184
    %11378 = vmatpush2.bf16.msra.mxu0 %v8183
    %11379 = vmatprep.subr.bf16.mxu0 %v8176
    %11380 = vmatpush2.bf16.msra.mxu0 %v8175
    %11381 = vmatprep.subr.bf16.mxu0 %v8168
    %11382 = vmatpush2.bf16.msra.mxu0 %v8167
    %11383 = vmatprep.subr.bf16.mxu0 %v8160
    %11384 = vmatpush2.bf16.msra.mxu0 %v8159
    %11385 = vmatprep.subr.bf16.mxu0 %v8152
    %11386 = vmatpush2.bf16.msra.mxu0 %v8151
    %11387 = vmatprep.subr.bf16.mxu0 %v8144
    %11388 = vmatpush2.bf16.msra.mxu0 %v8143
    %11389 = vmatprep.mubr.bf16.mxu0 %v11095
    %11390 = vmatmul.mubr.bf16.gmra.mxu0 %v11087
    %v11391 = vpop.f32.mrf.mxu0
    %v11392 = vadd.f32 %v11351, %v11391
    %v11393 = vpop.f32.mrf.mxu0
    %v11394 = vadd.f32 %v11353, %v11393
    %v11395 = vpop.f32.mrf.mxu0
    %v11396 = vpop.f32.mrf.mxu0
    %11397 = vdwg.mxu0
    %11398 = vmatprep.subr.bf16.mxu0 %v8264
    %11399 = vmatpush1.bf16.msra.mxu0 %v8263
    %11400 = vmatprep.subr.bf16.mxu0 %v8256
    %11401 = vmatpush1.bf16.msra.mxu0 %v8255
    %11402 = vmatprep.subr.bf16.mxu0 %v8248
    %11403 = vmatpush1.bf16.msra.mxu0 %v8247
    %11404 = vmatprep.subr.bf16.mxu0 %v8240
    %11405 = vmatpush1.bf16.msra.mxu0 %v8239
    %11406 = vmatprep.subr.bf16.mxu0 %v8232
    %11407 = vmatpush1.bf16.msra.mxu0 %v8231
    %11408 = vmatprep.subr.bf16.mxu0 %v8224
    %11409 = vmatpush1.bf16.msra.mxu0 %v8223
    %11410 = vmatprep.subr.bf16.mxu0 %v8216
    %11411 = vmatpush1.bf16.msra.mxu0 %v8215
    %11412 = vmatprep.subr.bf16.mxu0 %v8208
    %11413 = vmatpush1.bf16.msra.mxu0 %v8207
    %11414 = vmatprep.subr.bf16.mxu0 %v8328
    %11415 = vmatpush2.bf16.msra.mxu0 %v8327
    %11416 = vmatprep.subr.bf16.mxu0 %v8320
    %11417 = vmatpush2.bf16.msra.mxu0 %v8319
    %11418 = vmatprep.subr.bf16.mxu0 %v8312
    %11419 = vmatpush2.bf16.msra.mxu0 %v8311
    %11420 = vmatprep.subr.bf16.mxu0 %v8304
    %11421 = vmatpush2.bf16.msra.mxu0 %v8303
    %11422 = vmatprep.subr.bf16.mxu0 %v8296
    %11423 = vmatpush2.bf16.msra.mxu0 %v8295
    %11424 = vmatprep.subr.bf16.mxu0 %v8288
    %11425 = vmatpush2.bf16.msra.mxu0 %v8287
    %11426 = vmatprep.subr.bf16.mxu0 %v8280
    %11427 = vmatpush2.bf16.msra.mxu0 %v8279
    %11428 = vmatprep.subr.bf16.mxu0 %v8272
    %11429 = vmatpush2.bf16.msra.mxu0 %v8271
    %11430 = vmatprep.mubr.bf16.mxu0 %v11103
    %11431 = vmatmul.mubr.bf16.gmra.mxu0 %v11103
    %v11432 = vpop.f32.mrf.mxu0
    %v11433 = vadd.f32 %v11392, %v11432
    %v11434 = vpop.f32.mrf.mxu0
    %v11435 = vadd.f32 %v11394, %v11434
    %v11436 = vpop.f32.mrf.mxu0
    %v11437 = vpop.f32.mrf.mxu0
    %11438 = vdwg.mxu0
    %11439 = vmatprep.subr.bf16.mxu0 %v7882
    %11440 = vmatpush1.bf16.msra.mxu0 %v7881
    %11441 = vmatprep.subr.bf16.mxu0 %v7874
    %11442 = vmatpush1.bf16.msra.mxu0 %v7873
    %11443 = vmatprep.subr.bf16.mxu0 %v7866
    %11444 = vmatpush1.bf16.msra.mxu0 %v7865
    %11445 = vmatprep.subr.bf16.mxu0 %v7858
    %11446 = vmatpush1.bf16.msra.mxu0 %v7857
    %11447 = vmatprep.subr.bf16.mxu0 %v7850
    %11448 = vmatpush1.bf16.msra.mxu0 %v7849
    %11449 = vmatprep.subr.bf16.mxu0 %v7842
    %11450 = vmatpush1.bf16.msra.mxu0 %v7841
    %11451 = vmatprep.subr.bf16.mxu0 %v7834
    %11452 = vmatpush1.bf16.msra.mxu0 %v7833
    %11453 = vmatprep.subr.bf16.mxu0 %v7826
    %11454 = vmatpush1.bf16.msra.mxu0 %v7825
    %11455 = vmatprep.subr.bf16.mxu0 %v7946
    %11456 = vmatpush2.bf16.msra.mxu0 %v7945
    %11457 = vmatprep.subr.bf16.mxu0 %v7938
    %11458 = vmatpush2.bf16.msra.mxu0 %v7937
    %11459 = vmatprep.subr.bf16.mxu0 %v7930
    %11460 = vmatpush2.bf16.msra.mxu0 %v7929
    %11461 = vmatprep.subr.bf16.mxu0 %v7922
    %11462 = vmatpush2.bf16.msra.mxu0 %v7921
    %11463 = vmatprep.subr.bf16.mxu0 %v7914
    %11464 = vmatpush2.bf16.msra.mxu0 %v7913
    %11465 = vmatprep.subr.bf16.mxu0 %v7906
    %11466 = vmatpush2.bf16.msra.mxu0 %v7905
    %11467 = vmatprep.subr.bf16.mxu0 %v7898
    %11468 = vmatpush2.bf16.msra.mxu0 %v7897
    %11469 = vmatprep.subr.bf16.mxu0 %v7890
    %11470 = vmatpush2.bf16.msra.mxu0 %v7889
    %11471 = vmatprep.mubr.bf16.mxu0 %v11063
    %11472 = vmatmul.mubr.bf16.gmra.mxu0 %v11055
    %v11473 = vpop.f32.mrf.mxu0
    %v11474 = vadd.f32 0.0, %v11473
    %v11475 = vpop.f32.mrf.mxu0
    %v11476 = vadd.f32 0.0, %v11475
    %v11477 = vpop.f32.mrf.mxu0
    %v11478 = vpop.f32.mrf.mxu0
    %11479 = vdwg.mxu0
    %11480 = vmatprep.subr.bf16.mxu0 %v8010
    %11481 = vmatpush1.bf16.msra.mxu0 %v8009
    %11482 = vmatprep.subr.bf16.mxu0 %v8002
    %11483 = vmatpush1.bf16.msra.mxu0 %v8001
    %11484 = vmatprep.subr.bf16.mxu0 %v7994
    %11485 = vmatpush1.bf16.msra.mxu0 %v7993
    %11486 = vmatprep.subr.bf16.mxu0 %v7986
    %11487 = vmatpush1.bf16.msra.mxu0 %v7985
    %11488 = vmatprep.subr.bf16.mxu0 %v7978
    %11489 = vmatpush1.bf16.msra.mxu0 %v7977
    %11490 = vmatprep.subr.bf16.mxu0 %v7970
    %11491 = vmatpush1.bf16.msra.mxu0 %v7969
    %11492 = vmatprep.subr.bf16.mxu0 %v7962
    %11493 = vmatpush1.bf16.msra.mxu0 %v7961
    %11494 = vmatprep.subr.bf16.mxu0 %v7954
    %11495 = vmatpush1.bf16.msra.mxu0 %v7953
    %11496 = vmatprep.subr.bf16.mxu0 %v8074
    %11497 = vmatpush2.bf16.msra.mxu0 %v8073
    %11498 = vmatprep.subr.bf16.mxu0 %v8066
    %11499 = vmatpush2.bf16.msra.mxu0 %v8065
    %11500 = vmatprep.subr.bf16.mxu0 %v8058
    %11501 = vmatpush2.bf16.msra.mxu0 %v8057
    %11502 = vmatprep.subr.bf16.mxu0 %v8050
    %11503 = vmatpush2.bf16.msra.mxu0 %v8049
    %11504 = vmatprep.subr.bf16.mxu0 %v8042
    %11505 = vmatpush2.bf16.msra.mxu0 %v8041
    %11506 = vmatprep.subr.bf16.mxu0 %v8034
    %11507 = vmatpush2.bf16.msra.mxu0 %v8033
    %11508 = vmatprep.subr.bf16.mxu0 %v8026
    %11509 = vmatpush2.bf16.msra.mxu0 %v8025
    %11510 = vmatprep.subr.bf16.mxu0 %v8018
    %11511 = vmatpush2.bf16.msra.mxu0 %v8017
    %11512 = vmatprep.mubr.bf16.mxu0 %v11079
    %11513 = vmatmul.mubr.bf16.gmra.mxu0 %v11071
    %v11514 = vpop.f32.mrf.mxu0
    %v11515 = vadd.f32 %v11474, %v11514
    %v11516 = vpop.f32.mrf.mxu0
    %v11517 = vadd.f32 %v11476, %v11516
    %v11518 = vpop.f32.mrf.mxu0
    %v11519 = vpop.f32.mrf.mxu0
    %11520 = vdwg.mxu0
    %11521 = vmatprep.subr.bf16.mxu0 %v8138
    %11522 = vmatpush1.bf16.msra.mxu0 %v8137
    %11523 = vmatprep.subr.bf16.mxu0 %v8130
    %11524 = vmatpush1.bf16.msra.mxu0 %v8129
    %11525 = vmatprep.subr.bf16.mxu0 %v8122
    %11526 = vmatpush1.bf16.msra.mxu0 %v8121
    %11527 = vmatprep.subr.bf16.mxu0 %v8114
    %11528 = vmatpush1.bf16.msra.mxu0 %v8113
    %11529 = vmatprep.subr.bf16.mxu0 %v8106
    %11530 = vmatpush1.bf16.msra.mxu0 %v8105
    %11531 = vmatprep.subr.bf16.mxu0 %v8098
    %11532 = vmatpush1.bf16.msra.mxu0 %v8097
    %11533 = vmatprep.subr.bf16.mxu0 %v8090
    %11534 = vmatpush1.bf16.msra.mxu0 %v8089
    %11535 = vmatprep.subr.bf16.mxu0 %v8082
    %11536 = vmatpush1.bf16.msra.mxu0 %v8081
    %11537 = vmatprep.subr.bf16.mxu0 %v8202
    %11538 = vmatpush2.bf16.msra.mxu0 %v8201
    %11539 = vmatprep.subr.bf16.mxu0 %v8194
    %11540 = vmatpush2.bf16.msra.mxu0 %v8193
    %11541 = vmatprep.subr.bf16.mxu0 %v8186
    %11542 = vmatpush2.bf16.msra.mxu0 %v8185
    %11543 = vmatprep.subr.bf16.mxu0 %v8178
    %11544 = vmatpush2.bf16.msra.mxu0 %v8177
    %11545 = vmatprep.subr.bf16.mxu0 %v8170
    %11546 = vmatpush2.bf16.msra.mxu0 %v8169
    %11547 = vmatprep.subr.bf16.mxu0 %v8162
    %11548 = vmatpush2.bf16.msra.mxu0 %v8161
    %11549 = vmatprep.subr.bf16.mxu0 %v8154
    %11550 = vmatpush2.bf16.msra.mxu0 %v8153
    %11551 = vmatprep.subr.bf16.mxu0 %v8146
    %11552 = vmatpush2.bf16.msra.mxu0 %v8145
    %11553 = vmatprep.mubr.bf16.mxu0 %v11095
    %11554 = vmatmul.mubr.bf16.gmra.mxu0 %v11087
    %v11555 = vpop.f32.mrf.mxu0
    %v11556 = vadd.f32 %v11515, %v11555
    %v11557 = vpop.f32.mrf.mxu0
    %v11558 = vadd.f32 %v11517, %v11557
    %v11559 = vpop.f32.mrf.mxu0
    %v11560 = vpop.f32.mrf.mxu0
    %11561 = vdwg.mxu0
    %11562 = vmatprep.subr.bf16.mxu0 %v8266
    %11563 = vmatpush1.bf16.msra.mxu0 %v8265
    %11564 = vmatprep.subr.bf16.mxu0 %v8258
    %11565 = vmatpush1.bf16.msra.mxu0 %v8257
    %11566 = vmatprep.subr.bf16.mxu0 %v8250
    %11567 = vmatpush1.bf16.msra.mxu0 %v8249
    %11568 = vmatprep.subr.bf16.mxu0 %v8242
    %11569 = vmatpush1.bf16.msra.mxu0 %v8241
    %11570 = vmatprep.subr.bf16.mxu0 %v8234
    %11571 = vmatpush1.bf16.msra.mxu0 %v8233
    %11572 = vmatprep.subr.bf16.mxu0 %v8226
    %11573 = vmatpush1.bf16.msra.mxu0 %v8225
    %11574 = vmatprep.subr.bf16.mxu0 %v8218
    %11575 = vmatpush1.bf16.msra.mxu0 %v8217
    %11576 = vmatprep.subr.bf16.mxu0 %v8210
    %11577 = vmatpush1.bf16.msra.mxu0 %v8209
    %11578 = vmatprep.subr.bf16.mxu0 %v8330
    %11579 = vmatpush2.bf16.msra.mxu0 %v8329
    %11580 = vmatprep.subr.bf16.mxu0 %v8322
    %11581 = vmatpush2.bf16.msra.mxu0 %v8321
    %11582 = vmatprep.subr.bf16.mxu0 %v8314
    %11583 = vmatpush2.bf16.msra.mxu0 %v8313
    %11584 = vmatprep.subr.bf16.mxu0 %v8306
    %11585 = vmatpush2.bf16.msra.mxu0 %v8305
    %11586 = vmatprep.subr.bf16.mxu0 %v8298
    %11587 = vmatpush2.bf16.msra.mxu0 %v8297
    %11588 = vmatprep.subr.bf16.mxu0 %v8290
    %11589 = vmatpush2.bf16.msra.mxu0 %v8289
    %11590 = vmatprep.subr.bf16.mxu0 %v8282
    %11591 = vmatpush2.bf16.msra.mxu0 %v8281
    %11592 = vmatprep.subr.bf16.mxu0 %v8274
    %11593 = vmatpush2.bf16.msra.mxu0 %v8273
    %11594 = vmatprep.mubr.bf16.mxu0 %v11103
    %11595 = vmatmul.mubr.bf16.gmra.mxu0 %v11103
    %v11596 = vpop.f32.mrf.mxu0
    %v11597 = vadd.f32 %v11556, %v11596
    %v11598 = vpop.f32.mrf.mxu0
    %v11599 = vadd.f32 %v11558, %v11598
    %v11600 = vpop.f32.mrf.mxu0
    %v11601 = vpop.f32.mrf.mxu0
    %11602 = vdwg.mxu0
    %11603 = vmatprep.subr.bf16.mxu0 %v7884
    %11604 = vmatpush1.bf16.msra.mxu0 %v7883
    %11605 = vmatprep.subr.bf16.mxu0 %v7876
    %11606 = vmatpush1.bf16.msra.mxu0 %v7875
    %11607 = vmatprep.subr.bf16.mxu0 %v7868
    %11608 = vmatpush1.bf16.msra.mxu0 %v7867
    %11609 = vmatprep.subr.bf16.mxu0 %v7860
    %11610 = vmatpush1.bf16.msra.mxu0 %v7859
    %11611 = vmatprep.subr.bf16.mxu0 %v7852
    %11612 = vmatpush1.bf16.msra.mxu0 %v7851
    %11613 = vmatprep.subr.bf16.mxu0 %v7844
    %11614 = vmatpush1.bf16.msra.mxu0 %v7843
    %11615 = vmatprep.subr.bf16.mxu0 %v7836
    %11616 = vmatpush1.bf16.msra.mxu0 %v7835
    %11617 = vmatprep.subr.bf16.mxu0 %v7828
    %11618 = vmatpush1.bf16.msra.mxu0 %v7827
    %11619 = vmatprep.subr.bf16.mxu0 %v7948
    %11620 = vmatpush2.bf16.msra.mxu0 %v7947
    %11621 = vmatprep.subr.bf16.mxu0 %v7940
    %11622 = vmatpush2.bf16.msra.mxu0 %v7939
    %11623 = vmatprep.subr.bf16.mxu0 %v7932
    %11624 = vmatpush2.bf16.msra.mxu0 %v7931
    %11625 = vmatprep.subr.bf16.mxu0 %v7924
    %11626 = vmatpush2.bf16.msra.mxu0 %v7923
    %11627 = vmatprep.subr.bf16.mxu0 %v7916
    %11628 = vmatpush2.bf16.msra.mxu0 %v7915
    %11629 = vmatprep.subr.bf16.mxu0 %v7908
    %11630 = vmatpush2.bf16.msra.mxu0 %v7907
    %11631 = vmatprep.subr.bf16.mxu0 %v7900
    %11632 = vmatpush2.bf16.msra.mxu0 %v7899
    %11633 = vmatprep.subr.bf16.mxu0 %v7892
    %11634 = vmatpush2.bf16.msra.mxu0 %v7891
    %11635 = vmatprep.mubr.bf16.mxu0 %v11063
    %11636 = vmatmul.mubr.bf16.gmra.mxu0 %v11055
    %v11637 = vpop.f32.mrf.mxu0
    %v11638 = vadd.f32 0.0, %v11637
    %v11639 = vpop.f32.mrf.mxu0
    %v11640 = vadd.f32 0.0, %v11639
    %v11641 = vpop.f32.mrf.mxu0
    %v11642 = vpop.f32.mrf.mxu0
    %11643 = vdwg.mxu0
    %11644 = vmatprep.subr.bf16.mxu0 %v8012
    %11645 = vmatpush1.bf16.msra.mxu0 %v8011
    %11646 = vmatprep.subr.bf16.mxu0 %v8004
    %11647 = vmatpush1.bf16.msra.mxu0 %v8003
    %11648 = vmatprep.subr.bf16.mxu0 %v7996
    %11649 = vmatpush1.bf16.msra.mxu0 %v7995
    %11650 = vmatprep.subr.bf16.mxu0 %v7988
    %11651 = vmatpush1.bf16.msra.mxu0 %v7987
    %11652 = vmatprep.subr.bf16.mxu0 %v7980
    %11653 = vmatpush1.bf16.msra.mxu0 %v7979
    %11654 = vmatprep.subr.bf16.mxu0 %v7972
    %11655 = vmatpush1.bf16.msra.mxu0 %v7971
    %11656 = vmatprep.subr.bf16.mxu0 %v7964
    %11657 = vmatpush1.bf16.msra.mxu0 %v7963
    %11658 = vmatprep.subr.bf16.mxu0 %v7956
    %11659 = vmatpush1.bf16.msra.mxu0 %v7955
    %11660 = vmatprep.subr.bf16.mxu0 %v8076
    %11661 = vmatpush2.bf16.msra.mxu0 %v8075
    %11662 = vmatprep.subr.bf16.mxu0 %v8068
    %11663 = vmatpush2.bf16.msra.mxu0 %v8067
    %11664 = vmatprep.subr.bf16.mxu0 %v8060
    %11665 = vmatpush2.bf16.msra.mxu0 %v8059
    %11666 = vmatprep.subr.bf16.mxu0 %v8052
    %11667 = vmatpush2.bf16.msra.mxu0 %v8051
    %11668 = vmatprep.subr.bf16.mxu0 %v8044
    %11669 = vmatpush2.bf16.msra.mxu0 %v8043
    %11670 = vmatprep.subr.bf16.mxu0 %v8036
    %11671 = vmatpush2.bf16.msra.mxu0 %v8035
    %11672 = vmatprep.subr.bf16.mxu0 %v8028
    %11673 = vmatpush2.bf16.msra.mxu0 %v8027
    %11674 = vmatprep.subr.bf16.mxu0 %v8020
    %11675 = vmatpush2.bf16.msra.mxu0 %v8019
    %11676 = vmatprep.mubr.bf16.mxu0 %v11079
    %11677 = vmatmul.mubr.bf16.gmra.mxu0 %v11071
    %v11678 = vpop.f32.mrf.mxu0
    %v11679 = vadd.f32 %v11638, %v11678
    %v11680 = vpop.f32.mrf.mxu0
    %v11681 = vadd.f32 %v11640, %v11680
    %v11682 = vpop.f32.mrf.mxu0
    %v11683 = vpop.f32.mrf.mxu0
    %11684 = vdwg.mxu0
    %11685 = vmatprep.subr.bf16.mxu0 %v8140
    %11686 = vmatpush1.bf16.msra.mxu0 %v8139
    %11687 = vmatprep.subr.bf16.mxu0 %v8132
    %11688 = vmatpush1.bf16.msra.mxu0 %v8131
    %11689 = vmatprep.subr.bf16.mxu0 %v8124
    %11690 = vmatpush1.bf16.msra.mxu0 %v8123
    %11691 = vmatprep.subr.bf16.mxu0 %v8116
    %11692 = vmatpush1.bf16.msra.mxu0 %v8115
    %11693 = vmatprep.subr.bf16.mxu0 %v8108
    %11694 = vmatpush1.bf16.msra.mxu0 %v8107
    %11695 = vmatprep.subr.bf16.mxu0 %v8100
    %11696 = vmatpush1.bf16.msra.mxu0 %v8099
    %11697 = vmatprep.subr.bf16.mxu0 %v8092
    %11698 = vmatpush1.bf16.msra.mxu0 %v8091
    %11699 = vmatprep.subr.bf16.mxu0 %v8084
    %11700 = vmatpush1.bf16.msra.mxu0 %v8083
    %11701 = vmatprep.subr.bf16.mxu0 %v8204
    %11702 = vmatpush2.bf16.msra.mxu0 %v8203
    %11703 = vmatprep.subr.bf16.mxu0 %v8196
    %11704 = vmatpush2.bf16.msra.mxu0 %v8195
    %11705 = vmatprep.subr.bf16.mxu0 %v8188
    %11706 = vmatpush2.bf16.msra.mxu0 %v8187
    %11707 = vmatprep.subr.bf16.mxu0 %v8180
    %11708 = vmatpush2.bf16.msra.mxu0 %v8179
    %11709 = vmatprep.subr.bf16.mxu0 %v8172
    %11710 = vmatpush2.bf16.msra.mxu0 %v8171
    %11711 = vmatprep.subr.bf16.mxu0 %v8164
    %11712 = vmatpush2.bf16.msra.mxu0 %v8163
    %11713 = vmatprep.subr.bf16.mxu0 %v8156
    %11714 = vmatpush2.bf16.msra.mxu0 %v8155
    %11715 = vmatprep.subr.bf16.mxu0 %v8148
    %11716 = vmatpush2.bf16.msra.mxu0 %v8147
    %11717 = vmatprep.mubr.bf16.mxu0 %v11095
    %11718 = vmatmul.mubr.bf16.gmra.mxu0 %v11087
    %v11719 = vpop.f32.mrf.mxu0
    %v11720 = vadd.f32 %v11679, %v11719
    %v11721 = vpop.f32.mrf.mxu0
    %v11722 = vadd.f32 %v11681, %v11721
    %v11723 = vpop.f32.mrf.mxu0
    %v11724 = vpop.f32.mrf.mxu0
    %11725 = vdwg.mxu0
    %11726 = vmatprep.subr.bf16.mxu0 %v8268
    %11727 = vmatpush1.bf16.msra.mxu0 %v8267
    %11728 = vmatprep.subr.bf16.mxu0 %v8260
    %11729 = vmatpush1.bf16.msra.mxu0 %v8259
    %11730 = vmatprep.subr.bf16.mxu0 %v8252
    %11731 = vmatpush1.bf16.msra.mxu0 %v8251
    %11732 = vmatprep.subr.bf16.mxu0 %v8244
    %11733 = vmatpush1.bf16.msra.mxu0 %v8243
    %11734 = vmatprep.subr.bf16.mxu0 %v8236
    %11735 = vmatpush1.bf16.msra.mxu0 %v8235
    %11736 = vmatprep.subr.bf16.mxu0 %v8228
    %11737 = vmatpush1.bf16.msra.mxu0 %v8227
    %11738 = vmatprep.subr.bf16.mxu0 %v8220
    %11739 = vmatpush1.bf16.msra.mxu0 %v8219
    %11740 = vmatprep.subr.bf16.mxu0 %v8212
    %11741 = vmatpush1.bf16.msra.mxu0 %v8211
    %11742 = vmatprep.subr.bf16.mxu0 %v8332
    %11743 = vmatpush2.bf16.msra.mxu0 %v8331
    %11744 = vmatprep.subr.bf16.mxu0 %v8324
    %11745 = vmatpush2.bf16.msra.mxu0 %v8323
    %11746 = vmatprep.subr.bf16.mxu0 %v8316
    %11747 = vmatpush2.bf16.msra.mxu0 %v8315
    %11748 = vmatprep.subr.bf16.mxu0 %v8308
    %11749 = vmatpush2.bf16.msra.mxu0 %v8307
    %11750 = vmatprep.subr.bf16.mxu0 %v8300
    %11751 = vmatpush2.bf16.msra.mxu0 %v8299
    %11752 = vmatprep.subr.bf16.mxu0 %v8292
    %11753 = vmatpush2.bf16.msra.mxu0 %v8291
    %11754 = vmatprep.subr.bf16.mxu0 %v8284
    %11755 = vmatpush2.bf16.msra.mxu0 %v8283
    %11756 = vmatprep.subr.bf16.mxu0 %v8276
    %11757 = vmatpush2.bf16.msra.mxu0 %v8275
    %11758 = vmatprep.mubr.bf16.mxu0 %v11103
    %11759 = vmatmul.mubr.bf16.gmra.mxu0 %v11103
    %v11760 = vpop.f32.mrf.mxu0
    %v11761 = vadd.f32 %v11720, %v11760
    %v11762 = vpop.f32.mrf.mxu0
    %v11763 = vadd.f32 %v11722, %v11762
    %v11764 = vpop.f32.mrf.mxu0
    %v11765 = vpop.f32.mrf.mxu0
    %11766 = vdwg.mxu0
    %v11767 = vmax.f32 %v11269, %v11433
    %v11768 = vmax.f32 %v11271, %v11435
    %v11769 = vmax.f32 %v11597, %v11761
    %v11770 = vmax.f32 %v11599, %v11763
    %v11771 = vmax.f32 %v11767, %v11769
    %v11772 = vmax.f32 %v11768, %v11770
    %v11773 = vadd.f32 %v11771, %v9512
    %v11774 = vadd.f32 %v11772, %v9516
    %v11775 = vmax.f32 %v11773, 0.0
    %v11776 = vmax.f32 %v11774, 0.0
    %v11777 = vpack.c.bf16 %v11775, %v11775
    %v11778 = vpack.c.bf16 %v11776, %v11776
    %v11779 = vld [vmem:[%s7] sm:$0xff]
    %v11780 = vld [vmem:[%s7 + $0x8] sm:$0xff]
    %v11781 = vld [vmem:[%s7 + $0x10] sm:$0xff]
    %v11782 = vld [vmem:[%s7 + $0x18] sm:$0xff]
    %v11783 = vld [vmem:[%s7 + $0x20] sm:$0xff]
    %v11784 = vld [vmem:[%s7 + $0x28] sm:$0xff]
    %v11785 = vld [vmem:[%s7 + $0x30] sm:$0xff]
    %v11786 = vld [vmem:[%s7 + $0x38] sm:$0xff]
    %v11787 = vld [vmem:[%s7 + $0x40] sm:$0xff]
    %v11788 = vld [vmem:[%s7 + $0x48] sm:$0xff]
    %v11789 = vld [vmem:[%s7 + $0x50] sm:$0xff]
    %v11790 = vld [vmem:[%s7 + $0x58] sm:$0xff]
    %v11791 = vld [vmem:[%s7 + $0x60] sm:$0xff]
    %v11792 = vld [vmem:[%s7 + $0x68] sm:$0xff]
    %v11793 = vld [vmem:[%s7 + $0x70] sm:$0xff]
    %v11794 = vld [vmem:[%s7 + $0x78] sm:$0xff]
    %v11795 = vld [vmem:[%s7 + $0x80] sm:$0xff]
    %v11796 = vld [vmem:[%s7 + $0x88] sm:$0xff]
    %v11797 = vld [vmem:[%s7 + $0x90] sm:$0xff]
    %v11798 = vld [vmem:[%s7 + $0x98] sm:$0xff]
    %v11799 = vld [vmem:[%s7 + $0xa0] sm:$0xff]
    %v11800 = vld [vmem:[%s7 + $0xa8] sm:$0xff]
    %v11801 = vld [vmem:[%s7 + $0xb0] sm:$0xff]
    %v11802 = vld [vmem:[%s7 + $0xb8] sm:$0xff]
    %v11803 = vld [vmem:[%s7 + $0xc0] sm:$0xff]
    %v11804 = vld [vmem:[%s7 + $0xc8] sm:$0xff]
    %v11805 = vld [vmem:[%s7 + $0xd0] sm:$0xff]
    %v11806 = vld [vmem:[%s7 + $0xd8] sm:$0xff]
    %v11807 = vld [vmem:[%s7 + $0xe0] sm:$0xff]
    %v11808 = vld [vmem:[%s7 + $0xe8] sm:$0xff]
    %v11809 = vld [vmem:[%s7 + $0xf0] sm:$0xff]
    %v11810 = vld [vmem:[%s7 + $0xf8] sm:$0xff]
    %v11811 = vld [vmem:[%s7 + $0x100] sm:$0xff]
    %v11812 = vld [vmem:[%s7 + $0x108] sm:$0xff]
    %v11813 = vld [vmem:[%s7 + $0x110] sm:$0xff]
    %v11814 = vld [vmem:[%s7 + $0x118] sm:$0xff]
    %v11815 = vld [vmem:[%s7 + $0x120] sm:$0xff]
    %v11816 = vld [vmem:[%s7 + $0x128] sm:$0xff]
    %v11817 = vld [vmem:[%s7 + $0x130] sm:$0xff]
    %v11818 = vld [vmem:[%s7 + $0x138] sm:$0xff]
    %v11819 = vld [vmem:[%s7 + $0x140] sm:$0xff]
    %v11820 = vld [vmem:[%s7 + $0x148] sm:$0xff]
    %v11821 = vld [vmem:[%s7 + $0x150] sm:$0xff]
    %v11822 = vld [vmem:[%s7 + $0x158] sm:$0xff]
    %v11823 = vld [vmem:[%s7 + $0x160] sm:$0xff]
    %v11824 = vld [vmem:[%s7 + $0x168] sm:$0xff]
    %v11825 = vld [vmem:[%s7 + $0x170] sm:$0xff]
    %v11826 = vld [vmem:[%s7 + $0x178] sm:$0xff]
    %v11827 = vld [vmem:[%s7 + $0x180] sm:$0xff]
    %v11828 = vld [vmem:[%s7 + $0x188] sm:$0xff]
    %v11829 = vld [vmem:[%s7 + $0x190] sm:$0xff]
    %v11830 = vld [vmem:[%s7 + $0x198] sm:$0xff]
    %v11831 = vld [vmem:[%s7 + $0x1a0] sm:$0xff]
    %v11832 = vld [vmem:[%s7 + $0x1a8] sm:$0xff]
    %v11833 = vld [vmem:[%s7 + $0x1b0] sm:$0xff]
    %v11834 = vld [vmem:[%s7 + $0x1b8] sm:$0xff]
    %v11835 = vld [vmem:[%s7 + $0x1c0] sm:$0xff]
    %v11836 = vld [vmem:[%s7 + $0x1c8] sm:$0xff]
    %v11837 = vld [vmem:[%s7 + $0x1d0] sm:$0xff]
    %v11838 = vld [vmem:[%s7 + $0x1d8] sm:$0xff]
    %v11839 = vld [vmem:[%s7 + $0x1e0] sm:$0xff]
    %v11840 = vld [vmem:[%s7 + $0x1e8] sm:$0xff]
    %v11841 = vld [vmem:[%s7 + $0x1f0] sm:$0xff]
    %v11842 = vld [vmem:[%s7 + $0x1f8] sm:$0xff]
    %v11843 = vld [vmem:[%s7 + $0x200] sm:$0xff]
    %v11844 = vld [vmem:[%s7 + $0x208] sm:$0xff]
    %v11845 = vld [vmem:[%s7 + $0x210] sm:$0xff]
    %v11846 = vld [vmem:[%s7 + $0x218] sm:$0xff]
    %v11847 = vld [vmem:[%s7 + $0x220] sm:$0xff]
    %v11848 = vld [vmem:[%s7 + $0x228] sm:$0xff]
    %v11849 = vld [vmem:[%s7 + $0x230] sm:$0xff]
    %v11850 = vld [vmem:[%s7 + $0x238] sm:$0xff]
    %v11851 = vld [vmem:[%s7 + $0x240] sm:$0xff]
    %v11852 = vld [vmem:[%s7 + $0x248] sm:$0xff]
    %v11853 = vld [vmem:[%s7 + $0x250] sm:$0xff]
    %v11854 = vld [vmem:[%s7 + $0x258] sm:$0xff]
    %v11855 = vld [vmem:[%s7 + $0x260] sm:$0xff]
    %v11856 = vld [vmem:[%s7 + $0x268] sm:$0xff]
    %v11857 = vld [vmem:[%s7 + $0x270] sm:$0xff]
    %v11858 = vld [vmem:[%s7 + $0x278] sm:$0xff]
    %v11859 = vld [vmem:[%s7 + $0x280] sm:$0xff]
    %v11860 = vld [vmem:[%s7 + $0x288] sm:$0xff]
    %v11861 = vld [vmem:[%s7 + $0x290] sm:$0xff]
    %v11862 = vld [vmem:[%s7 + $0x298] sm:$0xff]
    %v11863 = vld [vmem:[%s7 + $0x2a0] sm:$0xff]
    %v11864 = vld [vmem:[%s7 + $0x2a8] sm:$0xff]
    %v11865 = vld [vmem:[%s7 + $0x2b0] sm:$0xff]
    %v11866 = vld [vmem:[%s7 + $0x2b8] sm:$0xff]
    %v11867 = vld [vmem:[%s7 + $0x2c0] sm:$0xff]
    %v11868 = vld [vmem:[%s7 + $0x2c8] sm:$0xff]
    %v11869 = vld [vmem:[%s7 + $0x2d0] sm:$0xff]
    %v11870 = vld [vmem:[%s7 + $0x2d8] sm:$0xff]
    %v11871 = vld [vmem:[%s7 + $0x2e0] sm:$0xff]
    %v11872 = vld [vmem:[%s7 + $0x2e8] sm:$0xff]
    %v11873 = vld [vmem:[%s7 + $0x2f0] sm:$0xff]
    %v11874 = vld [vmem:[%s7 + $0x2f8] sm:$0xff]
    %v11875 = vld [vmem:[%s7 + $0x300] sm:$0xff]
    %v11876 = vld [vmem:[%s7 + $0x308] sm:$0xff]
    %v11877 = vld [vmem:[%s7 + $0x310] sm:$0xff]
    %v11878 = vld [vmem:[%s7 + $0x318] sm:$0xff]
    %v11879 = vld [vmem:[%s7 + $0x320] sm:$0xff]
    %v11880 = vld [vmem:[%s7 + $0x328] sm:$0xff]
    %v11881 = vld [vmem:[%s7 + $0x330] sm:$0xff]
    %v11882 = vld [vmem:[%s7 + $0x338] sm:$0xff]
    %v11883 = vld [vmem:[%s7 + $0x340] sm:$0xff]
    %v11884 = vld [vmem:[%s7 + $0x348] sm:$0xff]
    %v11885 = vld [vmem:[%s7 + $0x350] sm:$0xff]
    %v11886 = vld [vmem:[%s7 + $0x358] sm:$0xff]
    %v11887 = vld [vmem:[%s7 + $0x360] sm:$0xff]
    %v11888 = vld [vmem:[%s7 + $0x368] sm:$0xff]
    %v11889 = vld [vmem:[%s7 + $0x370] sm:$0xff]
    %v11890 = vld [vmem:[%s7 + $0x378] sm:$0xff]
    %v11891 = vld [vmem:[%s7 + $0x380] sm:$0xff]
    %v11892 = vld [vmem:[%s7 + $0x388] sm:$0xff]
    %v11893 = vld [vmem:[%s7 + $0x390] sm:$0xff]
    %v11894 = vld [vmem:[%s7 + $0x398] sm:$0xff]
    %v11895 = vld [vmem:[%s7 + $0x3a0] sm:$0xff]
    %v11896 = vld [vmem:[%s7 + $0x3a8] sm:$0xff]
    %v11897 = vld [vmem:[%s7 + $0x3b0] sm:$0xff]
    %v11898 = vld [vmem:[%s7 + $0x3b8] sm:$0xff]
    %v11899 = vld [vmem:[%s7 + $0x3c0] sm:$0xff]
    %v11900 = vld [vmem:[%s7 + $0x3c8] sm:$0xff]
    %v11901 = vld [vmem:[%s7 + $0x3d0] sm:$0xff]
    %v11902 = vld [vmem:[%s7 + $0x3d8] sm:$0xff]
    %v11903 = vld [vmem:[%s7 + $0x3e0] sm:$0xff]
    %v11904 = vld [vmem:[%s7 + $0x3e8] sm:$0xff]
    %v11905 = vld [vmem:[%s7 + $0x3f0] sm:$0xff]
    %v11906 = vld [vmem:[%s7 + $0x3f8] sm:$0xff]
    %v11907 = vld [vmem:[%s7 + $0x400] sm:$0xff]
    %v11908 = vld [vmem:[%s7 + $0x408] sm:$0xff]
    %v11909 = vld [vmem:[%s7 + $0x410] sm:$0xff]
    %v11910 = vld [vmem:[%s7 + $0x418] sm:$0xff]
    %v11911 = vld [vmem:[%s7 + $0x420] sm:$0xff]
    %v11912 = vld [vmem:[%s7 + $0x428] sm:$0xff]
    %v11913 = vld [vmem:[%s7 + $0x430] sm:$0xff]
    %v11914 = vld [vmem:[%s7 + $0x438] sm:$0xff]
    %v11915 = vld [vmem:[%s7 + $0x440] sm:$0xff]
    %v11916 = vld [vmem:[%s7 + $0x448] sm:$0xff]
    %v11917 = vld [vmem:[%s7 + $0x450] sm:$0xff]
    %v11918 = vld [vmem:[%s7 + $0x458] sm:$0xff]
    %v11919 = vld [vmem:[%s7 + $0x460] sm:$0xff]
    %v11920 = vld [vmem:[%s7 + $0x468] sm:$0xff]
    %v11921 = vld [vmem:[%s7 + $0x470] sm:$0xff]
    %v11922 = vld [vmem:[%s7 + $0x478] sm:$0xff]
    %v11923 = vld [vmem:[%s7 + $0x480] sm:$0xff]
    %v11924 = vld [vmem:[%s7 + $0x488] sm:$0xff]
    %v11925 = vld [vmem:[%s7 + $0x490] sm:$0xff]
    %v11926 = vld [vmem:[%s7 + $0x498] sm:$0xff]
    %v11927 = vld [vmem:[%s7 + $0x4a0] sm:$0xff]
    %v11928 = vld [vmem:[%s7 + $0x4a8] sm:$0xff]
    %v11929 = vld [vmem:[%s7 + $0x4b0] sm:$0xff]
    %v11930 = vld [vmem:[%s7 + $0x4b8] sm:$0xff]
    %v11931 = vld [vmem:[%s7 + $0x4c0] sm:$0xff]
    %v11932 = vld [vmem:[%s7 + $0x4c8] sm:$0xff]
    %v11933 = vld [vmem:[%s7 + $0x4d0] sm:$0xff]
    %v11934 = vld [vmem:[%s7 + $0x4d8] sm:$0xff]
    %v11935 = vld [vmem:[%s7 + $0x4e0] sm:$0xff]
    %v11936 = vld [vmem:[%s7 + $0x4e8] sm:$0xff]
    %v11937 = vld [vmem:[%s7 + $0x4f0] sm:$0xff]
    %v11938 = vld [vmem:[%s7 + $0x4f8] sm:$0xff]
    %v11939 = vld [vmem:[%s7 + $0x500] sm:$0xff]
    %v11940 = vld [vmem:[%s7 + $0x508] sm:$0xff]
    %v11941 = vld [vmem:[%s7 + $0x510] sm:$0xff]
    %v11942 = vld [vmem:[%s7 + $0x518] sm:$0xff]
    %v11943 = vld [vmem:[%s7 + $0x520] sm:$0xff]
    %v11944 = vld [vmem:[%s7 + $0x528] sm:$0xff]
    %v11945 = vld [vmem:[%s7 + $0x530] sm:$0xff]
    %v11946 = vld [vmem:[%s7 + $0x538] sm:$0xff]
    %v11947 = vld [vmem:[%s7 + $0x540] sm:$0xff]
    %v11948 = vld [vmem:[%s7 + $0x548] sm:$0xff]
    %v11949 = vld [vmem:[%s7 + $0x550] sm:$0xff]
    %v11950 = vld [vmem:[%s7 + $0x558] sm:$0xff]
    %v11951 = vld [vmem:[%s7 + $0x560] sm:$0xff]
    %v11952 = vld [vmem:[%s7 + $0x568] sm:$0xff]
    %v11953 = vld [vmem:[%s7 + $0x570] sm:$0xff]
    %v11954 = vld [vmem:[%s7 + $0x578] sm:$0xff]
    %v11955 = vld [vmem:[%s7 + $0x580] sm:$0xff]
    %v11956 = vld [vmem:[%s7 + $0x588] sm:$0xff]
    %v11957 = vld [vmem:[%s7 + $0x590] sm:$0xff]
    %v11958 = vld [vmem:[%s7 + $0x598] sm:$0xff]
    %v11959 = vld [vmem:[%s7 + $0x5a0] sm:$0xff]
    %v11960 = vld [vmem:[%s7 + $0x5a8] sm:$0xff]
    %v11961 = vld [vmem:[%s7 + $0x5b0] sm:$0xff]
    %v11962 = vld [vmem:[%s7 + $0x5b8] sm:$0xff]
    %v11963 = vld [vmem:[%s7 + $0x5c0] sm:$0xff]
    %v11964 = vld [vmem:[%s7 + $0x5c8] sm:$0xff]
    %v11965 = vld [vmem:[%s7 + $0x5d0] sm:$0xff]
    %v11966 = vld [vmem:[%s7 + $0x5d8] sm:$0xff]
    %v11967 = vld [vmem:[%s7 + $0x5e0] sm:$0xff]
    %v11968 = vld [vmem:[%s7 + $0x5e8] sm:$0xff]
    %v11969 = vld [vmem:[%s7 + $0x5f0] sm:$0xff]
    %v11970 = vld [vmem:[%s7 + $0x5f8] sm:$0xff]
    %v11971 = vld [vmem:[%s7 + $0x600] sm:$0xff]
    %v11972 = vld [vmem:[%s7 + $0x608] sm:$0xff]
    %v11973 = vld [vmem:[%s7 + $0x610] sm:$0xff]
    %v11974 = vld [vmem:[%s7 + $0x618] sm:$0xff]
    %v11975 = vld [vmem:[%s7 + $0x620] sm:$0xff]
    %v11976 = vld [vmem:[%s7 + $0x628] sm:$0xff]
    %v11977 = vld [vmem:[%s7 + $0x630] sm:$0xff]
    %v11978 = vld [vmem:[%s7 + $0x638] sm:$0xff]
    %v11979 = vld [vmem:[%s7 + $0x640] sm:$0xff]
    %v11980 = vld [vmem:[%s7 + $0x648] sm:$0xff]
    %v11981 = vld [vmem:[%s7 + $0x650] sm:$0xff]
    %v11982 = vld [vmem:[%s7 + $0x658] sm:$0xff]
    %v11983 = vld [vmem:[%s7 + $0x660] sm:$0xff]
    %v11984 = vld [vmem:[%s7 + $0x668] sm:$0xff]
    %v11985 = vld [vmem:[%s7 + $0x670] sm:$0xff]
    %v11986 = vld [vmem:[%s7 + $0x678] sm:$0xff]
    %v11987 = vld [vmem:[%s7 + $0x680] sm:$0xff]
    %v11988 = vld [vmem:[%s7 + $0x688] sm:$0xff]
    %v11989 = vld [vmem:[%s7 + $0x690] sm:$0xff]
    %v11990 = vld [vmem:[%s7 + $0x698] sm:$0xff]
    %v11991 = vld [vmem:[%s7 + $0x6a0] sm:$0xff]
    %v11992 = vld [vmem:[%s7 + $0x6a8] sm:$0xff]
    %v11993 = vld [vmem:[%s7 + $0x6b0] sm:$0xff]
    %v11994 = vld [vmem:[%s7 + $0x6b8] sm:$0xff]
    %v11995 = vld [vmem:[%s7 + $0x6c0] sm:$0xff]
    %v11996 = vld [vmem:[%s7 + $0x6c8] sm:$0xff]
    %v11997 = vld [vmem:[%s7 + $0x6d0] sm:$0xff]
    %v11998 = vld [vmem:[%s7 + $0x6d8] sm:$0xff]
    %v11999 = vld [vmem:[%s7 + $0x6e0] sm:$0xff]
    %v12000 = vld [vmem:[%s7 + $0x6e8] sm:$0xff]
    %v12001 = vld [vmem:[%s7 + $0x6f0] sm:$0xff]
    %v12002 = vld [vmem:[%s7 + $0x6f8] sm:$0xff]
    %v12003 = vld [vmem:[%s7 + $0x700] sm:$0xff]
    %v12004 = vld [vmem:[%s7 + $0x708] sm:$0xff]
    %v12005 = vld [vmem:[%s7 + $0x710] sm:$0xff]
    %v12006 = vld [vmem:[%s7 + $0x718] sm:$0xff]
    %v12007 = vld [vmem:[%s7 + $0x720] sm:$0xff]
    %v12008 = vld [vmem:[%s7 + $0x728] sm:$0xff]
    %v12009 = vld [vmem:[%s7 + $0x730] sm:$0xff]
    %v12010 = vld [vmem:[%s7 + $0x738] sm:$0xff]
    %v12011 = vld [vmem:[%s7 + $0x740] sm:$0xff]
    %v12012 = vld [vmem:[%s7 + $0x748] sm:$0xff]
    %v12013 = vld [vmem:[%s7 + $0x750] sm:$0xff]
    %v12014 = vld [vmem:[%s7 + $0x758] sm:$0xff]
    %v12015 = vld [vmem:[%s7 + $0x760] sm:$0xff]
    %v12016 = vld [vmem:[%s7 + $0x768] sm:$0xff]
    %v12017 = vld [vmem:[%s7 + $0x770] sm:$0xff]
    %v12018 = vld [vmem:[%s7 + $0x778] sm:$0xff]
    %v12019 = vld [vmem:[%s7 + $0x780] sm:$0xff]
    %v12020 = vld [vmem:[%s7 + $0x788] sm:$0xff]
    %v12021 = vld [vmem:[%s7 + $0x790] sm:$0xff]
    %v12022 = vld [vmem:[%s7 + $0x798] sm:$0xff]
    %v12023 = vld [vmem:[%s7 + $0x7a0] sm:$0xff]
    %v12024 = vld [vmem:[%s7 + $0x7a8] sm:$0xff]
    %v12025 = vld [vmem:[%s7 + $0x7b0] sm:$0xff]
    %v12026 = vld [vmem:[%s7 + $0x7b8] sm:$0xff]
    %v12027 = vld [vmem:[%s7 + $0x7c0] sm:$0xff]
    %v12028 = vld [vmem:[%s7 + $0x7c8] sm:$0xff]
    %v12029 = vld [vmem:[%s7 + $0x7d0] sm:$0xff]
    %v12030 = vld [vmem:[%s7 + $0x7d8] sm:$0xff]
    %v12031 = vld [vmem:[%s7 + $0x7e0] sm:$0xff]
    %v12032 = vld [vmem:[%s7 + $0x7e8] sm:$0xff]
    %v12033 = vld [vmem:[%s7 + $0x7f0] sm:$0xff]
    %v12034 = vld [vmem:[%s7 + $0x7f8] sm:$0xff]
    %v12035 = vld [vmem:[%s8] sm:$0xf]
    %v12037 = vlaneseq
    %v12038 = vshrl.u32 %v12037, 7
    %v12039 = vsub.s32 0, %v12038
    %v12040 = vrot.slane %v12035, %v12039
    %v12041 = vlaneseq
    %v12042 = vshrl.u32 %v12041, 7
    %v12043 = vsub.s32 1, %v12042
    %v12044 = vrot.slane %v12035, %v12043
    %v12045 = vlaneseq
    %v12046 = vshrl.u32 %v12045, 7
    %v12047 = vsub.s32 2, %v12046
    %v12048 = vrot.slane %v12035, %v12047
    %v12049 = vlaneseq
    %v12050 = vshrl.u32 %v12049, 7
    %v12051 = vsub.s32 3, %v12050
    %v12052 = vrot.slane %v12035, %v12051
    %v12313 = vunpack.c.l.b16 %v11779
    %v12314 = vunpack.c.h.b16 %v11779
    %v12315 = vunpack.c.l.b16 %v11780
    %v12316 = vunpack.c.h.b16 %v11780
    %v12317 = vunpack.c.l.b16 %v11781
    %v12318 = vunpack.c.h.b16 %v11781
    %v12319 = vunpack.c.l.b16 %v11782
    %v12320 = vunpack.c.h.b16 %v11782
    %v12321 = vunpack.c.l.b16 %v11783
    %v12322 = vunpack.c.h.b16 %v11783
    %v12323 = vunpack.c.l.b16 %v11784
    %v12324 = vunpack.c.h.b16 %v11784
    %v12325 = vunpack.c.l.b16 %v11785
    %v12326 = vunpack.c.h.b16 %v11785
    %v12327 = vunpack.c.l.b16 %v11786
    %v12328 = vunpack.c.h.b16 %v11786
    %v12329 = vunpack.c.l.b16 %v11787
    %v12330 = vunpack.c.h.b16 %v11787
    %v12331 = vunpack.c.l.b16 %v11788
    %v12332 = vunpack.c.h.b16 %v11788
    %v12333 = vunpack.c.l.b16 %v11789
    %v12334 = vunpack.c.h.b16 %v11789
    %v12335 = vunpack.c.l.b16 %v11790
    %v12336 = vunpack.c.h.b16 %v11790
    %v12337 = vunpack.c.l.b16 %v11791
    %v12338 = vunpack.c.h.b16 %v11791
    %v12339 = vunpack.c.l.b16 %v11792
    %v12340 = vunpack.c.h.b16 %v11792
    %v12341 = vunpack.c.l.b16 %v11793
    %v12342 = vunpack.c.h.b16 %v11793
    %v12343 = vunpack.c.l.b16 %v11794
    %v12344 = vunpack.c.h.b16 %v11794
    %v12345 = vunpack.c.l.b16 %v11795
    %v12346 = vunpack.c.h.b16 %v11795
    %v12347 = vunpack.c.l.b16 %v11796
    %v12348 = vunpack.c.h.b16 %v11796
    %v12349 = vunpack.c.l.b16 %v11797
    %v12350 = vunpack.c.h.b16 %v11797
    %v12351 = vunpack.c.l.b16 %v11798
    %v12352 = vunpack.c.h.b16 %v11798
    %v12353 = vunpack.c.l.b16 %v11799
    %v12354 = vunpack.c.h.b16 %v11799
    %v12355 = vunpack.c.l.b16 %v11800
    %v12356 = vunpack.c.h.b16 %v11800
    %v12357 = vunpack.c.l.b16 %v11801
    %v12358 = vunpack.c.h.b16 %v11801
    %v12359 = vunpack.c.l.b16 %v11802
    %v12360 = vunpack.c.h.b16 %v11802
    %v12361 = vunpack.c.l.b16 %v11803
    %v12362 = vunpack.c.h.b16 %v11803
    %v12363 = vunpack.c.l.b16 %v11804
    %v12364 = vunpack.c.h.b16 %v11804
    %v12365 = vunpack.c.l.b16 %v11805
    %v12366 = vunpack.c.h.b16 %v11805
    %v12367 = vunpack.c.l.b16 %v11806
    %v12368 = vunpack.c.h.b16 %v11806
    %v12369 = vunpack.c.l.b16 %v11807
    %v12370 = vunpack.c.h.b16 %v11807
    %v12371 = vunpack.c.l.b16 %v11808
    %v12372 = vunpack.c.h.b16 %v11808
    %v12373 = vunpack.c.l.b16 %v11809
    %v12374 = vunpack.c.h.b16 %v11809
    %v12375 = vunpack.c.l.b16 %v11810
    %v12376 = vunpack.c.h.b16 %v11810
    %v12377 = vunpack.c.l.b16 %v11811
    %v12378 = vunpack.c.h.b16 %v11811
    %v12379 = vunpack.c.l.b16 %v11812
    %v12380 = vunpack.c.h.b16 %v11812
    %v12381 = vunpack.c.l.b16 %v11813
    %v12382 = vunpack.c.h.b16 %v11813
    %v12383 = vunpack.c.l.b16 %v11814
    %v12384 = vunpack.c.h.b16 %v11814
    %v12385 = vunpack.c.l.b16 %v11815
    %v12386 = vunpack.c.h.b16 %v11815
    %v12387 = vunpack.c.l.b16 %v11816
    %v12388 = vunpack.c.h.b16 %v11816
    %v12389 = vunpack.c.l.b16 %v11817
    %v12390 = vunpack.c.h.b16 %v11817
    %v12391 = vunpack.c.l.b16 %v11818
    %v12392 = vunpack.c.h.b16 %v11818
    %v12393 = vunpack.c.l.b16 %v11819
    %v12394 = vunpack.c.h.b16 %v11819
    %v12395 = vunpack.c.l.b16 %v11820
    %v12396 = vunpack.c.h.b16 %v11820
    %v12397 = vunpack.c.l.b16 %v11821
    %v12398 = vunpack.c.h.b16 %v11821
    %v12399 = vunpack.c.l.b16 %v11822
    %v12400 = vunpack.c.h.b16 %v11822
    %v12401 = vunpack.c.l.b16 %v11823
    %v12402 = vunpack.c.h.b16 %v11823
    %v12403 = vunpack.c.l.b16 %v11824
    %v12404 = vunpack.c.h.b16 %v11824
    %v12405 = vunpack.c.l.b16 %v11825
    %v12406 = vunpack.c.h.b16 %v11825
    %v12407 = vunpack.c.l.b16 %v11826
    %v12408 = vunpack.c.h.b16 %v11826
    %v12409 = vunpack.c.l.b16 %v11827
    %v12410 = vunpack.c.h.b16 %v11827
    %v12411 = vunpack.c.l.b16 %v11828
    %v12412 = vunpack.c.h.b16 %v11828
    %v12413 = vunpack.c.l.b16 %v11829
    %v12414 = vunpack.c.h.b16 %v11829
    %v12415 = vunpack.c.l.b16 %v11830
    %v12416 = vunpack.c.h.b16 %v11830
    %v12417 = vunpack.c.l.b16 %v11831
    %v12418 = vunpack.c.h.b16 %v11831
    %v12419 = vunpack.c.l.b16 %v11832
    %v12420 = vunpack.c.h.b16 %v11832
    %v12421 = vunpack.c.l.b16 %v11833
    %v12422 = vunpack.c.h.b16 %v11833
    %v12423 = vunpack.c.l.b16 %v11834
    %v12424 = vunpack.c.h.b16 %v11834
    %v12425 = vunpack.c.l.b16 %v11835
    %v12426 = vunpack.c.h.b16 %v11835
    %v12427 = vunpack.c.l.b16 %v11836
    %v12428 = vunpack.c.h.b16 %v11836
    %v12429 = vunpack.c.l.b16 %v11837
    %v12430 = vunpack.c.h.b16 %v11837
    %v12431 = vunpack.c.l.b16 %v11838
    %v12432 = vunpack.c.h.b16 %v11838
    %v12433 = vunpack.c.l.b16 %v11839
    %v12434 = vunpack.c.h.b16 %v11839
    %v12435 = vunpack.c.l.b16 %v11840
    %v12436 = vunpack.c.h.b16 %v11840
    %v12437 = vunpack.c.l.b16 %v11841
    %v12438 = vunpack.c.h.b16 %v11841
    %v12439 = vunpack.c.l.b16 %v11842
    %v12440 = vunpack.c.h.b16 %v11842
    %v12441 = vunpack.c.l.b16 %v11843
    %v12442 = vunpack.c.h.b16 %v11843
    %v12443 = vunpack.c.l.b16 %v11844
    %v12444 = vunpack.c.h.b16 %v11844
    %v12445 = vunpack.c.l.b16 %v11845
    %v12446 = vunpack.c.h.b16 %v11845
    %v12447 = vunpack.c.l.b16 %v11846
    %v12448 = vunpack.c.h.b16 %v11846
    %v12449 = vunpack.c.l.b16 %v11847
    %v12450 = vunpack.c.h.b16 %v11847
    %v12451 = vunpack.c.l.b16 %v11848
    %v12452 = vunpack.c.h.b16 %v11848
    %v12453 = vunpack.c.l.b16 %v11849
    %v12454 = vunpack.c.h.b16 %v11849
    %v12455 = vunpack.c.l.b16 %v11850
    %v12456 = vunpack.c.h.b16 %v11850
    %v12457 = vunpack.c.l.b16 %v11851
    %v12458 = vunpack.c.h.b16 %v11851
    %v12459 = vunpack.c.l.b16 %v11852
    %v12460 = vunpack.c.h.b16 %v11852
    %v12461 = vunpack.c.l.b16 %v11853
    %v12462 = vunpack.c.h.b16 %v11853
    %v12463 = vunpack.c.l.b16 %v11854
    %v12464 = vunpack.c.h.b16 %v11854
    %v12465 = vunpack.c.l.b16 %v11855
    %v12466 = vunpack.c.h.b16 %v11855
    %v12467 = vunpack.c.l.b16 %v11856
    %v12468 = vunpack.c.h.b16 %v11856
    %v12469 = vunpack.c.l.b16 %v11857
    %v12470 = vunpack.c.h.b16 %v11857
    %v12471 = vunpack.c.l.b16 %v11858
    %v12472 = vunpack.c.h.b16 %v11858
    %v12473 = vunpack.c.l.b16 %v11859
    %v12474 = vunpack.c.h.b16 %v11859
    %v12475 = vunpack.c.l.b16 %v11860
    %v12476 = vunpack.c.h.b16 %v11860
    %v12477 = vunpack.c.l.b16 %v11861
    %v12478 = vunpack.c.h.b16 %v11861
    %v12479 = vunpack.c.l.b16 %v11862
    %v12480 = vunpack.c.h.b16 %v11862
    %v12481 = vunpack.c.l.b16 %v11863
    %v12482 = vunpack.c.h.b16 %v11863
    %v12483 = vunpack.c.l.b16 %v11864
    %v12484 = vunpack.c.h.b16 %v11864
    %v12485 = vunpack.c.l.b16 %v11865
    %v12486 = vunpack.c.h.b16 %v11865
    %v12487 = vunpack.c.l.b16 %v11866
    %v12488 = vunpack.c.h.b16 %v11866
    %v12489 = vunpack.c.l.b16 %v11867
    %v12490 = vunpack.c.h.b16 %v11867
    %v12491 = vunpack.c.l.b16 %v11868
    %v12492 = vunpack.c.h.b16 %v11868
    %v12493 = vunpack.c.l.b16 %v11869
    %v12494 = vunpack.c.h.b16 %v11869
    %v12495 = vunpack.c.l.b16 %v11870
    %v12496 = vunpack.c.h.b16 %v11870
    %v12497 = vunpack.c.l.b16 %v11871
    %v12498 = vunpack.c.h.b16 %v11871
    %v12499 = vunpack.c.l.b16 %v11872
    %v12500 = vunpack.c.h.b16 %v11872
    %v12501 = vunpack.c.l.b16 %v11873
    %v12502 = vunpack.c.h.b16 %v11873
    %v12503 = vunpack.c.l.b16 %v11874
    %v12504 = vunpack.c.h.b16 %v11874
    %v12505 = vunpack.c.l.b16 %v11875
    %v12506 = vunpack.c.h.b16 %v11875
    %v12507 = vunpack.c.l.b16 %v11876
    %v12508 = vunpack.c.h.b16 %v11876
    %v12509 = vunpack.c.l.b16 %v11877
    %v12510 = vunpack.c.h.b16 %v11877
    %v12511 = vunpack.c.l.b16 %v11878
    %v12512 = vunpack.c.h.b16 %v11878
    %v12513 = vunpack.c.l.b16 %v11879
    %v12514 = vunpack.c.h.b16 %v11879
    %v12515 = vunpack.c.l.b16 %v11880
    %v12516 = vunpack.c.h.b16 %v11880
    %v12517 = vunpack.c.l.b16 %v11881
    %v12518 = vunpack.c.h.b16 %v11881
    %v12519 = vunpack.c.l.b16 %v11882
    %v12520 = vunpack.c.h.b16 %v11882
    %v12521 = vunpack.c.l.b16 %v11883
    %v12522 = vunpack.c.h.b16 %v11883
    %v12523 = vunpack.c.l.b16 %v11884
    %v12524 = vunpack.c.h.b16 %v11884
    %v12525 = vunpack.c.l.b16 %v11885
    %v12526 = vunpack.c.h.b16 %v11885
    %v12527 = vunpack.c.l.b16 %v11886
    %v12528 = vunpack.c.h.b16 %v11886
    %v12529 = vunpack.c.l.b16 %v11887
    %v12530 = vunpack.c.h.b16 %v11887
    %v12531 = vunpack.c.l.b16 %v11888
    %v12532 = vunpack.c.h.b16 %v11888
    %v12533 = vunpack.c.l.b16 %v11889
    %v12534 = vunpack.c.h.b16 %v11889
    %v12535 = vunpack.c.l.b16 %v11890
    %v12536 = vunpack.c.h.b16 %v11890
    %v12537 = vunpack.c.l.b16 %v11891
    %v12538 = vunpack.c.h.b16 %v11891
    %v12539 = vunpack.c.l.b16 %v11892
    %v12540 = vunpack.c.h.b16 %v11892
    %v12541 = vunpack.c.l.b16 %v11893
    %v12542 = vunpack.c.h.b16 %v11893
    %v12543 = vunpack.c.l.b16 %v11894
    %v12544 = vunpack.c.h.b16 %v11894
    %v12545 = vunpack.c.l.b16 %v11895
    %v12546 = vunpack.c.h.b16 %v11895
    %v12547 = vunpack.c.l.b16 %v11896
    %v12548 = vunpack.c.h.b16 %v11896
    %v12549 = vunpack.c.l.b16 %v11897
    %v12550 = vunpack.c.h.b16 %v11897
    %v12551 = vunpack.c.l.b16 %v11898
    %v12552 = vunpack.c.h.b16 %v11898
    %v12553 = vunpack.c.l.b16 %v11899
    %v12554 = vunpack.c.h.b16 %v11899
    %v12555 = vunpack.c.l.b16 %v11900
    %v12556 = vunpack.c.h.b16 %v11900
    %v12557 = vunpack.c.l.b16 %v11901
    %v12558 = vunpack.c.h.b16 %v11901
    %v12559 = vunpack.c.l.b16 %v11902
    %v12560 = vunpack.c.h.b16 %v11902
    %v12561 = vunpack.c.l.b16 %v11903
    %v12562 = vunpack.c.h.b16 %v11903
    %v12563 = vunpack.c.l.b16 %v11904
    %v12564 = vunpack.c.h.b16 %v11904
    %v12565 = vunpack.c.l.b16 %v11905
    %v12566 = vunpack.c.h.b16 %v11905
    %v12567 = vunpack.c.l.b16 %v11906
    %v12568 = vunpack.c.h.b16 %v11906
    %v12569 = vunpack.c.l.b16 %v11907
    %v12570 = vunpack.c.h.b16 %v11907
    %v12571 = vunpack.c.l.b16 %v11908
    %v12572 = vunpack.c.h.b16 %v11908
    %v12573 = vunpack.c.l.b16 %v11909
    %v12574 = vunpack.c.h.b16 %v11909
    %v12575 = vunpack.c.l.b16 %v11910
    %v12576 = vunpack.c.h.b16 %v11910
    %v12577 = vunpack.c.l.b16 %v11911
    %v12578 = vunpack.c.h.b16 %v11911
    %v12579 = vunpack.c.l.b16 %v11912
    %v12580 = vunpack.c.h.b16 %v11912
    %v12581 = vunpack.c.l.b16 %v11913
    %v12582 = vunpack.c.h.b16 %v11913
    %v12583 = vunpack.c.l.b16 %v11914
    %v12584 = vunpack.c.h.b16 %v11914
    %v12585 = vunpack.c.l.b16 %v11915
    %v12586 = vunpack.c.h.b16 %v11915
    %v12587 = vunpack.c.l.b16 %v11916
    %v12588 = vunpack.c.h.b16 %v11916
    %v12589 = vunpack.c.l.b16 %v11917
    %v12590 = vunpack.c.h.b16 %v11917
    %v12591 = vunpack.c.l.b16 %v11918
    %v12592 = vunpack.c.h.b16 %v11918
    %v12593 = vunpack.c.l.b16 %v11919
    %v12594 = vunpack.c.h.b16 %v11919
    %v12595 = vunpack.c.l.b16 %v11920
    %v12596 = vunpack.c.h.b16 %v11920
    %v12597 = vunpack.c.l.b16 %v11921
    %v12598 = vunpack.c.h.b16 %v11921
    %v12599 = vunpack.c.l.b16 %v11922
    %v12600 = vunpack.c.h.b16 %v11922
    %v12601 = vunpack.c.l.b16 %v11923
    %v12602 = vunpack.c.h.b16 %v11923
    %v12603 = vunpack.c.l.b16 %v11924
    %v12604 = vunpack.c.h.b16 %v11924
    %v12605 = vunpack.c.l.b16 %v11925
    %v12606 = vunpack.c.h.b16 %v11925
    %v12607 = vunpack.c.l.b16 %v11926
    %v12608 = vunpack.c.h.b16 %v11926
    %v12609 = vunpack.c.l.b16 %v11927
    %v12610 = vunpack.c.h.b16 %v11927
    %v12611 = vunpack.c.l.b16 %v11928
    %v12612 = vunpack.c.h.b16 %v11928
    %v12613 = vunpack.c.l.b16 %v11929
    %v12614 = vunpack.c.h.b16 %v11929
    %v12615 = vunpack.c.l.b16 %v11930
    %v12616 = vunpack.c.h.b16 %v11930
    %v12617 = vunpack.c.l.b16 %v11931
    %v12618 = vunpack.c.h.b16 %v11931
    %v12619 = vunpack.c.l.b16 %v11932
    %v12620 = vunpack.c.h.b16 %v11932
    %v12621 = vunpack.c.l.b16 %v11933
    %v12622 = vunpack.c.h.b16 %v11933
    %v12623 = vunpack.c.l.b16 %v11934
    %v12624 = vunpack.c.h.b16 %v11934
    %v12625 = vunpack.c.l.b16 %v11935
    %v12626 = vunpack.c.h.b16 %v11935
    %v12627 = vunpack.c.l.b16 %v11936
    %v12628 = vunpack.c.h.b16 %v11936
    %v12629 = vunpack.c.l.b16 %v11937
    %v12630 = vunpack.c.h.b16 %v11937
    %v12631 = vunpack.c.l.b16 %v11938
    %v12632 = vunpack.c.h.b16 %v11938
    %v12633 = vunpack.c.l.b16 %v11939
    %v12634 = vunpack.c.h.b16 %v11939
    %v12635 = vunpack.c.l.b16 %v11940
    %v12636 = vunpack.c.h.b16 %v11940
    %v12637 = vunpack.c.l.b16 %v11941
    %v12638 = vunpack.c.h.b16 %v11941
    %v12639 = vunpack.c.l.b16 %v11942
    %v12640 = vunpack.c.h.b16 %v11942
    %v12641 = vunpack.c.l.b16 %v11943
    %v12642 = vunpack.c.h.b16 %v11943
    %v12643 = vunpack.c.l.b16 %v11944
    %v12644 = vunpack.c.h.b16 %v11944
    %v12645 = vunpack.c.l.b16 %v11945
    %v12646 = vunpack.c.h.b16 %v11945
    %v12647 = vunpack.c.l.b16 %v11946
    %v12648 = vunpack.c.h.b16 %v11946
    %v12649 = vunpack.c.l.b16 %v11947
    %v12650 = vunpack.c.h.b16 %v11947
    %v12651 = vunpack.c.l.b16 %v11948
    %v12652 = vunpack.c.h.b16 %v11948
    %v12653 = vunpack.c.l.b16 %v11949
    %v12654 = vunpack.c.h.b16 %v11949
    %v12655 = vunpack.c.l.b16 %v11950
    %v12656 = vunpack.c.h.b16 %v11950
    %v12657 = vunpack.c.l.b16 %v11951
    %v12658 = vunpack.c.h.b16 %v11951
    %v12659 = vunpack.c.l.b16 %v11952
    %v12660 = vunpack.c.h.b16 %v11952
    %v12661 = vunpack.c.l.b16 %v11953
    %v12662 = vunpack.c.h.b16 %v11953
    %v12663 = vunpack.c.l.b16 %v11954
    %v12664 = vunpack.c.h.b16 %v11954
    %v12665 = vunpack.c.l.b16 %v11955
    %v12666 = vunpack.c.h.b16 %v11955
    %v12667 = vunpack.c.l.b16 %v11956
    %v12668 = vunpack.c.h.b16 %v11956
    %v12669 = vunpack.c.l.b16 %v11957
    %v12670 = vunpack.c.h.b16 %v11957
    %v12671 = vunpack.c.l.b16 %v11958
    %v12672 = vunpack.c.h.b16 %v11958
    %v12673 = vunpack.c.l.b16 %v11959
    %v12674 = vunpack.c.h.b16 %v11959
    %v12675 = vunpack.c.l.b16 %v11960
    %v12676 = vunpack.c.h.b16 %v11960
    %v12677 = vunpack.c.l.b16 %v11961
    %v12678 = vunpack.c.h.b16 %v11961
    %v12679 = vunpack.c.l.b16 %v11962
    %v12680 = vunpack.c.h.b16 %v11962
    %v12681 = vunpack.c.l.b16 %v11963
    %v12682 = vunpack.c.h.b16 %v11963
    %v12683 = vunpack.c.l.b16 %v11964
    %v12684 = vunpack.c.h.b16 %v11964
    %v12685 = vunpack.c.l.b16 %v11965
    %v12686 = vunpack.c.h.b16 %v11965
    %v12687 = vunpack.c.l.b16 %v11966
    %v12688 = vunpack.c.h.b16 %v11966
    %v12689 = vunpack.c.l.b16 %v11967
    %v12690 = vunpack.c.h.b16 %v11967
    %v12691 = vunpack.c.l.b16 %v11968
    %v12692 = vunpack.c.h.b16 %v11968
    %v12693 = vunpack.c.l.b16 %v11969
    %v12694 = vunpack.c.h.b16 %v11969
    %v12695 = vunpack.c.l.b16 %v11970
    %v12696 = vunpack.c.h.b16 %v11970
    %v12697 = vunpack.c.l.b16 %v11971
    %v12698 = vunpack.c.h.b16 %v11971
    %v12699 = vunpack.c.l.b16 %v11972
    %v12700 = vunpack.c.h.b16 %v11972
    %v12701 = vunpack.c.l.b16 %v11973
    %v12702 = vunpack.c.h.b16 %v11973
    %v12703 = vunpack.c.l.b16 %v11974
    %v12704 = vunpack.c.h.b16 %v11974
    %v12705 = vunpack.c.l.b16 %v11975
    %v12706 = vunpack.c.h.b16 %v11975
    %v12707 = vunpack.c.l.b16 %v11976
    %v12708 = vunpack.c.h.b16 %v11976
    %v12709 = vunpack.c.l.b16 %v11977
    %v12710 = vunpack.c.h.b16 %v11977
    %v12711 = vunpack.c.l.b16 %v11978
    %v12712 = vunpack.c.h.b16 %v11978
    %v12713 = vunpack.c.l.b16 %v11979
    %v12714 = vunpack.c.h.b16 %v11979
    %v12715 = vunpack.c.l.b16 %v11980
    %v12716 = vunpack.c.h.b16 %v11980
    %v12717 = vunpack.c.l.b16 %v11981
    %v12718 = vunpack.c.h.b16 %v11981
    %v12719 = vunpack.c.l.b16 %v11982
    %v12720 = vunpack.c.h.b16 %v11982
    %v12721 = vunpack.c.l.b16 %v11983
    %v12722 = vunpack.c.h.b16 %v11983
    %v12723 = vunpack.c.l.b16 %v11984
    %v12724 = vunpack.c.h.b16 %v11984
    %v12725 = vunpack.c.l.b16 %v11985
    %v12726 = vunpack.c.h.b16 %v11985
    %v12727 = vunpack.c.l.b16 %v11986
    %v12728 = vunpack.c.h.b16 %v11986
    %v12729 = vunpack.c.l.b16 %v11987
    %v12730 = vunpack.c.h.b16 %v11987
    %v12731 = vunpack.c.l.b16 %v11988
    %v12732 = vunpack.c.h.b16 %v11988
    %v12733 = vunpack.c.l.b16 %v11989
    %v12734 = vunpack.c.h.b16 %v11989
    %v12735 = vunpack.c.l.b16 %v11990
    %v12736 = vunpack.c.h.b16 %v11990
    %v12737 = vunpack.c.l.b16 %v11991
    %v12738 = vunpack.c.h.b16 %v11991
    %v12739 = vunpack.c.l.b16 %v11992
    %v12740 = vunpack.c.h.b16 %v11992
    %v12741 = vunpack.c.l.b16 %v11993
    %v12742 = vunpack.c.h.b16 %v11993
    %v12743 = vunpack.c.l.b16 %v11994
    %v12744 = vunpack.c.h.b16 %v11994
    %v12745 = vunpack.c.l.b16 %v11995
    %v12746 = vunpack.c.h.b16 %v11995
    %v12747 = vunpack.c.l.b16 %v11996
    %v12748 = vunpack.c.h.b16 %v11996
    %v12749 = vunpack.c.l.b16 %v11997
    %v12750 = vunpack.c.h.b16 %v11997
    %v12751 = vunpack.c.l.b16 %v11998
    %v12752 = vunpack.c.h.b16 %v11998
    %v12753 = vunpack.c.l.b16 %v11999
    %v12754 = vunpack.c.h.b16 %v11999
    %v12755 = vunpack.c.l.b16 %v12000
    %v12756 = vunpack.c.h.b16 %v12000
    %v12757 = vunpack.c.l.b16 %v12001
    %v12758 = vunpack.c.h.b16 %v12001
    %v12759 = vunpack.c.l.b16 %v12002
    %v12760 = vunpack.c.h.b16 %v12002
    %v12761 = vunpack.c.l.b16 %v12003
    %v12762 = vunpack.c.h.b16 %v12003
    %v12763 = vunpack.c.l.b16 %v12004
    %v12764 = vunpack.c.h.b16 %v12004
    %v12765 = vunpack.c.l.b16 %v12005
    %v12766 = vunpack.c.h.b16 %v12005
    %v12767 = vunpack.c.l.b16 %v12006
    %v12768 = vunpack.c.h.b16 %v12006
    %v12769 = vunpack.c.l.b16 %v12007
    %v12770 = vunpack.c.h.b16 %v12007
    %v12771 = vunpack.c.l.b16 %v12008
    %v12772 = vunpack.c.h.b16 %v12008
    %v12773 = vunpack.c.l.b16 %v12009
    %v12774 = vunpack.c.h.b16 %v12009
    %v12775 = vunpack.c.l.b16 %v12010
    %v12776 = vunpack.c.h.b16 %v12010
    %v12777 = vunpack.c.l.b16 %v12011
    %v12778 = vunpack.c.h.b16 %v12011
    %v12779 = vunpack.c.l.b16 %v12012
    %v12780 = vunpack.c.h.b16 %v12012
    %v12781 = vunpack.c.l.b16 %v12013
    %v12782 = vunpack.c.h.b16 %v12013
    %v12783 = vunpack.c.l.b16 %v12014
    %v12784 = vunpack.c.h.b16 %v12014
    %v12785 = vunpack.c.l.b16 %v12015
    %v12786 = vunpack.c.h.b16 %v12015
    %v12787 = vunpack.c.l.b16 %v12016
    %v12788 = vunpack.c.h.b16 %v12016
    %v12789 = vunpack.c.l.b16 %v12017
    %v12790 = vunpack.c.h.b16 %v12017
    %v12791 = vunpack.c.l.b16 %v12018
    %v12792 = vunpack.c.h.b16 %v12018
    %v12793 = vunpack.c.l.b16 %v12019
    %v12794 = vunpack.c.h.b16 %v12019
    %v12795 = vunpack.c.l.b16 %v12020
    %v12796 = vunpack.c.h.b16 %v12020
    %v12797 = vunpack.c.l.b16 %v12021
    %v12798 = vunpack.c.h.b16 %v12021
    %v12799 = vunpack.c.l.b16 %v12022
    %v12800 = vunpack.c.h.b16 %v12022
    %v12801 = vunpack.c.l.b16 %v12023
    %v12802 = vunpack.c.h.b16 %v12023
    %v12803 = vunpack.c.l.b16 %v12024
    %v12804 = vunpack.c.h.b16 %v12024
    %v12805 = vunpack.c.l.b16 %v12025
    %v12806 = vunpack.c.h.b16 %v12025
    %v12807 = vunpack.c.l.b16 %v12026
    %v12808 = vunpack.c.h.b16 %v12026
    %v12809 = vunpack.c.l.b16 %v12027
    %v12810 = vunpack.c.h.b16 %v12027
    %v12811 = vunpack.c.l.b16 %v12028
    %v12812 = vunpack.c.h.b16 %v12028
    %v12813 = vunpack.c.l.b16 %v12029
    %v12814 = vunpack.c.h.b16 %v12029
    %v12815 = vunpack.c.l.b16 %v12030
    %v12816 = vunpack.c.h.b16 %v12030
    %v12817 = vunpack.c.l.b16 %v12031
    %v12818 = vunpack.c.h.b16 %v12031
    %v12819 = vunpack.c.l.b16 %v12032
    %v12820 = vunpack.c.h.b16 %v12032
    %v12821 = vunpack.c.l.b16 %v12033
    %v12822 = vunpack.c.h.b16 %v12033
    %v12823 = vunpack.c.l.b16 %v12034
    %v12824 = vunpack.c.h.b16 %v12034
    %v12825 = vpack.c.b16 %v12317, %v12313
    %v12826 = vpack.c.b16 %v12318, %v12314
    %v12827 = vpack.c.b16 %v12319, %v12315
    %v12828 = vpack.c.b16 %v12320, %v12316
    %v12829 = vpack.c.b16 %v12325, %v12321
    %v12830 = vpack.c.b16 %v12326, %v12322
    %v12831 = vpack.c.b16 %v12327, %v12323
    %v12832 = vpack.c.b16 %v12328, %v12324
    %v12833 = vpack.c.b16 %v12333, %v12329
    %v12834 = vpack.c.b16 %v12334, %v12330
    %v12835 = vpack.c.b16 %v12335, %v12331
    %v12836 = vpack.c.b16 %v12336, %v12332
    %v12837 = vpack.c.b16 %v12341, %v12337
    %v12838 = vpack.c.b16 %v12342, %v12338
    %v12839 = vpack.c.b16 %v12343, %v12339
    %v12840 = vpack.c.b16 %v12344, %v12340
    %v12841 = vpack.c.b16 %v12349, %v12345
    %v12842 = vpack.c.b16 %v12350, %v12346
    %v12843 = vpack.c.b16 %v12351, %v12347
    %v12844 = vpack.c.b16 %v12352, %v12348
    %v12845 = vpack.c.b16 %v12357, %v12353
    %v12846 = vpack.c.b16 %v12358, %v12354
    %v12847 = vpack.c.b16 %v12359, %v12355
    %v12848 = vpack.c.b16 %v12360, %v12356
    %v12849 = vpack.c.b16 %v12365, %v12361
    %v12850 = vpack.c.b16 %v12366, %v12362
    %v12851 = vpack.c.b16 %v12367, %v12363
    %v12852 = vpack.c.b16 %v12368, %v12364
    %v12853 = vpack.c.b16 %v12373, %v12369
    %v12854 = vpack.c.b16 %v12374, %v12370
    %v12855 = vpack.c.b16 %v12375, %v12371
    %v12856 = vpack.c.b16 %v12376, %v12372
    %v12857 = vpack.c.b16 %v12381, %v12377
    %v12858 = vpack.c.b16 %v12382, %v12378
    %v12859 = vpack.c.b16 %v12383, %v12379
    %v12860 = vpack.c.b16 %v12384, %v12380
    %v12861 = vpack.c.b16 %v12389, %v12385
    %v12862 = vpack.c.b16 %v12390, %v12386
    %v12863 = vpack.c.b16 %v12391, %v12387
    %v12864 = vpack.c.b16 %v12392, %v12388
    %v12865 = vpack.c.b16 %v12397, %v12393
    %v12866 = vpack.c.b16 %v12398, %v12394
    %v12867 = vpack.c.b16 %v12399, %v12395
    %v12868 = vpack.c.b16 %v12400, %v12396
    %v12869 = vpack.c.b16 %v12405, %v12401
    %v12870 = vpack.c.b16 %v12406, %v12402
    %v12871 = vpack.c.b16 %v12407, %v12403
    %v12872 = vpack.c.b16 %v12408, %v12404
    %v12873 = vpack.c.b16 %v12413, %v12409
    %v12874 = vpack.c.b16 %v12414, %v12410
    %v12875 = vpack.c.b16 %v12415, %v12411
    %v12876 = vpack.c.b16 %v12416, %v12412
    %v12877 = vpack.c.b16 %v12421, %v12417
    %v12878 = vpack.c.b16 %v12422, %v12418
    %v12879 = vpack.c.b16 %v12423, %v12419
    %v12880 = vpack.c.b16 %v12424, %v12420
    %v12881 = vpack.c.b16 %v12429, %v12425
    %v12882 = vpack.c.b16 %v12430, %v12426
    %v12883 = vpack.c.b16 %v12431, %v12427
    %v12884 = vpack.c.b16 %v12432, %v12428
    %v12885 = vpack.c.b16 %v12437, %v12433
    %v12886 = vpack.c.b16 %v12438, %v12434
    %v12887 = vpack.c.b16 %v12439, %v12435
    %v12888 = vpack.c.b16 %v12440, %v12436
    %v12889 = vpack.c.b16 %v12445, %v12441
    %v12890 = vpack.c.b16 %v12446, %v12442
    %v12891 = vpack.c.b16 %v12447, %v12443
    %v12892 = vpack.c.b16 %v12448, %v12444
    %v12893 = vpack.c.b16 %v12453, %v12449
    %v12894 = vpack.c.b16 %v12454, %v12450
    %v12895 = vpack.c.b16 %v12455, %v12451
    %v12896 = vpack.c.b16 %v12456, %v12452
    %v12897 = vpack.c.b16 %v12461, %v12457
    %v12898 = vpack.c.b16 %v12462, %v12458
    %v12899 = vpack.c.b16 %v12463, %v12459
    %v12900 = vpack.c.b16 %v12464, %v12460
    %v12901 = vpack.c.b16 %v12469, %v12465
    %v12902 = vpack.c.b16 %v12470, %v12466
    %v12903 = vpack.c.b16 %v12471, %v12467
    %v12904 = vpack.c.b16 %v12472, %v12468
    %v12905 = vpack.c.b16 %v12477, %v12473
    %v12906 = vpack.c.b16 %v12478, %v12474
    %v12907 = vpack.c.b16 %v12479, %v12475
    %v12908 = vpack.c.b16 %v12480, %v12476
    %v12909 = vpack.c.b16 %v12485, %v12481
    %v12910 = vpack.c.b16 %v12486, %v12482
    %v12911 = vpack.c.b16 %v12487, %v12483
    %v12912 = vpack.c.b16 %v12488, %v12484
    %v12913 = vpack.c.b16 %v12493, %v12489
    %v12914 = vpack.c.b16 %v12494, %v12490
    %v12915 = vpack.c.b16 %v12495, %v12491
    %v12916 = vpack.c.b16 %v12496, %v12492
    %v12917 = vpack.c.b16 %v12501, %v12497
    %v12918 = vpack.c.b16 %v12502, %v12498
    %v12919 = vpack.c.b16 %v12503, %v12499
    %v12920 = vpack.c.b16 %v12504, %v12500
    %v12921 = vpack.c.b16 %v12509, %v12505
    %v12922 = vpack.c.b16 %v12510, %v12506
    %v12923 = vpack.c.b16 %v12511, %v12507
    %v12924 = vpack.c.b16 %v12512, %v12508
    %v12925 = vpack.c.b16 %v12517, %v12513
    %v12926 = vpack.c.b16 %v12518, %v12514
    %v12927 = vpack.c.b16 %v12519, %v12515
    %v12928 = vpack.c.b16 %v12520, %v12516
    %v12929 = vpack.c.b16 %v12525, %v12521
    %v12930 = vpack.c.b16 %v12526, %v12522
    %v12931 = vpack.c.b16 %v12527, %v12523
    %v12932 = vpack.c.b16 %v12528, %v12524
    %v12933 = vpack.c.b16 %v12533, %v12529
    %v12934 = vpack.c.b16 %v12534, %v12530
    %v12935 = vpack.c.b16 %v12535, %v12531
    %v12936 = vpack.c.b16 %v12536, %v12532
    %v12937 = vpack.c.b16 %v12541, %v12537
    %v12938 = vpack.c.b16 %v12542, %v12538
    %v12939 = vpack.c.b16 %v12543, %v12539
    %v12940 = vpack.c.b16 %v12544, %v12540
    %v12941 = vpack.c.b16 %v12549, %v12545
    %v12942 = vpack.c.b16 %v12550, %v12546
    %v12943 = vpack.c.b16 %v12551, %v12547
    %v12944 = vpack.c.b16 %v12552, %v12548
    %v12945 = vpack.c.b16 %v12557, %v12553
    %v12946 = vpack.c.b16 %v12558, %v12554
    %v12947 = vpack.c.b16 %v12559, %v12555
    %v12948 = vpack.c.b16 %v12560, %v12556
    %v12949 = vpack.c.b16 %v12565, %v12561
    %v12950 = vpack.c.b16 %v12566, %v12562
    %v12951 = vpack.c.b16 %v12567, %v12563
    %v12952 = vpack.c.b16 %v12568, %v12564
    %v12953 = vpack.c.b16 %v12573, %v12569
    %v12954 = vpack.c.b16 %v12574, %v12570
    %v12955 = vpack.c.b16 %v12575, %v12571
    %v12956 = vpack.c.b16 %v12576, %v12572
    %v12957 = vpack.c.b16 %v12581, %v12577
    %v12958 = vpack.c.b16 %v12582, %v12578
    %v12959 = vpack.c.b16 %v12583, %v12579
    %v12960 = vpack.c.b16 %v12584, %v12580
    %v12961 = vpack.c.b16 %v12589, %v12585
    %v12962 = vpack.c.b16 %v12590, %v12586
    %v12963 = vpack.c.b16 %v12591, %v12587
    %v12964 = vpack.c.b16 %v12592, %v12588
    %v12965 = vpack.c.b16 %v12597, %v12593
    %v12966 = vpack.c.b16 %v12598, %v12594
    %v12967 = vpack.c.b16 %v12599, %v12595
    %v12968 = vpack.c.b16 %v12600, %v12596
    %v12969 = vpack.c.b16 %v12605, %v12601
    %v12970 = vpack.c.b16 %v12606, %v12602
    %v12971 = vpack.c.b16 %v12607, %v12603
    %v12972 = vpack.c.b16 %v12608, %v12604
    %v12973 = vpack.c.b16 %v12613, %v12609
    %v12974 = vpack.c.b16 %v12614, %v12610
    %v12975 = vpack.c.b16 %v12615, %v12611
    %v12976 = vpack.c.b16 %v12616, %v12612
    %v12977 = vpack.c.b16 %v12621, %v12617
    %v12978 = vpack.c.b16 %v12622, %v12618
    %v12979 = vpack.c.b16 %v12623, %v12619
    %v12980 = vpack.c.b16 %v12624, %v12620
    %v12981 = vpack.c.b16 %v12629, %v12625
    %v12982 = vpack.c.b16 %v12630, %v12626
    %v12983 = vpack.c.b16 %v12631, %v12627
    %v12984 = vpack.c.b16 %v12632, %v12628
    %v12985 = vpack.c.b16 %v12637, %v12633
    %v12986 = vpack.c.b16 %v12638, %v12634
    %v12987 = vpack.c.b16 %v12639, %v12635
    %v12988 = vpack.c.b16 %v12640, %v12636
    %v12989 = vpack.c.b16 %v12645, %v12641
    %v12990 = vpack.c.b16 %v12646, %v12642
    %v12991 = vpack.c.b16 %v12647, %v12643
    %v12992 = vpack.c.b16 %v12648, %v12644
    %v12993 = vpack.c.b16 %v12653, %v12649
    %v12994 = vpack.c.b16 %v12654, %v12650
    %v12995 = vpack.c.b16 %v12655, %v12651
    %v12996 = vpack.c.b16 %v12656, %v12652
    %v12997 = vpack.c.b16 %v12661, %v12657
    %v12998 = vpack.c.b16 %v12662, %v12658
    %v12999 = vpack.c.b16 %v12663, %v12659
    %v13000 = vpack.c.b16 %v12664, %v12660
    %v13001 = vpack.c.b16 %v12669, %v12665
    %v13002 = vpack.c.b16 %v12670, %v12666
    %v13003 = vpack.c.b16 %v12671, %v12667
    %v13004 = vpack.c.b16 %v12672, %v12668
    %v13005 = vpack.c.b16 %v12677, %v12673
    %v13006 = vpack.c.b16 %v12678, %v12674
    %v13007 = vpack.c.b16 %v12679, %v12675
    %v13008 = vpack.c.b16 %v12680, %v12676
    %v13009 = vpack.c.b16 %v12685, %v12681
    %v13010 = vpack.c.b16 %v12686, %v12682
    %v13011 = vpack.c.b16 %v12687, %v12683
    %v13012 = vpack.c.b16 %v12688, %v12684
    %v13013 = vpack.c.b16 %v12693, %v12689
    %v13014 = vpack.c.b16 %v12694, %v12690
    %v13015 = vpack.c.b16 %v12695, %v12691
    %v13016 = vpack.c.b16 %v12696, %v12692
    %v13017 = vpack.c.b16 %v12701, %v12697
    %v13018 = vpack.c.b16 %v12702, %v12698
    %v13019 = vpack.c.b16 %v12703, %v12699
    %v13020 = vpack.c.b16 %v12704, %v12700
    %v13021 = vpack.c.b16 %v12709, %v12705
    %v13022 = vpack.c.b16 %v12710, %v12706
    %v13023 = vpack.c.b16 %v12711, %v12707
    %v13024 = vpack.c.b16 %v12712, %v12708
    %v13025 = vpack.c.b16 %v12717, %v12713
    %v13026 = vpack.c.b16 %v12718, %v12714
    %v13027 = vpack.c.b16 %v12719, %v12715
    %v13028 = vpack.c.b16 %v12720, %v12716
    %v13029 = vpack.c.b16 %v12725, %v12721
    %v13030 = vpack.c.b16 %v12726, %v12722
    %v13031 = vpack.c.b16 %v12727, %v12723
    %v13032 = vpack.c.b16 %v12728, %v12724
    %v13033 = vpack.c.b16 %v12733, %v12729
    %v13034 = vpack.c.b16 %v12734, %v12730
    %v13035 = vpack.c.b16 %v12735, %v12731
    %v13036 = vpack.c.b16 %v12736, %v12732
    %v13037 = vpack.c.b16 %v12741, %v12737
    %v13038 = vpack.c.b16 %v12742, %v12738
    %v13039 = vpack.c.b16 %v12743, %v12739
    %v13040 = vpack.c.b16 %v12744, %v12740
    %v13041 = vpack.c.b16 %v12749, %v12745
    %v13042 = vpack.c.b16 %v12750, %v12746
    %v13043 = vpack.c.b16 %v12751, %v12747
    %v13044 = vpack.c.b16 %v12752, %v12748
    %v13045 = vpack.c.b16 %v12757, %v12753
    %v13046 = vpack.c.b16 %v12758, %v12754
    %v13047 = vpack.c.b16 %v12759, %v12755
    %v13048 = vpack.c.b16 %v12760, %v12756
    %v13049 = vpack.c.b16 %v12765, %v12761
    %v13050 = vpack.c.b16 %v12766, %v12762
    %v13051 = vpack.c.b16 %v12767, %v12763
    %v13052 = vpack.c.b16 %v12768, %v12764
    %v13053 = vpack.c.b16 %v12773, %v12769
    %v13054 = vpack.c.b16 %v12774, %v12770
    %v13055 = vpack.c.b16 %v12775, %v12771
    %v13056 = vpack.c.b16 %v12776, %v12772
    %v13057 = vpack.c.b16 %v12781, %v12777
    %v13058 = vpack.c.b16 %v12782, %v12778
    %v13059 = vpack.c.b16 %v12783, %v12779
    %v13060 = vpack.c.b16 %v12784, %v12780
    %v13061 = vpack.c.b16 %v12789, %v12785
    %v13062 = vpack.c.b16 %v12790, %v12786
    %v13063 = vpack.c.b16 %v12791, %v12787
    %v13064 = vpack.c.b16 %v12792, %v12788
    %v13065 = vpack.c.b16 %v12797, %v12793
    %v13066 = vpack.c.b16 %v12798, %v12794
    %v13067 = vpack.c.b16 %v12799, %v12795
    %v13068 = vpack.c.b16 %v12800, %v12796
    %v13069 = vpack.c.b16 %v12805, %v12801
    %v13070 = vpack.c.b16 %v12806, %v12802
    %v13071 = vpack.c.b16 %v12807, %v12803
    %v13072 = vpack.c.b16 %v12808, %v12804
    %v13073 = vpack.c.b16 %v12813, %v12809
    %v13074 = vpack.c.b16 %v12814, %v12810
    %v13075 = vpack.c.b16 %v12815, %v12811
    %v13076 = vpack.c.b16 %v12816, %v12812
    %v13077 = vpack.c.b16 %v12821, %v12817
    %v13078 = vpack.c.b16 %v12822, %v12818
    %v13079 = vpack.c.b16 %v12823, %v12819
    %v13080 = vpack.c.b16 %v12824, %v12820
    %13337 = vmatprep.subr.bf16.mxu0 %v12854
    %13338 = vmatpush1.bf16.msra.mxu0 %v12853
    %13339 = vmatprep.subr.bf16.mxu0 %v12850
    %13340 = vmatpush1.bf16.msra.mxu0 %v12849
    %13341 = vmatprep.subr.bf16.mxu0 %v12846
    %13342 = vmatpush1.bf16.msra.mxu0 %v12845
    %13343 = vmatprep.subr.bf16.mxu0 %v12842
    %13344 = vmatpush1.bf16.msra.mxu0 %v12841
    %13345 = vmatprep.subr.bf16.mxu0 %v12838
    %13346 = vmatpush1.bf16.msra.mxu0 %v12837
    %13347 = vmatprep.subr.bf16.mxu0 %v12834
    %13348 = vmatpush1.bf16.msra.mxu0 %v12833
    %13349 = vmatprep.subr.bf16.mxu0 %v12830
    %13350 = vmatpush1.bf16.msra.mxu0 %v12829
    %13351 = vmatprep.subr.bf16.mxu0 %v12826
    %13352 = vmatpush1.bf16.msra.mxu0 %v12825
    %13353 = vmatprep.subr.bf16.mxu0 %v12886
    %13354 = vmatpush2.bf16.msra.mxu0 %v12885
    %13355 = vmatprep.subr.bf16.mxu0 %v12882
    %13356 = vmatpush2.bf16.msra.mxu0 %v12881
    %13357 = vmatprep.subr.bf16.mxu0 %v12878
    %13358 = vmatpush2.bf16.msra.mxu0 %v12877
    %13359 = vmatprep.subr.bf16.mxu0 %v12874
    %13360 = vmatpush2.bf16.msra.mxu0 %v12873
    %13361 = vmatprep.subr.bf16.mxu0 %v12870
    %13362 = vmatpush2.bf16.msra.mxu0 %v12869
    %13363 = vmatprep.subr.bf16.mxu0 %v12866
    %13364 = vmatpush2.bf16.msra.mxu0 %v12865
    %13365 = vmatprep.subr.bf16.mxu0 %v12862
    %13366 = vmatpush2.bf16.msra.mxu0 %v12861
    %13367 = vmatprep.subr.bf16.mxu0 %v12858
    %13368 = vmatpush2.bf16.msra.mxu0 %v12857
    %13369 = vmatprep.mubr.bf16.mxu0 %v9524
    %13370 = vmatmul.mubr.bf16.gmra.mxu0 %v9523
    %v13371 = vpop.f32.mrf.mxu0
    %v13372 = vadd.f32 %v12040, %v13371
    %v13373 = vpop.f32.mrf.mxu0
    %v13374 = vadd.f32 %v12044, %v13373
    %v13375 = vpop.f32.mrf.mxu0
    %v13376 = vpop.f32.mrf.mxu0
    %13377 = vdwg.mxu0
    %13378 = vmatprep.subr.bf16.mxu0 %v12918
    %13379 = vmatpush1.bf16.msra.mxu0 %v12917
    %13380 = vmatprep.subr.bf16.mxu0 %v12914
    %13381 = vmatpush1.bf16.msra.mxu0 %v12913
    %13382 = vmatprep.subr.bf16.mxu0 %v12910
    %13383 = vmatpush1.bf16.msra.mxu0 %v12909
    %13384 = vmatprep.subr.bf16.mxu0 %v12906
    %13385 = vmatpush1.bf16.msra.mxu0 %v12905
    %13386 = vmatprep.subr.bf16.mxu0 %v12902
    %13387 = vmatpush1.bf16.msra.mxu0 %v12901
    %13388 = vmatprep.subr.bf16.mxu0 %v12898
    %13389 = vmatpush1.bf16.msra.mxu0 %v12897
    %13390 = vmatprep.subr.bf16.mxu0 %v12894
    %13391 = vmatpush1.bf16.msra.mxu0 %v12893
    %13392 = vmatprep.subr.bf16.mxu0 %v12890
    %13393 = vmatpush1.bf16.msra.mxu0 %v12889
    %13394 = vmatprep.subr.bf16.mxu0 %v12950
    %13395 = vmatpush2.bf16.msra.mxu0 %v12949
    %13396 = vmatprep.subr.bf16.mxu0 %v12946
    %13397 = vmatpush2.bf16.msra.mxu0 %v12945
    %13398 = vmatprep.subr.bf16.mxu0 %v12942
    %13399 = vmatpush2.bf16.msra.mxu0 %v12941
    %13400 = vmatprep.subr.bf16.mxu0 %v12938
    %13401 = vmatpush2.bf16.msra.mxu0 %v12937
    %13402 = vmatprep.subr.bf16.mxu0 %v12934
    %13403 = vmatpush2.bf16.msra.mxu0 %v12933
    %13404 = vmatprep.subr.bf16.mxu0 %v12930
    %13405 = vmatpush2.bf16.msra.mxu0 %v12929
    %13406 = vmatprep.subr.bf16.mxu0 %v12926
    %13407 = vmatpush2.bf16.msra.mxu0 %v12925
    %13408 = vmatprep.subr.bf16.mxu0 %v12922
    %13409 = vmatpush2.bf16.msra.mxu0 %v12921
    %13410 = vmatprep.mubr.bf16.mxu0 %v10277
    %13411 = vmatmul.mubr.bf16.gmra.mxu0 %v10276
    %v13412 = vpop.f32.mrf.mxu0
    %v13413 = vadd.f32 %v13372, %v13412
    %v13414 = vpop.f32.mrf.mxu0
    %v13415 = vadd.f32 %v13374, %v13414
    %v13416 = vpop.f32.mrf.mxu0
    %v13417 = vpop.f32.mrf.mxu0
    %13418 = vdwg.mxu0
    %13419 = vmatprep.subr.bf16.mxu0 %v12982
    %13420 = vmatpush1.bf16.msra.mxu0 %v12981
    %13421 = vmatprep.subr.bf16.mxu0 %v12978
    %13422 = vmatpush1.bf16.msra.mxu0 %v12977
    %13423 = vmatprep.subr.bf16.mxu0 %v12974
    %13424 = vmatpush1.bf16.msra.mxu0 %v12973
    %13425 = vmatprep.subr.bf16.mxu0 %v12970
    %13426 = vmatpush1.bf16.msra.mxu0 %v12969
    %13427 = vmatprep.subr.bf16.mxu0 %v12966
    %13428 = vmatpush1.bf16.msra.mxu0 %v12965
    %13429 = vmatprep.subr.bf16.mxu0 %v12962
    %13430 = vmatpush1.bf16.msra.mxu0 %v12961
    %13431 = vmatprep.subr.bf16.mxu0 %v12958
    %13432 = vmatpush1.bf16.msra.mxu0 %v12957
    %13433 = vmatprep.subr.bf16.mxu0 %v12954
    %13434 = vmatpush1.bf16.msra.mxu0 %v12953
    %13435 = vmatprep.subr.bf16.mxu0 %v13014
    %13436 = vmatpush2.bf16.msra.mxu0 %v13013
    %13437 = vmatprep.subr.bf16.mxu0 %v13010
    %13438 = vmatpush2.bf16.msra.mxu0 %v13009
    %13439 = vmatprep.subr.bf16.mxu0 %v13006
    %13440 = vmatpush2.bf16.msra.mxu0 %v13005
    %13441 = vmatprep.subr.bf16.mxu0 %v13002
    %13442 = vmatpush2.bf16.msra.mxu0 %v13001
    %13443 = vmatprep.subr.bf16.mxu0 %v12998
    %13444 = vmatpush2.bf16.msra.mxu0 %v12997
    %13445 = vmatprep.subr.bf16.mxu0 %v12994
    %13446 = vmatpush2.bf16.msra.mxu0 %v12993
    %13447 = vmatprep.subr.bf16.mxu0 %v12990
    %13448 = vmatpush2.bf16.msra.mxu0 %v12989
    %13449 = vmatprep.subr.bf16.mxu0 %v12986
    %13450 = vmatpush2.bf16.msra.mxu0 %v12985
    %13451 = vmatprep.mubr.bf16.mxu0 %v11034
    %13452 = vmatmul.mubr.bf16.gmra.mxu0 %v11033
    %v13453 = vpop.f32.mrf.mxu0
    %v13454 = vadd.f32 %v13413, %v13453
    %v13455 = vpop.f32.mrf.mxu0
    %v13456 = vadd.f32 %v13415, %v13455
    %v13457 = vpop.f32.mrf.mxu0
    %v13458 = vpop.f32.mrf.mxu0
    %13459 = vdwg.mxu0
    %13460 = vmatprep.subr.bf16.mxu0 %v13046
    %13461 = vmatpush1.bf16.msra.mxu0 %v13045
    %13462 = vmatprep.subr.bf16.mxu0 %v13042
    %13463 = vmatpush1.bf16.msra.mxu0 %v13041
    %13464 = vmatprep.subr.bf16.mxu0 %v13038
    %13465 = vmatpush1.bf16.msra.mxu0 %v13037
    %13466 = vmatprep.subr.bf16.mxu0 %v13034
    %13467 = vmatpush1.bf16.msra.mxu0 %v13033
    %13468 = vmatprep.subr.bf16.mxu0 %v13030
    %13469 = vmatpush1.bf16.msra.mxu0 %v13029
    %13470 = vmatprep.subr.bf16.mxu0 %v13026
    %13471 = vmatpush1.bf16.msra.mxu0 %v13025
    %13472 = vmatprep.subr.bf16.mxu0 %v13022
    %13473 = vmatpush1.bf16.msra.mxu0 %v13021
    %13474 = vmatprep.subr.bf16.mxu0 %v13018
    %13475 = vmatpush1.bf16.msra.mxu0 %v13017
    %13476 = vmatprep.subr.bf16.mxu0 %v13078
    %13477 = vmatpush2.bf16.msra.mxu0 %v13077
    %13478 = vmatprep.subr.bf16.mxu0 %v13074
    %13479 = vmatpush2.bf16.msra.mxu0 %v13073
    %13480 = vmatprep.subr.bf16.mxu0 %v13070
    %13481 = vmatpush2.bf16.msra.mxu0 %v13069
    %13482 = vmatprep.subr.bf16.mxu0 %v13066
    %13483 = vmatpush2.bf16.msra.mxu0 %v13065
    %13484 = vmatprep.subr.bf16.mxu0 %v13062
    %13485 = vmatpush2.bf16.msra.mxu0 %v13061
    %13486 = vmatprep.subr.bf16.mxu0 %v13058
    %13487 = vmatpush2.bf16.msra.mxu0 %v13057
    %13488 = vmatprep.subr.bf16.mxu0 %v13054
    %13489 = vmatpush2.bf16.msra.mxu0 %v13053
    %13490 = vmatprep.subr.bf16.mxu0 %v13050
    %13491 = vmatpush2.bf16.msra.mxu0 %v13049
    %13492 = vmatprep.mubr.bf16.mxu0 %v11778
    %13493 = vmatmul.mubr.bf16.gmra.mxu0 %v11777
    %v13494 = vpop.f32.mrf.mxu0
    %v13495 = vadd.f32 %v13454, %v13494
    %v13496 = vpop.f32.mrf.mxu0
    %v13497 = vadd.f32 %v13456, %v13496
    %v13498 = vpop.f32.mrf.mxu0
    %v13499 = vpop.f32.mrf.mxu0
    %13500 = vdwg.mxu0
    %13501 = vmatprep.subr.bf16.mxu0 %v12856
    %13502 = vmatpush1.bf16.msra.mxu0 %v12855
    %13503 = vmatprep.subr.bf16.mxu0 %v12852
    %13504 = vmatpush1.bf16.msra.mxu0 %v12851
    %13505 = vmatprep.subr.bf16.mxu0 %v12848
    %13506 = vmatpush1.bf16.msra.mxu0 %v12847
    %13507 = vmatprep.subr.bf16.mxu0 %v12844
    %13508 = vmatpush1.bf16.msra.mxu0 %v12843
    %13509 = vmatprep.subr.bf16.mxu0 %v12840
    %13510 = vmatpush1.bf16.msra.mxu0 %v12839
    %13511 = vmatprep.subr.bf16.mxu0 %v12836
    %13512 = vmatpush1.bf16.msra.mxu0 %v12835
    %13513 = vmatprep.subr.bf16.mxu0 %v12832
    %13514 = vmatpush1.bf16.msra.mxu0 %v12831
    %13515 = vmatprep.subr.bf16.mxu0 %v12828
    %13516 = vmatpush1.bf16.msra.mxu0 %v12827
    %13517 = vmatprep.subr.bf16.mxu0 %v12888
    %13518 = vmatpush2.bf16.msra.mxu0 %v12887
    %13519 = vmatprep.subr.bf16.mxu0 %v12884
    %13520 = vmatpush2.bf16.msra.mxu0 %v12883
    %13521 = vmatprep.subr.bf16.mxu0 %v12880
    %13522 = vmatpush2.bf16.msra.mxu0 %v12879
    %13523 = vmatprep.subr.bf16.mxu0 %v12876
    %13524 = vmatpush2.bf16.msra.mxu0 %v12875
    %13525 = vmatprep.subr.bf16.mxu0 %v12872
    %13526 = vmatpush2.bf16.msra.mxu0 %v12871
    %13527 = vmatprep.subr.bf16.mxu0 %v12868
    %13528 = vmatpush2.bf16.msra.mxu0 %v12867
    %13529 = vmatprep.subr.bf16.mxu0 %v12864
    %13530 = vmatpush2.bf16.msra.mxu0 %v12863
    %13531 = vmatprep.subr.bf16.mxu0 %v12860
    %13532 = vmatpush2.bf16.msra.mxu0 %v12859
    %13533 = vmatprep.mubr.bf16.mxu0 %v9524
    %13534 = vmatmul.mubr.bf16.gmra.mxu0 %v9523
    %v13535 = vpop.f32.mrf.mxu0
    %v13536 = vadd.f32 %v12048, %v13535
    %v13537 = vpop.f32.mrf.mxu0
    %v13538 = vadd.f32 %v12052, %v13537
    %v13539 = vpop.f32.mrf.mxu0
    %v13540 = vpop.f32.mrf.mxu0
    %13541 = vdwg.mxu0
    %13542 = vmatprep.subr.bf16.mxu0 %v12920
    %13543 = vmatpush1.bf16.msra.mxu0 %v12919
    %13544 = vmatprep.subr.bf16.mxu0 %v12916
    %13545 = vmatpush1.bf16.msra.mxu0 %v12915
    %13546 = vmatprep.subr.bf16.mxu0 %v12912
    %13547 = vmatpush1.bf16.msra.mxu0 %v12911
    %13548 = vmatprep.subr.bf16.mxu0 %v12908
    %13549 = vmatpush1.bf16.msra.mxu0 %v12907
    %13550 = vmatprep.subr.bf16.mxu0 %v12904
    %13551 = vmatpush1.bf16.msra.mxu0 %v12903
    %13552 = vmatprep.subr.bf16.mxu0 %v12900
    %13553 = vmatpush1.bf16.msra.mxu0 %v12899
    %13554 = vmatprep.subr.bf16.mxu0 %v12896
    %13555 = vmatpush1.bf16.msra.mxu0 %v12895
    %13556 = vmatprep.subr.bf16.mxu0 %v12892
    %13557 = vmatpush1.bf16.msra.mxu0 %v12891
    %13558 = vmatprep.subr.bf16.mxu0 %v12952
    %13559 = vmatpush2.bf16.msra.mxu0 %v12951
    %13560 = vmatprep.subr.bf16.mxu0 %v12948
    %13561 = vmatpush2.bf16.msra.mxu0 %v12947
    %13562 = vmatprep.subr.bf16.mxu0 %v12944
    %13563 = vmatpush2.bf16.msra.mxu0 %v12943
    %13564 = vmatprep.subr.bf16.mxu0 %v12940
    %13565 = vmatpush2.bf16.msra.mxu0 %v12939
    %13566 = vmatprep.subr.bf16.mxu0 %v12936
    %13567 = vmatpush2.bf16.msra.mxu0 %v12935
    %13568 = vmatprep.subr.bf16.mxu0 %v12932
    %13569 = vmatpush2.bf16.msra.mxu0 %v12931
    %13570 = vmatprep.subr.bf16.mxu0 %v12928
    %13571 = vmatpush2.bf16.msra.mxu0 %v12927
    %13572 = vmatprep.subr.bf16.mxu0 %v12924
    %13573 = vmatpush2.bf16.msra.mxu0 %v12923
    %13574 = vmatprep.mubr.bf16.mxu0 %v10277
    %13575 = vmatmul.mubr.bf16.gmra.mxu0 %v10276
    %v13576 = vpop.f32.mrf.mxu0
    %v13577 = vadd.f32 %v13536, %v13576
    %v13578 = vpop.f32.mrf.mxu0
    %v13579 = vadd.f32 %v13538, %v13578
    %v13580 = vpop.f32.mrf.mxu0
    %v13581 = vpop.f32.mrf.mxu0
    %13582 = vdwg.mxu0
    %13583 = vmatprep.subr.bf16.mxu0 %v12984
    %13584 = vmatpush1.bf16.msra.mxu0 %v12983
    %13585 = vmatprep.subr.bf16.mxu0 %v12980
    %13586 = vmatpush1.bf16.msra.mxu0 %v12979
    %13587 = vmatprep.subr.bf16.mxu0 %v12976
    %13588 = vmatpush1.bf16.msra.mxu0 %v12975
    %13589 = vmatprep.subr.bf16.mxu0 %v12972
    %13590 = vmatpush1.bf16.msra.mxu0 %v12971
    %13591 = vmatprep.subr.bf16.mxu0 %v12968
    %13592 = vmatpush1.bf16.msra.mxu0 %v12967
    %13593 = vmatprep.subr.bf16.mxu0 %v12964
    %13594 = vmatpush1.bf16.msra.mxu0 %v12963
    %13595 = vmatprep.subr.bf16.mxu0 %v12960
    %13596 = vmatpush1.bf16.msra.mxu0 %v12959
    %13597 = vmatprep.subr.bf16.mxu0 %v12956
    %13598 = vmatpush1.bf16.msra.mxu0 %v12955
    %13599 = vmatprep.subr.bf16.mxu0 %v13016
    %13600 = vmatpush2.bf16.msra.mxu0 %v13015
    %13601 = vmatprep.subr.bf16.mxu0 %v13012
    %13602 = vmatpush2.bf16.msra.mxu0 %v13011
    %13603 = vmatprep.subr.bf16.mxu0 %v13008
    %13604 = vmatpush2.bf16.msra.mxu0 %v13007
    %13605 = vmatprep.subr.bf16.mxu0 %v13004
    %13606 = vmatpush2.bf16.msra.mxu0 %v13003
    %13607 = vmatprep.subr.bf16.mxu0 %v13000
    %13608 = vmatpush2.bf16.msra.mxu0 %v12999
    %13609 = vmatprep.subr.bf16.mxu0 %v12996
    %13610 = vmatpush2.bf16.msra.mxu0 %v12995
    %13611 = vmatprep.subr.bf16.mxu0 %v12992
    %13612 = vmatpush2.bf16.msra.mxu0 %v12991
    %13613 = vmatprep.subr.bf16.mxu0 %v12988
    %13614 = vmatpush2.bf16.msra.mxu0 %v12987
    %13615 = vmatprep.mubr.bf16.mxu0 %v11034
    %13616 = vmatmul.mubr.bf16.gmra.mxu0 %v11033
    %v13617 = vpop.f32.mrf.mxu0
    %v13618 = vadd.f32 %v13577, %v13617
    %v13619 = vpop.f32.mrf.mxu0
    %v13620 = vadd.f32 %v13579, %v13619
    %v13621 = vpop.f32.mrf.mxu0
    %v13622 = vpop.f32.mrf.mxu0
    %13623 = vdwg.mxu0
    %13624 = vmatprep.subr.bf16.mxu0 %v13048
    %13625 = vmatpush1.bf16.msra.mxu0 %v13047
    %13626 = vmatprep.subr.bf16.mxu0 %v13044
    %13627 = vmatpush1.bf16.msra.mxu0 %v13043
    %13628 = vmatprep.subr.bf16.mxu0 %v13040
    %13629 = vmatpush1.bf16.msra.mxu0 %v13039
    %13630 = vmatprep.subr.bf16.mxu0 %v13036
    %13631 = vmatpush1.bf16.msra.mxu0 %v13035
    %13632 = vmatprep.subr.bf16.mxu0 %v13032
    %13633 = vmatpush1.bf16.msra.mxu0 %v13031
    %13634 = vmatprep.subr.bf16.mxu0 %v13028
    %13635 = vmatpush1.bf16.msra.mxu0 %v13027
    %13636 = vmatprep.subr.bf16.mxu0 %v13024
    %13637 = vmatpush1.bf16.msra.mxu0 %v13023
    %13638 = vmatprep.subr.bf16.mxu0 %v13020
    %13639 = vmatpush1.bf16.msra.mxu0 %v13019
    %13640 = vmatprep.subr.bf16.mxu0 %v13080
    %13641 = vmatpush2.bf16.msra.mxu0 %v13079
    %13642 = vmatprep.subr.bf16.mxu0 %v13076
    %13643 = vmatpush2.bf16.msra.mxu0 %v13075
    %13644 = vmatprep.subr.bf16.mxu0 %v13072
    %13645 = vmatpush2.bf16.msra.mxu0 %v13071
    %13646 = vmatprep.subr.bf16.mxu0 %v13068
    %13647 = vmatpush2.bf16.msra.mxu0 %v13067
    %13648 = vmatprep.subr.bf16.mxu0 %v13064
    %13649 = vmatpush2.bf16.msra.mxu0 %v13063
    %13650 = vmatprep.subr.bf16.mxu0 %v13060
    %13651 = vmatpush2.bf16.msra.mxu0 %v13059
    %13652 = vmatprep.subr.bf16.mxu0 %v13056
    %13653 = vmatpush2.bf16.msra.mxu0 %v13055
    %13654 = vmatprep.subr.bf16.mxu0 %v13052
    %13655 = vmatpush2.bf16.msra.mxu0 %v13051
    %13656 = vmatprep.mubr.bf16.mxu0 %v11778
    %13657 = vmatmul.mubr.bf16.gmra.mxu0 %v11777
    %v13658 = vpop.f32.mrf.mxu0
    %v13659 = vadd.f32 %v13618, %v13658
    %v13660 = vpop.f32.mrf.mxu0
    %v13661 = vadd.f32 %v13620, %v13660
    %v13662 = vpop.f32.mrf.mxu0
    %v13663 = vpop.f32.mrf.mxu0
    %13664 = vdwg.mxu0
    %v13665 = vmax.f32 %v13495, 0.0
    %v13666 = vmax.f32 %v13497, 0.0
    %v13667 = vmax.f32 %v13659, 0.0
    %v13668 = vmax.f32 %v13661, 0.0
    %v13669 = vpack.c.bf16 %v13665, %v13665
    %v13670 = vpack.c.bf16 %v13666, %v13666
    %v13671 = vpack.c.bf16 %v13667, %v13667
    %v13672 = vpack.c.bf16 %v13668, %v13668
    %v13673 = vld [vmem:[%s9] sm:$0xf]
    %v13674 = vld [vmem:[%s9 + $0x4] sm:$0xf]
    %v13675 = vld [vmem:[%s9 + $0x8] sm:$0xf]
    %v13676 = vld [vmem:[%s9 + $0xc] sm:$0xf]
    %v13677 = vld [vmem:[%s9 + $0x10] sm:$0xf]
    %v13678 = vld [vmem:[%s9 + $0x14] sm:$0xf]
    %v13679 = vld [vmem:[%s9 + $0x18] sm:$0xf]
    %v13680 = vld [vmem:[%s9 + $0x1c] sm:$0xf]
    %v13681 = vld [vmem:[%s9 + $0x20] sm:$0xf]
    %v13682 = vld [vmem:[%s9 + $0x24] sm:$0xf]
    %v13683 = vld [vmem:[%s9 + $0x28] sm:$0xf]
    %v13684 = vld [vmem:[%s9 + $0x2c] sm:$0xf]
    %v13685 = vld [vmem:[%s9 + $0x30] sm:$0xf]
    %v13686 = vld [vmem:[%s9 + $0x34] sm:$0xf]
    %v13687 = vld [vmem:[%s9 + $0x38] sm:$0xf]
    %v13688 = vld [vmem:[%s9 + $0x3c] sm:$0xf]
    %v13689 = vld [vmem:[%s9 + $0x40] sm:$0xf]
    %v13690 = vld [vmem:[%s9 + $0x44] sm:$0xf]
    %v13691 = vld [vmem:[%s9 + $0x48] sm:$0xf]
    %v13692 = vld [vmem:[%s9 + $0x4c] sm:$0xf]
    %v13693 = vld [vmem:[%s9 + $0x50] sm:$0xf]
    %v13694 = vld [vmem:[%s9 + $0x54] sm:$0xf]
    %v13695 = vld [vmem:[%s9 + $0x58] sm:$0xf]
    %v13696 = vld [vmem:[%s9 + $0x5c] sm:$0xf]
    %v13697 = vld [vmem:[%s9 + $0x60] sm:$0xf]
    %v13698 = vld [vmem:[%s9 + $0x64] sm:$0xf]
    %v13699 = vld [vmem:[%s9 + $0x68] sm:$0xf]
    %v13700 = vld [vmem:[%s9 + $0x6c] sm:$0xf]
    %v13701 = vld [vmem:[%s9 + $0x70] sm:$0xf]
    %v13702 = vld [vmem:[%s9 + $0x74] sm:$0xf]
    %v13703 = vld [vmem:[%s9 + $0x78] sm:$0xf]
    %v13704 = vld [vmem:[%s9 + $0x7c] sm:$0xf]
    %v13705 = vld [vmem:[%s9 + $0x80] sm:$0xf]
    %v13706 = vld [vmem:[%s9 + $0x84] sm:$0xf]
    %v13707 = vld [vmem:[%s9 + $0x88] sm:$0xf]
    %v13708 = vld [vmem:[%s9 + $0x8c] sm:$0xf]
    %v13709 = vld [vmem:[%s9 + $0x90] sm:$0xf]
    %v13710 = vld [vmem:[%s9 + $0x94] sm:$0xf]
    %v13711 = vld [vmem:[%s9 + $0x98] sm:$0xf]
    %v13712 = vld [vmem:[%s9 + $0x9c] sm:$0xf]
    %v13713 = vld [vmem:[%s9 + $0xa0] sm:$0xf]
    %v13714 = vld [vmem:[%s9 + $0xa4] sm:$0xf]
    %v13715 = vld [vmem:[%s9 + $0xa8] sm:$0xf]
    %v13716 = vld [vmem:[%s9 + $0xac] sm:$0xf]
    %v13717 = vld [vmem:[%s9 + $0xb0] sm:$0xf]
    %v13718 = vld [vmem:[%s9 + $0xb4] sm:$0xf]
    %v13719 = vld [vmem:[%s9 + $0xb8] sm:$0xf]
    %v13720 = vld [vmem:[%s9 + $0xbc] sm:$0xf]
    %v13721 = vld [vmem:[%s9 + $0xc0] sm:$0xf]
    %v13722 = vld [vmem:[%s9 + $0xc4] sm:$0xf]
    %v13723 = vld [vmem:[%s9 + $0xc8] sm:$0xf]
    %v13724 = vld [vmem:[%s9 + $0xcc] sm:$0xf]
    %v13725 = vld [vmem:[%s9 + $0xd0] sm:$0xf]
    %v13726 = vld [vmem:[%s9 + $0xd4] sm:$0xf]
    %v13727 = vld [vmem:[%s9 + $0xd8] sm:$0xf]
    %v13728 = vld [vmem:[%s9 + $0xdc] sm:$0xf]
    %v13729 = vld [vmem:[%s9 + $0xe0] sm:$0xf]
    %v13730 = vld [vmem:[%s9 + $0xe4] sm:$0xf]
    %v13731 = vld [vmem:[%s9 + $0xe8] sm:$0xf]
    %v13732 = vld [vmem:[%s9 + $0xec] sm:$0xf]
    %v13733 = vld [vmem:[%s9 + $0xf0] sm:$0xf]
    %v13734 = vld [vmem:[%s9 + $0xf4] sm:$0xf]
    %v13735 = vld [vmem:[%s9 + $0xf8] sm:$0xf]
    %v13736 = vld [vmem:[%s9 + $0xfc] sm:$0xf]
    %v13737 = vld [vmem:[%s10] sm:$0x1]
    %v13739 = vlaneseq
    %v13740 = vshrl.u32 %v13739, 7
    %v13741 = vsub.s32 0, %v13740
    %v13742 = vrot.slane %v13737, %v13741
    %v13808 = vunpack.c.l.b16 %v13673
    %v13809 = vunpack.c.l.b16 %v13674
    %v13810 = vunpack.c.l.b16 %v13675
    %v13811 = vunpack.c.l.b16 %v13676
    %v13812 = vunpack.c.l.b16 %v13677
    %v13813 = vunpack.c.l.b16 %v13678
    %v13814 = vunpack.c.l.b16 %v13679
    %v13815 = vunpack.c.l.b16 %v13680
    %v13816 = vunpack.c.l.b16 %v13681
    %v13817 = vunpack.c.l.b16 %v13682
    %v13818 = vunpack.c.l.b16 %v13683
    %v13819 = vunpack.c.l.b16 %v13684
    %v13820 = vunpack.c.l.b16 %v13685
    %v13821 = vunpack.c.l.b16 %v13686
    %v13822 = vunpack.c.l.b16 %v13687
    %v13823 = vunpack.c.l.b16 %v13688
    %v13824 = vunpack.c.l.b16 %v13689
    %v13825 = vunpack.c.l.b16 %v13690
    %v13826 = vunpack.c.l.b16 %v13691
    %v13827 = vunpack.c.l.b16 %v13692
    %v13828 = vunpack.c.l.b16 %v13693
    %v13829 = vunpack.c.l.b16 %v13694
    %v13830 = vunpack.c.l.b16 %v13695
    %v13831 = vunpack.c.l.b16 %v13696
    %v13832 = vunpack.c.l.b16 %v13697
    %v13833 = vunpack.c.l.b16 %v13698
    %v13834 = vunpack.c.l.b16 %v13699
    %v13835 = vunpack.c.l.b16 %v13700
    %v13836 = vunpack.c.l.b16 %v13701
    %v13837 = vunpack.c.l.b16 %v13702
    %v13838 = vunpack.c.l.b16 %v13703
    %v13839 = vunpack.c.l.b16 %v13704
    %v13840 = vunpack.c.l.b16 %v13705
    %v13841 = vunpack.c.l.b16 %v13706
    %v13842 = vunpack.c.l.b16 %v13707
    %v13843 = vunpack.c.l.b16 %v13708
    %v13844 = vunpack.c.l.b16 %v13709
    %v13845 = vunpack.c.l.b16 %v13710
    %v13846 = vunpack.c.l.b16 %v13711
    %v13847 = vunpack.c.l.b16 %v13712
    %v13848 = vunpack.c.l.b16 %v13713
    %v13849 = vunpack.c.l.b16 %v13714
    %v13850 = vunpack.c.l.b16 %v13715
    %v13851 = vunpack.c.l.b16 %v13716
    %v13852 = vunpack.c.l.b16 %v13717
    %v13853 = vunpack.c.l.b16 %v13718
    %v13854 = vunpack.c.l.b16 %v13719
    %v13855 = vunpack.c.l.b16 %v13720
    %v13856 = vunpack.c.l.b16 %v13721
    %v13857 = vunpack.c.l.b16 %v13722
    %v13858 = vunpack.c.l.b16 %v13723
    %v13859 = vunpack.c.l.b16 %v13724
    %v13860 = vunpack.c.l.b16 %v13725
    %v13861 = vunpack.c.l.b16 %v13726
    %v13862 = vunpack.c.l.b16 %v13727
    %v13863 = vunpack.c.l.b16 %v13728
    %v13864 = vunpack.c.l.b16 %v13729
    %v13865 = vunpack.c.l.b16 %v13730
    %v13866 = vunpack.c.l.b16 %v13731
    %v13867 = vunpack.c.l.b16 %v13732
    %v13868 = vunpack.c.l.b16 %v13733
    %v13869 = vunpack.c.l.b16 %v13734
    %v13870 = vunpack.c.l.b16 %v13735
    %v13871 = vunpack.c.l.b16 %v13736
    %v13872 = vpack.c.b16 %v13809, %v13808
    %v13873 = vpack.c.b16 %v13811, %v13810
    %v13874 = vpack.c.b16 %v13813, %v13812
    %v13875 = vpack.c.b16 %v13815, %v13814
    %v13876 = vpack.c.b16 %v13817, %v13816
    %v13877 = vpack.c.b16 %v13819, %v13818
    %v13878 = vpack.c.b16 %v13821, %v13820
    %v13879 = vpack.c.b16 %v13823, %v13822
    %v13880 = vpack.c.b16 %v13825, %v13824
    %v13881 = vpack.c.b16 %v13827, %v13826
    %v13882 = vpack.c.b16 %v13829, %v13828
    %v13883 = vpack.c.b16 %v13831, %v13830
    %v13884 = vpack.c.b16 %v13833, %v13832
    %v13885 = vpack.c.b16 %v13835, %v13834
    %v13886 = vpack.c.b16 %v13837, %v13836
    %v13887 = vpack.c.b16 %v13839, %v13838
    %v13888 = vpack.c.b16 %v13841, %v13840
    %v13889 = vpack.c.b16 %v13843, %v13842
    %v13890 = vpack.c.b16 %v13845, %v13844
    %v13891 = vpack.c.b16 %v13847, %v13846
    %v13892 = vpack.c.b16 %v13849, %v13848
    %v13893 = vpack.c.b16 %v13851, %v13850
    %v13894 = vpack.c.b16 %v13853, %v13852
    %v13895 = vpack.c.b16 %v13855, %v13854
    %v13896 = vpack.c.b16 %v13857, %v13856
    %v13897 = vpack.c.b16 %v13859, %v13858
    %v13898 = vpack.c.b16 %v13861, %v13860
    %v13899 = vpack.c.b16 %v13863, %v13862
    %v13900 = vpack.c.b16 %v13865, %v13864
    %v13901 = vpack.c.b16 %v13867, %v13866
    %v13902 = vpack.c.b16 %v13869, %v13868
    %v13903 = vpack.c.b16 %v13871, %v13870
    %13936 = vmatprep.subr.bf16.mxu0 0
    %13937 = vmatpush1.bf16.msra.mxu0 %v13879
    %13938 = vmatprep.subr.bf16.mxu0 0
    %13939 = vmatpush1.bf16.msra.mxu0 %v13878
    %13940 = vmatprep.subr.bf16.mxu0 0
    %13941 = vmatpush1.bf16.msra.mxu0 %v13877
    %13942 = vmatprep.subr.bf16.mxu0 0
    %13943 = vmatpush1.bf16.msra.mxu0 %v13876
    %13944 = vmatprep.subr.bf16.mxu0 0
    %13945 = vmatpush1.bf16.msra.mxu0 %v13875
    %13946 = vmatprep.subr.bf16.mxu0 0
    %13947 = vmatpush1.bf16.msra.mxu0 %v13874
    %13948 = vmatprep.subr.bf16.mxu0 0
    %13949 = vmatpush1.bf16.msra.mxu0 %v13873
    %13950 = vmatprep.subr.bf16.mxu0 0
    %13951 = vmatpush1.bf16.msra.mxu0 %v13872
    %13952 = vmatprep.subr.bf16.mxu0 0
    %13953 = vmatpush2.bf16.msra.mxu0 %v13887
    %13954 = vmatprep.subr.bf16.mxu0 0
    %13955 = vmatpush2.bf16.msra.mxu0 %v13886
    %13956 = vmatprep.subr.bf16.mxu0 0
    %13957 = vmatpush2.bf16.msra.mxu0 %v13885
    %13958 = vmatprep.subr.bf16.mxu0 0
    %13959 = vmatpush2.bf16.msra.mxu0 %v13884
    %13960 = vmatprep.subr.bf16.mxu0 0
    %13961 = vmatpush2.bf16.msra.mxu0 %v13883
    %13962 = vmatprep.subr.bf16.mxu0 0
    %13963 = vmatpush2.bf16.msra.mxu0 %v13882
    %13964 = vmatprep.subr.bf16.mxu0 0
    %13965 = vmatpush2.bf16.msra.mxu0 %v13881
    %13966 = vmatprep.subr.bf16.mxu0 0
    %13967 = vmatpush2.bf16.msra.mxu0 %v13880
    %13968 = vmatprep.mubr.bf16.mxu0 %v13670
    %13969 = vmatmul.mubr.bf16.gmra.mxu0 %v13669
    %v13970 = vpop.f32.mrf.mxu0
    %v13971 = vadd.f32 %v13742, %v13970
    %v13972 = vpop.f32.mrf.mxu0
    %v13973 = vpop.f32.mrf.mxu0
    %v13974 = vpop.f32.mrf.mxu0
    %13975 = vdwg.mxu0
    %13976 = vmatprep.subr.bf16.mxu0 0
    %13977 = vmatpush1.bf16.msra.mxu0 %v13895
    %13978 = vmatprep.subr.bf16.mxu0 0
    %13979 = vmatpush1.bf16.msra.mxu0 %v13894
    %13980 = vmatprep.subr.bf16.mxu0 0
    %13981 = vmatpush1.bf16.msra.mxu0 %v13893
    %13982 = vmatprep.subr.bf16.mxu0 0
    %13983 = vmatpush1.bf16.msra.mxu0 %v13892
    %13984 = vmatprep.subr.bf16.mxu0 0
    %13985 = vmatpush1.bf16.msra.mxu0 %v13891
    %13986 = vmatprep.subr.bf16.mxu0 0
    %13987 = vmatpush1.bf16.msra.mxu0 %v13890
    %13988 = vmatprep.subr.bf16.mxu0 0
    %13989 = vmatpush1.bf16.msra.mxu0 %v13889
    %13990 = vmatprep.subr.bf16.mxu0 0
    %13991 = vmatpush1.bf16.msra.mxu0 %v13888
    %13992 = vmatprep.subr.bf16.mxu0 0
    %13993 = vmatpush2.bf16.msra.mxu0 %v13903
    %13994 = vmatprep.subr.bf16.mxu0 0
    %13995 = vmatpush2.bf16.msra.mxu0 %v13902
    %13996 = vmatprep.subr.bf16.mxu0 0
    %13997 = vmatpush2.bf16.msra.mxu0 %v13901
    %13998 = vmatprep.subr.bf16.mxu0 0
    %13999 = vmatpush2.bf16.msra.mxu0 %v13900
    %14000 = vmatprep.subr.bf16.mxu0 0
    %14001 = vmatpush2.bf16.msra.mxu0 %v13899
    %14002 = vmatprep.subr.bf16.mxu0 0
    %14003 = vmatpush2.bf16.msra.mxu0 %v13898
    %14004 = vmatprep.subr.bf16.mxu0 0
    %14005 = vmatpush2.bf16.msra.mxu0 %v13897
    %14006 = vmatprep.subr.bf16.mxu0 0
    %14007 = vmatpush2.bf16.msra.mxu0 %v13896
    %14008 = vmatprep.mubr.bf16.mxu0 %v13672
    %14009 = vmatmul.mubr.bf16.gmra.mxu0 %v13671
    %v14010 = vpop.f32.mrf.mxu0
    %v14011 = vadd.f32 %v13971, %v14010
    %v14012 = vpop.f32.mrf.mxu0
    %v14013 = vpop.f32.mrf.mxu0
    %v14014 = vpop.f32.mrf.mxu0
    %14015 = vdwg.mxu0
    %14016 = vst [vmem:[#allocation2] sm:$0x3] %v14011
    // Predicated region
    $region46: #{lenet_pallas.1} parent=1 // pred_check
      _
    $region47: #{lenet_pallas.1} parent=1 // pred_check_branch
      %14018 = sbr.rel (0) target = $region49
    $region48: #{lenet_pallas.1} parent=1 // pred_region
      %s14020 = ssub.s32 32, 32
      %14021 = vsyncadd [#allocation3], %s14020
      %s14023 = sshll.u32 [#allocation2], 4
      %s14024 = int_to_ptr.vmem [resolvable:$true] %s14023
      %14026 = dma.vmem_to_hbm [thread:$0]  %s14024, 32, %s11, [#allocation3]
    $region49: #{lenet_pallas.1} parent=1 // pred_fallthru
      _
    // Predicated region
    $region50: #{lenet_pallas.1} parent=1 // pred_check
      _
    $region51: #{lenet_pallas.1} parent=1 // pred_check_branch
      %14028 = sbr.rel (0) target = $region53
    $region52: #{lenet_pallas.1} parent=1 // pred_region
      %14029 = dma.done [#allocation3], 32
    $region53: #{lenet_pallas.1} parent=1 // pred_fallthru
      _
    %14030 = vsyncpa [#allocation3], 1

</llo_original>
